<compile_context>
chip_gen: v7x
topology: tpu7x:2x2x1
jax: 0.10.0
libtpu: 0.0.40
codegen_flags: <defaults>
</compile_context>

<pallas_src>
import functools
import numpy as np

import jax
import jax.numpy as jnp
from jax.experimental import pallas as pl
from jax.experimental.pallas import tpu as pltpu

# ----------------------------- configuration --------------------------------
NUM_CLASSES = 2
PATCH = 4
EMBED_DIM = 16
DEPTHS = (2, 2)
NUM_HEADS = (2, 4)
WINDOW = 4
MLP_RATIO = 4

_NEG = -1e9       # different window / different image -> softmax weight underflows to 0
VEC_LANES = 128   # packed small-vector array lane width


# --------------------- packed small-vector layout (static) -------------------
def _build_vec_layout():
    rows, r = {}, 0

    def add(name, length):
        nonlocal r
        rows[name] = (r, length)
        r += 1

    add("patch_b", EMBED_DIM)
    add("patch_ln_g", EMBED_DIM)
    add("patch_ln_b", EMBED_DIM)
    dim = EMBED_DIM
    for s, depth in enumerate(DEPTHS):
        for d in range(depth):
            p = f"s{s}b{d}_"
            add(p + "ln1_g", dim); add(p + "ln1_b", dim)
            add(p + "qkv_b", 3 * dim); add(p + "proj_b", dim)
            add(p + "ln2_g", dim); add(p + "ln2_b", dim)
            add(p + "mlp_b1", MLP_RATIO * dim); add(p + "mlp_b2", dim)
        if s < len(DEPTHS) - 1:
            add(f"merge{s}_ln_g", 4 * dim); add(f"merge{s}_ln_b", 4 * dim)
            dim *= 2
    add("final_ln_g", dim)
    add("final_ln_b", dim)
    add("fc_b", NUM_CLASSES)
    return rows, r


VEC_LAYOUT, VEC_ROWS = _build_vec_layout()


# ------------------------- in-kernel math helpers ----------------------------
def _ln(x, g, b, eps=1e-5):
    """nn.LayerNorm over the last dim (biased variance, eps inside sqrt)."""
    mu = jnp.mean(x, axis=-1, keepdims=True)
    var = jnp.mean(jnp.square(x - mu), axis=-1, keepdims=True)
    return (x - mu) * jax.lax.rsqrt(var + eps) * g + b


def _gelu(x):
    # TODO(synk): tanh-approximate GELU (runs on the EUP) instead of exact erf GELU;
    # max abs deviation ~1e-3, well below the synthetic-weight noise floor here.
    c = 0.7978845608028654  # sqrt(2/pi)
    return 0.5 * x * (1.0 + jnp.tanh(c * (x + 0.044715 * x * x * x)))


def _block_body(x, C, nH, hd, wA_ref, wB_ref, bias_ref, d,
                ln1_g, ln1_b, qkv_b, proj_b, ln2_g, ln2_b, mlp_b1, mlp_b2):
    """One Swin block on (T, C) tokens of one image.  Window partitioning, the cyclic
    shift, the torchvision -100 mask and the rel-pos bias live in bias_ref[d]."""
    wa = wA_ref[d]                                           # (C, 8C) bf16
    qkv_w = wa[:, :3 * C]
    proj_w = wa[:, 3 * C:4 * C]
    mlp_w1 = wa[:, 4 * C:]
    mlp_w2 = wB_ref[d]                                       # (4C, C) bf16

    # --- windowed multi-head self attention ---
    h = _ln(x, ln1_g, ln1_b)
    qkv = jnp.dot(h.astype(jnp.bfloat16), qkv_w,
                  preferred_element_type=jnp.float32) + qkv_b
    scale = float(hd) ** -0.5
    heads = []
    for hi in range(nH):
        o0 = hi * hd
        q = (qkv[:, o0:o0 + hd] * scale).astype(jnp.bfloat16)
        k = qkv[:, C + o0:C + o0 + hd].astype(jnp.bfloat16)
        v = qkv[:, 2 * C + o0:2 * C + o0 + hd].astype(jnp.bfloat16)
        s = jax.lax.dot_general(q, k, (((1,), (1,)), ((), ())),
                                preferred_element_type=jnp.float32)
        s = s + bias_ref[d, hi]
        s = s - jnp.max(s, axis=-1, keepdims=True)
        p = jnp.exp(s)
        p = p * pl.reciprocal(jnp.sum(p, axis=-1, keepdims=True), approx=True)
        heads.append(jnp.dot(p.astype(jnp.bfloat16), v,
                             preferred_element_type=jnp.float32))
    o = jnp.concatenate(heads, axis=-1)                      # (T, C)
    x = x + jnp.dot(o.astype(jnp.bfloat16), proj_w,          # single K=C proj matmul
                    preferred_element_type=jnp.float32) + proj_b

    # --- MLP ---
    h = _ln(x, ln2_g, ln2_b)
    h = jnp.dot(h.astype(jnp.bfloat16), mlp_w1,
                preferred_element_type=jnp.float32) + mlp_b1
    h = _gelu(h)
    h = jnp.dot(h.astype(jnp.bfloat16), mlp_w2,
                preferred_element_type=jnp.float32) + mlp_b2
    return x + h


# ------------------------------ fused kernel ---------------------------------
def _forward_kernel(patches_ref, vec_ref, patch_w_ref,
                    wA0_ref, wB0_ref, bias0_ref, merge_sel_ref, red_w_ref,
                    wA1_ref, wB1_ref, bias1_ref, fc_w_ref,
                    logits_ref, feat_ref):
    """Whole forward for one image (one grid step): patch-embed -> stage 0 (2 blocks)
    -> PatchMerging -> stage 1 (2 blocks) -> final LN -> avg-pool -> classifier."""

    def V(name):                                             # packed small vector slice
        r, L = VEC_LAYOUT[name]
        return vec_ref[r:r + 1, 0:L]

    # ---- patch embedding: per-patch linear (== Conv2d k=4 s=4) + LayerNorm ----
    x = jnp.dot(patches_ref[0], patch_w_ref[...],
                preferred_element_type=jnp.float32) + V("patch_b")
    x = _ln(x, V("patch_ln_g"), V("patch_ln_b"))

    dim = EMBED_DIM
    stage_refs = ((wA0_ref, wB0_ref, bias0_ref), (wA1_ref, wB1_ref, bias1_ref))
    for s in range(len(DEPTHS)):
        nH = NUM_HEADS[s]
        hd = dim // nH
        wA_ref, wB_ref, bias_ref = stage_refs[s]
        for d in range(DEPTHS[s]):
            p = f"s{s}b{d}_"
            x = _block_body(x, dim, nH, hd, wA_ref, wB_ref, bias_ref, d,
                            V(p + "ln1_g"), V(p + "ln1_b"), V(p + "qkv_b"),
                            V(p + "proj_b"), V(p + "ln2_g"), V(p + "ln2_b"),
                            V(p + "mlp_b1"), V(p + "mlp_b2"))
        if s < len(DEPTHS) - 1:
            # PatchMerging: 2x2 neighbourhood gather as 4 constant selection matmuls
            # (MXU) + lane concat, then LayerNorm + Linear(4C, 2C, bias=False).
            xb = x.astype(jnp.bfloat16)
            quads = [jnp.dot(merge_sel_ref[c], xb, preferred_element_type=jnp.float32)
                     for c in range(4)]
            xm = jnp.concatenate(quads, axis=-1)             # (n/4, 4*dim)
            xm = _ln(xm, V(f"merge{s}_ln_g"), V(f"merge{s}_ln_b"))
            x = jnp.dot(xm.astype(jnp.bfloat16), red_w_ref[...],
                        preferred_element_type=jnp.float32)
            dim *= 2

    # ---- final LayerNorm + global average pool (AdaptiveAvgPool2d(1)) + head ----
    xf = _ln(x, V("final_ln_g"), V("final_ln_b"))
    feat = jnp.mean(xf, axis=0, keepdims=True)               # (1, C_final)
    logits = jnp.dot(feat, fc_w_ref[...],
                     preferred_element_type=jnp.float32) + V("fc_b")
    logits_ref[0] = logits.astype(logits_ref.dtype)
    feat_ref[0] = feat.astype(feat_ref.dtype)


# ---------------------- static geometry (numpy, cached) ----------------------
@functools.lru_cache(maxsize=None)
def _win_mask_static(h, w, win, shift):
    """(n,n) rel-pos indices + additive base mask folding window partition, cyclic
    shift and torchvision's -100 shifted-window mask for one image (n = h*w)."""
    ys, xs = np.meshgrid(np.arange(h), np.arange(w), indexing="ij")
    ys, xs = ys.reshape(-1), xs.reshape(-1)
    yr, xr = (ys - shift) % h, (xs - shift) % w               # coords after the roll
    win_id = (yr // win) * (w // win) + (xr // win)
    py, px = yr % win, xr % win
    if shift > 0:
        def region(c, size):                                   # torchvision slice regions
            r = np.zeros_like(c)
            r = np.where(c >= size - win, 1, r)
            r = np.where(c >= size - shift, 2, r)
            return r
        reg = region(yr, h) * 3 + region(xr, w)
    else:
        reg = np.zeros_like(yr)
    rel = ((py[:, None] - py[None, :] + win - 1) * (2 * win - 1)
           + (px[:, None] - px[None, :] + win - 1))
    same_win = win_id[:, None] == win_id[None, :]
    same_reg = reg[:, None] == reg[None, :]
    base = np.where(same_win, np.where(same_reg, 0.0, -100.0), _NEG).astype(np.float32)
    return rel.astype(np.int32), base


@functools.lru_cache(maxsize=None)
def _merge_select(h, w):
    """(4, h*w/4, h*w) 0/1 selection matrices implementing the torchvision
    PatchMerging 2x2 gather order [x(0::2,0::2), x(1::2,0::2), x(0::2,1::2), x(1::2,1::2)]."""
    n_out = (h // 2) * (w // 2)
    S = np.zeros((4, n_out, h * w), np.float32)
    for c, (dr, dc) in enumerate([(0, 0), (1, 0), (0, 1), (1, 1)]):
        for i in range(h // 2):
            for j in range(w // 2):
                S[c, i * (w // 2) + j, (2 * i + dr) * w + (2 * j + dc)] = 1.0
    return S


# ----------------------------- parameter packing -----------------------------
def pack_params(params, img_hw=(32, 32)):
    """One-time (outside the hot path) repack of params into the kernel operand set:
    one packed small-vector array, per-stage concatenated bf16 weights, per-stage
    precomputed additive attention biases, and the constant merge selection matrices."""
    H, W = img_hw
    Hp, Wp = H // PATCH, W // PATCH
    packed = {}

    # ---- packed small vectors ----
    vals = {
        "patch_b": params["patch_b"],
        "patch_ln_g": params["patch_ln_g"],
        "patch_ln_b": params["patch_ln_b"],
        "final_ln_g": params["final_ln_g"],
        "final_ln_b": params["final_ln_b"],
        "fc_b": params["fc_b"],
    }
    for s, stage in enumerate(params["stages"]):
        for d, blk in enumerate(stage["blocks"]):
            p = f"s{s}b{d}_"
            vals[p + "ln1_g"] = blk["ln1_g"]; vals[p + "ln1_b"] = blk["ln1_b"]
            vals[p + "qkv_b"] = blk["qkv_b"]; vals[p + "proj_b"] = blk["proj_b"]
            vals[p + "ln2_g"] = blk["ln2_g"]; vals[p + "ln2_b"] = blk["ln2_b"]
            vals[p + "mlp_b1"] = blk["mlp_b1"]; vals[p + "mlp_b2"] = blk["mlp_b2"]
        if "merge" in stage:
            vals[f"merge{s}_ln_g"] = stage["merge"]["ln_g"]
            vals[f"merge{s}_ln_b"] = stage["merge"]["ln_b"]
    rows = []
    for name, (_, L) in VEC_LAYOUT.items():
        v = jnp.asarray(vals[name], jnp.float32).reshape(L)
        rows.append(jnp.pad(v, (0, VEC_LANES - L)))
    while len(rows) % 8 != 0:
        rows.append(jnp.zeros((VEC_LANES,), jnp.float32))
    packed["vec"] = jnp.stack(rows)

    # ---- matmul weights (bf16) and per-stage attention biases ----
    packed["patch_w"] = params["patch_w"].astype(jnp.bfloat16)
    packed["fc_w"] = params["fc_w"].astype(jnp.float32)
    h, w = Hp, Wp
    for s, stage in enumerate(params["stages"]):
        blocks = stage["blocks"]
        packed[f"wA{s}"] = jnp.stack(
            [jnp.concatenate([b["qkv_w"], b["proj_w"], b["mlp_w1"]], axis=1)
             for b in blocks]).astype(jnp.bfloat16)
        packed[f"wB{s}"] = jnp.stack([b["mlp_w2"] for b in blocks]).astype(jnp.bfloat16)

        idxs, bases = [], []
        for d in range(len(blocks)):
            shift = 0 if d % 2 == 0 else WINDOW // 2
            if WINDOW >= h or WINDOW >= w:                    # torchvision shift-disable
                shift = 0
            idx, base = _win_mask_static(h, w, WINDOW, shift)
            idxs.append(idx); bases.append(base)
        tbl = jnp.stack([b["rel_table"] for b in blocks])     # (depth, (2w-1)^2, nH)
        gathered = jax.vmap(lambda t, i: t[i])(tbl, jnp.asarray(np.stack(idxs)))
        packed[f"bias{s}"] = (jnp.transpose(gathered, (0, 3, 1, 2))
                              + jnp.asarray(np.stack(bases))[:, None])  # (depth,nH,n,n)

        if "merge" in stage:
            packed["red_w"] = stage["merge"]["red_w"].astype(jnp.bfloat16)
            packed["merge_sel"] = jnp.asarray(_merge_select(h, w), jnp.bfloat16)
            h, w = h // 2, w // 2
    return packed


# ------------------------------- forward wrapper ------------------------------
def swin_forward(x, packed):
    """x: (B, 3, H, W) NCHW -> (logits (B, NUM_CLASSES), features (B, C_final))."""
    B, Cin, H, W = x.shape
    Hp, Wp = H // PATCH, W // PATCH
    n0, Cp = Hp * Wp, Cin * PATCH * PATCH
    Cf = EMBED_DIM * (2 ** (len(DEPTHS) - 1))

    # Patch extraction (Conv2d(3, D, k=4, s=4) == per-patch linear projection).
    patches = (x.reshape(B, Cin, Hp, PATCH, Wp, PATCH)
                 .transpose(0, 2, 4, 1, 3, 5)
                 .reshape(B, n0, Cp)
                 .astype(jnp.bfloat16))

    operands = [patches, packed["vec"], packed["patch_w"],
                packed["wA0"], packed["wB0"], packed["bias0"],
                packed["merge_sel"], packed["red_w"],
                packed["wA1"], packed["wB1"], packed["bias1"], packed["fc_w"]]

    def full_spec(a):
        return pl.BlockSpec(a.shape, lambda b: (0,) * a.ndim)

    in_specs = ([pl.BlockSpec((1, n0, Cp), lambda b: (b, 0, 0))]
                + [full_spec(a) for a in operands[1:]])
    out_specs = (pl.BlockSpec((1, 1, NUM_CLASSES), lambda b: (b, 0, 0)),
                 pl.BlockSpec((1, 1, Cf), lambda b: (b, 0, 0)))

    in_bytes = sum(int(a.size) * a.dtype.itemsize for a in operands)
    out_bytes = B * (NUM_CLASSES + Cf) * 4
    cost = pl.CostEstimate(flops=int(2_600_000 * B),
                           transcendentals=int(32_000 * B),
                           bytes_accessed=int(in_bytes + out_bytes))

    logits3, feat3 = pl.pallas_call(
        _forward_kernel,
        grid=(B,),
        out_shape=(jax.ShapeDtypeStruct((B, 1, NUM_CLASSES), jnp.float32),
                   jax.ShapeDtypeStruct((B, 1, Cf), jnp.float32)),
        in_specs=in_specs,
        out_specs=out_specs,
        compiler_params=pltpu.CompilerParams(dimension_semantics=("parallel",)),
        cost_estimate=cost,
    )(*operands)
    # out.squeeze(-1).squeeze(-1) in the PyTorch module is a no-op here.
    return logits3[:, 0, :], feat3[:, 0, :]


# ----------------------------- parameter init --------------------------------
def init_params(key):
    # TODO(synk): pretrained torchvision weights are not loadable here; params are synthetic.
    keys = iter(jax.random.split(key, 256))

    def nrm(shape, scale=0.02):
        return scale * jax.random.normal(next(keys), shape, dtype=jnp.float32)

    params = {
        "patch_w": nrm((3 * PATCH * PATCH, EMBED_DIM)),
        "patch_b": nrm((EMBED_DIM,)),
        "patch_ln_g": jnp.ones((EMBED_DIM,), jnp.float32),
        "patch_ln_b": jnp.zeros((EMBED_DIM,), jnp.float32),
        "stages": [],
    }
    dim = EMBED_DIM
    for s, (depth, nh) in enumerate(zip(DEPTHS, NUM_HEADS)):
        blocks = []
        hid = MLP_RATIO * dim
        for _ in range(depth):
            blocks.append(dict(
                ln1_g=jnp.ones((dim,), jnp.float32),
                ln1_b=jnp.zeros((dim,), jnp.float32),
                qkv_w=nrm((dim, 3 * dim)),
                qkv_b=nrm((3 * dim,)),
                proj_w=nrm((dim, dim)),
                proj_b=nrm((dim,)),
                rel_table=nrm(((2 * WINDOW - 1) ** 2, nh)),
                ln2_g=jnp.ones((dim,), jnp.float32),
                ln2_b=jnp.zeros((dim,), jnp.float32),
                mlp_w1=nrm((dim, hid)),
                mlp_b1=nrm((hid,)),
                mlp_w2=nrm((hid, dim)),
                mlp_b2=nrm((dim,)),
            ))
        stage = {"blocks": blocks}
        if s < len(DEPTHS) - 1:
            stage["merge"] = dict(
                ln_g=jnp.ones((4 * dim,), jnp.float32),
                ln_b=jnp.zeros((4 * dim,), jnp.float32),
                red_w=nrm((4 * dim, 2 * dim)),
            )
        params["stages"].append(stage)
        if s < len(DEPTHS) - 1:
            dim *= 2
    params["final_ln_g"] = jnp.ones((dim,), jnp.float32)
    params["final_ln_b"] = jnp.zeros((dim,), jnp.float32)
    params["fc_w"] = nrm((dim, NUM_CLASSES))
    params["fc_b"] = jnp.zeros((NUM_CLASSES,), jnp.float32)
    return params


# ------------------------------------ main -----------------------------------
if __name__ == "__main__":
    x = jax.random.normal(jax.random.PRNGKey(0), (2, 3, 32, 32), jnp.float32)
    params = init_params(jax.random.PRNGKey(42))

    packed = pack_params(params, img_hw=(32, 32))   # one-time prep, outside the hot path
    logits, feats = jax.jit(swin_forward)(x, packed)
    jax.block_until_ready((logits, feats))

    c_final = EMBED_DIM * (2 ** (len(DEPTHS) - 1))
    assert logits.shape == (2, NUM_CLASSES), logits.shape
    assert feats.shape == (2, c_final), feats.shape
    assert bool(jnp.all(jnp.isfinite(logits))) and bool(jnp.all(jnp.isfinite(feats)))
    print("KERNEL_OK")
</pallas_src>

<mosaic_0001>
module attributes {stable_mosaic.version = 11 : i64} {
  func.func @_forward_kernel(%arg0: i32, %arg1: memref<1x64x48xbf16, #tpu.memory_space<vmem>>, %arg2: memref<40x128xf32, #tpu.memory_space<vmem>>, %arg3: memref<48x16xbf16, #tpu.memory_space<vmem>>, %arg4: memref<2x16x128xbf16, #tpu.memory_space<vmem>>, %arg5: memref<2x64x16xbf16, #tpu.memory_space<vmem>>, %arg6: memref<2x2x64x64xf32, #tpu.memory_space<vmem>>, %arg7: memref<4x16x64xbf16, #tpu.memory_space<vmem>>, %arg8: memref<64x32xbf16, #tpu.memory_space<vmem>>, %arg9: memref<2x32x256xbf16, #tpu.memory_space<vmem>>, %arg10: memref<2x128x32xbf16, #tpu.memory_space<vmem>>, %arg11: memref<2x4x16x16xf32, #tpu.memory_space<vmem>>, %arg12: memref<32x2xf32, #tpu.memory_space<vmem>>, %arg13: memref<1x1x2xf32, #tpu.memory_space<vmem>>, %arg14: memref<1x1x32xf32, #tpu.memory_space<vmem>>) attributes {dimension_semantics = [#tpu.dimension_semantics<parallel>], iteration_bounds = array<i64: 2>, scalar_prefetch = 0 : i64, scratch_operands = 0 : i64, tpu.core_type = #tpu.core_type<tc>, window_params = [{transform_indices = @transform_0, window_bounds = array<i64: 1, 64, 48>}, {pipeline_mode = #tpu.pipeline_mode<synchronous>, transform_indices = @transform_1, window_bounds = array<i64: 40, 128>}, {pipeline_mode = #tpu.pipeline_mode<synchronous>, transform_indices = @transform_2, window_bounds = array<i64: 48, 16>}, {pipeline_mode = #tpu.pipeline_mode<synchronous>, transform_indices = @transform_3, window_bounds = array<i64: 2, 16, 128>}, {pipeline_mode = #tpu.pipeline_mode<synchronous>, transform_indices = @transform_4, window_bounds = array<i64: 2, 64, 16>}, {pipeline_mode = #tpu.pipeline_mode<synchronous>, transform_indices = @transform_5, window_bounds = array<i64: 2, 2, 64, 64>}, {pipeline_mode = #tpu.pipeline_mode<synchronous>, transform_indices = @transform_6, window_bounds = array<i64: 4, 16, 64>}, {pipeline_mode = #tpu.pipeline_mode<synchronous>, transform_indices = @transform_7, window_bounds = array<i64: 64, 32>}, {pipeline_mode = #tpu.pipeline_mode<synchronous>, transform_indices = @transform_8, window_bounds = array<i64: 2, 32, 256>}, {pipeline_mode = #tpu.pipeline_mode<synchronous>, transform_indices = @transform_9, window_bounds = array<i64: 2, 128, 32>}, {pipeline_mode = #tpu.pipeline_mode<synchronous>, transform_indices = @transform_10, window_bounds = array<i64: 2, 4, 16, 16>}, {pipeline_mode = #tpu.pipeline_mode<synchronous>, transform_indices = @transform_11, window_bounds = array<i64: 32, 2>}, {transform_indices = @transform_12, window_bounds = array<i64: 1, 1, 2>}, {transform_indices = @transform_13, window_bounds = array<i64: 1, 1, 32>}]} {
    %c0 = arith.constant 0 : index
    %c0_0 = arith.constant 0 : index
    %c0_1 = arith.constant 0 : index
    %0 = vector.load %arg1[%c0, %c0_0, %c0_1] : memref<1x64x48xbf16, #tpu.memory_space<vmem>>, vector<1x64x48xbf16>
    %1 = vector.shape_cast %0 : vector<1x64x48xbf16> to vector<64x48xbf16>
    %c0_2 = arith.constant 0 : index
    %c0_3 = arith.constant 0 : index
    %2 = vector.load %arg3[%c0_2, %c0_3] : memref<48x16xbf16, #tpu.memory_space<vmem>>, vector<48x16xbf16>
    %cst = arith.constant dense<0.000000e+00> : vector<64x16xf32>
    %3 = tpu.matmul %1, %2, %cst {dimension_numbers = #tpu.dot_dimension_numbers<[1], [0], [0], [1], [0, 0, 1, 1], [], []>} : vector<64x48xbf16>, vector<48x16xbf16>, vector<64x16xf32> -> vector<64x16xf32>
    %c0_4 = arith.constant 0 : index
    %c0_5 = arith.constant 0 : index
    %4 = vector.load %arg2[%c0_4, %c0_5] : memref<40x128xf32, #tpu.memory_space<vmem>>, vector<1x16xf32>
    %5 = vector.broadcast %4 : vector<1x16xf32> to vector<64x16xf32>
    %6 = arith.addf %3, %5 : vector<64x16xf32>
    %c1 = arith.constant 1 : index
    %c0_6 = arith.constant 0 : index
    %7 = vector.load %arg2[%c1, %c0_6] : memref<40x128xf32, #tpu.memory_space<vmem>>, vector<1x16xf32>
    %c2 = arith.constant 2 : index
    %c0_7 = arith.constant 0 : index
    %8 = vector.load %arg2[%c2, %c0_7] : memref<40x128xf32, #tpu.memory_space<vmem>>, vector<1x16xf32>
    %cst_8 = arith.constant dense<0.000000e+00> : vector<64xf32>
    %9 = vector.multi_reduction <add>, %6, %cst_8 [1] : vector<64x16xf32> to vector<64xf32>
    %10 = vector.shape_cast %9 : vector<64xf32> to vector<64x1xf32>
    %cst_9 = arith.constant 1.600000e+01 : f32
    %11 = vector.broadcast %cst_9 : f32 to vector<64x1xf32>
    %12 = arith.divf %10, %11 : vector<64x1xf32>
    %13 = vector.broadcast %12 : vector<64x1xf32> to vector<64x16xf32>
    %14 = arith.subf %6, %13 : vector<64x16xf32>
    %15 = arith.mulf %14, %14 : vector<64x16xf32>
    %cst_10 = arith.constant dense<0.000000e+00> : vector<64xf32>
    %16 = vector.multi_reduction <add>, %15, %cst_10 [1] : vector<64x16xf32> to vector<64xf32>
    %17 = vector.shape_cast %16 : vector<64xf32> to vector<64x1xf32>
    %cst_11 = arith.constant 1.600000e+01 : f32
    %18 = vector.broadcast %cst_11 : f32 to vector<64x1xf32>
    %19 = arith.divf %17, %18 : vector<64x1xf32>
    %20 = vector.broadcast %12 : vector<64x1xf32> to vector<64x16xf32>
    %21 = arith.subf %6, %20 : vector<64x16xf32>
    %cst_12 = arith.constant 9.99999974E-6 : f32
    %22 = vector.broadcast %cst_12 : f32 to vector<64x1xf32>
    %23 = arith.addf %19, %22 : vector<64x1xf32>
    %24 = math.rsqrt %23 : vector<64x1xf32>
    %25 = vector.broadcast %24 : vector<64x1xf32> to vector<64x16xf32>
    %26 = arith.mulf %21, %25 : vector<64x16xf32>
    %27 = vector.broadcast %7 : vector<1x16xf32> to vector<64x16xf32>
    %28 = arith.mulf %26, %27 : vector<64x16xf32>
    %29 = vector.broadcast %8 : vector<1x16xf32> to vector<64x16xf32>
    %30 = arith.addf %28, %29 : vector<64x16xf32>
    %c3 = arith.constant 3 : index
    %c0_13 = arith.constant 0 : index
    %31 = vector.load %arg2[%c3, %c0_13] : memref<40x128xf32, #tpu.memory_space<vmem>>, vector<1x16xf32>
    %c4 = arith.constant 4 : index
    %c0_14 = arith.constant 0 : index
    %32 = vector.load %arg2[%c4, %c0_14] : memref<40x128xf32, #tpu.memory_space<vmem>>, vector<1x16xf32>
    %c5 = arith.constant 5 : index
    %c0_15 = arith.constant 0 : index
    %33 = vector.load %arg2[%c5, %c0_15] : memref<40x128xf32, #tpu.memory_space<vmem>>, vector<1x48xf32>
    %c6 = arith.constant 6 : index
    %c0_16 = arith.constant 0 : index
    %34 = vector.load %arg2[%c6, %c0_16] : memref<40x128xf32, #tpu.memory_space<vmem>>, vector<1x16xf32>
    %c7 = arith.constant 7 : index
    %c0_17 = arith.constant 0 : index
    %35 = vector.load %arg2[%c7, %c0_17] : memref<40x128xf32, #tpu.memory_space<vmem>>, vector<1x16xf32>
    %c8 = arith.constant 8 : index
    %c0_18 = arith.constant 0 : index
    %36 = vector.load %arg2[%c8, %c0_18] : memref<40x128xf32, #tpu.memory_space<vmem>>, vector<1x16xf32>
    %c9 = arith.constant 9 : index
    %c0_19 = arith.constant 0 : index
    %37 = vector.load %arg2[%c9, %c0_19] : memref<40x128xf32, #tpu.memory_space<vmem>>, vector<1x64xf32>
    %c10 = arith.constant 10 : index
    %c0_20 = arith.constant 0 : index
    %38 = vector.load %arg2[%c10, %c0_20] : memref<40x128xf32, #tpu.memory_space<vmem>>, vector<1x16xf32>
    %c0_21 = arith.constant 0 : index
    %c0_22 = arith.constant 0 : index
    %c0_23 = arith.constant 0 : index
    %39 = vector.load %arg4[%c0_21, %c0_22, %c0_23] : memref<2x16x128xbf16, #tpu.memory_space<vmem>>, vector<1x16x128xbf16>
    %40 = vector.shape_cast %39 : vector<1x16x128xbf16> to vector<16x128xbf16>
    %41 = vector.extract_strided_slice %40 {offsets = [0, 0], sizes = [16, 48], strides = [1, 1]} : vector<16x128xbf16> to vector<16x48xbf16>
    %42 = vector.extract_strided_slice %40 {offsets = [0, 48], sizes = [16, 16], strides = [1, 1]} : vector<16x128xbf16> to vector<16x16xbf16>
    %43 = vector.extract_strided_slice %40 {offsets = [0, 64], sizes = [16, 64], strides = [1, 1]} : vector<16x128xbf16> to vector<16x64xbf16>
    %c0_24 = arith.constant 0 : index
    %c0_25 = arith.constant 0 : index
    %c0_26 = arith.constant 0 : index
    %44 = vector.load %arg5[%c0_24, %c0_25, %c0_26] : memref<2x64x16xbf16, #tpu.memory_space<vmem>>, vector<1x64x16xbf16>
    %45 = vector.shape_cast %44 : vector<1x64x16xbf16> to vector<64x16xbf16>
    %cst_27 = arith.constant dense<0.000000e+00> : vector<64xf32>
    %46 = vector.multi_reduction <add>, %30, %cst_27 [1] : vector<64x16xf32> to vector<64xf32>
    %47 = vector.shape_cast %46 : vector<64xf32> to vector<64x1xf32>
    %cst_28 = arith.constant 1.600000e+01 : f32
    %48 = vector.broadcast %cst_28 : f32 to vector<64x1xf32>
    %49 = arith.divf %47, %48 : vector<64x1xf32>
    %50 = vector.broadcast %49 : vector<64x1xf32> to vector<64x16xf32>
    %51 = arith.subf %30, %50 : vector<64x16xf32>
    %52 = arith.mulf %51, %51 : vector<64x16xf32>
    %cst_29 = arith.constant dense<0.000000e+00> : vector<64xf32>
    %53 = vector.multi_reduction <add>, %52, %cst_29 [1] : vector<64x16xf32> to vector<64xf32>
    %54 = vector.shape_cast %53 : vector<64xf32> to vector<64x1xf32>
    %cst_30 = arith.constant 1.600000e+01 : f32
    %55 = vector.broadcast %cst_30 : f32 to vector<64x1xf32>
    %56 = arith.divf %54, %55 : vector<64x1xf32>
    %57 = vector.broadcast %49 : vector<64x1xf32> to vector<64x16xf32>
    %58 = arith.subf %30, %57 : vector<64x16xf32>
    %cst_31 = arith.constant 9.99999974E-6 : f32
    %59 = vector.broadcast %cst_31 : f32 to vector<64x1xf32>
    %60 = arith.addf %56, %59 : vector<64x1xf32>
    %61 = math.rsqrt %60 : vector<64x1xf32>
    %62 = vector.broadcast %61 : vector<64x1xf32> to vector<64x16xf32>
    %63 = arith.mulf %58, %62 : vector<64x16xf32>
    %64 = vector.broadcast %31 : vector<1x16xf32> to vector<64x16xf32>
    %65 = arith.mulf %63, %64 : vector<64x16xf32>
    %66 = vector.broadcast %32 : vector<1x16xf32> to vector<64x16xf32>
    %67 = arith.addf %65, %66 : vector<64x16xf32>
    %68 = arith.truncf %67 : vector<64x16xf32> to vector<64x16xbf16>
    %cst_32 = arith.constant dense<0.000000e+00> : vector<64x48xf32>
    %69 = tpu.matmul %68, %41, %cst_32 {dimension_numbers = #tpu.dot_dimension_numbers<[1], [0], [0], [1], [0, 0, 1, 1], [], []>} : vector<64x16xbf16>, vector<16x48xbf16>, vector<64x48xf32> -> vector<64x48xf32>
    %70 = vector.broadcast %33 : vector<1x48xf32> to vector<64x48xf32>
    %71 = arith.addf %69, %70 : vector<64x48xf32>
    %72 = vector.extract_strided_slice %71 {offsets = [0, 0], sizes = [64, 8], strides = [1, 1]} : vector<64x48xf32> to vector<64x8xf32>
    %cst_33 = arith.constant 0.353553385 : f32
    %73 = vector.broadcast %cst_33 : f32 to vector<64x8xf32>
    %74 = arith.mulf %72, %73 : vector<64x8xf32>
    %75 = arith.truncf %74 : vector<64x8xf32> to vector<64x8xbf16>
    %76 = vector.extract_strided_slice %71 {offsets = [0, 16], sizes = [64, 8], strides = [1, 1]} : vector<64x48xf32> to vector<64x8xf32>
    %77 = arith.truncf %76 : vector<64x8xf32> to vector<64x8xbf16>
    %78 = vector.extract_strided_slice %71 {offsets = [0, 32], sizes = [64, 8], strides = [1, 1]} : vector<64x48xf32> to vector<64x8xf32>
    %79 = arith.truncf %78 : vector<64x8xf32> to vector<64x8xbf16>
    %cst_34 = arith.constant dense<0.000000e+00> : vector<64x64xf32>
    %80 = tpu.matmul %75, %77, %cst_34 {dimension_numbers = #tpu.dot_dimension_numbers<[1], [1], [0], [0], [0, 0, 1, 0], [], []>} : vector<64x8xbf16>, vector<64x8xbf16>, vector<64x64xf32> -> vector<64x64xf32>
    %c0_35 = arith.constant 0 : index
    %c0_36 = arith.constant 0 : index
    %c0_37 = arith.constant 0 : index
    %c0_38 = arith.constant 0 : index
    %81 = vector.load %arg6[%c0_35, %c0_36, %c0_37, %c0_38] : memref<2x2x64x64xf32, #tpu.memory_space<vmem>>, vector<1x1x64x64xf32>
    %82 = vector.shape_cast %81 : vector<1x1x64x64xf32> to vector<64x64xf32>
    %83 = arith.addf %80, %82 : vector<64x64xf32>
    %cst_39 = arith.constant dense<0xFF800000> : vector<64xf32>
    %84 = vector.multi_reduction <maximumf>, %83, %cst_39 [1] : vector<64x64xf32> to vector<64xf32>
    %85 = vector.shape_cast %84 : vector<64xf32> to vector<64x1xf32>
    %86 = vector.broadcast %85 : vector<64x1xf32> to vector<64x64xf32>
    %87 = arith.subf %83, %86 : vector<64x64xf32>
    %88 = math.exp %87 : vector<64x64xf32>
    %cst_40 = arith.constant dense<0.000000e+00> : vector<64xf32>
    %89 = vector.multi_reduction <add>, %88, %cst_40 [1] : vector<64x64xf32> to vector<64xf32>
    %90 = vector.shape_cast %89 : vector<64xf32> to vector<64x1xf32>
    %91 = tpu.reciprocal %90 {approx = true} : vector<64x1xf32> -> vector<64x1xf32>
    %92 = vector.broadcast %91 : vector<64x1xf32> to vector<64x64xf32>
    %93 = arith.mulf %88, %92 : vector<64x64xf32>
    %94 = arith.truncf %93 : vector<64x64xf32> to vector<64x64xbf16>
    %cst_41 = arith.constant dense<0.000000e+00> : vector<64x8xf32>
    %95 = tpu.matmul %94, %79, %cst_41 {dimension_numbers = #tpu.dot_dimension_numbers<[1], [0], [0], [1], [0, 0, 1, 1], [], []>} : vector<64x64xbf16>, vector<64x8xbf16>, vector<64x8xf32> -> vector<64x8xf32>
    %96 = vector.extract_strided_slice %71 {offsets = [0, 8], sizes = [64, 8], strides = [1, 1]} : vector<64x48xf32> to vector<64x8xf32>
    %cst_42 = arith.constant 0.353553385 : f32
    %97 = vector.broadcast %cst_42 : f32 to vector<64x8xf32>
    %98 = arith.mulf %96, %97 : vector<64x8xf32>
    %99 = arith.truncf %98 : vector<64x8xf32> to vector<64x8xbf16>
    %100 = vector.extract_strided_slice %71 {offsets = [0, 24], sizes = [64, 8], strides = [1, 1]} : vector<64x48xf32> to vector<64x8xf32>
    %101 = arith.truncf %100 : vector<64x8xf32> to vector<64x8xbf16>
    %102 = vector.extract_strided_slice %71 {offsets = [0, 40], sizes = [64, 8], strides = [1, 1]} : vector<64x48xf32> to vector<64x8xf32>
    %103 = arith.truncf %102 : vector<64x8xf32> to vector<64x8xbf16>
    %cst_43 = arith.constant dense<0.000000e+00> : vector<64x64xf32>
    %104 = tpu.matmul %99, %101, %cst_43 {dimension_numbers = #tpu.dot_dimension_numbers<[1], [1], [0], [0], [0, 0, 1, 0], [], []>} : vector<64x8xbf16>, vector<64x8xbf16>, vector<64x64xf32> -> vector<64x64xf32>
    %c0_44 = arith.constant 0 : index
    %c1_45 = arith.constant 1 : index
    %c0_46 = arith.constant 0 : index
    %c0_47 = arith.constant 0 : index
    %105 = vector.load %arg6[%c0_44, %c1_45, %c0_46, %c0_47] : memref<2x2x64x64xf32, #tpu.memory_space<vmem>>, vector<1x1x64x64xf32>
    %106 = vector.shape_cast %105 : vector<1x1x64x64xf32> to vector<64x64xf32>
    %107 = arith.addf %104, %106 : vector<64x64xf32>
    %cst_48 = arith.constant dense<0xFF800000> : vector<64xf32>
    %108 = vector.multi_reduction <maximumf>, %107, %cst_48 [1] : vector<64x64xf32> to vector<64xf32>
    %109 = vector.shape_cast %108 : vector<64xf32> to vector<64x1xf32>
    %110 = vector.broadcast %109 : vector<64x1xf32> to vector<64x64xf32>
    %111 = arith.subf %107, %110 : vector<64x64xf32>
    %112 = math.exp %111 : vector<64x64xf32>
    %cst_49 = arith.constant dense<0.000000e+00> : vector<64xf32>
    %113 = vector.multi_reduction <add>, %112, %cst_49 [1] : vector<64x64xf32> to vector<64xf32>
    %114 = vector.shape_cast %113 : vector<64xf32> to vector<64x1xf32>
    %115 = tpu.reciprocal %114 {approx = true} : vector<64x1xf32> -> vector<64x1xf32>
    %116 = vector.broadcast %115 : vector<64x1xf32> to vector<64x64xf32>
    %117 = arith.mulf %112, %116 : vector<64x64xf32>
    %118 = arith.truncf %117 : vector<64x64xf32> to vector<64x64xbf16>
    %cst_50 = arith.constant dense<0.000000e+00> : vector<64x8xf32>
    %119 = tpu.matmul %118, %103, %cst_50 {dimension_numbers = #tpu.dot_dimension_numbers<[1], [0], [0], [1], [0, 0, 1, 1], [], []>} : vector<64x64xbf16>, vector<64x8xbf16>, vector<64x8xf32> -> vector<64x8xf32>
    %120 = tpu.concatenate %95, %119 in 1 : vector<64x8xf32>, vector<64x8xf32> -> vector<64x16xf32>
    %121 = arith.truncf %120 : vector<64x16xf32> to vector<64x16xbf16>
    %cst_51 = arith.constant dense<0.000000e+00> : vector<64x16xf32>
    %122 = tpu.matmul %121, %42, %cst_51 {dimension_numbers = #tpu.dot_dimension_numbers<[1], [0], [0], [1], [0, 0, 1, 1], [], []>} : vector<64x16xbf16>, vector<16x16xbf16>, vector<64x16xf32> -> vector<64x16xf32>
    %123 = arith.addf %30, %122 : vector<64x16xf32>
    %124 = vector.broadcast %34 : vector<1x16xf32> to vector<64x16xf32>
    %125 = arith.addf %123, %124 : vector<64x16xf32>
    %cst_52 = arith.constant dense<0.000000e+00> : vector<64xf32>
    %126 = vector.multi_reduction <add>, %125, %cst_52 [1] : vector<64x16xf32> to vector<64xf32>
    %127 = vector.shape_cast %126 : vector<64xf32> to vector<64x1xf32>
    %cst_53 = arith.constant 1.600000e+01 : f32
    %128 = vector.broadcast %cst_53 : f32 to vector<64x1xf32>
    %129 = arith.divf %127, %128 : vector<64x1xf32>
    %130 = vector.broadcast %129 : vector<64x1xf32> to vector<64x16xf32>
    %131 = arith.subf %125, %130 : vector<64x16xf32>
    %132 = arith.mulf %131, %131 : vector<64x16xf32>
    %cst_54 = arith.constant dense<0.000000e+00> : vector<64xf32>
    %133 = vector.multi_reduction <add>, %132, %cst_54 [1] : vector<64x16xf32> to vector<64xf32>
    %134 = vector.shape_cast %133 : vector<64xf32> to vector<64x1xf32>
    %cst_55 = arith.constant 1.600000e+01 : f32
    %135 = vector.broadcast %cst_55 : f32 to vector<64x1xf32>
    %136 = arith.divf %134, %135 : vector<64x1xf32>
    %137 = vector.broadcast %129 : vector<64x1xf32> to vector<64x16xf32>
    %138 = arith.subf %125, %137 : vector<64x16xf32>
    %cst_56 = arith.constant 9.99999974E-6 : f32
    %139 = vector.broadcast %cst_56 : f32 to vector<64x1xf32>
    %140 = arith.addf %136, %139 : vector<64x1xf32>
    %141 = math.rsqrt %140 : vector<64x1xf32>
    %142 = vector.broadcast %141 : vector<64x1xf32> to vector<64x16xf32>
    %143 = arith.mulf %138, %142 : vector<64x16xf32>
    %144 = vector.broadcast %35 : vector<1x16xf32> to vector<64x16xf32>
    %145 = arith.mulf %143, %144 : vector<64x16xf32>
    %146 = vector.broadcast %36 : vector<1x16xf32> to vector<64x16xf32>
    %147 = arith.addf %145, %146 : vector<64x16xf32>
    %148 = arith.truncf %147 : vector<64x16xf32> to vector<64x16xbf16>
    %cst_57 = arith.constant dense<0.000000e+00> : vector<64x64xf32>
    %149 = tpu.matmul %148, %43, %cst_57 {dimension_numbers = #tpu.dot_dimension_numbers<[1], [0], [0], [1], [0, 0, 1, 1], [], []>} : vector<64x16xbf16>, vector<16x64xbf16>, vector<64x64xf32> -> vector<64x64xf32>
    %150 = vector.broadcast %37 : vector<1x64xf32> to vector<64x64xf32>
    %151 = arith.addf %149, %150 : vector<64x64xf32>
    %cst_58 = arith.constant 5.000000e-01 : f32
    %152 = vector.broadcast %cst_58 : f32 to vector<64x64xf32>
    %153 = arith.mulf %152, %151 : vector<64x64xf32>
    %cst_59 = arith.constant 4.471500e-02 : f32
    %154 = vector.broadcast %cst_59 : f32 to vector<64x64xf32>
    %155 = arith.mulf %154, %151 : vector<64x64xf32>
    %156 = arith.mulf %155, %151 : vector<64x64xf32>
    %157 = arith.mulf %156, %151 : vector<64x64xf32>
    %158 = arith.addf %151, %157 : vector<64x64xf32>
    %cst_60 = arith.constant 0.797884583 : f32
    %159 = vector.broadcast %cst_60 : f32 to vector<64x64xf32>
    %160 = arith.mulf %159, %158 : vector<64x64xf32>
    %161 = math.tanh %160 : vector<64x64xf32>
    %cst_61 = arith.constant 1.000000e+00 : f32
    %162 = vector.broadcast %cst_61 : f32 to vector<64x64xf32>
    %163 = arith.addf %162, %161 : vector<64x64xf32>
    %164 = arith.mulf %153, %163 : vector<64x64xf32>
    %165 = arith.truncf %164 : vector<64x64xf32> to vector<64x64xbf16>
    %cst_62 = arith.constant dense<0.000000e+00> : vector<64x16xf32>
    %166 = tpu.matmul %165, %45, %cst_62 {dimension_numbers = #tpu.dot_dimension_numbers<[1], [0], [0], [1], [0, 0, 1, 1], [], []>} : vector<64x64xbf16>, vector<64x16xbf16>, vector<64x16xf32> -> vector<64x16xf32>
    %167 = vector.broadcast %38 : vector<1x16xf32> to vector<64x16xf32>
    %168 = arith.addf %166, %167 : vector<64x16xf32>
    %169 = arith.addf %125, %168 : vector<64x16xf32>
    %c11 = arith.constant 11 : index
    %c0_63 = arith.constant 0 : index
    %170 = vector.load %arg2[%c11, %c0_63] : memref<40x128xf32, #tpu.memory_space<vmem>>, vector<1x16xf32>
    %c12 = arith.constant 12 : index
    %c0_64 = arith.constant 0 : index
    %171 = vector.load %arg2[%c12, %c0_64] : memref<40x128xf32, #tpu.memory_space<vmem>>, vector<1x16xf32>
    %c13 = arith.constant 13 : index
    %c0_65 = arith.constant 0 : index
    %172 = vector.load %arg2[%c13, %c0_65] : memref<40x128xf32, #tpu.memory_space<vmem>>, vector<1x48xf32>
    %c14 = arith.constant 14 : index
    %c0_66 = arith.constant 0 : index
    %173 = vector.load %arg2[%c14, %c0_66] : memref<40x128xf32, #tpu.memory_space<vmem>>, vector<1x16xf32>
    %c15 = arith.constant 15 : index
    %c0_67 = arith.constant 0 : index
    %174 = vector.load %arg2[%c15, %c0_67] : memref<40x128xf32, #tpu.memory_space<vmem>>, vector<1x16xf32>
    %c16 = arith.constant 16 : index
    %c0_68 = arith.constant 0 : index
    %175 = vector.load %arg2[%c16, %c0_68] : memref<40x128xf32, #tpu.memory_space<vmem>>, vector<1x16xf32>
    %c17 = arith.constant 17 : index
    %c0_69 = arith.constant 0 : index
    %176 = vector.load %arg2[%c17, %c0_69] : memref<40x128xf32, #tpu.memory_space<vmem>>, vector<1x64xf32>
    %c18 = arith.constant 18 : index
    %c0_70 = arith.constant 0 : index
    %177 = vector.load %arg2[%c18, %c0_70] : memref<40x128xf32, #tpu.memory_space<vmem>>, vector<1x16xf32>
    %c1_71 = arith.constant 1 : index
    %c0_72 = arith.constant 0 : index
    %c0_73 = arith.constant 0 : index
    %178 = vector.load %arg4[%c1_71, %c0_72, %c0_73] : memref<2x16x128xbf16, #tpu.memory_space<vmem>>, vector<1x16x128xbf16>
    %179 = vector.shape_cast %178 : vector<1x16x128xbf16> to vector<16x128xbf16>
    %180 = vector.extract_strided_slice %179 {offsets = [0, 0], sizes = [16, 48], strides = [1, 1]} : vector<16x128xbf16> to vector<16x48xbf16>
    %181 = vector.extract_strided_slice %179 {offsets = [0, 48], sizes = [16, 16], strides = [1, 1]} : vector<16x128xbf16> to vector<16x16xbf16>
    %182 = vector.extract_strided_slice %179 {offsets = [0, 64], sizes = [16, 64], strides = [1, 1]} : vector<16x128xbf16> to vector<16x64xbf16>
    %c1_74 = arith.constant 1 : index
    %c0_75 = arith.constant 0 : index
    %c0_76 = arith.constant 0 : index
    %183 = vector.load %arg5[%c1_74, %c0_75, %c0_76] : memref<2x64x16xbf16, #tpu.memory_space<vmem>>, vector<1x64x16xbf16>
    %184 = vector.shape_cast %183 : vector<1x64x16xbf16> to vector<64x16xbf16>
    %cst_77 = arith.constant dense<0.000000e+00> : vector<64xf32>
    %185 = vector.multi_reduction <add>, %169, %cst_77 [1] : vector<64x16xf32> to vector<64xf32>
    %186 = vector.shape_cast %185 : vector<64xf32> to vector<64x1xf32>
    %cst_78 = arith.constant 1.600000e+01 : f32
    %187 = vector.broadcast %cst_78 : f32 to vector<64x1xf32>
    %188 = arith.divf %186, %187 : vector<64x1xf32>
    %189 = vector.broadcast %188 : vector<64x1xf32> to vector<64x16xf32>
    %190 = arith.subf %169, %189 : vector<64x16xf32>
    %191 = arith.mulf %190, %190 : vector<64x16xf32>
    %cst_79 = arith.constant dense<0.000000e+00> : vector<64xf32>
    %192 = vector.multi_reduction <add>, %191, %cst_79 [1] : vector<64x16xf32> to vector<64xf32>
    %193 = vector.shape_cast %192 : vector<64xf32> to vector<64x1xf32>
    %cst_80 = arith.constant 1.600000e+01 : f32
    %194 = vector.broadcast %cst_80 : f32 to vector<64x1xf32>
    %195 = arith.divf %193, %194 : vector<64x1xf32>
    %196 = vector.broadcast %188 : vector<64x1xf32> to vector<64x16xf32>
    %197 = arith.subf %169, %196 : vector<64x16xf32>
    %cst_81 = arith.constant 9.99999974E-6 : f32
    %198 = vector.broadcast %cst_81 : f32 to vector<64x1xf32>
    %199 = arith.addf %195, %198 : vector<64x1xf32>
    %200 = math.rsqrt %199 : vector<64x1xf32>
    %201 = vector.broadcast %200 : vector<64x1xf32> to vector<64x16xf32>
    %202 = arith.mulf %197, %201 : vector<64x16xf32>
    %203 = vector.broadcast %170 : vector<1x16xf32> to vector<64x16xf32>
    %204 = arith.mulf %202, %203 : vector<64x16xf32>
    %205 = vector.broadcast %171 : vector<1x16xf32> to vector<64x16xf32>
    %206 = arith.addf %204, %205 : vector<64x16xf32>
    %207 = arith.truncf %206 : vector<64x16xf32> to vector<64x16xbf16>
    %cst_82 = arith.constant dense<0.000000e+00> : vector<64x48xf32>
    %208 = tpu.matmul %207, %180, %cst_82 {dimension_numbers = #tpu.dot_dimension_numbers<[1], [0], [0], [1], [0, 0, 1, 1], [], []>} : vector<64x16xbf16>, vector<16x48xbf16>, vector<64x48xf32> -> vector<64x48xf32>
    %209 = vector.broadcast %172 : vector<1x48xf32> to vector<64x48xf32>
    %210 = arith.addf %208, %209 : vector<64x48xf32>
    %211 = vector.extract_strided_slice %210 {offsets = [0, 0], sizes = [64, 8], strides = [1, 1]} : vector<64x48xf32> to vector<64x8xf32>
    %cst_83 = arith.constant 0.353553385 : f32
    %212 = vector.broadcast %cst_83 : f32 to vector<64x8xf32>
    %213 = arith.mulf %211, %212 : vector<64x8xf32>
    %214 = arith.truncf %213 : vector<64x8xf32> to vector<64x8xbf16>
    %215 = vector.extract_strided_slice %210 {offsets = [0, 16], sizes = [64, 8], strides = [1, 1]} : vector<64x48xf32> to vector<64x8xf32>
    %216 = arith.truncf %215 : vector<64x8xf32> to vector<64x8xbf16>
    %217 = vector.extract_strided_slice %210 {offsets = [0, 32], sizes = [64, 8], strides = [1, 1]} : vector<64x48xf32> to vector<64x8xf32>
    %218 = arith.truncf %217 : vector<64x8xf32> to vector<64x8xbf16>
    %cst_84 = arith.constant dense<0.000000e+00> : vector<64x64xf32>
    %219 = tpu.matmul %214, %216, %cst_84 {dimension_numbers = #tpu.dot_dimension_numbers<[1], [1], [0], [0], [0, 0, 1, 0], [], []>} : vector<64x8xbf16>, vector<64x8xbf16>, vector<64x64xf32> -> vector<64x64xf32>
    %c1_85 = arith.constant 1 : index
    %c0_86 = arith.constant 0 : index
    %c0_87 = arith.constant 0 : index
    %c0_88 = arith.constant 0 : index
    %220 = vector.load %arg6[%c1_85, %c0_86, %c0_87, %c0_88] : memref<2x2x64x64xf32, #tpu.memory_space<vmem>>, vector<1x1x64x64xf32>
    %221 = vector.shape_cast %220 : vector<1x1x64x64xf32> to vector<64x64xf32>
    %222 = arith.addf %219, %221 : vector<64x64xf32>
    %cst_89 = arith.constant dense<0xFF800000> : vector<64xf32>
    %223 = vector.multi_reduction <maximumf>, %222, %cst_89 [1] : vector<64x64xf32> to vector<64xf32>
    %224 = vector.shape_cast %223 : vector<64xf32> to vector<64x1xf32>
    %225 = vector.broadcast %224 : vector<64x1xf32> to vector<64x64xf32>
    %226 = arith.subf %222, %225 : vector<64x64xf32>
    %227 = math.exp %226 : vector<64x64xf32>
    %cst_90 = arith.constant dense<0.000000e+00> : vector<64xf32>
    %228 = vector.multi_reduction <add>, %227, %cst_90 [1] : vector<64x64xf32> to vector<64xf32>
    %229 = vector.shape_cast %228 : vector<64xf32> to vector<64x1xf32>
    %230 = tpu.reciprocal %229 {approx = true} : vector<64x1xf32> -> vector<64x1xf32>
    %231 = vector.broadcast %230 : vector<64x1xf32> to vector<64x64xf32>
    %232 = arith.mulf %227, %231 : vector<64x64xf32>
    %233 = arith.truncf %232 : vector<64x64xf32> to vector<64x64xbf16>
    %cst_91 = arith.constant dense<0.000000e+00> : vector<64x8xf32>
    %234 = tpu.matmul %233, %218, %cst_91 {dimension_numbers = #tpu.dot_dimension_numbers<[1], [0], [0], [1], [0, 0, 1, 1], [], []>} : vector<64x64xbf16>, vector<64x8xbf16>, vector<64x8xf32> -> vector<64x8xf32>
    %235 = vector.extract_strided_slice %210 {offsets = [0, 8], sizes = [64, 8], strides = [1, 1]} : vector<64x48xf32> to vector<64x8xf32>
    %cst_92 = arith.constant 0.353553385 : f32
    %236 = vector.broadcast %cst_92 : f32 to vector<64x8xf32>
    %237 = arith.mulf %235, %236 : vector<64x8xf32>
    %238 = arith.truncf %237 : vector<64x8xf32> to vector<64x8xbf16>
    %239 = vector.extract_strided_slice %210 {offsets = [0, 24], sizes = [64, 8], strides = [1, 1]} : vector<64x48xf32> to vector<64x8xf32>
    %240 = arith.truncf %239 : vector<64x8xf32> to vector<64x8xbf16>
    %241 = vector.extract_strided_slice %210 {offsets = [0, 40], sizes = [64, 8], strides = [1, 1]} : vector<64x48xf32> to vector<64x8xf32>
    %242 = arith.truncf %241 : vector<64x8xf32> to vector<64x8xbf16>
    %cst_93 = arith.constant dense<0.000000e+00> : vector<64x64xf32>
    %243 = tpu.matmul %238, %240, %cst_93 {dimension_numbers = #tpu.dot_dimension_numbers<[1], [1], [0], [0], [0, 0, 1, 0], [], []>} : vector<64x8xbf16>, vector<64x8xbf16>, vector<64x64xf32> -> vector<64x64xf32>
    %c1_94 = arith.constant 1 : index
    %c1_95 = arith.constant 1 : index
    %c0_96 = arith.constant 0 : index
    %c0_97 = arith.constant 0 : index
    %244 = vector.load %arg6[%c1_94, %c1_95, %c0_96, %c0_97] : memref<2x2x64x64xf32, #tpu.memory_space<vmem>>, vector<1x1x64x64xf32>
    %245 = vector.shape_cast %244 : vector<1x1x64x64xf32> to vector<64x64xf32>
    %246 = arith.addf %243, %245 : vector<64x64xf32>
    %cst_98 = arith.constant dense<0xFF800000> : vector<64xf32>
    %247 = vector.multi_reduction <maximumf>, %246, %cst_98 [1] : vector<64x64xf32> to vector<64xf32>
    %248 = vector.shape_cast %247 : vector<64xf32> to vector<64x1xf32>
    %249 = vector.broadcast %248 : vector<64x1xf32> to vector<64x64xf32>
    %250 = arith.subf %246, %249 : vector<64x64xf32>
    %251 = math.exp %250 : vector<64x64xf32>
    %cst_99 = arith.constant dense<0.000000e+00> : vector<64xf32>
    %252 = vector.multi_reduction <add>, %251, %cst_99 [1] : vector<64x64xf32> to vector<64xf32>
    %253 = vector.shape_cast %252 : vector<64xf32> to vector<64x1xf32>
    %254 = tpu.reciprocal %253 {approx = true} : vector<64x1xf32> -> vector<64x1xf32>
    %255 = vector.broadcast %254 : vector<64x1xf32> to vector<64x64xf32>
    %256 = arith.mulf %251, %255 : vector<64x64xf32>
    %257 = arith.truncf %256 : vector<64x64xf32> to vector<64x64xbf16>
    %cst_100 = arith.constant dense<0.000000e+00> : vector<64x8xf32>
    %258 = tpu.matmul %257, %242, %cst_100 {dimension_numbers = #tpu.dot_dimension_numbers<[1], [0], [0], [1], [0, 0, 1, 1], [], []>} : vector<64x64xbf16>, vector<64x8xbf16>, vector<64x8xf32> -> vector<64x8xf32>
    %259 = tpu.concatenate %234, %258 in 1 : vector<64x8xf32>, vector<64x8xf32> -> vector<64x16xf32>
    %260 = arith.truncf %259 : vector<64x16xf32> to vector<64x16xbf16>
    %cst_101 = arith.constant dense<0.000000e+00> : vector<64x16xf32>
    %261 = tpu.matmul %260, %181, %cst_101 {dimension_numbers = #tpu.dot_dimension_numbers<[1], [0], [0], [1], [0, 0, 1, 1], [], []>} : vector<64x16xbf16>, vector<16x16xbf16>, vector<64x16xf32> -> vector<64x16xf32>
    %262 = arith.addf %169, %261 : vector<64x16xf32>
    %263 = vector.broadcast %173 : vector<1x16xf32> to vector<64x16xf32>
    %264 = arith.addf %262, %263 : vector<64x16xf32>
    %cst_102 = arith.constant dense<0.000000e+00> : vector<64xf32>
    %265 = vector.multi_reduction <add>, %264, %cst_102 [1] : vector<64x16xf32> to vector<64xf32>
    %266 = vector.shape_cast %265 : vector<64xf32> to vector<64x1xf32>
    %cst_103 = arith.constant 1.600000e+01 : f32
    %267 = vector.broadcast %cst_103 : f32 to vector<64x1xf32>
    %268 = arith.divf %266, %267 : vector<64x1xf32>
    %269 = vector.broadcast %268 : vector<64x1xf32> to vector<64x16xf32>
    %270 = arith.subf %264, %269 : vector<64x16xf32>
    %271 = arith.mulf %270, %270 : vector<64x16xf32>
    %cst_104 = arith.constant dense<0.000000e+00> : vector<64xf32>
    %272 = vector.multi_reduction <add>, %271, %cst_104 [1] : vector<64x16xf32> to vector<64xf32>
    %273 = vector.shape_cast %272 : vector<64xf32> to vector<64x1xf32>
    %cst_105 = arith.constant 1.600000e+01 : f32
    %274 = vector.broadcast %cst_105 : f32 to vector<64x1xf32>
    %275 = arith.divf %273, %274 : vector<64x1xf32>
    %276 = vector.broadcast %268 : vector<64x1xf32> to vector<64x16xf32>
    %277 = arith.subf %264, %276 : vector<64x16xf32>
    %cst_106 = arith.constant 9.99999974E-6 : f32
    %278 = vector.broadcast %cst_106 : f32 to vector<64x1xf32>
    %279 = arith.addf %275, %278 : vector<64x1xf32>
    %280 = math.rsqrt %279 : vector<64x1xf32>
    %281 = vector.broadcast %280 : vector<64x1xf32> to vector<64x16xf32>
    %282 = arith.mulf %277, %281 : vector<64x16xf32>
    %283 = vector.broadcast %174 : vector<1x16xf32> to vector<64x16xf32>
    %284 = arith.mulf %282, %283 : vector<64x16xf32>
    %285 = vector.broadcast %175 : vector<1x16xf32> to vector<64x16xf32>
    %286 = arith.addf %284, %285 : vector<64x16xf32>
    %287 = arith.truncf %286 : vector<64x16xf32> to vector<64x16xbf16>
    %cst_107 = arith.constant dense<0.000000e+00> : vector<64x64xf32>
    %288 = tpu.matmul %287, %182, %cst_107 {dimension_numbers = #tpu.dot_dimension_numbers<[1], [0], [0], [1], [0, 0, 1, 1], [], []>} : vector<64x16xbf16>, vector<16x64xbf16>, vector<64x64xf32> -> vector<64x64xf32>
    %289 = vector.broadcast %176 : vector<1x64xf32> to vector<64x64xf32>
    %290 = arith.addf %288, %289 : vector<64x64xf32>
    %cst_108 = arith.constant 5.000000e-01 : f32
    %291 = vector.broadcast %cst_108 : f32 to vector<64x64xf32>
    %292 = arith.mulf %291, %290 : vector<64x64xf32>
    %cst_109 = arith.constant 4.471500e-02 : f32
    %293 = vector.broadcast %cst_109 : f32 to vector<64x64xf32>
    %294 = arith.mulf %293, %290 : vector<64x64xf32>
    %295 = arith.mulf %294, %290 : vector<64x64xf32>
    %296 = arith.mulf %295, %290 : vector<64x64xf32>
    %297 = arith.addf %290, %296 : vector<64x64xf32>
    %cst_110 = arith.constant 0.797884583 : f32
    %298 = vector.broadcast %cst_110 : f32 to vector<64x64xf32>
    %299 = arith.mulf %298, %297 : vector<64x64xf32>
    %300 = math.tanh %299 : vector<64x64xf32>
    %cst_111 = arith.constant 1.000000e+00 : f32
    %301 = vector.broadcast %cst_111 : f32 to vector<64x64xf32>
    %302 = arith.addf %301, %300 : vector<64x64xf32>
    %303 = arith.mulf %292, %302 : vector<64x64xf32>
    %304 = arith.truncf %303 : vector<64x64xf32> to vector<64x64xbf16>
    %cst_112 = arith.constant dense<0.000000e+00> : vector<64x16xf32>
    %305 = tpu.matmul %304, %184, %cst_112 {dimension_numbers = #tpu.dot_dimension_numbers<[1], [0], [0], [1], [0, 0, 1, 1], [], []>} : vector<64x64xbf16>, vector<64x16xbf16>, vector<64x16xf32> -> vector<64x16xf32>
    %306 = vector.broadcast %177 : vector<1x16xf32> to vector<64x16xf32>
    %307 = arith.addf %305, %306 : vector<64x16xf32>
    %308 = arith.addf %264, %307 : vector<64x16xf32>
    %309 = arith.truncf %308 : vector<64x16xf32> to vector<64x16xbf16>
    %c0_113 = arith.constant 0 : index
    %c0_114 = arith.constant 0 : index
    %c0_115 = arith.constant 0 : index
    %310 = vector.load %arg7[%c0_113, %c0_114, %c0_115] : memref<4x16x64xbf16, #tpu.memory_space<vmem>>, vector<1x16x64xbf16>
    %311 = vector.shape_cast %310 : vector<1x16x64xbf16> to vector<16x64xbf16>
    %cst_116 = arith.constant dense<0.000000e+00> : vector<16x16xf32>
    %312 = tpu.matmul %311, %309, %cst_116 {dimension_numbers = #tpu.dot_dimension_numbers<[1], [0], [0], [1], [0, 0, 1, 1], [], []>} : vector<16x64xbf16>, vector<64x16xbf16>, vector<16x16xf32> -> vector<16x16xf32>
    %c1_117 = arith.constant 1 : index
    %c0_118 = arith.constant 0 : index
    %c0_119 = arith.constant 0 : index
    %313 = vector.load %arg7[%c1_117, %c0_118, %c0_119] : memref<4x16x64xbf16, #tpu.memory_space<vmem>>, vector<1x16x64xbf16>
    %314 = vector.shape_cast %313 : vector<1x16x64xbf16> to vector<16x64xbf16>
    %cst_120 = arith.constant dense<0.000000e+00> : vector<16x16xf32>
    %315 = tpu.matmul %314, %309, %cst_120 {dimension_numbers = #tpu.dot_dimension_numbers<[1], [0], [0], [1], [0, 0, 1, 1], [], []>} : vector<16x64xbf16>, vector<64x16xbf16>, vector<16x16xf32> -> vector<16x16xf32>
    %c2_121 = arith.constant 2 : index
    %c0_122 = arith.constant 0 : index
    %c0_123 = arith.constant 0 : index
    %316 = vector.load %arg7[%c2_121, %c0_122, %c0_123] : memref<4x16x64xbf16, #tpu.memory_space<vmem>>, vector<1x16x64xbf16>
    %317 = vector.shape_cast %316 : vector<1x16x64xbf16> to vector<16x64xbf16>
    %cst_124 = arith.constant dense<0.000000e+00> : vector<16x16xf32>
    %318 = tpu.matmul %317, %309, %cst_124 {dimension_numbers = #tpu.dot_dimension_numbers<[1], [0], [0], [1], [0, 0, 1, 1], [], []>} : vector<16x64xbf16>, vector<64x16xbf16>, vector<16x16xf32> -> vector<16x16xf32>
    %c3_125 = arith.constant 3 : index
    %c0_126 = arith.constant 0 : index
    %c0_127 = arith.constant 0 : index
    %319 = vector.load %arg7[%c3_125, %c0_126, %c0_127] : memref<4x16x64xbf16, #tpu.memory_space<vmem>>, vector<1x16x64xbf16>
    %320 = vector.shape_cast %319 : vector<1x16x64xbf16> to vector<16x64xbf16>
    %cst_128 = arith.constant dense<0.000000e+00> : vector<16x16xf32>
    %321 = tpu.matmul %320, %309, %cst_128 {dimension_numbers = #tpu.dot_dimension_numbers<[1], [0], [0], [1], [0, 0, 1, 1], [], []>} : vector<16x64xbf16>, vector<64x16xbf16>, vector<16x16xf32> -> vector<16x16xf32>
    %322 = tpu.concatenate %312, %315, %318, %321 in 1 : vector<16x16xf32>, vector<16x16xf32>, vector<16x16xf32>, vector<16x16xf32> -> vector<16x64xf32>
    %c19 = arith.constant 19 : index
    %c0_129 = arith.constant 0 : index
    %323 = vector.load %arg2[%c19, %c0_129] : memref<40x128xf32, #tpu.memory_space<vmem>>, vector<1x64xf32>
    %c20 = arith.constant 20 : index
    %c0_130 = arith.constant 0 : index
    %324 = vector.load %arg2[%c20, %c0_130] : memref<40x128xf32, #tpu.memory_space<vmem>>, vector<1x64xf32>
    %cst_131 = arith.constant dense<0.000000e+00> : vector<16xf32>
    %325 = vector.multi_reduction <add>, %322, %cst_131 [1] : vector<16x64xf32> to vector<16xf32>
    %326 = vector.shape_cast %325 : vector<16xf32> to vector<16x1xf32>
    %cst_132 = arith.constant 6.400000e+01 : f32
    %327 = vector.broadcast %cst_132 : f32 to vector<16x1xf32>
    %328 = arith.divf %326, %327 : vector<16x1xf32>
    %329 = vector.broadcast %328 : vector<16x1xf32> to vector<16x64xf32>
    %330 = arith.subf %322, %329 : vector<16x64xf32>
    %331 = arith.mulf %330, %330 : vector<16x64xf32>
    %cst_133 = arith.constant dense<0.000000e+00> : vector<16xf32>
    %332 = vector.multi_reduction <add>, %331, %cst_133 [1] : vector<16x64xf32> to vector<16xf32>
    %333 = vector.shape_cast %332 : vector<16xf32> to vector<16x1xf32>
    %cst_134 = arith.constant 6.400000e+01 : f32
    %334 = vector.broadcast %cst_134 : f32 to vector<16x1xf32>
    %335 = arith.divf %333, %334 : vector<16x1xf32>
    %336 = vector.broadcast %328 : vector<16x1xf32> to vector<16x64xf32>
    %337 = arith.subf %322, %336 : vector<16x64xf32>
    %cst_135 = arith.constant 9.99999974E-6 : f32
    %338 = vector.broadcast %cst_135 : f32 to vector<16x1xf32>
    %339 = arith.addf %335, %338 : vector<16x1xf32>
    %340 = math.rsqrt %339 : vector<16x1xf32>
    %341 = vector.broadcast %340 : vector<16x1xf32> to vector<16x64xf32>
    %342 = arith.mulf %337, %341 : vector<16x64xf32>
    %343 = vector.broadcast %323 : vector<1x64xf32> to vector<16x64xf32>
    %344 = arith.mulf %342, %343 : vector<16x64xf32>
    %345 = vector.broadcast %324 : vector<1x64xf32> to vector<16x64xf32>
    %346 = arith.addf %344, %345 : vector<16x64xf32>
    %347 = arith.truncf %346 : vector<16x64xf32> to vector<16x64xbf16>
    %c0_136 = arith.constant 0 : index
    %c0_137 = arith.constant 0 : index
    %348 = vector.load %arg8[%c0_136, %c0_137] : memref<64x32xbf16, #tpu.memory_space<vmem>>, vector<64x32xbf16>
    %cst_138 = arith.constant dense<0.000000e+00> : vector<16x32xf32>
    %349 = tpu.matmul %347, %348, %cst_138 {dimension_numbers = #tpu.dot_dimension_numbers<[1], [0], [0], [1], [0, 0, 1, 1], [], []>} : vector<16x64xbf16>, vector<64x32xbf16>, vector<16x32xf32> -> vector<16x32xf32>
    %c21 = arith.constant 21 : index
    %c0_139 = arith.constant 0 : index
    %350 = vector.load %arg2[%c21, %c0_139] : memref<40x128xf32, #tpu.memory_space<vmem>>, vector<1x32xf32>
    %c22 = arith.constant 22 : index
    %c0_140 = arith.constant 0 : index
    %351 = vector.load %arg2[%c22, %c0_140] : memref<40x128xf32, #tpu.memory_space<vmem>>, vector<1x32xf32>
    %c23 = arith.constant 23 : index
    %c0_141 = arith.constant 0 : index
    %352 = vector.load %arg2[%c23, %c0_141] : memref<40x128xf32, #tpu.memory_space<vmem>>, vector<1x96xf32>
    %c24 = arith.constant 24 : index
    %c0_142 = arith.constant 0 : index
    %353 = vector.load %arg2[%c24, %c0_142] : memref<40x128xf32, #tpu.memory_space<vmem>>, vector<1x32xf32>
    %c25 = arith.constant 25 : index
    %c0_143 = arith.constant 0 : index
    %354 = vector.load %arg2[%c25, %c0_143] : memref<40x128xf32, #tpu.memory_space<vmem>>, vector<1x32xf32>
    %c26 = arith.constant 26 : index
    %c0_144 = arith.constant 0 : index
    %355 = vector.load %arg2[%c26, %c0_144] : memref<40x128xf32, #tpu.memory_space<vmem>>, vector<1x32xf32>
    %c27 = arith.constant 27 : index
    %c0_145 = arith.constant 0 : index
    %356 = vector.load %arg2[%c27, %c0_145] : memref<40x128xf32, #tpu.memory_space<vmem>>, vector<1x128xf32>
    %c28 = arith.constant 28 : index
    %c0_146 = arith.constant 0 : index
    %357 = vector.load %arg2[%c28, %c0_146] : memref<40x128xf32, #tpu.memory_space<vmem>>, vector<1x32xf32>
    %c0_147 = arith.constant 0 : index
    %c0_148 = arith.constant 0 : index
    %c0_149 = arith.constant 0 : index
    %358 = vector.load %arg9[%c0_147, %c0_148, %c0_149] : memref<2x32x256xbf16, #tpu.memory_space<vmem>>, vector<1x32x256xbf16>
    %359 = vector.shape_cast %358 : vector<1x32x256xbf16> to vector<32x256xbf16>
    %360 = vector.extract_strided_slice %359 {offsets = [0, 0], sizes = [32, 96], strides = [1, 1]} : vector<32x256xbf16> to vector<32x96xbf16>
    %361 = vector.extract_strided_slice %359 {offsets = [0, 96], sizes = [32, 32], strides = [1, 1]} : vector<32x256xbf16> to vector<32x32xbf16>
    %362 = vector.extract_strided_slice %359 {offsets = [0, 128], sizes = [32, 128], strides = [1, 1]} : vector<32x256xbf16> to vector<32x128xbf16>
    %c0_150 = arith.constant 0 : index
    %c0_151 = arith.constant 0 : index
    %c0_152 = arith.constant 0 : index
    %363 = vector.load %arg10[%c0_150, %c0_151, %c0_152] : memref<2x128x32xbf16, #tpu.memory_space<vmem>>, vector<1x128x32xbf16>
    %364 = vector.shape_cast %363 : vector<1x128x32xbf16> to vector<128x32xbf16>
    %cst_153 = arith.constant dense<0.000000e+00> : vector<16xf32>
    %365 = vector.multi_reduction <add>, %349, %cst_153 [1] : vector<16x32xf32> to vector<16xf32>
    %366 = vector.shape_cast %365 : vector<16xf32> to vector<16x1xf32>
    %cst_154 = arith.constant 3.200000e+01 : f32
    %367 = vector.broadcast %cst_154 : f32 to vector<16x1xf32>
    %368 = arith.divf %366, %367 : vector<16x1xf32>
    %369 = vector.broadcast %368 : vector<16x1xf32> to vector<16x32xf32>
    %370 = arith.subf %349, %369 : vector<16x32xf32>
    %371 = arith.mulf %370, %370 : vector<16x32xf32>
    %cst_155 = arith.constant dense<0.000000e+00> : vector<16xf32>
    %372 = vector.multi_reduction <add>, %371, %cst_155 [1] : vector<16x32xf32> to vector<16xf32>
    %373 = vector.shape_cast %372 : vector<16xf32> to vector<16x1xf32>
    %cst_156 = arith.constant 3.200000e+01 : f32
    %374 = vector.broadcast %cst_156 : f32 to vector<16x1xf32>
    %375 = arith.divf %373, %374 : vector<16x1xf32>
    %376 = vector.broadcast %368 : vector<16x1xf32> to vector<16x32xf32>
    %377 = arith.subf %349, %376 : vector<16x32xf32>
    %cst_157 = arith.constant 9.99999974E-6 : f32
    %378 = vector.broadcast %cst_157 : f32 to vector<16x1xf32>
    %379 = arith.addf %375, %378 : vector<16x1xf32>
    %380 = math.rsqrt %379 : vector<16x1xf32>
    %381 = vector.broadcast %380 : vector<16x1xf32> to vector<16x32xf32>
    %382 = arith.mulf %377, %381 : vector<16x32xf32>
    %383 = vector.broadcast %350 : vector<1x32xf32> to vector<16x32xf32>
    %384 = arith.mulf %382, %383 : vector<16x32xf32>
    %385 = vector.broadcast %351 : vector<1x32xf32> to vector<16x32xf32>
    %386 = arith.addf %384, %385 : vector<16x32xf32>
    %387 = arith.truncf %386 : vector<16x32xf32> to vector<16x32xbf16>
    %cst_158 = arith.constant dense<0.000000e+00> : vector<16x96xf32>
    %388 = tpu.matmul %387, %360, %cst_158 {dimension_numbers = #tpu.dot_dimension_numbers<[1], [0], [0], [1], [0, 0, 1, 1], [], []>} : vector<16x32xbf16>, vector<32x96xbf16>, vector<16x96xf32> -> vector<16x96xf32>
    %389 = vector.broadcast %352 : vector<1x96xf32> to vector<16x96xf32>
    %390 = arith.addf %388, %389 : vector<16x96xf32>
    %391 = vector.extract_strided_slice %390 {offsets = [0, 0], sizes = [16, 8], strides = [1, 1]} : vector<16x96xf32> to vector<16x8xf32>
    %cst_159 = arith.constant 0.353553385 : f32
    %392 = vector.broadcast %cst_159 : f32 to vector<16x8xf32>
    %393 = arith.mulf %391, %392 : vector<16x8xf32>
    %394 = arith.truncf %393 : vector<16x8xf32> to vector<16x8xbf16>
    %395 = vector.extract_strided_slice %390 {offsets = [0, 32], sizes = [16, 8], strides = [1, 1]} : vector<16x96xf32> to vector<16x8xf32>
    %396 = arith.truncf %395 : vector<16x8xf32> to vector<16x8xbf16>
    %397 = vector.extract_strided_slice %390 {offsets = [0, 64], sizes = [16, 8], strides = [1, 1]} : vector<16x96xf32> to vector<16x8xf32>
    %398 = arith.truncf %397 : vector<16x8xf32> to vector<16x8xbf16>
    %cst_160 = arith.constant dense<0.000000e+00> : vector<16x16xf32>
    %399 = tpu.matmul %394, %396, %cst_160 {dimension_numbers = #tpu.dot_dimension_numbers<[1], [1], [0], [0], [0, 0, 1, 0], [], []>} : vector<16x8xbf16>, vector<16x8xbf16>, vector<16x16xf32> -> vector<16x16xf32>
    %c0_161 = arith.constant 0 : index
    %c0_162 = arith.constant 0 : index
    %c0_163 = arith.constant 0 : index
    %c0_164 = arith.constant 0 : index
    %400 = vector.load %arg11[%c0_161, %c0_162, %c0_163, %c0_164] : memref<2x4x16x16xf32, #tpu.memory_space<vmem>>, vector<1x1x16x16xf32>
    %401 = vector.shape_cast %400 : vector<1x1x16x16xf32> to vector<16x16xf32>
    %402 = arith.addf %399, %401 : vector<16x16xf32>
    %cst_165 = arith.constant dense<0xFF800000> : vector<16xf32>
    %403 = vector.multi_reduction <maximumf>, %402, %cst_165 [1] : vector<16x16xf32> to vector<16xf32>
    %404 = vector.shape_cast %403 : vector<16xf32> to vector<16x1xf32>
    %405 = vector.broadcast %404 : vector<16x1xf32> to vector<16x16xf32>
    %406 = arith.subf %402, %405 : vector<16x16xf32>
    %407 = math.exp %406 : vector<16x16xf32>
    %cst_166 = arith.constant dense<0.000000e+00> : vector<16xf32>
    %408 = vector.multi_reduction <add>, %407, %cst_166 [1] : vector<16x16xf32> to vector<16xf32>
    %409 = vector.shape_cast %408 : vector<16xf32> to vector<16x1xf32>
    %410 = tpu.reciprocal %409 {approx = true} : vector<16x1xf32> -> vector<16x1xf32>
    %411 = vector.broadcast %410 : vector<16x1xf32> to vector<16x16xf32>
    %412 = arith.mulf %407, %411 : vector<16x16xf32>
    %413 = arith.truncf %412 : vector<16x16xf32> to vector<16x16xbf16>
    %cst_167 = arith.constant dense<0.000000e+00> : vector<16x8xf32>
    %414 = tpu.matmul %413, %398, %cst_167 {dimension_numbers = #tpu.dot_dimension_numbers<[1], [0], [0], [1], [0, 0, 1, 1], [], []>} : vector<16x16xbf16>, vector<16x8xbf16>, vector<16x8xf32> -> vector<16x8xf32>
    %415 = vector.extract_strided_slice %390 {offsets = [0, 8], sizes = [16, 8], strides = [1, 1]} : vector<16x96xf32> to vector<16x8xf32>
    %cst_168 = arith.constant 0.353553385 : f32
    %416 = vector.broadcast %cst_168 : f32 to vector<16x8xf32>
    %417 = arith.mulf %415, %416 : vector<16x8xf32>
    %418 = arith.truncf %417 : vector<16x8xf32> to vector<16x8xbf16>
    %419 = vector.extract_strided_slice %390 {offsets = [0, 40], sizes = [16, 8], strides = [1, 1]} : vector<16x96xf32> to vector<16x8xf32>
    %420 = arith.truncf %419 : vector<16x8xf32> to vector<16x8xbf16>
    %421 = vector.extract_strided_slice %390 {offsets = [0, 72], sizes = [16, 8], strides = [1, 1]} : vector<16x96xf32> to vector<16x8xf32>
    %422 = arith.truncf %421 : vector<16x8xf32> to vector<16x8xbf16>
    %cst_169 = arith.constant dense<0.000000e+00> : vector<16x16xf32>
    %423 = tpu.matmul %418, %420, %cst_169 {dimension_numbers = #tpu.dot_dimension_numbers<[1], [1], [0], [0], [0, 0, 1, 0], [], []>} : vector<16x8xbf16>, vector<16x8xbf16>, vector<16x16xf32> -> vector<16x16xf32>
    %c0_170 = arith.constant 0 : index
    %c1_171 = arith.constant 1 : index
    %c0_172 = arith.constant 0 : index
    %c0_173 = arith.constant 0 : index
    %424 = vector.load %arg11[%c0_170, %c1_171, %c0_172, %c0_173] : memref<2x4x16x16xf32, #tpu.memory_space<vmem>>, vector<1x1x16x16xf32>
    %425 = vector.shape_cast %424 : vector<1x1x16x16xf32> to vector<16x16xf32>
    %426 = arith.addf %423, %425 : vector<16x16xf32>
    %cst_174 = arith.constant dense<0xFF800000> : vector<16xf32>
    %427 = vector.multi_reduction <maximumf>, %426, %cst_174 [1] : vector<16x16xf32> to vector<16xf32>
    %428 = vector.shape_cast %427 : vector<16xf32> to vector<16x1xf32>
    %429 = vector.broadcast %428 : vector<16x1xf32> to vector<16x16xf32>
    %430 = arith.subf %426, %429 : vector<16x16xf32>
    %431 = math.exp %430 : vector<16x16xf32>
    %cst_175 = arith.constant dense<0.000000e+00> : vector<16xf32>
    %432 = vector.multi_reduction <add>, %431, %cst_175 [1] : vector<16x16xf32> to vector<16xf32>
    %433 = vector.shape_cast %432 : vector<16xf32> to vector<16x1xf32>
    %434 = tpu.reciprocal %433 {approx = true} : vector<16x1xf32> -> vector<16x1xf32>
    %435 = vector.broadcast %434 : vector<16x1xf32> to vector<16x16xf32>
    %436 = arith.mulf %431, %435 : vector<16x16xf32>
    %437 = arith.truncf %436 : vector<16x16xf32> to vector<16x16xbf16>
    %cst_176 = arith.constant dense<0.000000e+00> : vector<16x8xf32>
    %438 = tpu.matmul %437, %422, %cst_176 {dimension_numbers = #tpu.dot_dimension_numbers<[1], [0], [0], [1], [0, 0, 1, 1], [], []>} : vector<16x16xbf16>, vector<16x8xbf16>, vector<16x8xf32> -> vector<16x8xf32>
    %439 = vector.extract_strided_slice %390 {offsets = [0, 16], sizes = [16, 8], strides = [1, 1]} : vector<16x96xf32> to vector<16x8xf32>
    %cst_177 = arith.constant 0.353553385 : f32
    %440 = vector.broadcast %cst_177 : f32 to vector<16x8xf32>
    %441 = arith.mulf %439, %440 : vector<16x8xf32>
    %442 = arith.truncf %441 : vector<16x8xf32> to vector<16x8xbf16>
    %443 = vector.extract_strided_slice %390 {offsets = [0, 48], sizes = [16, 8], strides = [1, 1]} : vector<16x96xf32> to vector<16x8xf32>
    %444 = arith.truncf %443 : vector<16x8xf32> to vector<16x8xbf16>
    %445 = vector.extract_strided_slice %390 {offsets = [0, 80], sizes = [16, 8], strides = [1, 1]} : vector<16x96xf32> to vector<16x8xf32>
    %446 = arith.truncf %445 : vector<16x8xf32> to vector<16x8xbf16>
    %cst_178 = arith.constant dense<0.000000e+00> : vector<16x16xf32>
    %447 = tpu.matmul %442, %444, %cst_178 {dimension_numbers = #tpu.dot_dimension_numbers<[1], [1], [0], [0], [0, 0, 1, 0], [], []>} : vector<16x8xbf16>, vector<16x8xbf16>, vector<16x16xf32> -> vector<16x16xf32>
    %c0_179 = arith.constant 0 : index
    %c2_180 = arith.constant 2 : index
    %c0_181 = arith.constant 0 : index
    %c0_182 = arith.constant 0 : index
    %448 = vector.load %arg11[%c0_179, %c2_180, %c0_181, %c0_182] : memref<2x4x16x16xf32, #tpu.memory_space<vmem>>, vector<1x1x16x16xf32>
    %449 = vector.shape_cast %448 : vector<1x1x16x16xf32> to vector<16x16xf32>
    %450 = arith.addf %447, %449 : vector<16x16xf32>
    %cst_183 = arith.constant dense<0xFF800000> : vector<16xf32>
    %451 = vector.multi_reduction <maximumf>, %450, %cst_183 [1] : vector<16x16xf32> to vector<16xf32>
    %452 = vector.shape_cast %451 : vector<16xf32> to vector<16x1xf32>
    %453 = vector.broadcast %452 : vector<16x1xf32> to vector<16x16xf32>
    %454 = arith.subf %450, %453 : vector<16x16xf32>
    %455 = math.exp %454 : vector<16x16xf32>
    %cst_184 = arith.constant dense<0.000000e+00> : vector<16xf32>
    %456 = vector.multi_reduction <add>, %455, %cst_184 [1] : vector<16x16xf32> to vector<16xf32>
    %457 = vector.shape_cast %456 : vector<16xf32> to vector<16x1xf32>
    %458 = tpu.reciprocal %457 {approx = true} : vector<16x1xf32> -> vector<16x1xf32>
    %459 = vector.broadcast %458 : vector<16x1xf32> to vector<16x16xf32>
    %460 = arith.mulf %455, %459 : vector<16x16xf32>
    %461 = arith.truncf %460 : vector<16x16xf32> to vector<16x16xbf16>
    %cst_185 = arith.constant dense<0.000000e+00> : vector<16x8xf32>
    %462 = tpu.matmul %461, %446, %cst_185 {dimension_numbers = #tpu.dot_dimension_numbers<[1], [0], [0], [1], [0, 0, 1, 1], [], []>} : vector<16x16xbf16>, vector<16x8xbf16>, vector<16x8xf32> -> vector<16x8xf32>
    %463 = vector.extract_strided_slice %390 {offsets = [0, 24], sizes = [16, 8], strides = [1, 1]} : vector<16x96xf32> to vector<16x8xf32>
    %cst_186 = arith.constant 0.353553385 : f32
    %464 = vector.broadcast %cst_186 : f32 to vector<16x8xf32>
    %465 = arith.mulf %463, %464 : vector<16x8xf32>
    %466 = arith.truncf %465 : vector<16x8xf32> to vector<16x8xbf16>
    %467 = vector.extract_strided_slice %390 {offsets = [0, 56], sizes = [16, 8], strides = [1, 1]} : vector<16x96xf32> to vector<16x8xf32>
    %468 = arith.truncf %467 : vector<16x8xf32> to vector<16x8xbf16>
    %469 = vector.extract_strided_slice %390 {offsets = [0, 88], sizes = [16, 8], strides = [1, 1]} : vector<16x96xf32> to vector<16x8xf32>
    %470 = arith.truncf %469 : vector<16x8xf32> to vector<16x8xbf16>
    %cst_187 = arith.constant dense<0.000000e+00> : vector<16x16xf32>
    %471 = tpu.matmul %466, %468, %cst_187 {dimension_numbers = #tpu.dot_dimension_numbers<[1], [1], [0], [0], [0, 0, 1, 0], [], []>} : vector<16x8xbf16>, vector<16x8xbf16>, vector<16x16xf32> -> vector<16x16xf32>
    %c0_188 = arith.constant 0 : index
    %c3_189 = arith.constant 3 : index
    %c0_190 = arith.constant 0 : index
    %c0_191 = arith.constant 0 : index
    %472 = vector.load %arg11[%c0_188, %c3_189, %c0_190, %c0_191] : memref<2x4x16x16xf32, #tpu.memory_space<vmem>>, vector<1x1x16x16xf32>
    %473 = vector.shape_cast %472 : vector<1x1x16x16xf32> to vector<16x16xf32>
    %474 = arith.addf %471, %473 : vector<16x16xf32>
    %cst_192 = arith.constant dense<0xFF800000> : vector<16xf32>
    %475 = vector.multi_reduction <maximumf>, %474, %cst_192 [1] : vector<16x16xf32> to vector<16xf32>
    %476 = vector.shape_cast %475 : vector<16xf32> to vector<16x1xf32>
    %477 = vector.broadcast %476 : vector<16x1xf32> to vector<16x16xf32>
    %478 = arith.subf %474, %477 : vector<16x16xf32>
    %479 = math.exp %478 : vector<16x16xf32>
    %cst_193 = arith.constant dense<0.000000e+00> : vector<16xf32>
    %480 = vector.multi_reduction <add>, %479, %cst_193 [1] : vector<16x16xf32> to vector<16xf32>
    %481 = vector.shape_cast %480 : vector<16xf32> to vector<16x1xf32>
    %482 = tpu.reciprocal %481 {approx = true} : vector<16x1xf32> -> vector<16x1xf32>
    %483 = vector.broadcast %482 : vector<16x1xf32> to vector<16x16xf32>
    %484 = arith.mulf %479, %483 : vector<16x16xf32>
    %485 = arith.truncf %484 : vector<16x16xf32> to vector<16x16xbf16>
    %cst_194 = arith.constant dense<0.000000e+00> : vector<16x8xf32>
    %486 = tpu.matmul %485, %470, %cst_194 {dimension_numbers = #tpu.dot_dimension_numbers<[1], [0], [0], [1], [0, 0, 1, 1], [], []>} : vector<16x16xbf16>, vector<16x8xbf16>, vector<16x8xf32> -> vector<16x8xf32>
    %487 = tpu.concatenate %414, %438, %462, %486 in 1 : vector<16x8xf32>, vector<16x8xf32>, vector<16x8xf32>, vector<16x8xf32> -> vector<16x32xf32>
    %488 = arith.truncf %487 : vector<16x32xf32> to vector<16x32xbf16>
    %cst_195 = arith.constant dense<0.000000e+00> : vector<16x32xf32>
    %489 = tpu.matmul %488, %361, %cst_195 {dimension_numbers = #tpu.dot_dimension_numbers<[1], [0], [0], [1], [0, 0, 1, 1], [], []>} : vector<16x32xbf16>, vector<32x32xbf16>, vector<16x32xf32> -> vector<16x32xf32>
    %490 = arith.addf %349, %489 : vector<16x32xf32>
    %491 = vector.broadcast %353 : vector<1x32xf32> to vector<16x32xf32>
    %492 = arith.addf %490, %491 : vector<16x32xf32>
    %cst_196 = arith.constant dense<0.000000e+00> : vector<16xf32>
    %493 = vector.multi_reduction <add>, %492, %cst_196 [1] : vector<16x32xf32> to vector<16xf32>
    %494 = vector.shape_cast %493 : vector<16xf32> to vector<16x1xf32>
    %cst_197 = arith.constant 3.200000e+01 : f32
    %495 = vector.broadcast %cst_197 : f32 to vector<16x1xf32>
    %496 = arith.divf %494, %495 : vector<16x1xf32>
    %497 = vector.broadcast %496 : vector<16x1xf32> to vector<16x32xf32>
    %498 = arith.subf %492, %497 : vector<16x32xf32>
    %499 = arith.mulf %498, %498 : vector<16x32xf32>
    %cst_198 = arith.constant dense<0.000000e+00> : vector<16xf32>
    %500 = vector.multi_reduction <add>, %499, %cst_198 [1] : vector<16x32xf32> to vector<16xf32>
    %501 = vector.shape_cast %500 : vector<16xf32> to vector<16x1xf32>
    %cst_199 = arith.constant 3.200000e+01 : f32
    %502 = vector.broadcast %cst_199 : f32 to vector<16x1xf32>
    %503 = arith.divf %501, %502 : vector<16x1xf32>
    %504 = vector.broadcast %496 : vector<16x1xf32> to vector<16x32xf32>
    %505 = arith.subf %492, %504 : vector<16x32xf32>
    %cst_200 = arith.constant 9.99999974E-6 : f32
    %506 = vector.broadcast %cst_200 : f32 to vector<16x1xf32>
    %507 = arith.addf %503, %506 : vector<16x1xf32>
    %508 = math.rsqrt %507 : vector<16x1xf32>
    %509 = vector.broadcast %508 : vector<16x1xf32> to vector<16x32xf32>
    %510 = arith.mulf %505, %509 : vector<16x32xf32>
    %511 = vector.broadcast %354 : vector<1x32xf32> to vector<16x32xf32>
    %512 = arith.mulf %510, %511 : vector<16x32xf32>
    %513 = vector.broadcast %355 : vector<1x32xf32> to vector<16x32xf32>
    %514 = arith.addf %512, %513 : vector<16x32xf32>
    %515 = arith.truncf %514 : vector<16x32xf32> to vector<16x32xbf16>
    %cst_201 = arith.constant dense<0.000000e+00> : vector<16x128xf32>
    %516 = tpu.matmul %515, %362, %cst_201 {dimension_numbers = #tpu.dot_dimension_numbers<[1], [0], [0], [1], [0, 0, 1, 1], [], []>} : vector<16x32xbf16>, vector<32x128xbf16>, vector<16x128xf32> -> vector<16x128xf32>
    %517 = vector.broadcast %356 : vector<1x128xf32> to vector<16x128xf32>
    %518 = arith.addf %516, %517 : vector<16x128xf32>
    %cst_202 = arith.constant 5.000000e-01 : f32
    %519 = vector.broadcast %cst_202 : f32 to vector<16x128xf32>
    %520 = arith.mulf %519, %518 : vector<16x128xf32>
    %cst_203 = arith.constant 4.471500e-02 : f32
    %521 = vector.broadcast %cst_203 : f32 to vector<16x128xf32>
    %522 = arith.mulf %521, %518 : vector<16x128xf32>
    %523 = arith.mulf %522, %518 : vector<16x128xf32>
    %524 = arith.mulf %523, %518 : vector<16x128xf32>
    %525 = arith.addf %518, %524 : vector<16x128xf32>
    %cst_204 = arith.constant 0.797884583 : f32
    %526 = vector.broadcast %cst_204 : f32 to vector<16x128xf32>
    %527 = arith.mulf %526, %525 : vector<16x128xf32>
    %528 = math.tanh %527 : vector<16x128xf32>
    %cst_205 = arith.constant 1.000000e+00 : f32
    %529 = vector.broadcast %cst_205 : f32 to vector<16x128xf32>
    %530 = arith.addf %529, %528 : vector<16x128xf32>
    %531 = arith.mulf %520, %530 : vector<16x128xf32>
    %532 = arith.truncf %531 : vector<16x128xf32> to vector<16x128xbf16>
    %cst_206 = arith.constant dense<0.000000e+00> : vector<16x32xf32>
    %533 = tpu.matmul %532, %364, %cst_206 {dimension_numbers = #tpu.dot_dimension_numbers<[1], [0], [0], [1], [0, 0, 1, 1], [], []>} : vector<16x128xbf16>, vector<128x32xbf16>, vector<16x32xf32> -> vector<16x32xf32>
    %534 = vector.broadcast %357 : vector<1x32xf32> to vector<16x32xf32>
    %535 = arith.addf %533, %534 : vector<16x32xf32>
    %536 = arith.addf %492, %535 : vector<16x32xf32>
    %c29 = arith.constant 29 : index
    %c0_207 = arith.constant 0 : index
    %537 = vector.load %arg2[%c29, %c0_207] : memref<40x128xf32, #tpu.memory_space<vmem>>, vector<1x32xf32>
    %c30 = arith.constant 30 : index
    %c0_208 = arith.constant 0 : index
    %538 = vector.load %arg2[%c30, %c0_208] : memref<40x128xf32, #tpu.memory_space<vmem>>, vector<1x32xf32>
    %c31 = arith.constant 31 : index
    %c0_209 = arith.constant 0 : index
    %539 = vector.load %arg2[%c31, %c0_209] : memref<40x128xf32, #tpu.memory_space<vmem>>, vector<1x96xf32>
    %c32 = arith.constant 32 : index
    %c0_210 = arith.constant 0 : index
    %540 = vector.load %arg2[%c32, %c0_210] : memref<40x128xf32, #tpu.memory_space<vmem>>, vector<1x32xf32>
    %c33 = arith.constant 33 : index
    %c0_211 = arith.constant 0 : index
    %541 = vector.load %arg2[%c33, %c0_211] : memref<40x128xf32, #tpu.memory_space<vmem>>, vector<1x32xf32>
    %c34 = arith.constant 34 : index
    %c0_212 = arith.constant 0 : index
    %542 = vector.load %arg2[%c34, %c0_212] : memref<40x128xf32, #tpu.memory_space<vmem>>, vector<1x32xf32>
    %c35 = arith.constant 35 : index
    %c0_213 = arith.constant 0 : index
    %543 = vector.load %arg2[%c35, %c0_213] : memref<40x128xf32, #tpu.memory_space<vmem>>, vector<1x128xf32>
    %c36 = arith.constant 36 : index
    %c0_214 = arith.constant 0 : index
    %544 = vector.load %arg2[%c36, %c0_214] : memref<40x128xf32, #tpu.memory_space<vmem>>, vector<1x32xf32>
    %c1_215 = arith.constant 1 : index
    %c0_216 = arith.constant 0 : index
    %c0_217 = arith.constant 0 : index
    %545 = vector.load %arg9[%c1_215, %c0_216, %c0_217] : memref<2x32x256xbf16, #tpu.memory_space<vmem>>, vector<1x32x256xbf16>
    %546 = vector.shape_cast %545 : vector<1x32x256xbf16> to vector<32x256xbf16>
    %547 = vector.extract_strided_slice %546 {offsets = [0, 0], sizes = [32, 96], strides = [1, 1]} : vector<32x256xbf16> to vector<32x96xbf16>
    %548 = vector.extract_strided_slice %546 {offsets = [0, 96], sizes = [32, 32], strides = [1, 1]} : vector<32x256xbf16> to vector<32x32xbf16>
    %549 = vector.extract_strided_slice %546 {offsets = [0, 128], sizes = [32, 128], strides = [1, 1]} : vector<32x256xbf16> to vector<32x128xbf16>
    %c1_218 = arith.constant 1 : index
    %c0_219 = arith.constant 0 : index
    %c0_220 = arith.constant 0 : index
    %550 = vector.load %arg10[%c1_218, %c0_219, %c0_220] : memref<2x128x32xbf16, #tpu.memory_space<vmem>>, vector<1x128x32xbf16>
    %551 = vector.shape_cast %550 : vector<1x128x32xbf16> to vector<128x32xbf16>
    %cst_221 = arith.constant dense<0.000000e+00> : vector<16xf32>
    %552 = vector.multi_reduction <add>, %536, %cst_221 [1] : vector<16x32xf32> to vector<16xf32>
    %553 = vector.shape_cast %552 : vector<16xf32> to vector<16x1xf32>
    %cst_222 = arith.constant 3.200000e+01 : f32
    %554 = vector.broadcast %cst_222 : f32 to vector<16x1xf32>
    %555 = arith.divf %553, %554 : vector<16x1xf32>
    %556 = vector.broadcast %555 : vector<16x1xf32> to vector<16x32xf32>
    %557 = arith.subf %536, %556 : vector<16x32xf32>
    %558 = arith.mulf %557, %557 : vector<16x32xf32>
    %cst_223 = arith.constant dense<0.000000e+00> : vector<16xf32>
    %559 = vector.multi_reduction <add>, %558, %cst_223 [1] : vector<16x32xf32> to vector<16xf32>
    %560 = vector.shape_cast %559 : vector<16xf32> to vector<16x1xf32>
    %cst_224 = arith.constant 3.200000e+01 : f32
    %561 = vector.broadcast %cst_224 : f32 to vector<16x1xf32>
    %562 = arith.divf %560, %561 : vector<16x1xf32>
    %563 = vector.broadcast %555 : vector<16x1xf32> to vector<16x32xf32>
    %564 = arith.subf %536, %563 : vector<16x32xf32>
    %cst_225 = arith.constant 9.99999974E-6 : f32
    %565 = vector.broadcast %cst_225 : f32 to vector<16x1xf32>
    %566 = arith.addf %562, %565 : vector<16x1xf32>
    %567 = math.rsqrt %566 : vector<16x1xf32>
    %568 = vector.broadcast %567 : vector<16x1xf32> to vector<16x32xf32>
    %569 = arith.mulf %564, %568 : vector<16x32xf32>
    %570 = vector.broadcast %537 : vector<1x32xf32> to vector<16x32xf32>
    %571 = arith.mulf %569, %570 : vector<16x32xf32>
    %572 = vector.broadcast %538 : vector<1x32xf32> to vector<16x32xf32>
    %573 = arith.addf %571, %572 : vector<16x32xf32>
    %574 = arith.truncf %573 : vector<16x32xf32> to vector<16x32xbf16>
    %cst_226 = arith.constant dense<0.000000e+00> : vector<16x96xf32>
    %575 = tpu.matmul %574, %547, %cst_226 {dimension_numbers = #tpu.dot_dimension_numbers<[1], [0], [0], [1], [0, 0, 1, 1], [], []>} : vector<16x32xbf16>, vector<32x96xbf16>, vector<16x96xf32> -> vector<16x96xf32>
    %576 = vector.broadcast %539 : vector<1x96xf32> to vector<16x96xf32>
    %577 = arith.addf %575, %576 : vector<16x96xf32>
    %578 = vector.extract_strided_slice %577 {offsets = [0, 0], sizes = [16, 8], strides = [1, 1]} : vector<16x96xf32> to vector<16x8xf32>
    %cst_227 = arith.constant 0.353553385 : f32
    %579 = vector.broadcast %cst_227 : f32 to vector<16x8xf32>
    %580 = arith.mulf %578, %579 : vector<16x8xf32>
    %581 = arith.truncf %580 : vector<16x8xf32> to vector<16x8xbf16>
    %582 = vector.extract_strided_slice %577 {offsets = [0, 32], sizes = [16, 8], strides = [1, 1]} : vector<16x96xf32> to vector<16x8xf32>
    %583 = arith.truncf %582 : vector<16x8xf32> to vector<16x8xbf16>
    %584 = vector.extract_strided_slice %577 {offsets = [0, 64], sizes = [16, 8], strides = [1, 1]} : vector<16x96xf32> to vector<16x8xf32>
    %585 = arith.truncf %584 : vector<16x8xf32> to vector<16x8xbf16>
    %cst_228 = arith.constant dense<0.000000e+00> : vector<16x16xf32>
    %586 = tpu.matmul %581, %583, %cst_228 {dimension_numbers = #tpu.dot_dimension_numbers<[1], [1], [0], [0], [0, 0, 1, 0], [], []>} : vector<16x8xbf16>, vector<16x8xbf16>, vector<16x16xf32> -> vector<16x16xf32>
    %c1_229 = arith.constant 1 : index
    %c0_230 = arith.constant 0 : index
    %c0_231 = arith.constant 0 : index
    %c0_232 = arith.constant 0 : index
    %587 = vector.load %arg11[%c1_229, %c0_230, %c0_231, %c0_232] : memref<2x4x16x16xf32, #tpu.memory_space<vmem>>, vector<1x1x16x16xf32>
    %588 = vector.shape_cast %587 : vector<1x1x16x16xf32> to vector<16x16xf32>
    %589 = arith.addf %586, %588 : vector<16x16xf32>
    %cst_233 = arith.constant dense<0xFF800000> : vector<16xf32>
    %590 = vector.multi_reduction <maximumf>, %589, %cst_233 [1] : vector<16x16xf32> to vector<16xf32>
    %591 = vector.shape_cast %590 : vector<16xf32> to vector<16x1xf32>
    %592 = vector.broadcast %591 : vector<16x1xf32> to vector<16x16xf32>
    %593 = arith.subf %589, %592 : vector<16x16xf32>
    %594 = math.exp %593 : vector<16x16xf32>
    %cst_234 = arith.constant dense<0.000000e+00> : vector<16xf32>
    %595 = vector.multi_reduction <add>, %594, %cst_234 [1] : vector<16x16xf32> to vector<16xf32>
    %596 = vector.shape_cast %595 : vector<16xf32> to vector<16x1xf32>
    %597 = tpu.reciprocal %596 {approx = true} : vector<16x1xf32> -> vector<16x1xf32>
    %598 = vector.broadcast %597 : vector<16x1xf32> to vector<16x16xf32>
    %599 = arith.mulf %594, %598 : vector<16x16xf32>
    %600 = arith.truncf %599 : vector<16x16xf32> to vector<16x16xbf16>
    %cst_235 = arith.constant dense<0.000000e+00> : vector<16x8xf32>
    %601 = tpu.matmul %600, %585, %cst_235 {dimension_numbers = #tpu.dot_dimension_numbers<[1], [0], [0], [1], [0, 0, 1, 1], [], []>} : vector<16x16xbf16>, vector<16x8xbf16>, vector<16x8xf32> -> vector<16x8xf32>
    %602 = vector.extract_strided_slice %577 {offsets = [0, 8], sizes = [16, 8], strides = [1, 1]} : vector<16x96xf32> to vector<16x8xf32>
    %cst_236 = arith.constant 0.353553385 : f32
    %603 = vector.broadcast %cst_236 : f32 to vector<16x8xf32>
    %604 = arith.mulf %602, %603 : vector<16x8xf32>
    %605 = arith.truncf %604 : vector<16x8xf32> to vector<16x8xbf16>
    %606 = vector.extract_strided_slice %577 {offsets = [0, 40], sizes = [16, 8], strides = [1, 1]} : vector<16x96xf32> to vector<16x8xf32>
    %607 = arith.truncf %606 : vector<16x8xf32> to vector<16x8xbf16>
    %608 = vector.extract_strided_slice %577 {offsets = [0, 72], sizes = [16, 8], strides = [1, 1]} : vector<16x96xf32> to vector<16x8xf32>
    %609 = arith.truncf %608 : vector<16x8xf32> to vector<16x8xbf16>
    %cst_237 = arith.constant dense<0.000000e+00> : vector<16x16xf32>
    %610 = tpu.matmul %605, %607, %cst_237 {dimension_numbers = #tpu.dot_dimension_numbers<[1], [1], [0], [0], [0, 0, 1, 0], [], []>} : vector<16x8xbf16>, vector<16x8xbf16>, vector<16x16xf32> -> vector<16x16xf32>
    %c1_238 = arith.constant 1 : index
    %c1_239 = arith.constant 1 : index
    %c0_240 = arith.constant 0 : index
    %c0_241 = arith.constant 0 : index
    %611 = vector.load %arg11[%c1_238, %c1_239, %c0_240, %c0_241] : memref<2x4x16x16xf32, #tpu.memory_space<vmem>>, vector<1x1x16x16xf32>
    %612 = vector.shape_cast %611 : vector<1x1x16x16xf32> to vector<16x16xf32>
    %613 = arith.addf %610, %612 : vector<16x16xf32>
    %cst_242 = arith.constant dense<0xFF800000> : vector<16xf32>
    %614 = vector.multi_reduction <maximumf>, %613, %cst_242 [1] : vector<16x16xf32> to vector<16xf32>
    %615 = vector.shape_cast %614 : vector<16xf32> to vector<16x1xf32>
    %616 = vector.broadcast %615 : vector<16x1xf32> to vector<16x16xf32>
    %617 = arith.subf %613, %616 : vector<16x16xf32>
    %618 = math.exp %617 : vector<16x16xf32>
    %cst_243 = arith.constant dense<0.000000e+00> : vector<16xf32>
    %619 = vector.multi_reduction <add>, %618, %cst_243 [1] : vector<16x16xf32> to vector<16xf32>
    %620 = vector.shape_cast %619 : vector<16xf32> to vector<16x1xf32>
    %621 = tpu.reciprocal %620 {approx = true} : vector<16x1xf32> -> vector<16x1xf32>
    %622 = vector.broadcast %621 : vector<16x1xf32> to vector<16x16xf32>
    %623 = arith.mulf %618, %622 : vector<16x16xf32>
    %624 = arith.truncf %623 : vector<16x16xf32> to vector<16x16xbf16>
    %cst_244 = arith.constant dense<0.000000e+00> : vector<16x8xf32>
    %625 = tpu.matmul %624, %609, %cst_244 {dimension_numbers = #tpu.dot_dimension_numbers<[1], [0], [0], [1], [0, 0, 1, 1], [], []>} : vector<16x16xbf16>, vector<16x8xbf16>, vector<16x8xf32> -> vector<16x8xf32>
    %626 = vector.extract_strided_slice %577 {offsets = [0, 16], sizes = [16, 8], strides = [1, 1]} : vector<16x96xf32> to vector<16x8xf32>
    %cst_245 = arith.constant 0.353553385 : f32
    %627 = vector.broadcast %cst_245 : f32 to vector<16x8xf32>
    %628 = arith.mulf %626, %627 : vector<16x8xf32>
    %629 = arith.truncf %628 : vector<16x8xf32> to vector<16x8xbf16>
    %630 = vector.extract_strided_slice %577 {offsets = [0, 48], sizes = [16, 8], strides = [1, 1]} : vector<16x96xf32> to vector<16x8xf32>
    %631 = arith.truncf %630 : vector<16x8xf32> to vector<16x8xbf16>
    %632 = vector.extract_strided_slice %577 {offsets = [0, 80], sizes = [16, 8], strides = [1, 1]} : vector<16x96xf32> to vector<16x8xf32>
    %633 = arith.truncf %632 : vector<16x8xf32> to vector<16x8xbf16>
    %cst_246 = arith.constant dense<0.000000e+00> : vector<16x16xf32>
    %634 = tpu.matmul %629, %631, %cst_246 {dimension_numbers = #tpu.dot_dimension_numbers<[1], [1], [0], [0], [0, 0, 1, 0], [], []>} : vector<16x8xbf16>, vector<16x8xbf16>, vector<16x16xf32> -> vector<16x16xf32>
    %c1_247 = arith.constant 1 : index
    %c2_248 = arith.constant 2 : index
    %c0_249 = arith.constant 0 : index
    %c0_250 = arith.constant 0 : index
    %635 = vector.load %arg11[%c1_247, %c2_248, %c0_249, %c0_250] : memref<2x4x16x16xf32, #tpu.memory_space<vmem>>, vector<1x1x16x16xf32>
    %636 = vector.shape_cast %635 : vector<1x1x16x16xf32> to vector<16x16xf32>
    %637 = arith.addf %634, %636 : vector<16x16xf32>
    %cst_251 = arith.constant dense<0xFF800000> : vector<16xf32>
    %638 = vector.multi_reduction <maximumf>, %637, %cst_251 [1] : vector<16x16xf32> to vector<16xf32>
    %639 = vector.shape_cast %638 : vector<16xf32> to vector<16x1xf32>
    %640 = vector.broadcast %639 : vector<16x1xf32> to vector<16x16xf32>
    %641 = arith.subf %637, %640 : vector<16x16xf32>
    %642 = math.exp %641 : vector<16x16xf32>
    %cst_252 = arith.constant dense<0.000000e+00> : vector<16xf32>
    %643 = vector.multi_reduction <add>, %642, %cst_252 [1] : vector<16x16xf32> to vector<16xf32>
    %644 = vector.shape_cast %643 : vector<16xf32> to vector<16x1xf32>
    %645 = tpu.reciprocal %644 {approx = true} : vector<16x1xf32> -> vector<16x1xf32>
    %646 = vector.broadcast %645 : vector<16x1xf32> to vector<16x16xf32>
    %647 = arith.mulf %642, %646 : vector<16x16xf32>
    %648 = arith.truncf %647 : vector<16x16xf32> to vector<16x16xbf16>
    %cst_253 = arith.constant dense<0.000000e+00> : vector<16x8xf32>
    %649 = tpu.matmul %648, %633, %cst_253 {dimension_numbers = #tpu.dot_dimension_numbers<[1], [0], [0], [1], [0, 0, 1, 1], [], []>} : vector<16x16xbf16>, vector<16x8xbf16>, vector<16x8xf32> -> vector<16x8xf32>
    %650 = vector.extract_strided_slice %577 {offsets = [0, 24], sizes = [16, 8], strides = [1, 1]} : vector<16x96xf32> to vector<16x8xf32>
    %cst_254 = arith.constant 0.353553385 : f32
    %651 = vector.broadcast %cst_254 : f32 to vector<16x8xf32>
    %652 = arith.mulf %650, %651 : vector<16x8xf32>
    %653 = arith.truncf %652 : vector<16x8xf32> to vector<16x8xbf16>
    %654 = vector.extract_strided_slice %577 {offsets = [0, 56], sizes = [16, 8], strides = [1, 1]} : vector<16x96xf32> to vector<16x8xf32>
    %655 = arith.truncf %654 : vector<16x8xf32> to vector<16x8xbf16>
    %656 = vector.extract_strided_slice %577 {offsets = [0, 88], sizes = [16, 8], strides = [1, 1]} : vector<16x96xf32> to vector<16x8xf32>
    %657 = arith.truncf %656 : vector<16x8xf32> to vector<16x8xbf16>
    %cst_255 = arith.constant dense<0.000000e+00> : vector<16x16xf32>
    %658 = tpu.matmul %653, %655, %cst_255 {dimension_numbers = #tpu.dot_dimension_numbers<[1], [1], [0], [0], [0, 0, 1, 0], [], []>} : vector<16x8xbf16>, vector<16x8xbf16>, vector<16x16xf32> -> vector<16x16xf32>
    %c1_256 = arith.constant 1 : index
    %c3_257 = arith.constant 3 : index
    %c0_258 = arith.constant 0 : index
    %c0_259 = arith.constant 0 : index
    %659 = vector.load %arg11[%c1_256, %c3_257, %c0_258, %c0_259] : memref<2x4x16x16xf32, #tpu.memory_space<vmem>>, vector<1x1x16x16xf32>
    %660 = vector.shape_cast %659 : vector<1x1x16x16xf32> to vector<16x16xf32>
    %661 = arith.addf %658, %660 : vector<16x16xf32>
    %cst_260 = arith.constant dense<0xFF800000> : vector<16xf32>
    %662 = vector.multi_reduction <maximumf>, %661, %cst_260 [1] : vector<16x16xf32> to vector<16xf32>
    %663 = vector.shape_cast %662 : vector<16xf32> to vector<16x1xf32>
    %664 = vector.broadcast %663 : vector<16x1xf32> to vector<16x16xf32>
    %665 = arith.subf %661, %664 : vector<16x16xf32>
    %666 = math.exp %665 : vector<16x16xf32>
    %cst_261 = arith.constant dense<0.000000e+00> : vector<16xf32>
    %667 = vector.multi_reduction <add>, %666, %cst_261 [1] : vector<16x16xf32> to vector<16xf32>
    %668 = vector.shape_cast %667 : vector<16xf32> to vector<16x1xf32>
    %669 = tpu.reciprocal %668 {approx = true} : vector<16x1xf32> -> vector<16x1xf32>
    %670 = vector.broadcast %669 : vector<16x1xf32> to vector<16x16xf32>
    %671 = arith.mulf %666, %670 : vector<16x16xf32>
    %672 = arith.truncf %671 : vector<16x16xf32> to vector<16x16xbf16>
    %cst_262 = arith.constant dense<0.000000e+00> : vector<16x8xf32>
    %673 = tpu.matmul %672, %657, %cst_262 {dimension_numbers = #tpu.dot_dimension_numbers<[1], [0], [0], [1], [0, 0, 1, 1], [], []>} : vector<16x16xbf16>, vector<16x8xbf16>, vector<16x8xf32> -> vector<16x8xf32>
    %674 = tpu.concatenate %601, %625, %649, %673 in 1 : vector<16x8xf32>, vector<16x8xf32>, vector<16x8xf32>, vector<16x8xf32> -> vector<16x32xf32>
    %675 = arith.truncf %674 : vector<16x32xf32> to vector<16x32xbf16>
    %cst_263 = arith.constant dense<0.000000e+00> : vector<16x32xf32>
    %676 = tpu.matmul %675, %548, %cst_263 {dimension_numbers = #tpu.dot_dimension_numbers<[1], [0], [0], [1], [0, 0, 1, 1], [], []>} : vector<16x32xbf16>, vector<32x32xbf16>, vector<16x32xf32> -> vector<16x32xf32>
    %677 = arith.addf %536, %676 : vector<16x32xf32>
    %678 = vector.broadcast %540 : vector<1x32xf32> to vector<16x32xf32>
    %679 = arith.addf %677, %678 : vector<16x32xf32>
    %cst_264 = arith.constant dense<0.000000e+00> : vector<16xf32>
    %680 = vector.multi_reduction <add>, %679, %cst_264 [1] : vector<16x32xf32> to vector<16xf32>
    %681 = vector.shape_cast %680 : vector<16xf32> to vector<16x1xf32>
    %cst_265 = arith.constant 3.200000e+01 : f32
    %682 = vector.broadcast %cst_265 : f32 to vector<16x1xf32>
    %683 = arith.divf %681, %682 : vector<16x1xf32>
    %684 = vector.broadcast %683 : vector<16x1xf32> to vector<16x32xf32>
    %685 = arith.subf %679, %684 : vector<16x32xf32>
    %686 = arith.mulf %685, %685 : vector<16x32xf32>
    %cst_266 = arith.constant dense<0.000000e+00> : vector<16xf32>
    %687 = vector.multi_reduction <add>, %686, %cst_266 [1] : vector<16x32xf32> to vector<16xf32>
    %688 = vector.shape_cast %687 : vector<16xf32> to vector<16x1xf32>
    %cst_267 = arith.constant 3.200000e+01 : f32
    %689 = vector.broadcast %cst_267 : f32 to vector<16x1xf32>
    %690 = arith.divf %688, %689 : vector<16x1xf32>
    %691 = vector.broadcast %683 : vector<16x1xf32> to vector<16x32xf32>
    %692 = arith.subf %679, %691 : vector<16x32xf32>
    %cst_268 = arith.constant 9.99999974E-6 : f32
    %693 = vector.broadcast %cst_268 : f32 to vector<16x1xf32>
    %694 = arith.addf %690, %693 : vector<16x1xf32>
    %695 = math.rsqrt %694 : vector<16x1xf32>
    %696 = vector.broadcast %695 : vector<16x1xf32> to vector<16x32xf32>
    %697 = arith.mulf %692, %696 : vector<16x32xf32>
    %698 = vector.broadcast %541 : vector<1x32xf32> to vector<16x32xf32>
    %699 = arith.mulf %697, %698 : vector<16x32xf32>
    %700 = vector.broadcast %542 : vector<1x32xf32> to vector<16x32xf32>
    %701 = arith.addf %699, %700 : vector<16x32xf32>
    %702 = arith.truncf %701 : vector<16x32xf32> to vector<16x32xbf16>
    %cst_269 = arith.constant dense<0.000000e+00> : vector<16x128xf32>
    %703 = tpu.matmul %702, %549, %cst_269 {dimension_numbers = #tpu.dot_dimension_numbers<[1], [0], [0], [1], [0, 0, 1, 1], [], []>} : vector<16x32xbf16>, vector<32x128xbf16>, vector<16x128xf32> -> vector<16x128xf32>
    %704 = vector.broadcast %543 : vector<1x128xf32> to vector<16x128xf32>
    %705 = arith.addf %703, %704 : vector<16x128xf32>
    %cst_270 = arith.constant 5.000000e-01 : f32
    %706 = vector.broadcast %cst_270 : f32 to vector<16x128xf32>
    %707 = arith.mulf %706, %705 : vector<16x128xf32>
    %cst_271 = arith.constant 4.471500e-02 : f32
    %708 = vector.broadcast %cst_271 : f32 to vector<16x128xf32>
    %709 = arith.mulf %708, %705 : vector<16x128xf32>
    %710 = arith.mulf %709, %705 : vector<16x128xf32>
    %711 = arith.mulf %710, %705 : vector<16x128xf32>
    %712 = arith.addf %705, %711 : vector<16x128xf32>
    %cst_272 = arith.constant 0.797884583 : f32
    %713 = vector.broadcast %cst_272 : f32 to vector<16x128xf32>
    %714 = arith.mulf %713, %712 : vector<16x128xf32>
    %715 = math.tanh %714 : vector<16x128xf32>
    %cst_273 = arith.constant 1.000000e+00 : f32
    %716 = vector.broadcast %cst_273 : f32 to vector<16x128xf32>
    %717 = arith.addf %716, %715 : vector<16x128xf32>
    %718 = arith.mulf %707, %717 : vector<16x128xf32>
    %719 = arith.truncf %718 : vector<16x128xf32> to vector<16x128xbf16>
    %cst_274 = arith.constant dense<0.000000e+00> : vector<16x32xf32>
    %720 = tpu.matmul %719, %551, %cst_274 {dimension_numbers = #tpu.dot_dimension_numbers<[1], [0], [0], [1], [0, 0, 1, 1], [], []>} : vector<16x128xbf16>, vector<128x32xbf16>, vector<16x32xf32> -> vector<16x32xf32>
    %721 = vector.broadcast %544 : vector<1x32xf32> to vector<16x32xf32>
    %722 = arith.addf %720, %721 : vector<16x32xf32>
    %723 = arith.addf %679, %722 : vector<16x32xf32>
    %c37 = arith.constant 37 : index
    %c0_275 = arith.constant 0 : index
    %724 = vector.load %arg2[%c37, %c0_275] : memref<40x128xf32, #tpu.memory_space<vmem>>, vector<1x32xf32>
    %c38 = arith.constant 38 : index
    %c0_276 = arith.constant 0 : index
    %725 = vector.load %arg2[%c38, %c0_276] : memref<40x128xf32, #tpu.memory_space<vmem>>, vector<1x32xf32>
    %cst_277 = arith.constant dense<0.000000e+00> : vector<16xf32>
    %726 = vector.multi_reduction <add>, %723, %cst_277 [1] : vector<16x32xf32> to vector<16xf32>
    %727 = vector.shape_cast %726 : vector<16xf32> to vector<16x1xf32>
    %cst_278 = arith.constant 3.200000e+01 : f32
    %728 = vector.broadcast %cst_278 : f32 to vector<16x1xf32>
    %729 = arith.divf %727, %728 : vector<16x1xf32>
    %730 = vector.broadcast %729 : vector<16x1xf32> to vector<16x32xf32>
    %731 = arith.subf %723, %730 : vector<16x32xf32>
    %732 = arith.mulf %731, %731 : vector<16x32xf32>
    %cst_279 = arith.constant dense<0.000000e+00> : vector<16xf32>
    %733 = vector.multi_reduction <add>, %732, %cst_279 [1] : vector<16x32xf32> to vector<16xf32>
    %734 = vector.shape_cast %733 : vector<16xf32> to vector<16x1xf32>
    %cst_280 = arith.constant 3.200000e+01 : f32
    %735 = vector.broadcast %cst_280 : f32 to vector<16x1xf32>
    %736 = arith.divf %734, %735 : vector<16x1xf32>
    %737 = vector.broadcast %729 : vector<16x1xf32> to vector<16x32xf32>
    %738 = arith.subf %723, %737 : vector<16x32xf32>
    %cst_281 = arith.constant 9.99999974E-6 : f32
    %739 = vector.broadcast %cst_281 : f32 to vector<16x1xf32>
    %740 = arith.addf %736, %739 : vector<16x1xf32>
    %741 = math.rsqrt %740 : vector<16x1xf32>
    %742 = vector.broadcast %741 : vector<16x1xf32> to vector<16x32xf32>
    %743 = arith.mulf %738, %742 : vector<16x32xf32>
    %744 = vector.broadcast %724 : vector<1x32xf32> to vector<16x32xf32>
    %745 = arith.mulf %743, %744 : vector<16x32xf32>
    %746 = vector.broadcast %725 : vector<1x32xf32> to vector<16x32xf32>
    %747 = arith.addf %745, %746 : vector<16x32xf32>
    %cst_282 = arith.constant dense<0.000000e+00> : vector<32xf32>
    %748 = vector.multi_reduction <add>, %747, %cst_282 [0] : vector<16x32xf32> to vector<32xf32>
    %749 = vector.shape_cast %748 : vector<32xf32> to vector<1x32xf32>
    %cst_283 = arith.constant 1.600000e+01 : f32
    %750 = vector.broadcast %cst_283 : f32 to vector<1x32xf32>
    %751 = arith.divf %749, %750 : vector<1x32xf32>
    %c0_284 = arith.constant 0 : index
    %c0_285 = arith.constant 0 : index
    %752 = vector.load %arg12[%c0_284, %c0_285] : memref<32x2xf32, #tpu.memory_space<vmem>>, vector<32x2xf32>
    %cst_286 = arith.constant dense<0.000000e+00> : vector<1x2xf32>
    %753 = tpu.matmul %751, %752, %cst_286 {dimension_numbers = #tpu.dot_dimension_numbers<[1], [0], [0], [1], [0, 0, 1, 1], [], []>} : vector<1x32xf32>, vector<32x2xf32>, vector<1x2xf32> -> vector<1x2xf32>
    %c39 = arith.constant 39 : index
    %c0_287 = arith.constant 0 : index
    %754 = vector.load %arg2[%c39, %c0_287] : memref<40x128xf32, #tpu.memory_space<vmem>>, vector<1x2xf32>
    %755 = arith.addf %753, %754 : vector<1x2xf32>
    %c0_288 = arith.constant 0 : index
    %c0_289 = arith.constant 0 : index
    %c0_290 = arith.constant 0 : index
    %756 = vector.load %arg13[%c0_288, %c0_289, %c0_290] : memref<1x1x2xf32, #tpu.memory_space<vmem>>, vector<1x1x2xf32>
    %757 = vector.shape_cast %756 : vector<1x1x2xf32> to vector<1x2xf32>
    %758 = vector.shape_cast %755 : vector<1x2xf32> to vector<1x1x2xf32>
    tpu.vector_store %arg13[%c0_288, %c0_289, %c0_290], %758 {strides = array<i32>} : memref<1x1x2xf32, #tpu.memory_space<vmem>>, vector<1x1x2xf32>,
    %c0_291 = arith.constant 0 : index
    %c0_292 = arith.constant 0 : index
    %c0_293 = arith.constant 0 : index
    %759 = vector.load %arg14[%c0_291, %c0_292, %c0_293] : memref<1x1x32xf32, #tpu.memory_space<vmem>>, vector<1x1x32xf32>
    %760 = vector.shape_cast %759 : vector<1x1x32xf32> to vector<1x32xf32>
    %761 = vector.shape_cast %751 : vector<1x32xf32> to vector<1x1x32xf32>
    tpu.vector_store %arg14[%c0_291, %c0_292, %c0_293], %761 {strides = array<i32>} : memref<1x1x32xf32, #tpu.memory_space<vmem>>, vector<1x1x32xf32>,
    return
  }
  func.func @transform_0(%arg0: i32) -> (i32, i32, i32) {
    %c0_i32 = arith.constant 0 : i32
    %c0_i32_0 = arith.constant 0 : i32
    %c0_i32_1 = arith.constant 0 : i32
    return %arg0, %c0_i32, %c0_i32_0 : i32, i32, i32
  }
  func.func @transform_1(%arg0: i32) -> (i32, i32) {
    %c0_i32 = arith.constant 0 : i32
    %c0_i32_0 = arith.constant 0 : i32
    %c0_i32_1 = arith.constant 0 : i32
    return %c0_i32, %c0_i32_0 : i32, i32
  }
  func.func @transform_2(%arg0: i32) -> (i32, i32) {
    %c0_i32 = arith.constant 0 : i32
    %c0_i32_0 = arith.constant 0 : i32
    %c0_i32_1 = arith.constant 0 : i32
    return %c0_i32, %c0_i32_0 : i32, i32
  }
  func.func @transform_3(%arg0: i32) -> (i32, i32, i32) {
    %c0_i32 = arith.constant 0 : i32
    %c0_i32_0 = arith.constant 0 : i32
    %c0_i32_1 = arith.constant 0 : i32
    %c0_i32_2 = arith.constant 0 : i32
    return %c0_i32, %c0_i32_0, %c0_i32_1 : i32, i32, i32
  }
  func.func @transform_4(%arg0: i32) -> (i32, i32, i32) {
    %c0_i32 = arith.constant 0 : i32
    %c0_i32_0 = arith.constant 0 : i32
    %c0_i32_1 = arith.constant 0 : i32
    %c0_i32_2 = arith.constant 0 : i32
    return %c0_i32, %c0_i32_0, %c0_i32_1 : i32, i32, i32
  }
  func.func @transform_5(%arg0: i32) -> (i32, i32, i32, i32) {
    %c0_i32 = arith.constant 0 : i32
    %c0_i32_0 = arith.constant 0 : i32
    %c0_i32_1 = arith.constant 0 : i32
    %c0_i32_2 = arith.constant 0 : i32
    %c0_i32_3 = arith.constant 0 : i32
    return %c0_i32, %c0_i32_0, %c0_i32_1, %c0_i32_2 : i32, i32, i32, i32
  }
  func.func @transform_6(%arg0: i32) -> (i32, i32, i32) {
    %c0_i32 = arith.constant 0 : i32
    %c0_i32_0 = arith.constant 0 : i32
    %c0_i32_1 = arith.constant 0 : i32
    %c0_i32_2 = arith.constant 0 : i32
    return %c0_i32, %c0_i32_0, %c0_i32_1 : i32, i32, i32
  }
  func.func @transform_7(%arg0: i32) -> (i32, i32) {
    %c0_i32 = arith.constant 0 : i32
    %c0_i32_0 = arith.constant 0 : i32
    %c0_i32_1 = arith.constant 0 : i32
    return %c0_i32, %c0_i32_0 : i32, i32
  }
  func.func @transform_8(%arg0: i32) -> (i32, i32, i32) {
    %c0_i32 = arith.constant 0 : i32
    %c0_i32_0 = arith.constant 0 : i32
    %c0_i32_1 = arith.constant 0 : i32
    %c0_i32_2 = arith.constant 0 : i32
    return %c0_i32, %c0_i32_0, %c0_i32_1 : i32, i32, i32
  }
  func.func @transform_9(%arg0: i32) -> (i32, i32, i32) {
    %c0_i32 = arith.constant 0 : i32
    %c0_i32_0 = arith.constant 0 : i32
    %c0_i32_1 = arith.constant 0 : i32
    %c0_i32_2 = arith.constant 0 : i32
    return %c0_i32, %c0_i32_0, %c0_i32_1 : i32, i32, i32
  }
  func.func @transform_10(%arg0: i32) -> (i32, i32, i32, i32) {
    %c0_i32 = arith.constant 0 : i32
    %c0_i32_0 = arith.constant 0 : i32
    %c0_i32_1 = arith.constant 0 : i32
    %c0_i32_2 = arith.constant 0 : i32
    %c0_i32_3 = arith.constant 0 : i32
    return %c0_i32, %c0_i32_0, %c0_i32_1, %c0_i32_2 : i32, i32, i32, i32
  }
  func.func @transform_11(%arg0: i32) -> (i32, i32) {
    %c0_i32 = arith.constant 0 : i32
    %c0_i32_0 = arith.constant 0 : i32
    %c0_i32_1 = arith.constant 0 : i32
    return %c0_i32, %c0_i32_0 : i32, i32
  }
  func.func @transform_12(%arg0: i32) -> (i32, i32, i32) {
    %c0_i32 = arith.constant 0 : i32
    %c0_i32_0 = arith.constant 0 : i32
    %c0_i32_1 = arith.constant 0 : i32
    return %arg0, %c0_i32, %c0_i32_0 : i32, i32, i32
  }
  func.func @transform_13(%arg0: i32) -> (i32, i32, i32) {
    %c0_i32 = arith.constant 0 : i32
    %c0_i32_0 = arith.constant 0 : i32
    %c0_i32_1 = arith.constant 0 : i32
    return %arg0, %c0_i32, %c0_i32_0 : i32, i32, i32
  }
}

</mosaic_0001>

<llo_original>
// kernel: swin_forward.1
$region0: #{swin_forward.1}
  #allocation0 [shape = 'u32[]', space=smem, size = 0x4, offset = 0x4, fixed_abs, tag = 'smem constant byte address 0x4 - core index']
  #allocation1 [shape = 'u32[144,128]{1,0:T(1,128)}', space=vmem, size = 0x12000, scoped, tag = 'internal scratch']
  %s0 = inlined_call_operand.vmem [shape: bf16[2,64,48], index: 0, kind: input, shape index: {}]
  %s1 = inlined_call_operand.vmem [shape: f32[40,128], index: 1, kind: input, shape index: {}]
  %s2 = inlined_call_operand.vmem [shape: bf16[48,16], index: 2, kind: input, shape index: {}]
  %s3 = inlined_call_operand.vmem [shape: bf16[2,16,128], index: 3, kind: input, shape index: {}]
  %s4 = inlined_call_operand.vmem [shape: bf16[2,64,16], index: 4, kind: input, shape index: {}]
  %s5 = inlined_call_operand.vmem [shape: f32[2,2,64,64], index: 5, kind: input, shape index: {}]
  %s6 = inlined_call_operand.vmem [shape: bf16[4,16,64], index: 6, kind: input, shape index: {}]
  %s7 = inlined_call_operand.vmem [shape: bf16[64,32], index: 7, kind: input, shape index: {}]
  %s8 = inlined_call_operand.vmem [shape: bf16[2,32,256], index: 8, kind: input, shape index: {}]
  %s9 = inlined_call_operand.vmem [shape: bf16[2,128,32], index: 9, kind: input, shape index: {}]
  %s10 = inlined_call_operand.vmem [shape: f32[2,4,16,16], index: 10, kind: input, shape index: {}]
  %s11 = inlined_call_operand.vmem [shape: f32[32,2], index: 11, kind: input, shape index: {}]
  %s12 = inlined_call_operand.hbm [shape: f32[2,1,2], index: 12, kind: output, shape index: {0}]
  %s13 = inlined_call_operand.hbm [shape: f32[2,1,32], index: 13, kind: output, shape index: {1}]
  %14 = xla_tuple %s12, %s13
  %s15 = sld [smem:[#allocation0]]
  $region89: #{swin_forward.1} parent=0
    _
  %s17 = ssub.s32 1, %s15
  %s18 = scalar_select 0, %s17, %s15
  $region1: #{swin_forward.1} parent=0
    #allocation2 [shape = 'u8[1024]{0}', space=vmem, size = 0x400, scoped, tag = 'output window, operand 0']
    #allocation3 [shape = 's32[2]{0}', space=sflag, size = 0x8, scoped, tag = 'scoped memory for swin_forward.1']
    #allocation4 [shape = 'u8[1024]{0}', space=vmem, size = 0x400, scoped, tag = 'output window, operand 1']
    #allocation5 [shape = 's32[2]{0}', space=sflag, size = 0x8, scoped, tag = 'scoped memory for swin_forward.1']
    %19 = vsyncpa [#allocation3], 0
    %s20 = scalar_lea.sflag [#allocation3], 1
    %21 = vsyncpa %s20, 0
    %22 = vsyncpa [#allocation5], 0
    %s23 = scalar_lea.sflag [#allocation5], 1
    %24 = vsyncpa %s23, 0
    loop: start=0, step=1, limit=4
    $region2: #{swin_forward.1} parent=1 // loop_pre_header
      _
    $region3: #{swin_forward.1} parent=1 // loop_header
      %s26 = sphi 0, %s30
      %p27 = scmp.ge.s32.totalorder %s26, 4
      %s36 = sphi 0, %s38
      %s39 = sphi 0, %s36
      %s40 = sphi 0, %s39
      %s56 = sphi 0, %s40
      %s60 = sphi 0, %s60
      %s62 = sphi 0, %s60
      %s63 = sphi 0, %s62
      %s77 = sphi 0, %s63
      %s81 = sphi 0, %s81
      %s83 = sphi 0, %s81
      %s84 = sphi 0, %s83
      %s98 = sphi 0, %s84
      %s102 = sphi 0, %s102
      %s104 = sphi 0, %s102
      %s105 = sphi 0, %s104
      %s119 = sphi 0, %s105
      %s123 = sphi 0, %s123
      %s125 = sphi 0, %s123
      %s126 = sphi 0, %s125
      %s140 = sphi 0, %s126
      %s144 = sphi 0, %s144
      %s146 = sphi 0, %s144
      %s147 = sphi 0, %s146
      %s161 = sphi 0, %s147
      %s165 = sphi 0, %s165
      %s167 = sphi 0, %s165
      %s168 = sphi 0, %s167
      %s182 = sphi 0, %s168
      %s186 = sphi 0, %s186
      %s188 = sphi 0, %s186
      %s189 = sphi 0, %s188
      %s203 = sphi 0, %s189
      %s207 = sphi 0, %s207
      %s209 = sphi 0, %s207
      %s210 = sphi 0, %s209
      %s224 = sphi 0, %s210
      %s228 = sphi 0, %s228
      %s230 = sphi 0, %s228
      %s231 = sphi 0, %s230
      %s245 = sphi 0, %s231
      %s249 = sphi 0, %s249
      %s251 = sphi 0, %s249
      %s252 = sphi 0, %s251
      %s266 = sphi 0, %s252
      %s270 = sphi 0, %s270
      %s272 = sphi 0, %s270
      %s273 = sphi 0, %s272
      %s287 = sphi 0, %s273
      %s293 = sphi 0, %s295
      %s296 = sphi 0, %s293
      %s297 = sphi 0, %s296
      %s313 = sphi 0, %s297
      %s319 = sphi 0, %s321
      %s322 = sphi 0, %s319
      %s323 = sphi 0, %s322
      %s339 = sphi 0, %s323
    $region4: #{swin_forward.1} parent=1 // loop_header_branch
      %29 = sbr.rel (%p27) target = $region8
    $region5: #{swin_forward.1} parent=1 // loop_body
      %s31 = ssub.s32 %s26, 1
      %s32 = ssub.s32 %s26, 2
      %s33 = sadd.s32 %s26, 1
      %s34 = ssub.s32 %s26, %s33
      %p35 = scmp.eq.s32.totalorder %s34, 0
      %s37 = sadd.s32 %s36, 1
      %s38 = scalar_select %p35, %s36, %s37
      %p41 = pneg %p35
      %p42 = scmp.eq.s32.totalorder %s26, 1
      %p43 = por %p41, %p42
      %p44 = scmp.ne.s32.totalorder %s36, %s39
      %p45 = scmp.eq.s32.totalorder %s26, 0
      %p46 = por %p44, %p45
      %p47 = scmp.ne.s32.totalorder %s36, %s39
      %p48 = scmp.eq.s32.totalorder %s31, 1
      %p49 = por %p47, %p48
      %p50 = scmp.ne.s32.totalorder %s39, %s40
      %p51 = scmp.eq.s32.totalorder %s31, 0
      %p52 = por %p50, %p51
      %p53 = scmp.ne.s32.totalorder %s39, %s40
      %p54 = scmp.eq.s32.totalorder %s32, 1
      %p55 = por %p53, %p54
      %p57 = scmp.ne.s32.totalorder %s40, %s56
      %p58 = scmp.eq.s32.totalorder %s32, 0
      %p59 = por %p57, %p58
      %s61 = sadd.s32 %s60, 1
      %p64 = scmp.eq.s32.totalorder %s26, 1
      %p65 = scmp.ne.s32.totalorder %s60, %s62
      %p66 = scmp.eq.s32.totalorder %s26, 0
      %p67 = por %p65, %p66
      %p68 = scmp.ne.s32.totalorder %s60, %s62
      %p69 = scmp.eq.s32.totalorder %s31, 1
      %p70 = por %p68, %p69
      %p71 = scmp.ne.s32.totalorder %s62, %s63
      %p72 = scmp.eq.s32.totalorder %s31, 0
      %p73 = por %p71, %p72
      %p74 = scmp.ne.s32.totalorder %s62, %s63
      %p75 = scmp.eq.s32.totalorder %s32, 1
      %p76 = por %p74, %p75
      %p78 = scmp.ne.s32.totalorder %s63, %s77
      %p79 = scmp.eq.s32.totalorder %s32, 0
      %p80 = por %p78, %p79
      %s82 = sadd.s32 %s81, 1
      %p85 = scmp.eq.s32.totalorder %s26, 1
      %p86 = scmp.ne.s32.totalorder %s81, %s83
      %p87 = scmp.eq.s32.totalorder %s26, 0
      %p88 = por %p86, %p87
      %p89 = scmp.ne.s32.totalorder %s81, %s83
      %p90 = scmp.eq.s32.totalorder %s31, 1
      %p91 = por %p89, %p90
      %p92 = scmp.ne.s32.totalorder %s83, %s84
      %p93 = scmp.eq.s32.totalorder %s31, 0
      %p94 = por %p92, %p93
      %p95 = scmp.ne.s32.totalorder %s83, %s84
      %p96 = scmp.eq.s32.totalorder %s32, 1
      %p97 = por %p95, %p96
      %p99 = scmp.ne.s32.totalorder %s84, %s98
      %p100 = scmp.eq.s32.totalorder %s32, 0
      %p101 = por %p99, %p100
      %s103 = sadd.s32 %s102, 1
      %p106 = scmp.eq.s32.totalorder %s26, 1
      %p107 = scmp.ne.s32.totalorder %s102, %s104
      %p108 = scmp.eq.s32.totalorder %s26, 0
      %p109 = por %p107, %p108
      %p110 = scmp.ne.s32.totalorder %s102, %s104
      %p111 = scmp.eq.s32.totalorder %s31, 1
      %p112 = por %p110, %p111
      %p113 = scmp.ne.s32.totalorder %s104, %s105
      %p114 = scmp.eq.s32.totalorder %s31, 0
      %p115 = por %p113, %p114
      %p116 = scmp.ne.s32.totalorder %s104, %s105
      %p117 = scmp.eq.s32.totalorder %s32, 1
      %p118 = por %p116, %p117
      %p120 = scmp.ne.s32.totalorder %s105, %s119
      %p121 = scmp.eq.s32.totalorder %s32, 0
      %p122 = por %p120, %p121
      %s124 = sadd.s32 %s123, 1
      %p127 = scmp.eq.s32.totalorder %s26, 1
      %p128 = scmp.ne.s32.totalorder %s123, %s125
      %p129 = scmp.eq.s32.totalorder %s26, 0
      %p130 = por %p128, %p129
      %p131 = scmp.ne.s32.totalorder %s123, %s125
      %p132 = scmp.eq.s32.totalorder %s31, 1
      %p133 = por %p131, %p132
      %p134 = scmp.ne.s32.totalorder %s125, %s126
      %p135 = scmp.eq.s32.totalorder %s31, 0
      %p136 = por %p134, %p135
      %p137 = scmp.ne.s32.totalorder %s125, %s126
      %p138 = scmp.eq.s32.totalorder %s32, 1
      %p139 = por %p137, %p138
      %p141 = scmp.ne.s32.totalorder %s126, %s140
      %p142 = scmp.eq.s32.totalorder %s32, 0
      %p143 = por %p141, %p142
      %s145 = sadd.s32 %s144, 1
      %p148 = scmp.eq.s32.totalorder %s26, 1
      %p149 = scmp.ne.s32.totalorder %s144, %s146
      %p150 = scmp.eq.s32.totalorder %s26, 0
      %p151 = por %p149, %p150
      %p152 = scmp.ne.s32.totalorder %s144, %s146
      %p153 = scmp.eq.s32.totalorder %s31, 1
      %p154 = por %p152, %p153
      %p155 = scmp.ne.s32.totalorder %s146, %s147
      %p156 = scmp.eq.s32.totalorder %s31, 0
      %p157 = por %p155, %p156
      %p158 = scmp.ne.s32.totalorder %s146, %s147
      %p159 = scmp.eq.s32.totalorder %s32, 1
      %p160 = por %p158, %p159
      %p162 = scmp.ne.s32.totalorder %s147, %s161
      %p163 = scmp.eq.s32.totalorder %s32, 0
      %p164 = por %p162, %p163
      %s166 = sadd.s32 %s165, 1
      %p169 = scmp.eq.s32.totalorder %s26, 1
      %p170 = scmp.ne.s32.totalorder %s165, %s167
      %p171 = scmp.eq.s32.totalorder %s26, 0
      %p172 = por %p170, %p171
      %p173 = scmp.ne.s32.totalorder %s165, %s167
      %p174 = scmp.eq.s32.totalorder %s31, 1
      %p175 = por %p173, %p174
      %p176 = scmp.ne.s32.totalorder %s167, %s168
      %p177 = scmp.eq.s32.totalorder %s31, 0
      %p178 = por %p176, %p177
      %p179 = scmp.ne.s32.totalorder %s167, %s168
      %p180 = scmp.eq.s32.totalorder %s32, 1
      %p181 = por %p179, %p180
      %p183 = scmp.ne.s32.totalorder %s168, %s182
      %p184 = scmp.eq.s32.totalorder %s32, 0
      %p185 = por %p183, %p184
      %s187 = sadd.s32 %s186, 1
      %p190 = scmp.eq.s32.totalorder %s26, 1
      %p191 = scmp.ne.s32.totalorder %s186, %s188
      %p192 = scmp.eq.s32.totalorder %s26, 0
      %p193 = por %p191, %p192
      %p194 = scmp.ne.s32.totalorder %s186, %s188
      %p195 = scmp.eq.s32.totalorder %s31, 1
      %p196 = por %p194, %p195
      %p197 = scmp.ne.s32.totalorder %s188, %s189
      %p198 = scmp.eq.s32.totalorder %s31, 0
      %p199 = por %p197, %p198
      %p200 = scmp.ne.s32.totalorder %s188, %s189
      %p201 = scmp.eq.s32.totalorder %s32, 1
      %p202 = por %p200, %p201
      %p204 = scmp.ne.s32.totalorder %s189, %s203
      %p205 = scmp.eq.s32.totalorder %s32, 0
      %p206 = por %p204, %p205
      %s208 = sadd.s32 %s207, 1
      %p211 = scmp.eq.s32.totalorder %s26, 1
      %p212 = scmp.ne.s32.totalorder %s207, %s209
      %p213 = scmp.eq.s32.totalorder %s26, 0
      %p214 = por %p212, %p213
      %p215 = scmp.ne.s32.totalorder %s207, %s209
      %p216 = scmp.eq.s32.totalorder %s31, 1
      %p217 = por %p215, %p216
      %p218 = scmp.ne.s32.totalorder %s209, %s210
      %p219 = scmp.eq.s32.totalorder %s31, 0
      %p220 = por %p218, %p219
      %p221 = scmp.ne.s32.totalorder %s209, %s210
      %p222 = scmp.eq.s32.totalorder %s32, 1
      %p223 = por %p221, %p222
      %p225 = scmp.ne.s32.totalorder %s210, %s224
      %p226 = scmp.eq.s32.totalorder %s32, 0
      %p227 = por %p225, %p226
      %s229 = sadd.s32 %s228, 1
      %p232 = scmp.eq.s32.totalorder %s26, 1
      %p233 = scmp.ne.s32.totalorder %s228, %s230
      %p234 = scmp.eq.s32.totalorder %s26, 0
      %p235 = por %p233, %p234
      %p236 = scmp.ne.s32.totalorder %s228, %s230
      %p237 = scmp.eq.s32.totalorder %s31, 1
      %p238 = por %p236, %p237
      %p239 = scmp.ne.s32.totalorder %s230, %s231
      %p240 = scmp.eq.s32.totalorder %s31, 0
      %p241 = por %p239, %p240
      %p242 = scmp.ne.s32.totalorder %s230, %s231
      %p243 = scmp.eq.s32.totalorder %s32, 1
      %p244 = por %p242, %p243
      %p246 = scmp.ne.s32.totalorder %s231, %s245
      %p247 = scmp.eq.s32.totalorder %s32, 0
      %p248 = por %p246, %p247
      %s250 = sadd.s32 %s249, 1
      %p253 = scmp.eq.s32.totalorder %s26, 1
      %p254 = scmp.ne.s32.totalorder %s249, %s251
      %p255 = scmp.eq.s32.totalorder %s26, 0
      %p256 = por %p254, %p255
      %p257 = scmp.ne.s32.totalorder %s249, %s251
      %p258 = scmp.eq.s32.totalorder %s31, 1
      %p259 = por %p257, %p258
      %p260 = scmp.ne.s32.totalorder %s251, %s252
      %p261 = scmp.eq.s32.totalorder %s31, 0
      %p262 = por %p260, %p261
      %p263 = scmp.ne.s32.totalorder %s251, %s252
      %p264 = scmp.eq.s32.totalorder %s32, 1
      %p265 = por %p263, %p264
      %p267 = scmp.ne.s32.totalorder %s252, %s266
      %p268 = scmp.eq.s32.totalorder %s32, 0
      %p269 = por %p267, %p268
      %s271 = sadd.s32 %s270, 1
      %p274 = scmp.eq.s32.totalorder %s26, 1
      %p275 = scmp.ne.s32.totalorder %s270, %s272
      %p276 = scmp.eq.s32.totalorder %s26, 0
      %p277 = por %p275, %p276
      %p278 = scmp.ne.s32.totalorder %s270, %s272
      %p279 = scmp.eq.s32.totalorder %s31, 1
      %p280 = por %p278, %p279
      %p281 = scmp.ne.s32.totalorder %s272, %s273
      %p282 = scmp.eq.s32.totalorder %s31, 0
      %p283 = por %p281, %p282
      %p284 = scmp.ne.s32.totalorder %s272, %s273
      %p285 = scmp.eq.s32.totalorder %s32, 1
      %p286 = por %p284, %p285
      %p288 = scmp.ne.s32.totalorder %s273, %s287
      %p289 = scmp.eq.s32.totalorder %s32, 0
      %p290 = por %p288, %p289
      %s291 = ssub.s32 %s26, %s33
      %p292 = scmp.eq.s32.totalorder %s291, 0
      %s294 = sadd.s32 %s293, 1
      %s295 = scalar_select %p292, %s293, %s294
      %p298 = pneg %p292
      %p299 = scmp.eq.s32.totalorder %s26, 1
      %p300 = por %p298, %p299
      %p301 = scmp.ne.s32.totalorder %s293, %s296
      %p302 = scmp.eq.s32.totalorder %s26, 0
      %p303 = por %p301, %p302
      %p304 = scmp.ne.s32.totalorder %s293, %s296
      %p305 = scmp.eq.s32.totalorder %s31, 1
      %p306 = por %p304, %p305
      %p307 = scmp.ne.s32.totalorder %s296, %s297
      %p308 = scmp.eq.s32.totalorder %s31, 0
      %p309 = por %p307, %p308
      %p310 = scmp.ne.s32.totalorder %s296, %s297
      %p311 = scmp.eq.s32.totalorder %s32, 1
      %p312 = por %p310, %p311
      %p314 = scmp.ne.s32.totalorder %s297, %s313
      %p315 = scmp.eq.s32.totalorder %s32, 0
      %p316 = por %p314, %p315
      %s317 = ssub.s32 %s26, %s33
      %p318 = scmp.eq.s32.totalorder %s317, 0
      %s320 = sadd.s32 %s319, 1
      %s321 = scalar_select %p318, %s319, %s320
      %p324 = pneg %p318
      %p325 = scmp.eq.s32.totalorder %s26, 1
      %p326 = por %p324, %p325
      %p327 = scmp.ne.s32.totalorder %s319, %s322
      %p328 = scmp.eq.s32.totalorder %s26, 0
      %p329 = por %p327, %p328
      %p330 = scmp.ne.s32.totalorder %s319, %s322
      %p331 = scmp.eq.s32.totalorder %s31, 1
      %p332 = por %p330, %p331
      %p333 = scmp.ne.s32.totalorder %s322, %s323
      %p334 = scmp.eq.s32.totalorder %s31, 0
      %p335 = por %p333, %p334
      %p336 = scmp.ne.s32.totalorder %s322, %s323
      %p337 = scmp.eq.s32.totalorder %s32, 1
      %p338 = por %p336, %p337
      %p340 = scmp.ne.s32.totalorder %s323, %s339
      %p341 = scmp.eq.s32.totalorder %s32, 0
      %p342 = por %p340, %p341
      %p343 = scmp.le.s32.totalorder 1, %s26
      %p344 = scmp.lt.s32.totalorder %s26, 3
      %p345 = pnand %p343, %p344
      %p346 = pneg %p345
      // Predicated region
      $region9: #{swin_forward.1} parent=5 // pred_check
        _
      $region10: #{swin_forward.1} parent=5 // pred_check_branch
        %348 = sbr.rel (%p345) target = $region12
      $region11: #{swin_forward.1} parent=5 // pred_region
        %s349 = ssub.s32 %s26, 1
        // Predicated region
        $region13: #{swin_forward.1} parent=11 // pred_check
          %p350 = pneg %p73
        $region14: #{swin_forward.1} parent=11 // pred_check_branch
          %352 = sbr.rel (%p350) target = $region16
        $region15: #{swin_forward.1} parent=11 // pred_region
          _
        $region16: #{swin_forward.1} parent=11 // pred_fallthru
          _
        // Predicated region
        $region17: #{swin_forward.1} parent=11 // pred_check
          %p353 = pneg %p94
        $region18: #{swin_forward.1} parent=11 // pred_check_branch
          %355 = sbr.rel (%p353) target = $region20
        $region19: #{swin_forward.1} parent=11 // pred_region
          _
        $region20: #{swin_forward.1} parent=11 // pred_fallthru
          _
        // Predicated region
        $region21: #{swin_forward.1} parent=11 // pred_check
          %p356 = pneg %p115
        $region22: #{swin_forward.1} parent=11 // pred_check_branch
          %358 = sbr.rel (%p356) target = $region24
        $region23: #{swin_forward.1} parent=11 // pred_region
          _
        $region24: #{swin_forward.1} parent=11 // pred_fallthru
          _
        // Predicated region
        $region25: #{swin_forward.1} parent=11 // pred_check
          %p359 = pneg %p136
        $region26: #{swin_forward.1} parent=11 // pred_check_branch
          %361 = sbr.rel (%p359) target = $region28
        $region27: #{swin_forward.1} parent=11 // pred_region
          _
        $region28: #{swin_forward.1} parent=11 // pred_fallthru
          _
        // Predicated region
        $region29: #{swin_forward.1} parent=11 // pred_check
          %p362 = pneg %p157
        $region30: #{swin_forward.1} parent=11 // pred_check_branch
          %364 = sbr.rel (%p362) target = $region32
        $region31: #{swin_forward.1} parent=11 // pred_region
          _
        $region32: #{swin_forward.1} parent=11 // pred_fallthru
          _
        // Predicated region
        $region33: #{swin_forward.1} parent=11 // pred_check
          %p365 = pneg %p178
        $region34: #{swin_forward.1} parent=11 // pred_check_branch
          %367 = sbr.rel (%p365) target = $region36
        $region35: #{swin_forward.1} parent=11 // pred_region
          _
        $region36: #{swin_forward.1} parent=11 // pred_fallthru
          _
        // Predicated region
        $region37: #{swin_forward.1} parent=11 // pred_check
          %p368 = pneg %p199
        $region38: #{swin_forward.1} parent=11 // pred_check_branch
          %370 = sbr.rel (%p368) target = $region40
        $region39: #{swin_forward.1} parent=11 // pred_region
          _
        $region40: #{swin_forward.1} parent=11 // pred_fallthru
          _
        // Predicated region
        $region41: #{swin_forward.1} parent=11 // pred_check
          %p371 = pneg %p220
        $region42: #{swin_forward.1} parent=11 // pred_check_branch
          %373 = sbr.rel (%p371) target = $region44
        $region43: #{swin_forward.1} parent=11 // pred_region
          _
        $region44: #{swin_forward.1} parent=11 // pred_fallthru
          _
        // Predicated region
        $region45: #{swin_forward.1} parent=11 // pred_check
          %p374 = pneg %p241
        $region46: #{swin_forward.1} parent=11 // pred_check_branch
          %376 = sbr.rel (%p374) target = $region48
        $region47: #{swin_forward.1} parent=11 // pred_region
          _
        $region48: #{swin_forward.1} parent=11 // pred_fallthru
          _
        // Predicated region
        $region49: #{swin_forward.1} parent=11 // pred_check
          %p377 = pneg %p262
        $region50: #{swin_forward.1} parent=11 // pred_check_branch
          %379 = sbr.rel (%p377) target = $region52
        $region51: #{swin_forward.1} parent=11 // pred_region
          _
        $region52: #{swin_forward.1} parent=11 // pred_fallthru
          _
        // Predicated region
        $region53: #{swin_forward.1} parent=11 // pred_check
          %p380 = pneg %p283
        $region54: #{swin_forward.1} parent=11 // pred_check_branch
          %382 = sbr.rel (%p380) target = $region56
        $region55: #{swin_forward.1} parent=11 // pred_region
          _
        $region56: #{swin_forward.1} parent=11 // pred_fallthru
          _
      $region12: #{swin_forward.1} parent=5 // pred_fallthru
        _
      %p383 = scmp.lt.s32.totalorder %s26, 2
      // Predicated region
      $region57: #{swin_forward.1} parent=5 // pred_check
        %p384 = pneg %p383
      $region58: #{swin_forward.1} parent=5 // pred_check_branch
        %386 = sbr.rel (%p384) target = $region60
      $region59: #{swin_forward.1} parent=5 // pred_region
        // Predicated region
        $region61: #{swin_forward.1} parent=59 // pred_check
          %p387 = pneg %p46
        $region62: #{swin_forward.1} parent=59 // pred_check_branch
          %389 = sbr.rel (%p387) target = $region64
        $region63: #{swin_forward.1} parent=59 // pred_region
          %p390 = scmp.lt.s32.totalorder %s26, 1
          %s391 = scalar_select %p390, %s26, 1
          %s392 = smul.addr %s391, 8
          %s393 = smul.addr %s392, 4
          %s394 = scalar_lea.vmem %s0, %s393
        $region64: #{swin_forward.1} parent=59 // pred_fallthru
          _
      $region60: #{swin_forward.1} parent=5 // pred_fallthru
        _
      %p395 = scmp.le.s32.totalorder 1, %s26
      %p396 = scmp.lt.s32.totalorder %s26, 3
      %p397 = pnand %p395, %p396
      %p398 = pneg %p397
      // Predicated region
      $region65: #{swin_forward.1} parent=5 // pred_check
        _
      $region66: #{swin_forward.1} parent=5 // pred_check_branch
        %400 = sbr.rel (%p397) target = $region68
      $region67: #{swin_forward.1} parent=5 // pred_region
        %s401 = ssub.s32 %s26, 1
        %p402 = scmp.lt.s32.totalorder %s31, 1
        %s403 = scalar_select %p402, %s31, 1
        %s404 = smul.addr %s403, 8
        %s405 = smul.addr %s404, 4
        %s406 = scalar_lea.vmem %s0, %s405
        %p407 = pneg %p52
        %p408 = pneg %p49
        %p409 = pneg %p73
        %p410 = pneg %p70
        %p411 = pneg %p94
        %p412 = pneg %p91
        %p413 = pneg %p115
        %p414 = pneg %p112
        %p415 = pneg %p136
        %p416 = pneg %p133
        %p417 = pneg %p157
        %p418 = pneg %p154
        %p419 = pneg %p178
        %p420 = pneg %p175
        %p421 = pneg %p199
        %p422 = pneg %p196
        %p423 = pneg %p220
        %p424 = pneg %p217
        %p425 = pneg %p241
        %p426 = pneg %p238
        %p427 = pneg %p262
        %p428 = pneg %p259
        %p429 = pneg %p283
        %p430 = pneg %p280
        %p431 = pneg %p309
        %p432 = pneg %p306
        %s433 = sand.u32 %s296, 1
        %s434 = scalar_lea.sflag [#allocation3], %s433
        %s435 = sand.u32 %s296, 1
        %s436 = scalar_lea.vmem [#allocation2], %s435
        %p437 = pneg %p335
        %p438 = pneg %p332
        %s439 = sand.u32 %s322, 1
        %s440 = scalar_lea.sflag [#allocation5], %s439
        %s441 = sand.u32 %s322, 1
        %s442 = scalar_lea.vmem [#allocation4], %s441
        %p443 = scmp.lt.s32.totalorder %s31, 1
        %s444 = scalar_select %p443, %s31, 1
        %s445 = smul.addr %s444, 8
        %s446 = smul.addr %s445, 4
        %s447 = scalar_lea.vmem %s0, %s446
        %v449 = vld [vmem:[%s447] sm:$0xf]
        %v450 = vld [vmem:[%s447 + $0x4] sm:$0xf]
        %v451 = vld [vmem:[%s447 + $0x8] sm:$0xf]
        %v452 = vld [vmem:[%s447 + $0xc] sm:$0xf]
        %v453 = vld [vmem:[%s447 + $0x10] sm:$0xf]
        %v454 = vld [vmem:[%s447 + $0x14] sm:$0xf]
        %v455 = vld [vmem:[%s447 + $0x18] sm:$0xf]
        %v456 = vld [vmem:[%s447 + $0x1c] sm:$0xf]
        %v457 = vld [vmem:[%s2] sm:$0xf]
        %v458 = vld [vmem:[%s2 + $0x4] sm:$0xf]
        %v459 = vld [vmem:[%s2 + $0x8] sm:$0xf]
        %v460 = vld [vmem:[%s2 + $0xc] sm:$0xf]
        %v461 = vld [vmem:[%s2 + $0x10] sm:$0xf]
        %v462 = vld [vmem:[%s2 + $0x14] sm:$0xf]
        %v463 = vld [vmem:[%s1] sm:$0x1]
        %v464 = vlaneseq
        %v465 = vshrl.u32 %v464, 7
        %v466 = vsub.s32 0, %v465
        %v467 = vrot.slane %v463, %v466
        %v476 = vunpack.c.l.b16 %v449
        %v477 = vunpack.c.l.b16 %v450
        %v478 = vunpack.c.l.b16 %v451
        %v479 = vunpack.c.l.b16 %v452
        %v480 = vunpack.c.l.b16 %v453
        %v481 = vunpack.c.l.b16 %v454
        %v482 = vunpack.c.l.b16 %v455
        %v483 = vunpack.c.l.b16 %v456
        %v484 = vpack.c.b16 %v477, %v476
        %v485 = vpack.c.b16 %v479, %v478
        %v486 = vpack.c.b16 %v481, %v480
        %v487 = vpack.c.b16 %v483, %v482
        %v494 = vunpack.c.l.b16 %v457
        %v495 = vunpack.c.l.b16 %v458
        %v496 = vunpack.c.l.b16 %v459
        %v497 = vunpack.c.l.b16 %v460
        %v498 = vunpack.c.l.b16 %v461
        %v499 = vunpack.c.l.b16 %v462
        %v500 = vpack.c.b16 %v495, %v494
        %v501 = vpack.c.b16 %v497, %v496
        %v502 = vpack.c.b16 %v499, %v498
        %vm506 = vcmask 392192
        %v508 = vsel %vm506, %v484, 0
        %v511 = vsel %vm506, %v485, 0
        %v514 = vsel %vm506, %v486, 0
        %v517 = vsel %vm506, %v487, 0
        %519 = vmatprep.subr.bf16.mxu0 0
        %520 = vmatpush1.bf16.msra.mxu0 %v500
        %521 = vmatprep.subr.bf16.mxu0 0
        %522 = vmatpush1.bf16.msra.mxu0 %v501
        %523 = vmatprep.subr.bf16.mxu0 0
        %524 = vmatpush1.bf16.msra.mxu0 %v502
        %525 = vmatprep.subr.bf16.mxu0 0
        %526 = vmatpush1.bf16.msra.mxu0 0
        %527 = vmatprep.subr.bf16.mxu0 0
        %528 = vmatpush1.bf16.msra.mxu0 0
        %529 = vmatprep.subr.bf16.mxu0 0
        %530 = vmatpush1.bf16.msra.mxu0 0
        %531 = vmatprep.subr.bf16.mxu0 0
        %532 = vmatpush1.bf16.msra.mxu0 0
        %533 = vmatprep.subr.bf16.mxu0 0
        %534 = vmatpush1.bf16.msra.mxu0 0
        %535 = vmatprep.subr.bf16.mxu0 0
        %536 = vmatpush1.bf16.msra.mxu0 0
        %537 = vmatprep.subr.bf16.mxu0 0
        %538 = vmatpush1.bf16.msra.mxu0 0
        %539 = vmatprep.subr.bf16.mxu0 0
        %540 = vmatpush1.bf16.msra.mxu0 0
        %541 = vmatprep.subr.bf16.mxu0 0
        %542 = vmatpush1.bf16.msra.mxu0 0
        %543 = vmatprep.subr.bf16.mxu0 0
        %544 = vmatpush1.bf16.msra.mxu0 0
        %545 = vmatprep.subr.bf16.mxu0 0
        %546 = vmatpush1.bf16.msra.mxu0 0
        %547 = vmatprep.subr.bf16.mxu0 0
        %548 = vmatpush1.bf16.msra.mxu0 0
        %549 = vmatprep.subr.bf16.mxu0 0
        %550 = vmatpush1.bf16.msra.mxu0 0
        %551 = vmatprep.mubr.bf16.mxu0 0
        %552 = vmatmul.mubr.bf16.gmra.mrb[0].mxu0 %v508
        %v553 = vpop.f32.mrb[0].mxu0
        %v554 = vadd.f32 %v467, %v553
        %v555 = vpop.f32.mrb[0].mxu0
        %v556 = vpop.f32.mrb[0].mxu0
        %v557 = vadd.f32 %v467, %v556
        %v558 = vpop.f32.mrb[0].mxu0
        %559 = vmatprep.mubr.bf16.mxu0 0
        %560 = vmatmul.mubr.bf16.gmra.mrb[0].mxu0 %v511
        %v561 = vpop.f32.mrb[0].mxu0
        %v562 = vadd.f32 %v467, %v561
        %v563 = vpop.f32.mrb[0].mxu0
        %v564 = vpop.f32.mrb[0].mxu0
        %v565 = vadd.f32 %v467, %v564
        %v566 = vpop.f32.mrb[0].mxu0
        %567 = vmatprep.mubr.bf16.mxu0 0
        %568 = vmatmul.mubr.bf16.gmra.mrb[0].mxu0 %v514
        %v569 = vpop.f32.mrb[0].mxu0
        %v570 = vadd.f32 %v467, %v569
        %v571 = vpop.f32.mrb[0].mxu0
        %v572 = vpop.f32.mrb[0].mxu0
        %v573 = vadd.f32 %v467, %v572
        %v574 = vpop.f32.mrb[0].mxu0
        %575 = vmatprep.mubr.bf16.mxu0 0
        %576 = vmatmul.mubr.bf16.gmra.mrb[0].mxu0 %v517
        %v577 = vpop.f32.mrb[0].mxu0
        %v578 = vadd.f32 %v467, %v577
        %v579 = vpop.f32.mrb[0].mxu0
        %v580 = vpop.f32.mrb[0].mxu0
        %v581 = vadd.f32 %v467, %v580
        %v582 = vpop.f32.mrb[0].mxu0
        %583 = vdwg.mxu0
        %v584 = vld [vmem:[%s1 + $0x1] sm:$0x1]
        %v585 = vld [vmem:[%s1 + $0x2] sm:$0x1]
        %vm586 = vcmask 130048
        %v587 = vsel %vm586, %v554, 0.0
        %588 = vadd.xlane.f32.xlu0 %v587
        %v589 = vpop.xlane.xlu0 %588
        %v590 = vsel %vm586, %v557, 0.0
        %591 = vadd.xlane.f32.xlu0 %v590
        %v592 = vpop.xlane.xlu0 %591
        %v593 = vsel %vm586, %v562, 0.0
        %594 = vadd.xlane.f32.xlu0 %v593
        %v595 = vpop.xlane.xlu0 %594
        %v596 = vsel %vm586, %v565, 0.0
        %597 = vadd.xlane.f32.xlu0 %v596
        %v598 = vpop.xlane.xlu0 %597
        %v599 = vsel %vm586, %v570, 0.0
        %600 = vadd.xlane.f32.xlu0 %v599
        %v601 = vpop.xlane.xlu0 %600
        %v602 = vsel %vm586, %v573, 0.0
        %603 = vadd.xlane.f32.xlu0 %v602
        %v604 = vpop.xlane.xlu0 %603
        %v605 = vsel %vm586, %v578, 0.0
        %606 = vadd.xlane.f32.xlu0 %v605
        %v607 = vpop.xlane.xlu0 %606
        %v608 = vsel %vm586, %v581, 0.0
        %609 = vadd.xlane.f32.xlu0 %v608
        %v610 = vpop.xlane.xlu0 %609
        %v611 = vrcp.pop 16.0
        %v612 = vmul.f32 %v589, %v611
        %v613 = vmul.f32 %v592, %v611
        %v614 = vmul.f32 %v595, %v611
        %v615 = vmul.f32 %v598, %v611
        %v616 = vmul.f32 %v601, %v611
        %v617 = vmul.f32 %v604, %v611
        %v618 = vmul.f32 %v607, %v611
        %v619 = vmul.f32 %v610, %v611
        %v620 = vsub.f32 %v554, %v612
        %v621 = vsub.f32 %v557, %v613
        %v622 = vsub.f32 %v562, %v614
        %v623 = vsub.f32 %v565, %v615
        %v624 = vsub.f32 %v570, %v616
        %v625 = vsub.f32 %v573, %v617
        %v626 = vsub.f32 %v578, %v618
        %v627 = vsub.f32 %v581, %v619
        %v628 = vmul.f32 %v620, %v620
        %v629 = vmul.f32 %v621, %v621
        %v630 = vmul.f32 %v622, %v622
        %v631 = vmul.f32 %v623, %v623
        %v632 = vmul.f32 %v624, %v624
        %v633 = vmul.f32 %v625, %v625
        %v634 = vmul.f32 %v626, %v626
        %v635 = vmul.f32 %v627, %v627
        %v636 = vsel %vm586, %v628, 0.0
        %637 = vadd.xlane.f32.xlu0 %v636
        %v638 = vpop.xlane.xlu0 %637
        %v639 = vsel %vm586, %v629, 0.0
        %640 = vadd.xlane.f32.xlu0 %v639
        %v641 = vpop.xlane.xlu0 %640
        %v642 = vsel %vm586, %v630, 0.0
        %643 = vadd.xlane.f32.xlu0 %v642
        %v644 = vpop.xlane.xlu0 %643
        %v645 = vsel %vm586, %v631, 0.0
        %646 = vadd.xlane.f32.xlu0 %v645
        %v647 = vpop.xlane.xlu0 %646
        %v648 = vsel %vm586, %v632, 0.0
        %649 = vadd.xlane.f32.xlu0 %v648
        %v650 = vpop.xlane.xlu0 %649
        %v651 = vsel %vm586, %v633, 0.0
        %652 = vadd.xlane.f32.xlu0 %v651
        %v653 = vpop.xlane.xlu0 %652
        %v654 = vsel %vm586, %v634, 0.0
        %655 = vadd.xlane.f32.xlu0 %v654
        %v656 = vpop.xlane.xlu0 %655
        %v657 = vsel %vm586, %v635, 0.0
        %658 = vadd.xlane.f32.xlu0 %v657
        %v659 = vpop.xlane.xlu0 %658
        %v660 = vmul.f32 %v638, %v611
        %v661 = vmul.f32 %v641, %v611
        %v662 = vmul.f32 %v644, %v611
        %v663 = vmul.f32 %v647, %v611
        %v664 = vmul.f32 %v650, %v611
        %v665 = vmul.f32 %v653, %v611
        %v666 = vmul.f32 %v656, %v611
        %v667 = vmul.f32 %v659, %v611
        %v668 = vadd.f32 %v660, 1e-05
        %v669 = vadd.f32 %v661, 1e-05
        %v670 = vadd.f32 %v662, 1e-05
        %v671 = vadd.f32 %v663, 1e-05
        %v672 = vadd.f32 %v664, 1e-05
        %v673 = vadd.f32 %v665, 1e-05
        %v674 = vadd.f32 %v666, 1e-05
        %v675 = vadd.f32 %v667, 1e-05
        %v676 = vrsqrt.pop %v668
        %v677 = vrsqrt.pop %v669
        %v678 = vrsqrt.pop %v670
        %v679 = vrsqrt.pop %v671
        %v680 = vrsqrt.pop %v672
        %v681 = vrsqrt.pop %v673
        %v682 = vrsqrt.pop %v674
        %v683 = vrsqrt.pop %v675
        %v684 = vmul.f32 %v620, %v676
        %v685 = vmul.f32 %v621, %v677
        %v686 = vmul.f32 %v622, %v678
        %v687 = vmul.f32 %v623, %v679
        %v688 = vmul.f32 %v624, %v680
        %v689 = vmul.f32 %v625, %v681
        %v690 = vmul.f32 %v626, %v682
        %v691 = vmul.f32 %v627, %v683
        %v692 = vlaneseq
        %v693 = vshrl.u32 %v692, 7
        %v694 = vsub.s32 0, %v693
        %v695 = vrot.slane %v584, %v694
        %v696 = vmul.f32 %v684, %v695
        %v697 = vmul.f32 %v685, %v695
        %v698 = vmul.f32 %v686, %v695
        %v699 = vmul.f32 %v687, %v695
        %v700 = vmul.f32 %v688, %v695
        %v701 = vmul.f32 %v689, %v695
        %v702 = vmul.f32 %v690, %v695
        %v703 = vmul.f32 %v691, %v695
        %v704 = vlaneseq
        %v705 = vshrl.u32 %v704, 7
        %v706 = vsub.s32 0, %v705
        %v707 = vrot.slane %v585, %v706
        %v708 = vadd.f32 %v696, %v707
        %v709 = vadd.f32 %v697, %v707
        %v710 = vadd.f32 %v698, %v707
        %v711 = vadd.f32 %v699, %v707
        %v712 = vadd.f32 %v700, %v707
        %v713 = vadd.f32 %v701, %v707
        %v714 = vadd.f32 %v702, %v707
        %v715 = vadd.f32 %v703, %v707
        %v716 = vld [vmem:[%s1 + $0x3] sm:$0x1]
        %v717 = vld [vmem:[%s1 + $0x4] sm:$0x1]
        %v718 = vld [vmem:[%s1 + $0x5] sm:$0x1]
        %v719 = vld [vmem:[%s1 + $0x6] sm:$0x1]
        %v720 = vld [vmem:[%s1 + $0x7] sm:$0x1]
        %v721 = vld [vmem:[%s1 + $0x8] sm:$0x1]
        %v722 = vld [vmem:[%s1 + $0x9] sm:$0x1]
        %v723 = vld [vmem:[%s1 + $0xa] sm:$0x1]
        %v724 = vld [vmem:[%s3] sm:$0xf]
        %v725 = vld [vmem:[%s3 + $0x4] sm:$0xf]
        %v726 = vld [vmem:[%s4] sm:$0xf]
        %v727 = vld [vmem:[%s4 + $0x4] sm:$0xf]
        %v728 = vld [vmem:[%s4 + $0x8] sm:$0xf]
        %v729 = vld [vmem:[%s4 + $0xc] sm:$0xf]
        %v730 = vld [vmem:[%s4 + $0x10] sm:$0xf]
        %v731 = vld [vmem:[%s4 + $0x14] sm:$0xf]
        %v732 = vld [vmem:[%s4 + $0x18] sm:$0xf]
        %v733 = vld [vmem:[%s4 + $0x1c] sm:$0xf]
        %v734 = vsel %vm586, %v708, 0.0
        %735 = vadd.xlane.f32.xlu0 %v734
        %v736 = vpop.xlane.xlu0 %735
        %v737 = vsel %vm586, %v709, 0.0
        %738 = vadd.xlane.f32.xlu0 %v737
        %v739 = vpop.xlane.xlu0 %738
        %v740 = vsel %vm586, %v710, 0.0
        %741 = vadd.xlane.f32.xlu0 %v740
        %v742 = vpop.xlane.xlu0 %741
        %v743 = vsel %vm586, %v711, 0.0
        %744 = vadd.xlane.f32.xlu0 %v743
        %v745 = vpop.xlane.xlu0 %744
        %v746 = vsel %vm586, %v712, 0.0
        %747 = vadd.xlane.f32.xlu0 %v746
        %v748 = vpop.xlane.xlu0 %747
        %v749 = vsel %vm586, %v713, 0.0
        %750 = vadd.xlane.f32.xlu0 %v749
        %v751 = vpop.xlane.xlu0 %750
        %v752 = vsel %vm586, %v714, 0.0
        %753 = vadd.xlane.f32.xlu0 %v752
        %v754 = vpop.xlane.xlu0 %753
        %v755 = vsel %vm586, %v715, 0.0
        %756 = vadd.xlane.f32.xlu0 %v755
        %v757 = vpop.xlane.xlu0 %756
        %v758 = vmul.f32 %v736, %v611
        %v759 = vmul.f32 %v739, %v611
        %v760 = vmul.f32 %v742, %v611
        %v761 = vmul.f32 %v745, %v611
        %v762 = vmul.f32 %v748, %v611
        %v763 = vmul.f32 %v751, %v611
        %v764 = vmul.f32 %v754, %v611
        %v765 = vmul.f32 %v757, %v611
        %v766 = vsub.f32 %v708, %v758
        %v767 = vsub.f32 %v709, %v759
        %v768 = vsub.f32 %v710, %v760
        %v769 = vsub.f32 %v711, %v761
        %v770 = vsub.f32 %v712, %v762
        %v771 = vsub.f32 %v713, %v763
        %v772 = vsub.f32 %v714, %v764
        %v773 = vsub.f32 %v715, %v765
        %v774 = vmul.f32 %v766, %v766
        %v775 = vmul.f32 %v767, %v767
        %v776 = vmul.f32 %v768, %v768
        %v777 = vmul.f32 %v769, %v769
        %v778 = vmul.f32 %v770, %v770
        %v779 = vmul.f32 %v771, %v771
        %v780 = vmul.f32 %v772, %v772
        %v781 = vmul.f32 %v773, %v773
        %v782 = vsel %vm586, %v774, 0.0
        %783 = vadd.xlane.f32.xlu0 %v782
        %v784 = vpop.xlane.xlu0 %783
        %v785 = vsel %vm586, %v775, 0.0
        %786 = vadd.xlane.f32.xlu0 %v785
        %v787 = vpop.xlane.xlu0 %786
        %v788 = vsel %vm586, %v776, 0.0
        %789 = vadd.xlane.f32.xlu0 %v788
        %v790 = vpop.xlane.xlu0 %789
        %v791 = vsel %vm586, %v777, 0.0
        %792 = vadd.xlane.f32.xlu0 %v791
        %v793 = vpop.xlane.xlu0 %792
        %v794 = vsel %vm586, %v778, 0.0
        %795 = vadd.xlane.f32.xlu0 %v794
        %v796 = vpop.xlane.xlu0 %795
        %v797 = vsel %vm586, %v779, 0.0
        %798 = vadd.xlane.f32.xlu0 %v797
        %v799 = vpop.xlane.xlu0 %798
        %v800 = vsel %vm586, %v780, 0.0
        %801 = vadd.xlane.f32.xlu0 %v800
        %v802 = vpop.xlane.xlu0 %801
        %v803 = vsel %vm586, %v781, 0.0
        %804 = vadd.xlane.f32.xlu0 %v803
        %v805 = vpop.xlane.xlu0 %804
        %v806 = vmul.f32 %v784, %v611
        %v807 = vmul.f32 %v787, %v611
        %v808 = vmul.f32 %v790, %v611
        %v809 = vmul.f32 %v793, %v611
        %v810 = vmul.f32 %v796, %v611
        %v811 = vmul.f32 %v799, %v611
        %v812 = vmul.f32 %v802, %v611
        %v813 = vmul.f32 %v805, %v611
        %v814 = vadd.f32 %v806, 1e-05
        %v815 = vadd.f32 %v807, 1e-05
        %v816 = vadd.f32 %v808, 1e-05
        %v817 = vadd.f32 %v809, 1e-05
        %v818 = vadd.f32 %v810, 1e-05
        %v819 = vadd.f32 %v811, 1e-05
        %v820 = vadd.f32 %v812, 1e-05
        %v821 = vadd.f32 %v813, 1e-05
        %v822 = vrsqrt.pop %v814
        %v823 = vrsqrt.pop %v815
        %v824 = vrsqrt.pop %v816
        %v825 = vrsqrt.pop %v817
        %v826 = vrsqrt.pop %v818
        %v827 = vrsqrt.pop %v819
        %v828 = vrsqrt.pop %v820
        %v829 = vrsqrt.pop %v821
        %v830 = vmul.f32 %v766, %v822
        %v831 = vmul.f32 %v767, %v823
        %v832 = vmul.f32 %v768, %v824
        %v833 = vmul.f32 %v769, %v825
        %v834 = vmul.f32 %v770, %v826
        %v835 = vmul.f32 %v771, %v827
        %v836 = vmul.f32 %v772, %v828
        %v837 = vmul.f32 %v773, %v829
        %v838 = vlaneseq
        %v839 = vshrl.u32 %v838, 7
        %v840 = vsub.s32 0, %v839
        %v841 = vrot.slane %v716, %v840
        %v842 = vmul.f32 %v830, %v841
        %v843 = vmul.f32 %v831, %v841
        %v844 = vmul.f32 %v832, %v841
        %v845 = vmul.f32 %v833, %v841
        %v846 = vmul.f32 %v834, %v841
        %v847 = vmul.f32 %v835, %v841
        %v848 = vmul.f32 %v836, %v841
        %v849 = vmul.f32 %v837, %v841
        %v850 = vlaneseq
        %v851 = vshrl.u32 %v850, 7
        %v852 = vsub.s32 0, %v851
        %v853 = vrot.slane %v717, %v852
        %v854 = vadd.f32 %v842, %v853
        %v855 = vadd.f32 %v843, %v853
        %v856 = vadd.f32 %v844, %v853
        %v857 = vadd.f32 %v845, %v853
        %v858 = vadd.f32 %v846, %v853
        %v859 = vadd.f32 %v847, %v853
        %v860 = vadd.f32 %v848, %v853
        %v861 = vadd.f32 %v849, %v853
        %v862 = vpack.c.bf16 %v855, %v854
        %v863 = vpack.c.bf16 %v857, %v856
        %v864 = vpack.c.bf16 %v859, %v858
        %v865 = vpack.c.bf16 %v861, %v860
        %v866 = vlaneseq
        %v867 = vshrl.u32 %v866, 7
        %v868 = vsub.s32 0, %v867
        %v869 = vrot.slane %v718, %v868
        %v872 = vunpack.c.l.b16 %v724
        %v873 = vunpack.c.l.b16 %v725
        %v874 = vpack.c.b16 %v873, %v872
        %v877 = vsel %vm586, %v862, 0
        %v880 = vsel %vm586, %v863, 0
        %v883 = vsel %vm586, %v864, 0
        %v886 = vsel %vm586, %v865, 0
        %888 = vmatprep.subr.bf16.mxu0 0
        %889 = vmatpush1.bf16.msra.mxu0 %v874
        %890 = vmatprep.subr.bf16.mxu0 0
        %891 = vmatpush1.bf16.msra.mxu0 0
        %892 = vmatprep.subr.bf16.mxu0 0
        %893 = vmatpush1.bf16.msra.mxu0 0
        %894 = vmatprep.subr.bf16.mxu0 0
        %895 = vmatpush1.bf16.msra.mxu0 0
        %896 = vmatprep.subr.bf16.mxu0 0
        %897 = vmatpush1.bf16.msra.mxu0 0
        %898 = vmatprep.subr.bf16.mxu0 0
        %899 = vmatpush1.bf16.msra.mxu0 0
        %900 = vmatprep.subr.bf16.mxu0 0
        %901 = vmatpush1.bf16.msra.mxu0 0
        %902 = vmatprep.subr.bf16.mxu0 0
        %903 = vmatpush1.bf16.msra.mxu0 0
        %904 = vmatprep.subr.bf16.mxu0 0
        %905 = vmatpush1.bf16.msra.mxu0 0
        %906 = vmatprep.subr.bf16.mxu0 0
        %907 = vmatpush1.bf16.msra.mxu0 0
        %908 = vmatprep.subr.bf16.mxu0 0
        %909 = vmatpush1.bf16.msra.mxu0 0
        %910 = vmatprep.subr.bf16.mxu0 0
        %911 = vmatpush1.bf16.msra.mxu0 0
        %912 = vmatprep.subr.bf16.mxu0 0
        %913 = vmatpush1.bf16.msra.mxu0 0
        %914 = vmatprep.subr.bf16.mxu0 0
        %915 = vmatpush1.bf16.msra.mxu0 0
        %916 = vmatprep.subr.bf16.mxu0 0
        %917 = vmatpush1.bf16.msra.mxu0 0
        %918 = vmatprep.subr.bf16.mxu0 0
        %919 = vmatpush1.bf16.msra.mxu0 0
        %920 = vmatprep.mubr.bf16.mxu0 0
        %921 = vmatmul.mubr.bf16.gmra.mrb[0].mxu0 %v877
        %v922 = vpop.f32.mrb[0].mxu0
        %v923 = vadd.f32 %v869, %v922
        %v924 = vpop.f32.mrb[0].mxu0
        %v925 = vpop.f32.mrb[0].mxu0
        %v926 = vadd.f32 %v869, %v925
        %v927 = vpop.f32.mrb[0].mxu0
        %928 = vmatprep.mubr.bf16.mxu0 0
        %929 = vmatmul.mubr.bf16.gmra.mrb[0].mxu0 %v880
        %v930 = vpop.f32.mrb[0].mxu0
        %v931 = vadd.f32 %v869, %v930
        %v932 = vpop.f32.mrb[0].mxu0
        %v933 = vpop.f32.mrb[0].mxu0
        %v934 = vadd.f32 %v869, %v933
        %v935 = vpop.f32.mrb[0].mxu0
        %936 = vmatprep.mubr.bf16.mxu0 0
        %937 = vmatmul.mubr.bf16.gmra.mrb[0].mxu0 %v883
        %v938 = vpop.f32.mrb[0].mxu0
        %v939 = vadd.f32 %v869, %v938
        %v940 = vpop.f32.mrb[0].mxu0
        %v941 = vpop.f32.mrb[0].mxu0
        %v942 = vadd.f32 %v869, %v941
        %v943 = vpop.f32.mrb[0].mxu0
        %944 = vmatprep.mubr.bf16.mxu0 0
        %945 = vmatmul.mubr.bf16.gmra.mrb[0].mxu0 %v886
        %v946 = vpop.f32.mrb[0].mxu0
        %v947 = vadd.f32 %v869, %v946
        %v948 = vpop.f32.mrb[0].mxu0
        %v949 = vpop.f32.mrb[0].mxu0
        %v950 = vadd.f32 %v869, %v949
        %v951 = vpop.f32.mrb[0].mxu0
        %952 = vdwg.mxu0
        %v953 = vmul.f32 %v923, 0.35355338
        %v954 = vmul.f32 %v926, 0.35355338
        %v955 = vmul.f32 %v931, 0.35355338
        %v956 = vmul.f32 %v934, 0.35355338
        %v957 = vmul.f32 %v939, 0.35355338
        %v958 = vmul.f32 %v942, 0.35355338
        %v959 = vmul.f32 %v947, 0.35355338
        %v960 = vmul.f32 %v950, 0.35355338
        %v961 = vpack.c.bf16 %v954, %v953
        %v962 = vpack.c.bf16 %v956, %v955
        %v963 = vpack.c.bf16 %v958, %v957
        %v964 = vpack.c.bf16 %v960, %v959
        %v965 = vpack.c.bf16 %v926, %v923
        %v966 = vpack.c.bf16 %v934, %v931
        %v967 = vpack.c.bf16 %v942, %v939
        %v968 = vpack.c.bf16 %v950, %v947
        %v969 = vld [vmem:[%s5] sm:$0xff]
        %v970 = vld [vmem:[%s5 + $0x8] sm:$0xff]
        %v971 = vld [vmem:[%s5 + $0x10] sm:$0xff]
        %v972 = vld [vmem:[%s5 + $0x18] sm:$0xff]
        %v973 = vld [vmem:[%s5 + $0x20] sm:$0xff]
        %v974 = vld [vmem:[%s5 + $0x28] sm:$0xff]
        %v975 = vld [vmem:[%s5 + $0x30] sm:$0xff]
        %v976 = vld [vmem:[%s5 + $0x38] sm:$0xff]
        %981 = vrot.lane.b32.xlu0 %v965, 112
        %v982 = vpop.permute.xlu0 %981
        %983 = vrot.lane.b32.xlu0 %v966, 112
        %v984 = vpop.permute.xlu0 %983
        %985 = vrot.lane.b32.xlu0 %v967, 112
        %v986 = vpop.permute.xlu0 %985
        %987 = vrot.lane.b32.xlu0 %v968, 112
        %v988 = vpop.permute.xlu0 %987
        %vm989 = vcmask 64512
        %v991 = vsel %vm989, %v961, 0
        %v994 = vsel %vm989, %v962, 0
        %v997 = vsel %vm989, %v963, 0
        %v1000 = vsel %vm989, %v964, 0
        %v1003 = vsel %vm989, %v982, 0
        %v1006 = vsel %vm989, %v984, 0
        %v1009 = vsel %vm989, %v986, 0
        %v1012 = vsel %vm989, %v988, 0
        %1014 = vmatprep.subr.bf16.mxu0 0
        %1015 = vmatpush1.bf16.xpose.msra.mxu0 %v1003
        %1016 = vmatprep.subr.bf16.mxu0 0
        %1017 = vmatpush1.bf16.xpose.msra.mxu0 %v1006
        %1018 = vmatprep.subr.bf16.mxu0 0
        %1019 = vmatpush1.bf16.xpose.msra.mxu0 %v1009
        %1020 = vmatprep.subr.bf16.mxu0 0
        %1021 = vmatpush1.bf16.xpose.msra.mxu0 %v1012
        %1022 = vmatprep.subr.bf16.mxu0 0
        %1023 = vmatpush1.bf16.xpose.msra.mxu0 0
        %1024 = vmatprep.subr.bf16.mxu0 0
        %1025 = vmatpush1.bf16.xpose.msra.mxu0 0
        %1026 = vmatprep.subr.bf16.mxu0 0
        %1027 = vmatpush1.bf16.xpose.msra.mxu0 0
        %1028 = vmatprep.subr.bf16.mxu0 0
        %1029 = vmatpush1.bf16.xpose.msra.mxu0 0
        %1030 = vmatprep.subr.bf16.mxu0 0
        %1031 = vmatpush1.bf16.xpose.msra.mxu0 0
        %1032 = vmatprep.subr.bf16.mxu0 0
        %1033 = vmatpush1.bf16.xpose.msra.mxu0 0
        %1034 = vmatprep.subr.bf16.mxu0 0
        %1035 = vmatpush1.bf16.xpose.msra.mxu0 0
        %1036 = vmatprep.subr.bf16.mxu0 0
        %1037 = vmatpush1.bf16.xpose.msra.mxu0 0
        %1038 = vmatprep.subr.bf16.mxu0 0
        %1039 = vmatpush1.bf16.xpose.msra.mxu0 0
        %1040 = vmatprep.subr.bf16.mxu0 0
        %1041 = vmatpush1.bf16.xpose.msra.mxu0 0
        %1042 = vmatprep.subr.bf16.mxu0 0
        %1043 = vmatpush1.bf16.xpose.msra.mxu0 0
        %1044 = vmatprep.subr.bf16.mxu0 0
        %1045 = vmatpush1.bf16.xpose.msra.mxu0 0
        %1046 = vmatprep.mubr.bf16.mxu0 0
        %1047 = vmatmul.mubr.bf16.gmra.mrb[0].mxu0 %v991
        %v1048 = vpop.f32.mrb[0].mxu0
        %v1049 = vadd.f32 %v969, %v1048
        %v1050 = vpop.f32.mrb[0].mxu0
        %v1051 = vpop.f32.mrb[0].mxu0
        %v1052 = vadd.f32 %v970, %v1051
        %v1053 = vpop.f32.mrb[0].mxu0
        %1054 = vmatprep.mubr.bf16.mxu0 0
        %1055 = vmatmul.mubr.bf16.gmra.mrb[0].mxu0 %v994
        %v1056 = vpop.f32.mrb[0].mxu0
        %v1057 = vadd.f32 %v971, %v1056
        %v1058 = vpop.f32.mrb[0].mxu0
        %v1059 = vpop.f32.mrb[0].mxu0
        %v1060 = vadd.f32 %v972, %v1059
        %v1061 = vpop.f32.mrb[0].mxu0
        %1062 = vmatprep.mubr.bf16.mxu0 0
        %1063 = vmatmul.mubr.bf16.gmra.mrb[0].mxu0 %v997
        %v1064 = vpop.f32.mrb[0].mxu0
        %v1065 = vadd.f32 %v973, %v1064
        %v1066 = vpop.f32.mrb[0].mxu0
        %v1067 = vpop.f32.mrb[0].mxu0
        %v1068 = vadd.f32 %v974, %v1067
        %v1069 = vpop.f32.mrb[0].mxu0
        %1070 = vmatprep.mubr.bf16.mxu0 0
        %1071 = vmatmul.mubr.bf16.gmra.mrb[0].mxu0 %v1000
        %v1072 = vpop.f32.mrb[0].mxu0
        %v1073 = vadd.f32 %v975, %v1072
        %v1074 = vpop.f32.mrb[0].mxu0
        %v1075 = vpop.f32.mrb[0].mxu0
        %v1076 = vadd.f32 %v976, %v1075
        %v1077 = vpop.f32.mrb[0].mxu0
        %1078 = vdwg.mxu0
        %vm1079 = vcmask 523264
        %v1080 = vsel %vm1079, %v1049, -inf
        %1081 = vmax.xlane.f32.xlu0 %v1080
        %v1082 = vpop.xlane.xlu0 %1081
        %v1083 = vsel %vm1079, %v1052, -inf
        %1084 = vmax.xlane.f32.xlu0 %v1083
        %v1085 = vpop.xlane.xlu0 %1084
        %v1086 = vsel %vm1079, %v1057, -inf
        %1087 = vmax.xlane.f32.xlu0 %v1086
        %v1088 = vpop.xlane.xlu0 %1087
        %v1089 = vsel %vm1079, %v1060, -inf
        %1090 = vmax.xlane.f32.xlu0 %v1089
        %v1091 = vpop.xlane.xlu0 %1090
        %v1092 = vsel %vm1079, %v1065, -inf
        %1093 = vmax.xlane.f32.xlu0 %v1092
        %v1094 = vpop.xlane.xlu0 %1093
        %v1095 = vsel %vm1079, %v1068, -inf
        %1096 = vmax.xlane.f32.xlu0 %v1095
        %v1097 = vpop.xlane.xlu0 %1096
        %v1098 = vsel %vm1079, %v1073, -inf
        %1099 = vmax.xlane.f32.xlu0 %v1098
        %v1100 = vpop.xlane.xlu0 %1099
        %v1101 = vsel %vm1079, %v1076, -inf
        %1102 = vmax.xlane.f32.xlu0 %v1101
        %v1103 = vpop.xlane.xlu0 %1102
        %v1104 = vsub.f32 %v1049, %v1082
        %v1105 = vsub.f32 %v1052, %v1085
        %v1106 = vsub.f32 %v1057, %v1088
        %v1107 = vsub.f32 %v1060, %v1091
        %v1108 = vsub.f32 %v1065, %v1094
        %v1109 = vsub.f32 %v1068, %v1097
        %v1110 = vsub.f32 %v1073, %v1100
        %v1111 = vsub.f32 %v1076, %v1103
        %v1112 = vmul.f32 %v1104, 1.442695
        %v1113 = vpow.pop %v1112
        %v1114 = vmul.f32 %v1105, 1.442695
        %v1115 = vpow.pop %v1114
        %v1116 = vmul.f32 %v1106, 1.442695
        %v1117 = vpow.pop %v1116
        %v1118 = vmul.f32 %v1107, 1.442695
        %v1119 = vpow.pop %v1118
        %v1120 = vmul.f32 %v1108, 1.442695
        %v1121 = vpow.pop %v1120
        %v1122 = vmul.f32 %v1109, 1.442695
        %v1123 = vpow.pop %v1122
        %v1124 = vmul.f32 %v1110, 1.442695
        %v1125 = vpow.pop %v1124
        %v1126 = vmul.f32 %v1111, 1.442695
        %v1127 = vpow.pop %v1126
        %v1128 = vsel %vm1079, %v1113, 0.0
        %1129 = vadd.xlane.f32.xlu0 %v1128
        %v1130 = vpop.xlane.xlu0 %1129
        %v1131 = vsel %vm1079, %v1115, 0.0
        %1132 = vadd.xlane.f32.xlu0 %v1131
        %v1133 = vpop.xlane.xlu0 %1132
        %v1134 = vsel %vm1079, %v1117, 0.0
        %1135 = vadd.xlane.f32.xlu0 %v1134
        %v1136 = vpop.xlane.xlu0 %1135
        %v1137 = vsel %vm1079, %v1119, 0.0
        %1138 = vadd.xlane.f32.xlu0 %v1137
        %v1139 = vpop.xlane.xlu0 %1138
        %v1140 = vsel %vm1079, %v1121, 0.0
        %1141 = vadd.xlane.f32.xlu0 %v1140
        %v1142 = vpop.xlane.xlu0 %1141
        %v1143 = vsel %vm1079, %v1123, 0.0
        %1144 = vadd.xlane.f32.xlu0 %v1143
        %v1145 = vpop.xlane.xlu0 %1144
        %v1146 = vsel %vm1079, %v1125, 0.0
        %1147 = vadd.xlane.f32.xlu0 %v1146
        %v1148 = vpop.xlane.xlu0 %1147
        %v1149 = vsel %vm1079, %v1127, 0.0
        %1150 = vadd.xlane.f32.xlu0 %v1149
        %v1151 = vpop.xlane.xlu0 %1150
        %v1152 = vrcp.pop %v1130
        %v1153 = vrcp.pop %v1133
        %v1154 = vrcp.pop %v1136
        %v1155 = vrcp.pop %v1139
        %v1156 = vrcp.pop %v1142
        %v1157 = vrcp.pop %v1145
        %v1158 = vrcp.pop %v1148
        %v1159 = vrcp.pop %v1151
        %v1160 = vmul.f32 %v1113, %v1152
        %v1161 = vmul.f32 %v1115, %v1153
        %v1162 = vmul.f32 %v1117, %v1154
        %v1163 = vmul.f32 %v1119, %v1155
        %v1164 = vmul.f32 %v1121, %v1156
        %v1165 = vmul.f32 %v1123, %v1157
        %v1166 = vmul.f32 %v1125, %v1158
        %v1167 = vmul.f32 %v1127, %v1159
        %v1168 = vpack.c.bf16 %v1161, %v1160
        %v1169 = vpack.c.bf16 %v1163, %v1162
        %v1170 = vpack.c.bf16 %v1165, %v1164
        %v1171 = vpack.c.bf16 %v1167, %v1166
        %1172 = vrot.lane.b32.xlu0 %v965, 96
        %v1173 = vpop.permute.xlu0 %1172
        %1174 = vrot.lane.b32.xlu0 %v966, 96
        %v1175 = vpop.permute.xlu0 %1174
        %1176 = vrot.lane.b32.xlu0 %v967, 96
        %v1177 = vpop.permute.xlu0 %1176
        %1178 = vrot.lane.b32.xlu0 %v968, 96
        %v1179 = vpop.permute.xlu0 %1178
        %v1185 = vsel %vm1079, %v1168, 0
        %v1188 = vsel %vm1079, %v1169, 0
        %v1191 = vsel %vm1079, %v1170, 0
        %v1194 = vsel %vm1079, %v1171, 0
        %1196 = vmatprep.subr.bf16.mxu0 0
        %1197 = vmatpush1.bf16.msra.mxu0 %v1173
        %1198 = vmatprep.subr.bf16.mxu0 0
        %1199 = vmatpush1.bf16.msra.mxu0 %v1175
        %1200 = vmatprep.subr.bf16.mxu0 0
        %1201 = vmatpush1.bf16.msra.mxu0 %v1177
        %1202 = vmatprep.subr.bf16.mxu0 0
        %1203 = vmatpush1.bf16.msra.mxu0 %v1179
        %1204 = vmatprep.subr.bf16.mxu0 0
        %1205 = vmatpush1.bf16.msra.mxu0 0
        %1206 = vmatprep.subr.bf16.mxu0 0
        %1207 = vmatpush1.bf16.msra.mxu0 0
        %1208 = vmatprep.subr.bf16.mxu0 0
        %1209 = vmatpush1.bf16.msra.mxu0 0
        %1210 = vmatprep.subr.bf16.mxu0 0
        %1211 = vmatpush1.bf16.msra.mxu0 0
        %1212 = vmatprep.subr.bf16.mxu0 0
        %1213 = vmatpush1.bf16.msra.mxu0 0
        %1214 = vmatprep.subr.bf16.mxu0 0
        %1215 = vmatpush1.bf16.msra.mxu0 0
        %1216 = vmatprep.subr.bf16.mxu0 0
        %1217 = vmatpush1.bf16.msra.mxu0 0
        %1218 = vmatprep.subr.bf16.mxu0 0
        %1219 = vmatpush1.bf16.msra.mxu0 0
        %1220 = vmatprep.subr.bf16.mxu0 0
        %1221 = vmatpush1.bf16.msra.mxu0 0
        %1222 = vmatprep.subr.bf16.mxu0 0
        %1223 = vmatpush1.bf16.msra.mxu0 0
        %1224 = vmatprep.subr.bf16.mxu0 0
        %1225 = vmatpush1.bf16.msra.mxu0 0
        %1226 = vmatprep.subr.bf16.mxu0 0
        %1227 = vmatpush1.bf16.msra.mxu0 0
        %1228 = vmatprep.mubr.bf16.mxu0 0
        %1229 = vmatmul.mubr.bf16.gmra.mrb[0].mxu0 %v1185
        %v1230 = vpop.f32.mrb[0].mxu0
        %v1231 = vadd.f32 0.0, %v1230
        %v1232 = vpop.f32.mrb[0].mxu0
        %v1233 = vpop.f32.mrb[0].mxu0
        %v1234 = vadd.f32 0.0, %v1233
        %v1235 = vpop.f32.mrb[0].mxu0
        %1236 = vmatprep.mubr.bf16.mxu0 0
        %1237 = vmatmul.mubr.bf16.gmra.mrb[0].mxu0 %v1188
        %v1238 = vpop.f32.mrb[0].mxu0
        %v1239 = vadd.f32 0.0, %v1238
        %v1240 = vpop.f32.mrb[0].mxu0
        %v1241 = vpop.f32.mrb[0].mxu0
        %v1242 = vadd.f32 0.0, %v1241
        %v1243 = vpop.f32.mrb[0].mxu0
        %1244 = vmatprep.mubr.bf16.mxu0 0
        %1245 = vmatmul.mubr.bf16.gmra.mrb[0].mxu0 %v1191
        %v1246 = vpop.f32.mrb[0].mxu0
        %v1247 = vadd.f32 0.0, %v1246
        %v1248 = vpop.f32.mrb[0].mxu0
        %v1249 = vpop.f32.mrb[0].mxu0
        %v1250 = vadd.f32 0.0, %v1249
        %v1251 = vpop.f32.mrb[0].mxu0
        %1252 = vmatprep.mubr.bf16.mxu0 0
        %1253 = vmatmul.mubr.bf16.gmra.mrb[0].mxu0 %v1194
        %v1254 = vpop.f32.mrb[0].mxu0
        %v1255 = vadd.f32 0.0, %v1254
        %v1256 = vpop.f32.mrb[0].mxu0
        %v1257 = vpop.f32.mrb[0].mxu0
        %v1258 = vadd.f32 0.0, %v1257
        %v1259 = vpop.f32.mrb[0].mxu0
        %1260 = vdwg.mxu0
        %s1261 = scalar_lea.vmem %s5, 64
        %v1262 = vld [vmem:[%s1261] sm:$0xff]
        %v1263 = vld [vmem:[%s1261 + $0x8] sm:$0xff]
        %v1264 = vld [vmem:[%s1261 + $0x10] sm:$0xff]
        %v1265 = vld [vmem:[%s1261 + $0x18] sm:$0xff]
        %v1266 = vld [vmem:[%s1261 + $0x20] sm:$0xff]
        %v1267 = vld [vmem:[%s1261 + $0x28] sm:$0xff]
        %v1268 = vld [vmem:[%s1261 + $0x30] sm:$0xff]
        %v1269 = vld [vmem:[%s1261 + $0x38] sm:$0xff]
        %1274 = vrot.lane.b32.xlu0 %v961, 120
        %v1275 = vpop.permute.xlu0 %1274
        %1276 = vrot.lane.b32.xlu0 %v962, 120
        %v1277 = vpop.permute.xlu0 %1276
        %1278 = vrot.lane.b32.xlu0 %v963, 120
        %v1279 = vpop.permute.xlu0 %1278
        %1280 = vrot.lane.b32.xlu0 %v964, 120
        %v1281 = vpop.permute.xlu0 %1280
        %1282 = vrot.lane.b32.xlu0 %v965, 104
        %v1283 = vpop.permute.xlu0 %1282
        %1284 = vrot.lane.b32.xlu0 %v966, 104
        %v1285 = vpop.permute.xlu0 %1284
        %1286 = vrot.lane.b32.xlu0 %v967, 104
        %v1287 = vpop.permute.xlu0 %1286
        %1288 = vrot.lane.b32.xlu0 %v968, 104
        %v1289 = vpop.permute.xlu0 %1288
        %v1291 = vsel %vm989, %v1275, 0
        %v1294 = vsel %vm989, %v1277, 0
        %v1297 = vsel %vm989, %v1279, 0
        %v1300 = vsel %vm989, %v1281, 0
        %v1303 = vsel %vm989, %v1283, 0
        %v1306 = vsel %vm989, %v1285, 0
        %v1309 = vsel %vm989, %v1287, 0
        %v1312 = vsel %vm989, %v1289, 0
        %1314 = vmatprep.subr.bf16.mxu0 0
        %1315 = vmatpush1.bf16.xpose.msra.mxu0 %v1303
        %1316 = vmatprep.subr.bf16.mxu0 0
        %1317 = vmatpush1.bf16.xpose.msra.mxu0 %v1306
        %1318 = vmatprep.subr.bf16.mxu0 0
        %1319 = vmatpush1.bf16.xpose.msra.mxu0 %v1309
        %1320 = vmatprep.subr.bf16.mxu0 0
        %1321 = vmatpush1.bf16.xpose.msra.mxu0 %v1312
        %1322 = vmatprep.subr.bf16.mxu0 0
        %1323 = vmatpush1.bf16.xpose.msra.mxu0 0
        %1324 = vmatprep.subr.bf16.mxu0 0
        %1325 = vmatpush1.bf16.xpose.msra.mxu0 0
        %1326 = vmatprep.subr.bf16.mxu0 0
        %1327 = vmatpush1.bf16.xpose.msra.mxu0 0
        %1328 = vmatprep.subr.bf16.mxu0 0
        %1329 = vmatpush1.bf16.xpose.msra.mxu0 0
        %1330 = vmatprep.subr.bf16.mxu0 0
        %1331 = vmatpush1.bf16.xpose.msra.mxu0 0
        %1332 = vmatprep.subr.bf16.mxu0 0
        %1333 = vmatpush1.bf16.xpose.msra.mxu0 0
        %1334 = vmatprep.subr.bf16.mxu0 0
        %1335 = vmatpush1.bf16.xpose.msra.mxu0 0
        %1336 = vmatprep.subr.bf16.mxu0 0
        %1337 = vmatpush1.bf16.xpose.msra.mxu0 0
        %1338 = vmatprep.subr.bf16.mxu0 0
        %1339 = vmatpush1.bf16.xpose.msra.mxu0 0
        %1340 = vmatprep.subr.bf16.mxu0 0
        %1341 = vmatpush1.bf16.xpose.msra.mxu0 0
        %1342 = vmatprep.subr.bf16.mxu0 0
        %1343 = vmatpush1.bf16.xpose.msra.mxu0 0
        %1344 = vmatprep.subr.bf16.mxu0 0
        %1345 = vmatpush1.bf16.xpose.msra.mxu0 0
        %1346 = vmatprep.mubr.bf16.mxu0 0
        %1347 = vmatmul.mubr.bf16.gmra.mrb[0].mxu0 %v1291
        %v1348 = vpop.f32.mrb[0].mxu0
        %v1349 = vadd.f32 %v1262, %v1348
        %v1350 = vpop.f32.mrb[0].mxu0
        %v1351 = vpop.f32.mrb[0].mxu0
        %v1352 = vadd.f32 %v1263, %v1351
        %v1353 = vpop.f32.mrb[0].mxu0
        %1354 = vmatprep.mubr.bf16.mxu0 0
        %1355 = vmatmul.mubr.bf16.gmra.mrb[0].mxu0 %v1294
        %v1356 = vpop.f32.mrb[0].mxu0
        %v1357 = vadd.f32 %v1264, %v1356
        %v1358 = vpop.f32.mrb[0].mxu0
        %v1359 = vpop.f32.mrb[0].mxu0
        %v1360 = vadd.f32 %v1265, %v1359
        %v1361 = vpop.f32.mrb[0].mxu0
        %1362 = vmatprep.mubr.bf16.mxu0 0
        %1363 = vmatmul.mubr.bf16.gmra.mrb[0].mxu0 %v1297
        %v1364 = vpop.f32.mrb[0].mxu0
        %v1365 = vadd.f32 %v1266, %v1364
        %v1366 = vpop.f32.mrb[0].mxu0
        %v1367 = vpop.f32.mrb[0].mxu0
        %v1368 = vadd.f32 %v1267, %v1367
        %v1369 = vpop.f32.mrb[0].mxu0
        %1370 = vmatprep.mubr.bf16.mxu0 0
        %1371 = vmatmul.mubr.bf16.gmra.mrb[0].mxu0 %v1300
        %v1372 = vpop.f32.mrb[0].mxu0
        %v1373 = vadd.f32 %v1268, %v1372
        %v1374 = vpop.f32.mrb[0].mxu0
        %v1375 = vpop.f32.mrb[0].mxu0
        %v1376 = vadd.f32 %v1269, %v1375
        %v1377 = vpop.f32.mrb[0].mxu0
        %1378 = vdwg.mxu0
        %v1379 = vsel %vm1079, %v1349, -inf
        %1380 = vmax.xlane.f32.xlu0 %v1379
        %v1381 = vpop.xlane.xlu0 %1380
        %v1382 = vsel %vm1079, %v1352, -inf
        %1383 = vmax.xlane.f32.xlu0 %v1382
        %v1384 = vpop.xlane.xlu0 %1383
        %v1385 = vsel %vm1079, %v1357, -inf
        %1386 = vmax.xlane.f32.xlu0 %v1385
        %v1387 = vpop.xlane.xlu0 %1386
        %v1388 = vsel %vm1079, %v1360, -inf
        %1389 = vmax.xlane.f32.xlu0 %v1388
        %v1390 = vpop.xlane.xlu0 %1389
        %v1391 = vsel %vm1079, %v1365, -inf
        %1392 = vmax.xlane.f32.xlu0 %v1391
        %v1393 = vpop.xlane.xlu0 %1392
        %v1394 = vsel %vm1079, %v1368, -inf
        %1395 = vmax.xlane.f32.xlu0 %v1394
        %v1396 = vpop.xlane.xlu0 %1395
        %v1397 = vsel %vm1079, %v1373, -inf
        %1398 = vmax.xlane.f32.xlu0 %v1397
        %v1399 = vpop.xlane.xlu0 %1398
        %v1400 = vsel %vm1079, %v1376, -inf
        %1401 = vmax.xlane.f32.xlu0 %v1400
        %v1402 = vpop.xlane.xlu0 %1401
        %v1403 = vsub.f32 %v1349, %v1381
        %v1404 = vsub.f32 %v1352, %v1384
        %v1405 = vsub.f32 %v1357, %v1387
        %v1406 = vsub.f32 %v1360, %v1390
        %v1407 = vsub.f32 %v1365, %v1393
        %v1408 = vsub.f32 %v1368, %v1396
        %v1409 = vsub.f32 %v1373, %v1399
        %v1410 = vsub.f32 %v1376, %v1402
        %v1411 = vmul.f32 %v1403, 1.442695
        %v1412 = vpow.pop %v1411
        %v1413 = vmul.f32 %v1404, 1.442695
        %v1414 = vpow.pop %v1413
        %v1415 = vmul.f32 %v1405, 1.442695
        %v1416 = vpow.pop %v1415
        %v1417 = vmul.f32 %v1406, 1.442695
        %v1418 = vpow.pop %v1417
        %v1419 = vmul.f32 %v1407, 1.442695
        %v1420 = vpow.pop %v1419
        %v1421 = vmul.f32 %v1408, 1.442695
        %v1422 = vpow.pop %v1421
        %v1423 = vmul.f32 %v1409, 1.442695
        %v1424 = vpow.pop %v1423
        %v1425 = vmul.f32 %v1410, 1.442695
        %v1426 = vpow.pop %v1425
        %v1427 = vsel %vm1079, %v1412, 0.0
        %1428 = vadd.xlane.f32.xlu0 %v1427
        %v1429 = vpop.xlane.xlu0 %1428
        %v1430 = vsel %vm1079, %v1414, 0.0
        %1431 = vadd.xlane.f32.xlu0 %v1430
        %v1432 = vpop.xlane.xlu0 %1431
        %v1433 = vsel %vm1079, %v1416, 0.0
        %1434 = vadd.xlane.f32.xlu0 %v1433
        %v1435 = vpop.xlane.xlu0 %1434
        %v1436 = vsel %vm1079, %v1418, 0.0
        %1437 = vadd.xlane.f32.xlu0 %v1436
        %v1438 = vpop.xlane.xlu0 %1437
        %v1439 = vsel %vm1079, %v1420, 0.0
        %1440 = vadd.xlane.f32.xlu0 %v1439
        %v1441 = vpop.xlane.xlu0 %1440
        %v1442 = vsel %vm1079, %v1422, 0.0
        %1443 = vadd.xlane.f32.xlu0 %v1442
        %v1444 = vpop.xlane.xlu0 %1443
        %v1445 = vsel %vm1079, %v1424, 0.0
        %1446 = vadd.xlane.f32.xlu0 %v1445
        %v1447 = vpop.xlane.xlu0 %1446
        %v1448 = vsel %vm1079, %v1426, 0.0
        %1449 = vadd.xlane.f32.xlu0 %v1448
        %v1450 = vpop.xlane.xlu0 %1449
        %v1451 = vrcp.pop %v1429
        %v1452 = vrcp.pop %v1432
        %v1453 = vrcp.pop %v1435
        %v1454 = vrcp.pop %v1438
        %v1455 = vrcp.pop %v1441
        %v1456 = vrcp.pop %v1444
        %v1457 = vrcp.pop %v1447
        %v1458 = vrcp.pop %v1450
        %v1459 = vmul.f32 %v1412, %v1451
        %v1460 = vmul.f32 %v1414, %v1452
        %v1461 = vmul.f32 %v1416, %v1453
        %v1462 = vmul.f32 %v1418, %v1454
        %v1463 = vmul.f32 %v1420, %v1455
        %v1464 = vmul.f32 %v1422, %v1456
        %v1465 = vmul.f32 %v1424, %v1457
        %v1466 = vmul.f32 %v1426, %v1458
        %v1467 = vpack.c.bf16 %v1460, %v1459
        %v1468 = vpack.c.bf16 %v1462, %v1461
        %v1469 = vpack.c.bf16 %v1464, %v1463
        %v1470 = vpack.c.bf16 %v1466, %v1465
        %1471 = vrot.lane.b32.xlu0 %v965, 88
        %v1472 = vpop.permute.xlu0 %1471
        %1473 = vrot.lane.b32.xlu0 %v966, 88
        %v1474 = vpop.permute.xlu0 %1473
        %1475 = vrot.lane.b32.xlu0 %v967, 88
        %v1476 = vpop.permute.xlu0 %1475
        %1477 = vrot.lane.b32.xlu0 %v968, 88
        %v1478 = vpop.permute.xlu0 %1477
        %v1484 = vsel %vm1079, %v1467, 0
        %v1487 = vsel %vm1079, %v1468, 0
        %v1490 = vsel %vm1079, %v1469, 0
        %v1493 = vsel %vm1079, %v1470, 0
        %1495 = vmatprep.subr.bf16.mxu0 0
        %1496 = vmatpush1.bf16.msra.mxu0 %v1472
        %1497 = vmatprep.subr.bf16.mxu0 0
        %1498 = vmatpush1.bf16.msra.mxu0 %v1474
        %1499 = vmatprep.subr.bf16.mxu0 0
        %1500 = vmatpush1.bf16.msra.mxu0 %v1476
        %1501 = vmatprep.subr.bf16.mxu0 0
        %1502 = vmatpush1.bf16.msra.mxu0 %v1478
        %1503 = vmatprep.subr.bf16.mxu0 0
        %1504 = vmatpush1.bf16.msra.mxu0 0
        %1505 = vmatprep.subr.bf16.mxu0 0
        %1506 = vmatpush1.bf16.msra.mxu0 0
        %1507 = vmatprep.subr.bf16.mxu0 0
        %1508 = vmatpush1.bf16.msra.mxu0 0
        %1509 = vmatprep.subr.bf16.mxu0 0
        %1510 = vmatpush1.bf16.msra.mxu0 0
        %1511 = vmatprep.subr.bf16.mxu0 0
        %1512 = vmatpush1.bf16.msra.mxu0 0
        %1513 = vmatprep.subr.bf16.mxu0 0
        %1514 = vmatpush1.bf16.msra.mxu0 0
        %1515 = vmatprep.subr.bf16.mxu0 0
        %1516 = vmatpush1.bf16.msra.mxu0 0
        %1517 = vmatprep.subr.bf16.mxu0 0
        %1518 = vmatpush1.bf16.msra.mxu0 0
        %1519 = vmatprep.subr.bf16.mxu0 0
        %1520 = vmatpush1.bf16.msra.mxu0 0
        %1521 = vmatprep.subr.bf16.mxu0 0
        %1522 = vmatpush1.bf16.msra.mxu0 0
        %1523 = vmatprep.subr.bf16.mxu0 0
        %1524 = vmatpush1.bf16.msra.mxu0 0
        %1525 = vmatprep.subr.bf16.mxu0 0
        %1526 = vmatpush1.bf16.msra.mxu0 0
        %1527 = vmatprep.mubr.bf16.mxu0 0
        %1528 = vmatmul.mubr.bf16.gmra.mrb[0].mxu0 %v1484
        %v1529 = vpop.f32.mrb[0].mxu0
        %v1530 = vadd.f32 0.0, %v1529
        %v1531 = vpop.f32.mrb[0].mxu0
        %v1532 = vpop.f32.mrb[0].mxu0
        %v1533 = vadd.f32 0.0, %v1532
        %v1534 = vpop.f32.mrb[0].mxu0
        %1535 = vmatprep.mubr.bf16.mxu0 0
        %1536 = vmatmul.mubr.bf16.gmra.mrb[0].mxu0 %v1487
        %v1537 = vpop.f32.mrb[0].mxu0
        %v1538 = vadd.f32 0.0, %v1537
        %v1539 = vpop.f32.mrb[0].mxu0
        %v1540 = vpop.f32.mrb[0].mxu0
        %v1541 = vadd.f32 0.0, %v1540
        %v1542 = vpop.f32.mrb[0].mxu0
        %1543 = vmatprep.mubr.bf16.mxu0 0
        %1544 = vmatmul.mubr.bf16.gmra.mrb[0].mxu0 %v1490
        %v1545 = vpop.f32.mrb[0].mxu0
        %v1546 = vadd.f32 0.0, %v1545
        %v1547 = vpop.f32.mrb[0].mxu0
        %v1548 = vpop.f32.mrb[0].mxu0
        %v1549 = vadd.f32 0.0, %v1548
        %v1550 = vpop.f32.mrb[0].mxu0
        %1551 = vmatprep.mubr.bf16.mxu0 0
        %1552 = vmatmul.mubr.bf16.gmra.mrb[0].mxu0 %v1493
        %v1553 = vpop.f32.mrb[0].mxu0
        %v1554 = vadd.f32 0.0, %v1553
        %v1555 = vpop.f32.mrb[0].mxu0
        %v1556 = vpop.f32.mrb[0].mxu0
        %v1557 = vadd.f32 0.0, %v1556
        %v1558 = vpop.f32.mrb[0].mxu0
        %1559 = vdwg.mxu0
        %1568 = vrot.lane.b32.xlu0 %v1530, 8
        %v1569 = vpop.permute.xlu0 %1568
        %1570 = vrot.lane.b32.xlu0 %v1533, 8
        %v1571 = vpop.permute.xlu0 %1570
        %1572 = vrot.lane.b32.xlu0 %v1538, 8
        %v1573 = vpop.permute.xlu0 %1572
        %1574 = vrot.lane.b32.xlu0 %v1541, 8
        %v1575 = vpop.permute.xlu0 %1574
        %1576 = vrot.lane.b32.xlu0 %v1546, 8
        %v1577 = vpop.permute.xlu0 %1576
        %1578 = vrot.lane.b32.xlu0 %v1549, 8
        %v1579 = vpop.permute.xlu0 %1578
        %1580 = vrot.lane.b32.xlu0 %v1554, 8
        %v1581 = vpop.permute.xlu0 %1580
        %1582 = vrot.lane.b32.xlu0 %v1557, 8
        %v1583 = vpop.permute.xlu0 %1582
        %v1592 = vsel %vm989, %v1231, %v1569
        %v1593 = vsel %vm989, %v1234, %v1571
        %v1594 = vsel %vm989, %v1239, %v1573
        %v1595 = vsel %vm989, %v1242, %v1575
        %v1596 = vsel %vm989, %v1247, %v1577
        %v1597 = vsel %vm989, %v1250, %v1579
        %v1598 = vsel %vm989, %v1255, %v1581
        %v1599 = vsel %vm989, %v1258, %v1583
        %v1600 = vpack.c.bf16 %v1593, %v1592
        %v1601 = vpack.c.bf16 %v1595, %v1594
        %v1602 = vpack.c.bf16 %v1597, %v1596
        %v1603 = vpack.c.bf16 %v1599, %v1598
        %1604 = vrot.lane.b32.xlu0 %v874, 80
        %v1605 = vpop.permute.xlu0 %1604
        %v1608 = vsel %vm586, %v1600, 0
        %v1611 = vsel %vm586, %v1601, 0
        %v1614 = vsel %vm586, %v1602, 0
        %v1617 = vsel %vm586, %v1603, 0
        %1619 = vmatprep.subr.bf16.mxu0 0
        %1620 = vmatpush1.bf16.msra.mxu0 %v1605
        %1621 = vmatprep.subr.bf16.mxu0 0
        %1622 = vmatpush1.bf16.msra.mxu0 0
        %1623 = vmatprep.subr.bf16.mxu0 0
        %1624 = vmatpush1.bf16.msra.mxu0 0
        %1625 = vmatprep.subr.bf16.mxu0 0
        %1626 = vmatpush1.bf16.msra.mxu0 0
        %1627 = vmatprep.subr.bf16.mxu0 0
        %1628 = vmatpush1.bf16.msra.mxu0 0
        %1629 = vmatprep.subr.bf16.mxu0 0
        %1630 = vmatpush1.bf16.msra.mxu0 0
        %1631 = vmatprep.subr.bf16.mxu0 0
        %1632 = vmatpush1.bf16.msra.mxu0 0
        %1633 = vmatprep.subr.bf16.mxu0 0
        %1634 = vmatpush1.bf16.msra.mxu0 0
        %1635 = vmatprep.subr.bf16.mxu0 0
        %1636 = vmatpush1.bf16.msra.mxu0 0
        %1637 = vmatprep.subr.bf16.mxu0 0
        %1638 = vmatpush1.bf16.msra.mxu0 0
        %1639 = vmatprep.subr.bf16.mxu0 0
        %1640 = vmatpush1.bf16.msra.mxu0 0
        %1641 = vmatprep.subr.bf16.mxu0 0
        %1642 = vmatpush1.bf16.msra.mxu0 0
        %1643 = vmatprep.subr.bf16.mxu0 0
        %1644 = vmatpush1.bf16.msra.mxu0 0
        %1645 = vmatprep.subr.bf16.mxu0 0
        %1646 = vmatpush1.bf16.msra.mxu0 0
        %1647 = vmatprep.subr.bf16.mxu0 0
        %1648 = vmatpush1.bf16.msra.mxu0 0
        %1649 = vmatprep.subr.bf16.mxu0 0
        %1650 = vmatpush1.bf16.msra.mxu0 0
        %1651 = vmatprep.mubr.bf16.mxu0 0
        %1652 = vmatmul.mubr.bf16.gmra.mrb[0].mxu0 %v1608
        %v1653 = vpop.f32.mrb[0].mxu0
        %v1654 = vadd.f32 0.0, %v1653
        %v1655 = vpop.f32.mrb[0].mxu0
        %v1656 = vpop.f32.mrb[0].mxu0
        %v1657 = vadd.f32 0.0, %v1656
        %v1658 = vpop.f32.mrb[0].mxu0
        %1659 = vmatprep.mubr.bf16.mxu0 0
        %1660 = vmatmul.mubr.bf16.gmra.mrb[0].mxu0 %v1611
        %v1661 = vpop.f32.mrb[0].mxu0
        %v1662 = vadd.f32 0.0, %v1661
        %v1663 = vpop.f32.mrb[0].mxu0
        %v1664 = vpop.f32.mrb[0].mxu0
        %v1665 = vadd.f32 0.0, %v1664
        %v1666 = vpop.f32.mrb[0].mxu0
        %1667 = vmatprep.mubr.bf16.mxu0 0
        %1668 = vmatmul.mubr.bf16.gmra.mrb[0].mxu0 %v1614
        %v1669 = vpop.f32.mrb[0].mxu0
        %v1670 = vadd.f32 0.0, %v1669
        %v1671 = vpop.f32.mrb[0].mxu0
        %v1672 = vpop.f32.mrb[0].mxu0
        %v1673 = vadd.f32 0.0, %v1672
        %v1674 = vpop.f32.mrb[0].mxu0
        %1675 = vmatprep.mubr.bf16.mxu0 0
        %1676 = vmatmul.mubr.bf16.gmra.mrb[0].mxu0 %v1617
        %v1677 = vpop.f32.mrb[0].mxu0
        %v1678 = vadd.f32 0.0, %v1677
        %v1679 = vpop.f32.mrb[0].mxu0
        %v1680 = vpop.f32.mrb[0].mxu0
        %v1681 = vadd.f32 0.0, %v1680
        %v1682 = vpop.f32.mrb[0].mxu0
        %1683 = vdwg.mxu0
        %v1684 = vadd.f32 %v708, %v1654
        %v1685 = vadd.f32 %v709, %v1657
        %v1686 = vadd.f32 %v710, %v1662
        %v1687 = vadd.f32 %v711, %v1665
        %v1688 = vadd.f32 %v712, %v1670
        %v1689 = vadd.f32 %v713, %v1673
        %v1690 = vadd.f32 %v714, %v1678
        %v1691 = vadd.f32 %v715, %v1681
        %v1692 = vlaneseq
        %v1693 = vshrl.u32 %v1692, 7
        %v1694 = vsub.s32 0, %v1693
        %v1695 = vrot.slane %v719, %v1694
        %v1696 = vadd.f32 %v1684, %v1695
        %v1697 = vadd.f32 %v1685, %v1695
        %v1698 = vadd.f32 %v1686, %v1695
        %v1699 = vadd.f32 %v1687, %v1695
        %v1700 = vadd.f32 %v1688, %v1695
        %v1701 = vadd.f32 %v1689, %v1695
        %v1702 = vadd.f32 %v1690, %v1695
        %v1703 = vadd.f32 %v1691, %v1695
        %v1704 = vsel %vm586, %v1696, 0.0
        %1705 = vadd.xlane.f32.xlu0 %v1704
        %v1706 = vpop.xlane.xlu0 %1705
        %v1707 = vsel %vm586, %v1697, 0.0
        %1708 = vadd.xlane.f32.xlu0 %v1707
        %v1709 = vpop.xlane.xlu0 %1708
        %v1710 = vsel %vm586, %v1698, 0.0
        %1711 = vadd.xlane.f32.xlu0 %v1710
        %v1712 = vpop.xlane.xlu0 %1711
        %v1713 = vsel %vm586, %v1699, 0.0
        %1714 = vadd.xlane.f32.xlu0 %v1713
        %v1715 = vpop.xlane.xlu0 %1714
        %v1716 = vsel %vm586, %v1700, 0.0
        %1717 = vadd.xlane.f32.xlu0 %v1716
        %v1718 = vpop.xlane.xlu0 %1717
        %v1719 = vsel %vm586, %v1701, 0.0
        %1720 = vadd.xlane.f32.xlu0 %v1719
        %v1721 = vpop.xlane.xlu0 %1720
        %v1722 = vsel %vm586, %v1702, 0.0
        %1723 = vadd.xlane.f32.xlu0 %v1722
        %v1724 = vpop.xlane.xlu0 %1723
        %v1725 = vsel %vm586, %v1703, 0.0
        %1726 = vadd.xlane.f32.xlu0 %v1725
        %v1727 = vpop.xlane.xlu0 %1726
        %v1728 = vmul.f32 %v1706, %v611
        %v1729 = vmul.f32 %v1709, %v611
        %v1730 = vmul.f32 %v1712, %v611
        %v1731 = vmul.f32 %v1715, %v611
        %v1732 = vmul.f32 %v1718, %v611
        %v1733 = vmul.f32 %v1721, %v611
        %v1734 = vmul.f32 %v1724, %v611
        %v1735 = vmul.f32 %v1727, %v611
        %v1736 = vsub.f32 %v1696, %v1728
        %v1737 = vsub.f32 %v1697, %v1729
        %v1738 = vsub.f32 %v1698, %v1730
        %v1739 = vsub.f32 %v1699, %v1731
        %v1740 = vsub.f32 %v1700, %v1732
        %v1741 = vsub.f32 %v1701, %v1733
        %v1742 = vsub.f32 %v1702, %v1734
        %v1743 = vsub.f32 %v1703, %v1735
        %v1744 = vmul.f32 %v1736, %v1736
        %v1745 = vmul.f32 %v1737, %v1737
        %v1746 = vmul.f32 %v1738, %v1738
        %v1747 = vmul.f32 %v1739, %v1739
        %v1748 = vmul.f32 %v1740, %v1740
        %v1749 = vmul.f32 %v1741, %v1741
        %v1750 = vmul.f32 %v1742, %v1742
        %v1751 = vmul.f32 %v1743, %v1743
        %v1752 = vsel %vm586, %v1744, 0.0
        %1753 = vadd.xlane.f32.xlu0 %v1752
        %v1754 = vpop.xlane.xlu0 %1753
        %v1755 = vsel %vm586, %v1745, 0.0
        %1756 = vadd.xlane.f32.xlu0 %v1755
        %v1757 = vpop.xlane.xlu0 %1756
        %v1758 = vsel %vm586, %v1746, 0.0
        %1759 = vadd.xlane.f32.xlu0 %v1758
        %v1760 = vpop.xlane.xlu0 %1759
        %v1761 = vsel %vm586, %v1747, 0.0
        %1762 = vadd.xlane.f32.xlu0 %v1761
        %v1763 = vpop.xlane.xlu0 %1762
        %v1764 = vsel %vm586, %v1748, 0.0
        %1765 = vadd.xlane.f32.xlu0 %v1764
        %v1766 = vpop.xlane.xlu0 %1765
        %v1767 = vsel %vm586, %v1749, 0.0
        %1768 = vadd.xlane.f32.xlu0 %v1767
        %v1769 = vpop.xlane.xlu0 %1768
        %v1770 = vsel %vm586, %v1750, 0.0
        %1771 = vadd.xlane.f32.xlu0 %v1770
        %v1772 = vpop.xlane.xlu0 %1771
        %v1773 = vsel %vm586, %v1751, 0.0
        %1774 = vadd.xlane.f32.xlu0 %v1773
        %v1775 = vpop.xlane.xlu0 %1774
        %v1776 = vmul.f32 %v1754, %v611
        %v1777 = vmul.f32 %v1757, %v611
        %v1778 = vmul.f32 %v1760, %v611
        %v1779 = vmul.f32 %v1763, %v611
        %v1780 = vmul.f32 %v1766, %v611
        %v1781 = vmul.f32 %v1769, %v611
        %v1782 = vmul.f32 %v1772, %v611
        %v1783 = vmul.f32 %v1775, %v611
        %v1784 = vadd.f32 %v1776, 1e-05
        %v1785 = vadd.f32 %v1777, 1e-05
        %v1786 = vadd.f32 %v1778, 1e-05
        %v1787 = vadd.f32 %v1779, 1e-05
        %v1788 = vadd.f32 %v1780, 1e-05
        %v1789 = vadd.f32 %v1781, 1e-05
        %v1790 = vadd.f32 %v1782, 1e-05
        %v1791 = vadd.f32 %v1783, 1e-05
        %v1792 = vrsqrt.pop %v1784
        %v1793 = vrsqrt.pop %v1785
        %v1794 = vrsqrt.pop %v1786
        %v1795 = vrsqrt.pop %v1787
        %v1796 = vrsqrt.pop %v1788
        %v1797 = vrsqrt.pop %v1789
        %v1798 = vrsqrt.pop %v1790
        %v1799 = vrsqrt.pop %v1791
        %v1800 = vmul.f32 %v1736, %v1792
        %v1801 = vmul.f32 %v1737, %v1793
        %v1802 = vmul.f32 %v1738, %v1794
        %v1803 = vmul.f32 %v1739, %v1795
        %v1804 = vmul.f32 %v1740, %v1796
        %v1805 = vmul.f32 %v1741, %v1797
        %v1806 = vmul.f32 %v1742, %v1798
        %v1807 = vmul.f32 %v1743, %v1799
        %v1808 = vlaneseq
        %v1809 = vshrl.u32 %v1808, 7
        %v1810 = vsub.s32 0, %v1809
        %v1811 = vrot.slane %v720, %v1810
        %v1812 = vmul.f32 %v1800, %v1811
        %v1813 = vmul.f32 %v1801, %v1811
        %v1814 = vmul.f32 %v1802, %v1811
        %v1815 = vmul.f32 %v1803, %v1811
        %v1816 = vmul.f32 %v1804, %v1811
        %v1817 = vmul.f32 %v1805, %v1811
        %v1818 = vmul.f32 %v1806, %v1811
        %v1819 = vmul.f32 %v1807, %v1811
        %v1820 = vlaneseq
        %v1821 = vshrl.u32 %v1820, 7
        %v1822 = vsub.s32 0, %v1821
        %v1823 = vrot.slane %v721, %v1822
        %v1824 = vadd.f32 %v1812, %v1823
        %v1825 = vadd.f32 %v1813, %v1823
        %v1826 = vadd.f32 %v1814, %v1823
        %v1827 = vadd.f32 %v1815, %v1823
        %v1828 = vadd.f32 %v1816, %v1823
        %v1829 = vadd.f32 %v1817, %v1823
        %v1830 = vadd.f32 %v1818, %v1823
        %v1831 = vadd.f32 %v1819, %v1823
        %v1832 = vpack.c.bf16 %v1825, %v1824
        %v1833 = vpack.c.bf16 %v1827, %v1826
        %v1834 = vpack.c.bf16 %v1829, %v1828
        %v1835 = vpack.c.bf16 %v1831, %v1830
        %v1836 = vlaneseq
        %v1837 = vshrl.u32 %v1836, 7
        %v1838 = vsub.s32 0, %v1837
        %v1839 = vrot.slane %v722, %v1838
        %1840 = vrot.lane.b32.xlu0 %v874, 64
        %v1841 = vpop.permute.xlu0 %1840
        %v1844 = vsel %vm586, %v1832, 0
        %v1847 = vsel %vm586, %v1833, 0
        %v1850 = vsel %vm586, %v1834, 0
        %v1853 = vsel %vm586, %v1835, 0
        %1855 = vmatprep.subr.bf16.mxu0 0
        %1856 = vmatpush1.bf16.msra.mxu0 %v1841
        %1857 = vmatprep.subr.bf16.mxu0 0
        %1858 = vmatpush1.bf16.msra.mxu0 0
        %1859 = vmatprep.subr.bf16.mxu0 0
        %1860 = vmatpush1.bf16.msra.mxu0 0
        %1861 = vmatprep.subr.bf16.mxu0 0
        %1862 = vmatpush1.bf16.msra.mxu0 0
        %1863 = vmatprep.subr.bf16.mxu0 0
        %1864 = vmatpush1.bf16.msra.mxu0 0
        %1865 = vmatprep.subr.bf16.mxu0 0
        %1866 = vmatpush1.bf16.msra.mxu0 0
        %1867 = vmatprep.subr.bf16.mxu0 0
        %1868 = vmatpush1.bf16.msra.mxu0 0
        %1869 = vmatprep.subr.bf16.mxu0 0
        %1870 = vmatpush1.bf16.msra.mxu0 0
        %1871 = vmatprep.subr.bf16.mxu0 0
        %1872 = vmatpush1.bf16.msra.mxu0 0
        %1873 = vmatprep.subr.bf16.mxu0 0
        %1874 = vmatpush1.bf16.msra.mxu0 0
        %1875 = vmatprep.subr.bf16.mxu0 0
        %1876 = vmatpush1.bf16.msra.mxu0 0
        %1877 = vmatprep.subr.bf16.mxu0 0
        %1878 = vmatpush1.bf16.msra.mxu0 0
        %1879 = vmatprep.subr.bf16.mxu0 0
        %1880 = vmatpush1.bf16.msra.mxu0 0
        %1881 = vmatprep.subr.bf16.mxu0 0
        %1882 = vmatpush1.bf16.msra.mxu0 0
        %1883 = vmatprep.subr.bf16.mxu0 0
        %1884 = vmatpush1.bf16.msra.mxu0 0
        %1885 = vmatprep.subr.bf16.mxu0 0
        %1886 = vmatpush1.bf16.msra.mxu0 0
        %1887 = vmatprep.mubr.bf16.mxu0 0
        %1888 = vmatmul.mubr.bf16.gmra.mrb[0].mxu0 %v1844
        %v1889 = vpop.f32.mrb[0].mxu0
        %v1890 = vadd.f32 %v1839, %v1889
        %v1891 = vpop.f32.mrb[0].mxu0
        %v1892 = vpop.f32.mrb[0].mxu0
        %v1893 = vadd.f32 %v1839, %v1892
        %v1894 = vpop.f32.mrb[0].mxu0
        %1895 = vmatprep.mubr.bf16.mxu0 0
        %1896 = vmatmul.mubr.bf16.gmra.mrb[0].mxu0 %v1847
        %v1897 = vpop.f32.mrb[0].mxu0
        %v1898 = vadd.f32 %v1839, %v1897
        %v1899 = vpop.f32.mrb[0].mxu0
        %v1900 = vpop.f32.mrb[0].mxu0
        %v1901 = vadd.f32 %v1839, %v1900
        %v1902 = vpop.f32.mrb[0].mxu0
        %1903 = vmatprep.mubr.bf16.mxu0 0
        %1904 = vmatmul.mubr.bf16.gmra.mrb[0].mxu0 %v1850
        %v1905 = vpop.f32.mrb[0].mxu0
        %v1906 = vadd.f32 %v1839, %v1905
        %v1907 = vpop.f32.mrb[0].mxu0
        %v1908 = vpop.f32.mrb[0].mxu0
        %v1909 = vadd.f32 %v1839, %v1908
        %v1910 = vpop.f32.mrb[0].mxu0
        %1911 = vmatprep.mubr.bf16.mxu0 0
        %1912 = vmatmul.mubr.bf16.gmra.mrb[0].mxu0 %v1853
        %v1913 = vpop.f32.mrb[0].mxu0
        %v1914 = vadd.f32 %v1839, %v1913
        %v1915 = vpop.f32.mrb[0].mxu0
        %v1916 = vpop.f32.mrb[0].mxu0
        %v1917 = vadd.f32 %v1839, %v1916
        %v1918 = vpop.f32.mrb[0].mxu0
        %1919 = vdwg.mxu0
        %v1920 = vmul.f32 %v1890, 0.5
        %v1921 = vmul.f32 %v1893, 0.5
        %v1922 = vmul.f32 %v1898, 0.5
        %v1923 = vmul.f32 %v1901, 0.5
        %v1924 = vmul.f32 %v1906, 0.5
        %v1925 = vmul.f32 %v1909, 0.5
        %v1926 = vmul.f32 %v1914, 0.5
        %v1927 = vmul.f32 %v1917, 0.5
        %v1928 = vmul.f32 %v1890, 0.044715
        %v1929 = vmul.f32 %v1893, 0.044715
        %v1930 = vmul.f32 %v1898, 0.044715
        %v1931 = vmul.f32 %v1901, 0.044715
        %v1932 = vmul.f32 %v1906, 0.044715
        %v1933 = vmul.f32 %v1909, 0.044715
        %v1934 = vmul.f32 %v1914, 0.044715
        %v1935 = vmul.f32 %v1917, 0.044715
        %v1936 = vmul.f32 %v1928, %v1890
        %v1937 = vmul.f32 %v1929, %v1893
        %v1938 = vmul.f32 %v1930, %v1898
        %v1939 = vmul.f32 %v1931, %v1901
        %v1940 = vmul.f32 %v1932, %v1906
        %v1941 = vmul.f32 %v1933, %v1909
        %v1942 = vmul.f32 %v1934, %v1914
        %v1943 = vmul.f32 %v1935, %v1917
        %v1944 = vmul.f32 %v1936, %v1890
        %v1945 = vmul.f32 %v1937, %v1893
        %v1946 = vmul.f32 %v1938, %v1898
        %v1947 = vmul.f32 %v1939, %v1901
        %v1948 = vmul.f32 %v1940, %v1906
        %v1949 = vmul.f32 %v1941, %v1909
        %v1950 = vmul.f32 %v1942, %v1914
        %v1951 = vmul.f32 %v1943, %v1917
        %v1952 = vadd.f32 %v1890, %v1944
        %v1953 = vadd.f32 %v1893, %v1945
        %v1954 = vadd.f32 %v1898, %v1946
        %v1955 = vadd.f32 %v1901, %v1947
        %v1956 = vadd.f32 %v1906, %v1948
        %v1957 = vadd.f32 %v1909, %v1949
        %v1958 = vadd.f32 %v1914, %v1950
        %v1959 = vadd.f32 %v1917, %v1951
        %v1960 = vmul.f32 %v1952, 0.7978846
        %v1961 = vmul.f32 %v1953, 0.7978846
        %v1962 = vmul.f32 %v1954, 0.7978846
        %v1963 = vmul.f32 %v1955, 0.7978846
        %v1964 = vmul.f32 %v1956, 0.7978846
        %v1965 = vmul.f32 %v1957, 0.7978846
        %v1966 = vmul.f32 %v1958, 0.7978846
        %v1967 = vmul.f32 %v1959, 0.7978846
        %v1968 = vtanh.pop %v1960
        %v1969 = vtanh.pop %v1961
        %v1970 = vtanh.pop %v1962
        %v1971 = vtanh.pop %v1963
        %v1972 = vtanh.pop %v1964
        %v1973 = vtanh.pop %v1965
        %v1974 = vtanh.pop %v1966
        %v1975 = vtanh.pop %v1967
        %v1976 = vadd.f32 %v1968, 1.0
        %v1977 = vadd.f32 %v1969, 1.0
        %v1978 = vadd.f32 %v1970, 1.0
        %v1979 = vadd.f32 %v1971, 1.0
        %v1980 = vadd.f32 %v1972, 1.0
        %v1981 = vadd.f32 %v1973, 1.0
        %v1982 = vadd.f32 %v1974, 1.0
        %v1983 = vadd.f32 %v1975, 1.0
        %v1984 = vmul.f32 %v1920, %v1976
        %v1985 = vmul.f32 %v1921, %v1977
        %v1986 = vmul.f32 %v1922, %v1978
        %v1987 = vmul.f32 %v1923, %v1979
        %v1988 = vmul.f32 %v1924, %v1980
        %v1989 = vmul.f32 %v1925, %v1981
        %v1990 = vmul.f32 %v1926, %v1982
        %v1991 = vmul.f32 %v1927, %v1983
        %v1992 = vpack.c.bf16 %v1985, %v1984
        %v1993 = vpack.c.bf16 %v1987, %v1986
        %v1994 = vpack.c.bf16 %v1989, %v1988
        %v1995 = vpack.c.bf16 %v1991, %v1990
        %v1996 = vlaneseq
        %v1997 = vshrl.u32 %v1996, 7
        %v1998 = vsub.s32 0, %v1997
        %v1999 = vrot.slane %v723, %v1998
        %v2008 = vunpack.c.l.b16 %v726
        %v2009 = vunpack.c.l.b16 %v727
        %v2010 = vunpack.c.l.b16 %v728
        %v2011 = vunpack.c.l.b16 %v729
        %v2012 = vunpack.c.l.b16 %v730
        %v2013 = vunpack.c.l.b16 %v731
        %v2014 = vunpack.c.l.b16 %v732
        %v2015 = vunpack.c.l.b16 %v733
        %v2016 = vpack.c.b16 %v2009, %v2008
        %v2017 = vpack.c.b16 %v2011, %v2010
        %v2018 = vpack.c.b16 %v2013, %v2012
        %v2019 = vpack.c.b16 %v2015, %v2014
        %v2025 = vsel %vm1079, %v1992, 0
        %v2028 = vsel %vm1079, %v1993, 0
        %v2031 = vsel %vm1079, %v1994, 0
        %v2034 = vsel %vm1079, %v1995, 0
        %2036 = vmatprep.subr.bf16.mxu0 0
        %2037 = vmatpush1.bf16.msra.mxu0 %v2016
        %2038 = vmatprep.subr.bf16.mxu0 0
        %2039 = vmatpush1.bf16.msra.mxu0 %v2017
        %2040 = vmatprep.subr.bf16.mxu0 0
        %2041 = vmatpush1.bf16.msra.mxu0 %v2018
        %2042 = vmatprep.subr.bf16.mxu0 0
        %2043 = vmatpush1.bf16.msra.mxu0 %v2019
        %2044 = vmatprep.subr.bf16.mxu0 0
        %2045 = vmatpush1.bf16.msra.mxu0 0
        %2046 = vmatprep.subr.bf16.mxu0 0
        %2047 = vmatpush1.bf16.msra.mxu0 0
        %2048 = vmatprep.subr.bf16.mxu0 0
        %2049 = vmatpush1.bf16.msra.mxu0 0
        %2050 = vmatprep.subr.bf16.mxu0 0
        %2051 = vmatpush1.bf16.msra.mxu0 0
        %2052 = vmatprep.subr.bf16.mxu0 0
        %2053 = vmatpush1.bf16.msra.mxu0 0
        %2054 = vmatprep.subr.bf16.mxu0 0
        %2055 = vmatpush1.bf16.msra.mxu0 0
        %2056 = vmatprep.subr.bf16.mxu0 0
        %2057 = vmatpush1.bf16.msra.mxu0 0
        %2058 = vmatprep.subr.bf16.mxu0 0
        %2059 = vmatpush1.bf16.msra.mxu0 0
        %2060 = vmatprep.subr.bf16.mxu0 0
        %2061 = vmatpush1.bf16.msra.mxu0 0
        %2062 = vmatprep.subr.bf16.mxu0 0
        %2063 = vmatpush1.bf16.msra.mxu0 0
        %2064 = vmatprep.subr.bf16.mxu0 0
        %2065 = vmatpush1.bf16.msra.mxu0 0
        %2066 = vmatprep.subr.bf16.mxu0 0
        %2067 = vmatpush1.bf16.msra.mxu0 0
        %2068 = vmatprep.mubr.bf16.mxu0 0
        %2069 = vmatmul.mubr.bf16.gmra.mrb[0].mxu0 %v2025
        %v2070 = vpop.f32.mrb[0].mxu0
        %v2071 = vadd.f32 %v1999, %v2070
        %v2072 = vpop.f32.mrb[0].mxu0
        %v2073 = vpop.f32.mrb[0].mxu0
        %v2074 = vadd.f32 %v1999, %v2073
        %v2075 = vpop.f32.mrb[0].mxu0
        %2076 = vmatprep.mubr.bf16.mxu0 0
        %2077 = vmatmul.mubr.bf16.gmra.mrb[0].mxu0 %v2028
        %v2078 = vpop.f32.mrb[0].mxu0
        %v2079 = vadd.f32 %v1999, %v2078
        %v2080 = vpop.f32.mrb[0].mxu0
        %v2081 = vpop.f32.mrb[0].mxu0
        %v2082 = vadd.f32 %v1999, %v2081
        %v2083 = vpop.f32.mrb[0].mxu0
        %2084 = vmatprep.mubr.bf16.mxu0 0
        %2085 = vmatmul.mubr.bf16.gmra.mrb[0].mxu0 %v2031
        %v2086 = vpop.f32.mrb[0].mxu0
        %v2087 = vadd.f32 %v1999, %v2086
        %v2088 = vpop.f32.mrb[0].mxu0
        %v2089 = vpop.f32.mrb[0].mxu0
        %v2090 = vadd.f32 %v1999, %v2089
        %v2091 = vpop.f32.mrb[0].mxu0
        %2092 = vmatprep.mubr.bf16.mxu0 0
        %2093 = vmatmul.mubr.bf16.gmra.mrb[0].mxu0 %v2034
        %v2094 = vpop.f32.mrb[0].mxu0
        %v2095 = vadd.f32 %v1999, %v2094
        %v2096 = vpop.f32.mrb[0].mxu0
        %v2097 = vpop.f32.mrb[0].mxu0
        %v2098 = vadd.f32 %v1999, %v2097
        %v2099 = vpop.f32.mrb[0].mxu0
        %2100 = vdwg.mxu0
        %v2101 = vadd.f32 %v1696, %v2071
        %v2102 = vadd.f32 %v1697, %v2074
        %v2103 = vadd.f32 %v1698, %v2079
        %v2104 = vadd.f32 %v1699, %v2082
        %v2105 = vadd.f32 %v1700, %v2087
        %v2106 = vadd.f32 %v1701, %v2090
        %v2107 = vadd.f32 %v1702, %v2095
        %v2108 = vadd.f32 %v1703, %v2098
        %v2109 = vld [vmem:[%s1 + $0xb] sm:$0x1]
        %v2110 = vld [vmem:[%s1 + $0xc] sm:$0x1]
        %v2111 = vld [vmem:[%s1 + $0xd] sm:$0x1]
        %v2112 = vld [vmem:[%s1 + $0xe] sm:$0x1]
        %v2113 = vld [vmem:[%s1 + $0xf] sm:$0x1]
        %v2114 = vld [vmem:[%s1 + $0x10] sm:$0x1]
        %v2115 = vld [vmem:[%s1 + $0x11] sm:$0x1]
        %v2116 = vld [vmem:[%s1 + $0x12] sm:$0x1]
        %s2117 = scalar_lea.vmem %s3, 8
        %v2118 = vld [vmem:[%s2117] sm:$0xf]
        %v2119 = vld [vmem:[%s2117 + $0x4] sm:$0xf]
        %s2120 = scalar_lea.vmem %s4, 32
        %v2121 = vld [vmem:[%s2120] sm:$0xf]
        %v2122 = vld [vmem:[%s2120 + $0x4] sm:$0xf]
        %v2123 = vld [vmem:[%s2120 + $0x8] sm:$0xf]
        %v2124 = vld [vmem:[%s2120 + $0xc] sm:$0xf]
        %v2125 = vld [vmem:[%s2120 + $0x10] sm:$0xf]
        %v2126 = vld [vmem:[%s2120 + $0x14] sm:$0xf]
        %v2127 = vld [vmem:[%s2120 + $0x18] sm:$0xf]
        %v2128 = vld [vmem:[%s2120 + $0x1c] sm:$0xf]
        %v2129 = vsel %vm586, %v2101, 0.0
        %2130 = vadd.xlane.f32.xlu0 %v2129
        %v2131 = vpop.xlane.xlu0 %2130
        %v2132 = vsel %vm586, %v2102, 0.0
        %2133 = vadd.xlane.f32.xlu0 %v2132
        %v2134 = vpop.xlane.xlu0 %2133
        %v2135 = vsel %vm586, %v2103, 0.0
        %2136 = vadd.xlane.f32.xlu0 %v2135
        %v2137 = vpop.xlane.xlu0 %2136
        %v2138 = vsel %vm586, %v2104, 0.0
        %2139 = vadd.xlane.f32.xlu0 %v2138
        %v2140 = vpop.xlane.xlu0 %2139
        %v2141 = vsel %vm586, %v2105, 0.0
        %2142 = vadd.xlane.f32.xlu0 %v2141
        %v2143 = vpop.xlane.xlu0 %2142
        %v2144 = vsel %vm586, %v2106, 0.0
        %2145 = vadd.xlane.f32.xlu0 %v2144
        %v2146 = vpop.xlane.xlu0 %2145
        %v2147 = vsel %vm586, %v2107, 0.0
        %2148 = vadd.xlane.f32.xlu0 %v2147
        %v2149 = vpop.xlane.xlu0 %2148
        %v2150 = vsel %vm586, %v2108, 0.0
        %2151 = vadd.xlane.f32.xlu0 %v2150
        %v2152 = vpop.xlane.xlu0 %2151
        %v2153 = vmul.f32 %v2131, %v611
        %v2154 = vmul.f32 %v2134, %v611
        %v2155 = vmul.f32 %v2137, %v611
        %v2156 = vmul.f32 %v2140, %v611
        %v2157 = vmul.f32 %v2143, %v611
        %v2158 = vmul.f32 %v2146, %v611
        %v2159 = vmul.f32 %v2149, %v611
        %v2160 = vmul.f32 %v2152, %v611
        %v2161 = vsub.f32 %v2101, %v2153
        %v2162 = vsub.f32 %v2102, %v2154
        %v2163 = vsub.f32 %v2103, %v2155
        %v2164 = vsub.f32 %v2104, %v2156
        %v2165 = vsub.f32 %v2105, %v2157
        %v2166 = vsub.f32 %v2106, %v2158
        %v2167 = vsub.f32 %v2107, %v2159
        %v2168 = vsub.f32 %v2108, %v2160
        %v2169 = vmul.f32 %v2161, %v2161
        %v2170 = vmul.f32 %v2162, %v2162
        %v2171 = vmul.f32 %v2163, %v2163
        %v2172 = vmul.f32 %v2164, %v2164
        %v2173 = vmul.f32 %v2165, %v2165
        %v2174 = vmul.f32 %v2166, %v2166
        %v2175 = vmul.f32 %v2167, %v2167
        %v2176 = vmul.f32 %v2168, %v2168
        %v2177 = vsel %vm586, %v2169, 0.0
        %2178 = vadd.xlane.f32.xlu0 %v2177
        %v2179 = vpop.xlane.xlu0 %2178
        %v2180 = vsel %vm586, %v2170, 0.0
        %2181 = vadd.xlane.f32.xlu0 %v2180
        %v2182 = vpop.xlane.xlu0 %2181
        %v2183 = vsel %vm586, %v2171, 0.0
        %2184 = vadd.xlane.f32.xlu0 %v2183
        %v2185 = vpop.xlane.xlu0 %2184
        %v2186 = vsel %vm586, %v2172, 0.0
        %2187 = vadd.xlane.f32.xlu0 %v2186
        %v2188 = vpop.xlane.xlu0 %2187
        %v2189 = vsel %vm586, %v2173, 0.0
        %2190 = vadd.xlane.f32.xlu0 %v2189
        %v2191 = vpop.xlane.xlu0 %2190
        %v2192 = vsel %vm586, %v2174, 0.0
        %2193 = vadd.xlane.f32.xlu0 %v2192
        %v2194 = vpop.xlane.xlu0 %2193
        %v2195 = vsel %vm586, %v2175, 0.0
        %2196 = vadd.xlane.f32.xlu0 %v2195
        %v2197 = vpop.xlane.xlu0 %2196
        %v2198 = vsel %vm586, %v2176, 0.0
        %2199 = vadd.xlane.f32.xlu0 %v2198
        %v2200 = vpop.xlane.xlu0 %2199
        %v2201 = vmul.f32 %v2179, %v611
        %v2202 = vmul.f32 %v2182, %v611
        %v2203 = vmul.f32 %v2185, %v611
        %v2204 = vmul.f32 %v2188, %v611
        %v2205 = vmul.f32 %v2191, %v611
        %v2206 = vmul.f32 %v2194, %v611
        %v2207 = vmul.f32 %v2197, %v611
        %v2208 = vmul.f32 %v2200, %v611
        %v2209 = vadd.f32 %v2201, 1e-05
        %v2210 = vadd.f32 %v2202, 1e-05
        %v2211 = vadd.f32 %v2203, 1e-05
        %v2212 = vadd.f32 %v2204, 1e-05
        %v2213 = vadd.f32 %v2205, 1e-05
        %v2214 = vadd.f32 %v2206, 1e-05
        %v2215 = vadd.f32 %v2207, 1e-05
        %v2216 = vadd.f32 %v2208, 1e-05
        %v2217 = vrsqrt.pop %v2209
        %v2218 = vrsqrt.pop %v2210
        %v2219 = vrsqrt.pop %v2211
        %v2220 = vrsqrt.pop %v2212
        %v2221 = vrsqrt.pop %v2213
        %v2222 = vrsqrt.pop %v2214
        %v2223 = vrsqrt.pop %v2215
        %v2224 = vrsqrt.pop %v2216
        %v2225 = vmul.f32 %v2161, %v2217
        %v2226 = vmul.f32 %v2162, %v2218
        %v2227 = vmul.f32 %v2163, %v2219
        %v2228 = vmul.f32 %v2164, %v2220
        %v2229 = vmul.f32 %v2165, %v2221
        %v2230 = vmul.f32 %v2166, %v2222
        %v2231 = vmul.f32 %v2167, %v2223
        %v2232 = vmul.f32 %v2168, %v2224
        %v2233 = vlaneseq
        %v2234 = vshrl.u32 %v2233, 7
        %v2235 = vsub.s32 0, %v2234
        %v2236 = vrot.slane %v2109, %v2235
        %v2237 = vmul.f32 %v2225, %v2236
        %v2238 = vmul.f32 %v2226, %v2236
        %v2239 = vmul.f32 %v2227, %v2236
        %v2240 = vmul.f32 %v2228, %v2236
        %v2241 = vmul.f32 %v2229, %v2236
        %v2242 = vmul.f32 %v2230, %v2236
        %v2243 = vmul.f32 %v2231, %v2236
        %v2244 = vmul.f32 %v2232, %v2236
        %v2245 = vlaneseq
        %v2246 = vshrl.u32 %v2245, 7
        %v2247 = vsub.s32 0, %v2246
        %v2248 = vrot.slane %v2110, %v2247
        %v2249 = vadd.f32 %v2237, %v2248
        %v2250 = vadd.f32 %v2238, %v2248
        %v2251 = vadd.f32 %v2239, %v2248
        %v2252 = vadd.f32 %v2240, %v2248
        %v2253 = vadd.f32 %v2241, %v2248
        %v2254 = vadd.f32 %v2242, %v2248
        %v2255 = vadd.f32 %v2243, %v2248
        %v2256 = vadd.f32 %v2244, %v2248
        %v2257 = vpack.c.bf16 %v2250, %v2249
        %v2258 = vpack.c.bf16 %v2252, %v2251
        %v2259 = vpack.c.bf16 %v2254, %v2253
        %v2260 = vpack.c.bf16 %v2256, %v2255
        %v2261 = vlaneseq
        %v2262 = vshrl.u32 %v2261, 7
        %v2263 = vsub.s32 0, %v2262
        %v2264 = vrot.slane %v2111, %v2263
        %v2267 = vunpack.c.l.b16 %v2118
        %v2268 = vunpack.c.l.b16 %v2119
        %v2269 = vpack.c.b16 %v2268, %v2267
        %v2272 = vsel %vm586, %v2257, 0
        %v2275 = vsel %vm586, %v2258, 0
        %v2278 = vsel %vm586, %v2259, 0
        %v2281 = vsel %vm586, %v2260, 0
        %2283 = vmatprep.subr.bf16.mxu0 0
        %2284 = vmatpush1.bf16.msra.mxu0 %v2269
        %2285 = vmatprep.subr.bf16.mxu0 0
        %2286 = vmatpush1.bf16.msra.mxu0 0
        %2287 = vmatprep.subr.bf16.mxu0 0
        %2288 = vmatpush1.bf16.msra.mxu0 0
        %2289 = vmatprep.subr.bf16.mxu0 0
        %2290 = vmatpush1.bf16.msra.mxu0 0
        %2291 = vmatprep.subr.bf16.mxu0 0
        %2292 = vmatpush1.bf16.msra.mxu0 0
        %2293 = vmatprep.subr.bf16.mxu0 0
        %2294 = vmatpush1.bf16.msra.mxu0 0
        %2295 = vmatprep.subr.bf16.mxu0 0
        %2296 = vmatpush1.bf16.msra.mxu0 0
        %2297 = vmatprep.subr.bf16.mxu0 0
        %2298 = vmatpush1.bf16.msra.mxu0 0
        %2299 = vmatprep.subr.bf16.mxu0 0
        %2300 = vmatpush1.bf16.msra.mxu0 0
        %2301 = vmatprep.subr.bf16.mxu0 0
        %2302 = vmatpush1.bf16.msra.mxu0 0
        %2303 = vmatprep.subr.bf16.mxu0 0
        %2304 = vmatpush1.bf16.msra.mxu0 0
        %2305 = vmatprep.subr.bf16.mxu0 0
        %2306 = vmatpush1.bf16.msra.mxu0 0
        %2307 = vmatprep.subr.bf16.mxu0 0
        %2308 = vmatpush1.bf16.msra.mxu0 0
        %2309 = vmatprep.subr.bf16.mxu0 0
        %2310 = vmatpush1.bf16.msra.mxu0 0
        %2311 = vmatprep.subr.bf16.mxu0 0
        %2312 = vmatpush1.bf16.msra.mxu0 0
        %2313 = vmatprep.subr.bf16.mxu0 0
        %2314 = vmatpush1.bf16.msra.mxu0 0
        %2315 = vmatprep.mubr.bf16.mxu0 0
        %2316 = vmatmul.mubr.bf16.gmra.mrb[0].mxu0 %v2272
        %v2317 = vpop.f32.mrb[0].mxu0
        %v2318 = vadd.f32 %v2264, %v2317
        %v2319 = vpop.f32.mrb[0].mxu0
        %v2320 = vpop.f32.mrb[0].mxu0
        %v2321 = vadd.f32 %v2264, %v2320
        %v2322 = vpop.f32.mrb[0].mxu0
        %2323 = vmatprep.mubr.bf16.mxu0 0
        %2324 = vmatmul.mubr.bf16.gmra.mrb[0].mxu0 %v2275
        %v2325 = vpop.f32.mrb[0].mxu0
        %v2326 = vadd.f32 %v2264, %v2325
        %v2327 = vpop.f32.mrb[0].mxu0
        %v2328 = vpop.f32.mrb[0].mxu0
        %v2329 = vadd.f32 %v2264, %v2328
        %v2330 = vpop.f32.mrb[0].mxu0
        %2331 = vmatprep.mubr.bf16.mxu0 0
        %2332 = vmatmul.mubr.bf16.gmra.mrb[0].mxu0 %v2278
        %v2333 = vpop.f32.mrb[0].mxu0
        %v2334 = vadd.f32 %v2264, %v2333
        %v2335 = vpop.f32.mrb[0].mxu0
        %v2336 = vpop.f32.mrb[0].mxu0
        %v2337 = vadd.f32 %v2264, %v2336
        %v2338 = vpop.f32.mrb[0].mxu0
        %2339 = vmatprep.mubr.bf16.mxu0 0
        %2340 = vmatmul.mubr.bf16.gmra.mrb[0].mxu0 %v2281
        %v2341 = vpop.f32.mrb[0].mxu0
        %v2342 = vadd.f32 %v2264, %v2341
        %v2343 = vpop.f32.mrb[0].mxu0
        %v2344 = vpop.f32.mrb[0].mxu0
        %v2345 = vadd.f32 %v2264, %v2344
        %v2346 = vpop.f32.mrb[0].mxu0
        %2347 = vdwg.mxu0
        %v2348 = vmul.f32 %v2318, 0.35355338
        %v2349 = vmul.f32 %v2321, 0.35355338
        %v2350 = vmul.f32 %v2326, 0.35355338
        %v2351 = vmul.f32 %v2329, 0.35355338
        %v2352 = vmul.f32 %v2334, 0.35355338
        %v2353 = vmul.f32 %v2337, 0.35355338
        %v2354 = vmul.f32 %v2342, 0.35355338
        %v2355 = vmul.f32 %v2345, 0.35355338
        %v2356 = vpack.c.bf16 %v2349, %v2348
        %v2357 = vpack.c.bf16 %v2351, %v2350
        %v2358 = vpack.c.bf16 %v2353, %v2352
        %v2359 = vpack.c.bf16 %v2355, %v2354
        %v2360 = vpack.c.bf16 %v2321, %v2318
        %v2361 = vpack.c.bf16 %v2329, %v2326
        %v2362 = vpack.c.bf16 %v2337, %v2334
        %v2363 = vpack.c.bf16 %v2345, %v2342
        %s2364 = scalar_lea.vmem %s5, 128
        %v2365 = vld [vmem:[%s2364] sm:$0xff]
        %v2366 = vld [vmem:[%s2364 + $0x8] sm:$0xff]
        %v2367 = vld [vmem:[%s2364 + $0x10] sm:$0xff]
        %v2368 = vld [vmem:[%s2364 + $0x18] sm:$0xff]
        %v2369 = vld [vmem:[%s2364 + $0x20] sm:$0xff]
        %v2370 = vld [vmem:[%s2364 + $0x28] sm:$0xff]
        %v2371 = vld [vmem:[%s2364 + $0x30] sm:$0xff]
        %v2372 = vld [vmem:[%s2364 + $0x38] sm:$0xff]
        %2377 = vrot.lane.b32.xlu0 %v2360, 112
        %v2378 = vpop.permute.xlu0 %2377
        %2379 = vrot.lane.b32.xlu0 %v2361, 112
        %v2380 = vpop.permute.xlu0 %2379
        %2381 = vrot.lane.b32.xlu0 %v2362, 112
        %v2382 = vpop.permute.xlu0 %2381
        %2383 = vrot.lane.b32.xlu0 %v2363, 112
        %v2384 = vpop.permute.xlu0 %2383
        %v2386 = vsel %vm989, %v2356, 0
        %v2389 = vsel %vm989, %v2357, 0
        %v2392 = vsel %vm989, %v2358, 0
        %v2395 = vsel %vm989, %v2359, 0
        %v2398 = vsel %vm989, %v2378, 0
        %v2401 = vsel %vm989, %v2380, 0
        %v2404 = vsel %vm989, %v2382, 0
        %v2407 = vsel %vm989, %v2384, 0
        %2409 = vmatprep.subr.bf16.mxu0 0
        %2410 = vmatpush1.bf16.xpose.msra.mxu0 %v2398
        %2411 = vmatprep.subr.bf16.mxu0 0
        %2412 = vmatpush1.bf16.xpose.msra.mxu0 %v2401
        %2413 = vmatprep.subr.bf16.mxu0 0
        %2414 = vmatpush1.bf16.xpose.msra.mxu0 %v2404
        %2415 = vmatprep.subr.bf16.mxu0 0
        %2416 = vmatpush1.bf16.xpose.msra.mxu0 %v2407
        %2417 = vmatprep.subr.bf16.mxu0 0
        %2418 = vmatpush1.bf16.xpose.msra.mxu0 0
        %2419 = vmatprep.subr.bf16.mxu0 0
        %2420 = vmatpush1.bf16.xpose.msra.mxu0 0
        %2421 = vmatprep.subr.bf16.mxu0 0
        %2422 = vmatpush1.bf16.xpose.msra.mxu0 0
        %2423 = vmatprep.subr.bf16.mxu0 0
        %2424 = vmatpush1.bf16.xpose.msra.mxu0 0
        %2425 = vmatprep.subr.bf16.mxu0 0
        %2426 = vmatpush1.bf16.xpose.msra.mxu0 0
        %2427 = vmatprep.subr.bf16.mxu0 0
        %2428 = vmatpush1.bf16.xpose.msra.mxu0 0
        %2429 = vmatprep.subr.bf16.mxu0 0
        %2430 = vmatpush1.bf16.xpose.msra.mxu0 0
        %2431 = vmatprep.subr.bf16.mxu0 0
        %2432 = vmatpush1.bf16.xpose.msra.mxu0 0
        %2433 = vmatprep.subr.bf16.mxu0 0
        %2434 = vmatpush1.bf16.xpose.msra.mxu0 0
        %2435 = vmatprep.subr.bf16.mxu0 0
        %2436 = vmatpush1.bf16.xpose.msra.mxu0 0
        %2437 = vmatprep.subr.bf16.mxu0 0
        %2438 = vmatpush1.bf16.xpose.msra.mxu0 0
        %2439 = vmatprep.subr.bf16.mxu0 0
        %2440 = vmatpush1.bf16.xpose.msra.mxu0 0
        %2441 = vmatprep.mubr.bf16.mxu0 0
        %2442 = vmatmul.mubr.bf16.gmra.mrb[0].mxu0 %v2386
        %v2443 = vpop.f32.mrb[0].mxu0
        %v2444 = vadd.f32 %v2365, %v2443
        %v2445 = vpop.f32.mrb[0].mxu0
        %v2446 = vpop.f32.mrb[0].mxu0
        %v2447 = vadd.f32 %v2366, %v2446
        %v2448 = vpop.f32.mrb[0].mxu0
        %2449 = vmatprep.mubr.bf16.mxu0 0
        %2450 = vmatmul.mubr.bf16.gmra.mrb[0].mxu0 %v2389
        %v2451 = vpop.f32.mrb[0].mxu0
        %v2452 = vadd.f32 %v2367, %v2451
        %v2453 = vpop.f32.mrb[0].mxu0
        %v2454 = vpop.f32.mrb[0].mxu0
        %v2455 = vadd.f32 %v2368, %v2454
        %v2456 = vpop.f32.mrb[0].mxu0
        %2457 = vmatprep.mubr.bf16.mxu0 0
        %2458 = vmatmul.mubr.bf16.gmra.mrb[0].mxu0 %v2392
        %v2459 = vpop.f32.mrb[0].mxu0
        %v2460 = vadd.f32 %v2369, %v2459
        %v2461 = vpop.f32.mrb[0].mxu0
        %v2462 = vpop.f32.mrb[0].mxu0
        %v2463 = vadd.f32 %v2370, %v2462
        %v2464 = vpop.f32.mrb[0].mxu0
        %2465 = vmatprep.mubr.bf16.mxu0 0
        %2466 = vmatmul.mubr.bf16.gmra.mrb[0].mxu0 %v2395
        %v2467 = vpop.f32.mrb[0].mxu0
        %v2468 = vadd.f32 %v2371, %v2467
        %v2469 = vpop.f32.mrb[0].mxu0
        %v2470 = vpop.f32.mrb[0].mxu0
        %v2471 = vadd.f32 %v2372, %v2470
        %v2472 = vpop.f32.mrb[0].mxu0
        %2473 = vdwg.mxu0
        %v2474 = vsel %vm1079, %v2444, -inf
        %2475 = vmax.xlane.f32.xlu0 %v2474
        %v2476 = vpop.xlane.xlu0 %2475
        %v2477 = vsel %vm1079, %v2447, -inf
        %2478 = vmax.xlane.f32.xlu0 %v2477
        %v2479 = vpop.xlane.xlu0 %2478
        %v2480 = vsel %vm1079, %v2452, -inf
        %2481 = vmax.xlane.f32.xlu0 %v2480
        %v2482 = vpop.xlane.xlu0 %2481
        %v2483 = vsel %vm1079, %v2455, -inf
        %2484 = vmax.xlane.f32.xlu0 %v2483
        %v2485 = vpop.xlane.xlu0 %2484
        %v2486 = vsel %vm1079, %v2460, -inf
        %2487 = vmax.xlane.f32.xlu0 %v2486
        %v2488 = vpop.xlane.xlu0 %2487
        %v2489 = vsel %vm1079, %v2463, -inf
        %2490 = vmax.xlane.f32.xlu0 %v2489
        %v2491 = vpop.xlane.xlu0 %2490
        %v2492 = vsel %vm1079, %v2468, -inf
        %2493 = vmax.xlane.f32.xlu0 %v2492
        %v2494 = vpop.xlane.xlu0 %2493
        %v2495 = vsel %vm1079, %v2471, -inf
        %2496 = vmax.xlane.f32.xlu0 %v2495
        %v2497 = vpop.xlane.xlu0 %2496
        %v2498 = vsub.f32 %v2444, %v2476
        %v2499 = vsub.f32 %v2447, %v2479
        %v2500 = vsub.f32 %v2452, %v2482
        %v2501 = vsub.f32 %v2455, %v2485
        %v2502 = vsub.f32 %v2460, %v2488
        %v2503 = vsub.f32 %v2463, %v2491
        %v2504 = vsub.f32 %v2468, %v2494
        %v2505 = vsub.f32 %v2471, %v2497
        %v2506 = vmul.f32 %v2498, 1.442695
        %v2507 = vpow.pop %v2506
        %v2508 = vmul.f32 %v2499, 1.442695
        %v2509 = vpow.pop %v2508
        %v2510 = vmul.f32 %v2500, 1.442695
        %v2511 = vpow.pop %v2510
        %v2512 = vmul.f32 %v2501, 1.442695
        %v2513 = vpow.pop %v2512
        %v2514 = vmul.f32 %v2502, 1.442695
        %v2515 = vpow.pop %v2514
        %v2516 = vmul.f32 %v2503, 1.442695
        %v2517 = vpow.pop %v2516
        %v2518 = vmul.f32 %v2504, 1.442695
        %v2519 = vpow.pop %v2518
        %v2520 = vmul.f32 %v2505, 1.442695
        %v2521 = vpow.pop %v2520
        %v2522 = vsel %vm1079, %v2507, 0.0
        %2523 = vadd.xlane.f32.xlu0 %v2522
        %v2524 = vpop.xlane.xlu0 %2523
        %v2525 = vsel %vm1079, %v2509, 0.0
        %2526 = vadd.xlane.f32.xlu0 %v2525
        %v2527 = vpop.xlane.xlu0 %2526
        %v2528 = vsel %vm1079, %v2511, 0.0
        %2529 = vadd.xlane.f32.xlu0 %v2528
        %v2530 = vpop.xlane.xlu0 %2529
        %v2531 = vsel %vm1079, %v2513, 0.0
        %2532 = vadd.xlane.f32.xlu0 %v2531
        %v2533 = vpop.xlane.xlu0 %2532
        %v2534 = vsel %vm1079, %v2515, 0.0
        %2535 = vadd.xlane.f32.xlu0 %v2534
        %v2536 = vpop.xlane.xlu0 %2535
        %v2537 = vsel %vm1079, %v2517, 0.0
        %2538 = vadd.xlane.f32.xlu0 %v2537
        %v2539 = vpop.xlane.xlu0 %2538
        %v2540 = vsel %vm1079, %v2519, 0.0
        %2541 = vadd.xlane.f32.xlu0 %v2540
        %v2542 = vpop.xlane.xlu0 %2541
        %v2543 = vsel %vm1079, %v2521, 0.0
        %2544 = vadd.xlane.f32.xlu0 %v2543
        %v2545 = vpop.xlane.xlu0 %2544
        %v2546 = vrcp.pop %v2524
        %v2547 = vrcp.pop %v2527
        %v2548 = vrcp.pop %v2530
        %v2549 = vrcp.pop %v2533
        %v2550 = vrcp.pop %v2536
        %v2551 = vrcp.pop %v2539
        %v2552 = vrcp.pop %v2542
        %v2553 = vrcp.pop %v2545
        %v2554 = vmul.f32 %v2507, %v2546
        %v2555 = vmul.f32 %v2509, %v2547
        %v2556 = vmul.f32 %v2511, %v2548
        %v2557 = vmul.f32 %v2513, %v2549
        %v2558 = vmul.f32 %v2515, %v2550
        %v2559 = vmul.f32 %v2517, %v2551
        %v2560 = vmul.f32 %v2519, %v2552
        %v2561 = vmul.f32 %v2521, %v2553
        %v2562 = vpack.c.bf16 %v2555, %v2554
        %v2563 = vpack.c.bf16 %v2557, %v2556
        %v2564 = vpack.c.bf16 %v2559, %v2558
        %v2565 = vpack.c.bf16 %v2561, %v2560
        %2566 = vrot.lane.b32.xlu0 %v2360, 96
        %v2567 = vpop.permute.xlu0 %2566
        %2568 = vrot.lane.b32.xlu0 %v2361, 96
        %v2569 = vpop.permute.xlu0 %2568
        %2570 = vrot.lane.b32.xlu0 %v2362, 96
        %v2571 = vpop.permute.xlu0 %2570
        %2572 = vrot.lane.b32.xlu0 %v2363, 96
        %v2573 = vpop.permute.xlu0 %2572
        %v2579 = vsel %vm1079, %v2562, 0
        %v2582 = vsel %vm1079, %v2563, 0
        %v2585 = vsel %vm1079, %v2564, 0
        %v2588 = vsel %vm1079, %v2565, 0
        %2590 = vmatprep.subr.bf16.mxu0 0
        %2591 = vmatpush1.bf16.msra.mxu0 %v2567
        %2592 = vmatprep.subr.bf16.mxu0 0
        %2593 = vmatpush1.bf16.msra.mxu0 %v2569
        %2594 = vmatprep.subr.bf16.mxu0 0
        %2595 = vmatpush1.bf16.msra.mxu0 %v2571
        %2596 = vmatprep.subr.bf16.mxu0 0
        %2597 = vmatpush1.bf16.msra.mxu0 %v2573
        %2598 = vmatprep.subr.bf16.mxu0 0
        %2599 = vmatpush1.bf16.msra.mxu0 0
        %2600 = vmatprep.subr.bf16.mxu0 0
        %2601 = vmatpush1.bf16.msra.mxu0 0
        %2602 = vmatprep.subr.bf16.mxu0 0
        %2603 = vmatpush1.bf16.msra.mxu0 0
        %2604 = vmatprep.subr.bf16.mxu0 0
        %2605 = vmatpush1.bf16.msra.mxu0 0
        %2606 = vmatprep.subr.bf16.mxu0 0
        %2607 = vmatpush1.bf16.msra.mxu0 0
        %2608 = vmatprep.subr.bf16.mxu0 0
        %2609 = vmatpush1.bf16.msra.mxu0 0
        %2610 = vmatprep.subr.bf16.mxu0 0
        %2611 = vmatpush1.bf16.msra.mxu0 0
        %2612 = vmatprep.subr.bf16.mxu0 0
        %2613 = vmatpush1.bf16.msra.mxu0 0
        %2614 = vmatprep.subr.bf16.mxu0 0
        %2615 = vmatpush1.bf16.msra.mxu0 0
        %2616 = vmatprep.subr.bf16.mxu0 0
        %2617 = vmatpush1.bf16.msra.mxu0 0
        %2618 = vmatprep.subr.bf16.mxu0 0
        %2619 = vmatpush1.bf16.msra.mxu0 0
        %2620 = vmatprep.subr.bf16.mxu0 0
        %2621 = vmatpush1.bf16.msra.mxu0 0
        %2622 = vmatprep.mubr.bf16.mxu0 0
        %2623 = vmatmul.mubr.bf16.gmra.mrb[0].mxu0 %v2579
        %v2624 = vpop.f32.mrb[0].mxu0
        %v2625 = vadd.f32 0.0, %v2624
        %v2626 = vpop.f32.mrb[0].mxu0
        %v2627 = vpop.f32.mrb[0].mxu0
        %v2628 = vadd.f32 0.0, %v2627
        %v2629 = vpop.f32.mrb[0].mxu0
        %2630 = vmatprep.mubr.bf16.mxu0 0
        %2631 = vmatmul.mubr.bf16.gmra.mrb[0].mxu0 %v2582
        %v2632 = vpop.f32.mrb[0].mxu0
        %v2633 = vadd.f32 0.0, %v2632
        %v2634 = vpop.f32.mrb[0].mxu0
        %v2635 = vpop.f32.mrb[0].mxu0
        %v2636 = vadd.f32 0.0, %v2635
        %v2637 = vpop.f32.mrb[0].mxu0
        %2638 = vmatprep.mubr.bf16.mxu0 0
        %2639 = vmatmul.mubr.bf16.gmra.mrb[0].mxu0 %v2585
        %v2640 = vpop.f32.mrb[0].mxu0
        %v2641 = vadd.f32 0.0, %v2640
        %v2642 = vpop.f32.mrb[0].mxu0
        %v2643 = vpop.f32.mrb[0].mxu0
        %v2644 = vadd.f32 0.0, %v2643
        %v2645 = vpop.f32.mrb[0].mxu0
        %2646 = vmatprep.mubr.bf16.mxu0 0
        %2647 = vmatmul.mubr.bf16.gmra.mrb[0].mxu0 %v2588
        %v2648 = vpop.f32.mrb[0].mxu0
        %v2649 = vadd.f32 0.0, %v2648
        %v2650 = vpop.f32.mrb[0].mxu0
        %v2651 = vpop.f32.mrb[0].mxu0
        %v2652 = vadd.f32 0.0, %v2651
        %v2653 = vpop.f32.mrb[0].mxu0
        %2654 = vdwg.mxu0
        %s2655 = scalar_lea.vmem %s5, 192
        %v2656 = vld [vmem:[%s2655] sm:$0xff]
        %v2657 = vld [vmem:[%s2655 + $0x8] sm:$0xff]
        %v2658 = vld [vmem:[%s2655 + $0x10] sm:$0xff]
        %v2659 = vld [vmem:[%s2655 + $0x18] sm:$0xff]
        %v2660 = vld [vmem:[%s2655 + $0x20] sm:$0xff]
        %v2661 = vld [vmem:[%s2655 + $0x28] sm:$0xff]
        %v2662 = vld [vmem:[%s2655 + $0x30] sm:$0xff]
        %v2663 = vld [vmem:[%s2655 + $0x38] sm:$0xff]
        %2668 = vrot.lane.b32.xlu0 %v2356, 120
        %v2669 = vpop.permute.xlu0 %2668
        %2670 = vrot.lane.b32.xlu0 %v2357, 120
        %v2671 = vpop.permute.xlu0 %2670
        %2672 = vrot.lane.b32.xlu0 %v2358, 120
        %v2673 = vpop.permute.xlu0 %2672
        %2674 = vrot.lane.b32.xlu0 %v2359, 120
        %v2675 = vpop.permute.xlu0 %2674
        %2676 = vrot.lane.b32.xlu0 %v2360, 104
        %v2677 = vpop.permute.xlu0 %2676
        %2678 = vrot.lane.b32.xlu0 %v2361, 104
        %v2679 = vpop.permute.xlu0 %2678
        %2680 = vrot.lane.b32.xlu0 %v2362, 104
        %v2681 = vpop.permute.xlu0 %2680
        %2682 = vrot.lane.b32.xlu0 %v2363, 104
        %v2683 = vpop.permute.xlu0 %2682
        %v2685 = vsel %vm989, %v2669, 0
        %v2688 = vsel %vm989, %v2671, 0
        %v2691 = vsel %vm989, %v2673, 0
        %v2694 = vsel %vm989, %v2675, 0
        %v2697 = vsel %vm989, %v2677, 0
        %v2700 = vsel %vm989, %v2679, 0
        %v2703 = vsel %vm989, %v2681, 0
        %v2706 = vsel %vm989, %v2683, 0
        %2708 = vmatprep.subr.bf16.mxu0 0
        %2709 = vmatpush1.bf16.xpose.msra.mxu0 %v2697
        %2710 = vmatprep.subr.bf16.mxu0 0
        %2711 = vmatpush1.bf16.xpose.msra.mxu0 %v2700
        %2712 = vmatprep.subr.bf16.mxu0 0
        %2713 = vmatpush1.bf16.xpose.msra.mxu0 %v2703
        %2714 = vmatprep.subr.bf16.mxu0 0
        %2715 = vmatpush1.bf16.xpose.msra.mxu0 %v2706
        %2716 = vmatprep.subr.bf16.mxu0 0
        %2717 = vmatpush1.bf16.xpose.msra.mxu0 0
        %2718 = vmatprep.subr.bf16.mxu0 0
        %2719 = vmatpush1.bf16.xpose.msra.mxu0 0
        %2720 = vmatprep.subr.bf16.mxu0 0
        %2721 = vmatpush1.bf16.xpose.msra.mxu0 0
        %2722 = vmatprep.subr.bf16.mxu0 0
        %2723 = vmatpush1.bf16.xpose.msra.mxu0 0
        %2724 = vmatprep.subr.bf16.mxu0 0
        %2725 = vmatpush1.bf16.xpose.msra.mxu0 0
        %2726 = vmatprep.subr.bf16.mxu0 0
        %2727 = vmatpush1.bf16.xpose.msra.mxu0 0
        %2728 = vmatprep.subr.bf16.mxu0 0
        %2729 = vmatpush1.bf16.xpose.msra.mxu0 0
        %2730 = vmatprep.subr.bf16.mxu0 0
        %2731 = vmatpush1.bf16.xpose.msra.mxu0 0
        %2732 = vmatprep.subr.bf16.mxu0 0
        %2733 = vmatpush1.bf16.xpose.msra.mxu0 0
        %2734 = vmatprep.subr.bf16.mxu0 0
        %2735 = vmatpush1.bf16.xpose.msra.mxu0 0
        %2736 = vmatprep.subr.bf16.mxu0 0
        %2737 = vmatpush1.bf16.xpose.msra.mxu0 0
        %2738 = vmatprep.subr.bf16.mxu0 0
        %2739 = vmatpush1.bf16.xpose.msra.mxu0 0
        %2740 = vmatprep.mubr.bf16.mxu0 0
        %2741 = vmatmul.mubr.bf16.gmra.mrb[0].mxu0 %v2685
        %v2742 = vpop.f32.mrb[0].mxu0
        %v2743 = vadd.f32 %v2656, %v2742
        %v2744 = vpop.f32.mrb[0].mxu0
        %v2745 = vpop.f32.mrb[0].mxu0
        %v2746 = vadd.f32 %v2657, %v2745
        %v2747 = vpop.f32.mrb[0].mxu0
        %2748 = vmatprep.mubr.bf16.mxu0 0
        %2749 = vmatmul.mubr.bf16.gmra.mrb[0].mxu0 %v2688
        %v2750 = vpop.f32.mrb[0].mxu0
        %v2751 = vadd.f32 %v2658, %v2750
        %v2752 = vpop.f32.mrb[0].mxu0
        %v2753 = vpop.f32.mrb[0].mxu0
        %v2754 = vadd.f32 %v2659, %v2753
        %v2755 = vpop.f32.mrb[0].mxu0
        %2756 = vmatprep.mubr.bf16.mxu0 0
        %2757 = vmatmul.mubr.bf16.gmra.mrb[0].mxu0 %v2691
        %v2758 = vpop.f32.mrb[0].mxu0
        %v2759 = vadd.f32 %v2660, %v2758
        %v2760 = vpop.f32.mrb[0].mxu0
        %v2761 = vpop.f32.mrb[0].mxu0
        %v2762 = vadd.f32 %v2661, %v2761
        %v2763 = vpop.f32.mrb[0].mxu0
        %2764 = vmatprep.mubr.bf16.mxu0 0
        %2765 = vmatmul.mubr.bf16.gmra.mrb[0].mxu0 %v2694
        %v2766 = vpop.f32.mrb[0].mxu0
        %v2767 = vadd.f32 %v2662, %v2766
        %v2768 = vpop.f32.mrb[0].mxu0
        %v2769 = vpop.f32.mrb[0].mxu0
        %v2770 = vadd.f32 %v2663, %v2769
        %v2771 = vpop.f32.mrb[0].mxu0
        %2772 = vdwg.mxu0
        %v2773 = vsel %vm1079, %v2743, -inf
        %2774 = vmax.xlane.f32.xlu0 %v2773
        %v2775 = vpop.xlane.xlu0 %2774
        %v2776 = vsel %vm1079, %v2746, -inf
        %2777 = vmax.xlane.f32.xlu0 %v2776
        %v2778 = vpop.xlane.xlu0 %2777
        %v2779 = vsel %vm1079, %v2751, -inf
        %2780 = vmax.xlane.f32.xlu0 %v2779
        %v2781 = vpop.xlane.xlu0 %2780
        %v2782 = vsel %vm1079, %v2754, -inf
        %2783 = vmax.xlane.f32.xlu0 %v2782
        %v2784 = vpop.xlane.xlu0 %2783
        %v2785 = vsel %vm1079, %v2759, -inf
        %2786 = vmax.xlane.f32.xlu0 %v2785
        %v2787 = vpop.xlane.xlu0 %2786
        %v2788 = vsel %vm1079, %v2762, -inf
        %2789 = vmax.xlane.f32.xlu0 %v2788
        %v2790 = vpop.xlane.xlu0 %2789
        %v2791 = vsel %vm1079, %v2767, -inf
        %2792 = vmax.xlane.f32.xlu0 %v2791
        %v2793 = vpop.xlane.xlu0 %2792
        %v2794 = vsel %vm1079, %v2770, -inf
        %2795 = vmax.xlane.f32.xlu0 %v2794
        %v2796 = vpop.xlane.xlu0 %2795
        %v2797 = vsub.f32 %v2743, %v2775
        %v2798 = vsub.f32 %v2746, %v2778
        %v2799 = vsub.f32 %v2751, %v2781
        %v2800 = vsub.f32 %v2754, %v2784
        %v2801 = vsub.f32 %v2759, %v2787
        %v2802 = vsub.f32 %v2762, %v2790
        %v2803 = vsub.f32 %v2767, %v2793
        %v2804 = vsub.f32 %v2770, %v2796
        %v2805 = vmul.f32 %v2797, 1.442695
        %v2806 = vpow.pop %v2805
        %v2807 = vmul.f32 %v2798, 1.442695
        %v2808 = vpow.pop %v2807
        %v2809 = vmul.f32 %v2799, 1.442695
        %v2810 = vpow.pop %v2809
        %v2811 = vmul.f32 %v2800, 1.442695
        %v2812 = vpow.pop %v2811
        %v2813 = vmul.f32 %v2801, 1.442695
        %v2814 = vpow.pop %v2813
        %v2815 = vmul.f32 %v2802, 1.442695
        %v2816 = vpow.pop %v2815
        %v2817 = vmul.f32 %v2803, 1.442695
        %v2818 = vpow.pop %v2817
        %v2819 = vmul.f32 %v2804, 1.442695
        %v2820 = vpow.pop %v2819
        %v2821 = vsel %vm1079, %v2806, 0.0
        %2822 = vadd.xlane.f32.xlu0 %v2821
        %v2823 = vpop.xlane.xlu0 %2822
        %v2824 = vsel %vm1079, %v2808, 0.0
        %2825 = vadd.xlane.f32.xlu0 %v2824
        %v2826 = vpop.xlane.xlu0 %2825
        %v2827 = vsel %vm1079, %v2810, 0.0
        %2828 = vadd.xlane.f32.xlu0 %v2827
        %v2829 = vpop.xlane.xlu0 %2828
        %v2830 = vsel %vm1079, %v2812, 0.0
        %2831 = vadd.xlane.f32.xlu0 %v2830
        %v2832 = vpop.xlane.xlu0 %2831
        %v2833 = vsel %vm1079, %v2814, 0.0
        %2834 = vadd.xlane.f32.xlu0 %v2833
        %v2835 = vpop.xlane.xlu0 %2834
        %v2836 = vsel %vm1079, %v2816, 0.0
        %2837 = vadd.xlane.f32.xlu0 %v2836
        %v2838 = vpop.xlane.xlu0 %2837
        %v2839 = vsel %vm1079, %v2818, 0.0
        %2840 = vadd.xlane.f32.xlu0 %v2839
        %v2841 = vpop.xlane.xlu0 %2840
        %v2842 = vsel %vm1079, %v2820, 0.0
        %2843 = vadd.xlane.f32.xlu0 %v2842
        %v2844 = vpop.xlane.xlu0 %2843
        %v2845 = vrcp.pop %v2823
        %v2846 = vrcp.pop %v2826
        %v2847 = vrcp.pop %v2829
        %v2848 = vrcp.pop %v2832
        %v2849 = vrcp.pop %v2835
        %v2850 = vrcp.pop %v2838
        %v2851 = vrcp.pop %v2841
        %v2852 = vrcp.pop %v2844
        %v2853 = vmul.f32 %v2806, %v2845
        %v2854 = vmul.f32 %v2808, %v2846
        %v2855 = vmul.f32 %v2810, %v2847
        %v2856 = vmul.f32 %v2812, %v2848
        %v2857 = vmul.f32 %v2814, %v2849
        %v2858 = vmul.f32 %v2816, %v2850
        %v2859 = vmul.f32 %v2818, %v2851
        %v2860 = vmul.f32 %v2820, %v2852
        %v2861 = vpack.c.bf16 %v2854, %v2853
        %v2862 = vpack.c.bf16 %v2856, %v2855
        %v2863 = vpack.c.bf16 %v2858, %v2857
        %v2864 = vpack.c.bf16 %v2860, %v2859
        %2865 = vrot.lane.b32.xlu0 %v2360, 88
        %v2866 = vpop.permute.xlu0 %2865
        %2867 = vrot.lane.b32.xlu0 %v2361, 88
        %v2868 = vpop.permute.xlu0 %2867
        %2869 = vrot.lane.b32.xlu0 %v2362, 88
        %v2870 = vpop.permute.xlu0 %2869
        %2871 = vrot.lane.b32.xlu0 %v2363, 88
        %v2872 = vpop.permute.xlu0 %2871
        %v2878 = vsel %vm1079, %v2861, 0
        %v2881 = vsel %vm1079, %v2862, 0
        %v2884 = vsel %vm1079, %v2863, 0
        %v2887 = vsel %vm1079, %v2864, 0
        %2889 = vmatprep.subr.bf16.mxu0 0
        %2890 = vmatpush1.bf16.msra.mxu0 %v2866
        %2891 = vmatprep.subr.bf16.mxu0 0
        %2892 = vmatpush1.bf16.msra.mxu0 %v2868
        %2893 = vmatprep.subr.bf16.mxu0 0
        %2894 = vmatpush1.bf16.msra.mxu0 %v2870
        %2895 = vmatprep.subr.bf16.mxu0 0
        %2896 = vmatpush1.bf16.msra.mxu0 %v2872
        %2897 = vmatprep.subr.bf16.mxu0 0
        %2898 = vmatpush1.bf16.msra.mxu0 0
        %2899 = vmatprep.subr.bf16.mxu0 0
        %2900 = vmatpush1.bf16.msra.mxu0 0
        %2901 = vmatprep.subr.bf16.mxu0 0
        %2902 = vmatpush1.bf16.msra.mxu0 0
        %2903 = vmatprep.subr.bf16.mxu0 0
        %2904 = vmatpush1.bf16.msra.mxu0 0
        %2905 = vmatprep.subr.bf16.mxu0 0
        %2906 = vmatpush1.bf16.msra.mxu0 0
        %2907 = vmatprep.subr.bf16.mxu0 0
        %2908 = vmatpush1.bf16.msra.mxu0 0
        %2909 = vmatprep.subr.bf16.mxu0 0
        %2910 = vmatpush1.bf16.msra.mxu0 0
        %2911 = vmatprep.subr.bf16.mxu0 0
        %2912 = vmatpush1.bf16.msra.mxu0 0
        %2913 = vmatprep.subr.bf16.mxu0 0
        %2914 = vmatpush1.bf16.msra.mxu0 0
        %2915 = vmatprep.subr.bf16.mxu0 0
        %2916 = vmatpush1.bf16.msra.mxu0 0
        %2917 = vmatprep.subr.bf16.mxu0 0
        %2918 = vmatpush1.bf16.msra.mxu0 0
        %2919 = vmatprep.subr.bf16.mxu0 0
        %2920 = vmatpush1.bf16.msra.mxu0 0
        %2921 = vmatprep.mubr.bf16.mxu0 0
        %2922 = vmatmul.mubr.bf16.gmra.mrb[0].mxu0 %v2878
        %v2923 = vpop.f32.mrb[0].mxu0
        %v2924 = vadd.f32 0.0, %v2923
        %v2925 = vpop.f32.mrb[0].mxu0
        %v2926 = vpop.f32.mrb[0].mxu0
        %v2927 = vadd.f32 0.0, %v2926
        %v2928 = vpop.f32.mrb[0].mxu0
        %2929 = vmatprep.mubr.bf16.mxu0 0
        %2930 = vmatmul.mubr.bf16.gmra.mrb[0].mxu0 %v2881
        %v2931 = vpop.f32.mrb[0].mxu0
        %v2932 = vadd.f32 0.0, %v2931
        %v2933 = vpop.f32.mrb[0].mxu0
        %v2934 = vpop.f32.mrb[0].mxu0
        %v2935 = vadd.f32 0.0, %v2934
        %v2936 = vpop.f32.mrb[0].mxu0
        %2937 = vmatprep.mubr.bf16.mxu0 0
        %2938 = vmatmul.mubr.bf16.gmra.mrb[0].mxu0 %v2884
        %v2939 = vpop.f32.mrb[0].mxu0
        %v2940 = vadd.f32 0.0, %v2939
        %v2941 = vpop.f32.mrb[0].mxu0
        %v2942 = vpop.f32.mrb[0].mxu0
        %v2943 = vadd.f32 0.0, %v2942
        %v2944 = vpop.f32.mrb[0].mxu0
        %2945 = vmatprep.mubr.bf16.mxu0 0
        %2946 = vmatmul.mubr.bf16.gmra.mrb[0].mxu0 %v2887
        %v2947 = vpop.f32.mrb[0].mxu0
        %v2948 = vadd.f32 0.0, %v2947
        %v2949 = vpop.f32.mrb[0].mxu0
        %v2950 = vpop.f32.mrb[0].mxu0
        %v2951 = vadd.f32 0.0, %v2950
        %v2952 = vpop.f32.mrb[0].mxu0
        %2953 = vdwg.mxu0
        %2962 = vrot.lane.b32.xlu0 %v2924, 8
        %v2963 = vpop.permute.xlu0 %2962
        %2964 = vrot.lane.b32.xlu0 %v2927, 8
        %v2965 = vpop.permute.xlu0 %2964
        %2966 = vrot.lane.b32.xlu0 %v2932, 8
        %v2967 = vpop.permute.xlu0 %2966
        %2968 = vrot.lane.b32.xlu0 %v2935, 8
        %v2969 = vpop.permute.xlu0 %2968
        %2970 = vrot.lane.b32.xlu0 %v2940, 8
        %v2971 = vpop.permute.xlu0 %2970
        %2972 = vrot.lane.b32.xlu0 %v2943, 8
        %v2973 = vpop.permute.xlu0 %2972
        %2974 = vrot.lane.b32.xlu0 %v2948, 8
        %v2975 = vpop.permute.xlu0 %2974
        %2976 = vrot.lane.b32.xlu0 %v2951, 8
        %v2977 = vpop.permute.xlu0 %2976
        %v2986 = vsel %vm989, %v2625, %v2963
        %v2987 = vsel %vm989, %v2628, %v2965
        %v2988 = vsel %vm989, %v2633, %v2967
        %v2989 = vsel %vm989, %v2636, %v2969
        %v2990 = vsel %vm989, %v2641, %v2971
        %v2991 = vsel %vm989, %v2644, %v2973
        %v2992 = vsel %vm989, %v2649, %v2975
        %v2993 = vsel %vm989, %v2652, %v2977
        %v2994 = vpack.c.bf16 %v2987, %v2986
        %v2995 = vpack.c.bf16 %v2989, %v2988
        %v2996 = vpack.c.bf16 %v2991, %v2990
        %v2997 = vpack.c.bf16 %v2993, %v2992
        %2998 = vrot.lane.b32.xlu0 %v2269, 80
        %v2999 = vpop.permute.xlu0 %2998
        %v3002 = vsel %vm586, %v2994, 0
        %v3005 = vsel %vm586, %v2995, 0
        %v3008 = vsel %vm586, %v2996, 0
        %v3011 = vsel %vm586, %v2997, 0
        %3013 = vmatprep.subr.bf16.mxu0 0
        %3014 = vmatpush1.bf16.msra.mxu0 %v2999
        %3015 = vmatprep.subr.bf16.mxu0 0
        %3016 = vmatpush1.bf16.msra.mxu0 0
        %3017 = vmatprep.subr.bf16.mxu0 0
        %3018 = vmatpush1.bf16.msra.mxu0 0
        %3019 = vmatprep.subr.bf16.mxu0 0
        %3020 = vmatpush1.bf16.msra.mxu0 0
        %3021 = vmatprep.subr.bf16.mxu0 0
        %3022 = vmatpush1.bf16.msra.mxu0 0
        %3023 = vmatprep.subr.bf16.mxu0 0
        %3024 = vmatpush1.bf16.msra.mxu0 0
        %3025 = vmatprep.subr.bf16.mxu0 0
        %3026 = vmatpush1.bf16.msra.mxu0 0
        %3027 = vmatprep.subr.bf16.mxu0 0
        %3028 = vmatpush1.bf16.msra.mxu0 0
        %3029 = vmatprep.subr.bf16.mxu0 0
        %3030 = vmatpush1.bf16.msra.mxu0 0
        %3031 = vmatprep.subr.bf16.mxu0 0
        %3032 = vmatpush1.bf16.msra.mxu0 0
        %3033 = vmatprep.subr.bf16.mxu0 0
        %3034 = vmatpush1.bf16.msra.mxu0 0
        %3035 = vmatprep.subr.bf16.mxu0 0
        %3036 = vmatpush1.bf16.msra.mxu0 0
        %3037 = vmatprep.subr.bf16.mxu0 0
        %3038 = vmatpush1.bf16.msra.mxu0 0
        %3039 = vmatprep.subr.bf16.mxu0 0
        %3040 = vmatpush1.bf16.msra.mxu0 0
        %3041 = vmatprep.subr.bf16.mxu0 0
        %3042 = vmatpush1.bf16.msra.mxu0 0
        %3043 = vmatprep.subr.bf16.mxu0 0
        %3044 = vmatpush1.bf16.msra.mxu0 0
        %3045 = vmatprep.mubr.bf16.mxu0 0
        %3046 = vmatmul.mubr.bf16.gmra.mrb[0].mxu0 %v3002
        %v3047 = vpop.f32.mrb[0].mxu0
        %v3048 = vadd.f32 0.0, %v3047
        %v3049 = vpop.f32.mrb[0].mxu0
        %v3050 = vpop.f32.mrb[0].mxu0
        %v3051 = vadd.f32 0.0, %v3050
        %v3052 = vpop.f32.mrb[0].mxu0
        %3053 = vmatprep.mubr.bf16.mxu0 0
        %3054 = vmatmul.mubr.bf16.gmra.mrb[0].mxu0 %v3005
        %v3055 = vpop.f32.mrb[0].mxu0
        %v3056 = vadd.f32 0.0, %v3055
        %v3057 = vpop.f32.mrb[0].mxu0
        %v3058 = vpop.f32.mrb[0].mxu0
        %v3059 = vadd.f32 0.0, %v3058
        %v3060 = vpop.f32.mrb[0].mxu0
        %3061 = vmatprep.mubr.bf16.mxu0 0
        %3062 = vmatmul.mubr.bf16.gmra.mrb[0].mxu0 %v3008
        %v3063 = vpop.f32.mrb[0].mxu0
        %v3064 = vadd.f32 0.0, %v3063
        %v3065 = vpop.f32.mrb[0].mxu0
        %v3066 = vpop.f32.mrb[0].mxu0
        %v3067 = vadd.f32 0.0, %v3066
        %v3068 = vpop.f32.mrb[0].mxu0
        %3069 = vmatprep.mubr.bf16.mxu0 0
        %3070 = vmatmul.mubr.bf16.gmra.mrb[0].mxu0 %v3011
        %v3071 = vpop.f32.mrb[0].mxu0
        %v3072 = vadd.f32 0.0, %v3071
        %v3073 = vpop.f32.mrb[0].mxu0
        %v3074 = vpop.f32.mrb[0].mxu0
        %v3075 = vadd.f32 0.0, %v3074
        %v3076 = vpop.f32.mrb[0].mxu0
        %3077 = vdwg.mxu0
        %v3078 = vadd.f32 %v2101, %v3048
        %v3079 = vadd.f32 %v2102, %v3051
        %v3080 = vadd.f32 %v2103, %v3056
        %v3081 = vadd.f32 %v2104, %v3059
        %v3082 = vadd.f32 %v2105, %v3064
        %v3083 = vadd.f32 %v2106, %v3067
        %v3084 = vadd.f32 %v2107, %v3072
        %v3085 = vadd.f32 %v2108, %v3075
        %v3086 = vlaneseq
        %v3087 = vshrl.u32 %v3086, 7
        %v3088 = vsub.s32 0, %v3087
        %v3089 = vrot.slane %v2112, %v3088
        %v3090 = vadd.f32 %v3078, %v3089
        %v3091 = vadd.f32 %v3079, %v3089
        %v3092 = vadd.f32 %v3080, %v3089
        %v3093 = vadd.f32 %v3081, %v3089
        %v3094 = vadd.f32 %v3082, %v3089
        %v3095 = vadd.f32 %v3083, %v3089
        %v3096 = vadd.f32 %v3084, %v3089
        %v3097 = vadd.f32 %v3085, %v3089
        %v3098 = vsel %vm586, %v3090, 0.0
        %3099 = vadd.xlane.f32.xlu0 %v3098
        %v3100 = vpop.xlane.xlu0 %3099
        %v3101 = vsel %vm586, %v3091, 0.0
        %3102 = vadd.xlane.f32.xlu0 %v3101
        %v3103 = vpop.xlane.xlu0 %3102
        %v3104 = vsel %vm586, %v3092, 0.0
        %3105 = vadd.xlane.f32.xlu0 %v3104
        %v3106 = vpop.xlane.xlu0 %3105
        %v3107 = vsel %vm586, %v3093, 0.0
        %3108 = vadd.xlane.f32.xlu0 %v3107
        %v3109 = vpop.xlane.xlu0 %3108
        %v3110 = vsel %vm586, %v3094, 0.0
        %3111 = vadd.xlane.f32.xlu0 %v3110
        %v3112 = vpop.xlane.xlu0 %3111
        %v3113 = vsel %vm586, %v3095, 0.0
        %3114 = vadd.xlane.f32.xlu0 %v3113
        %v3115 = vpop.xlane.xlu0 %3114
        %v3116 = vsel %vm586, %v3096, 0.0
        %3117 = vadd.xlane.f32.xlu0 %v3116
        %v3118 = vpop.xlane.xlu0 %3117
        %v3119 = vsel %vm586, %v3097, 0.0
        %3120 = vadd.xlane.f32.xlu0 %v3119
        %v3121 = vpop.xlane.xlu0 %3120
        %v3122 = vmul.f32 %v3100, %v611
        %v3123 = vmul.f32 %v3103, %v611
        %v3124 = vmul.f32 %v3106, %v611
        %v3125 = vmul.f32 %v3109, %v611
        %v3126 = vmul.f32 %v3112, %v611
        %v3127 = vmul.f32 %v3115, %v611
        %v3128 = vmul.f32 %v3118, %v611
        %v3129 = vmul.f32 %v3121, %v611
        %v3130 = vsub.f32 %v3090, %v3122
        %v3131 = vsub.f32 %v3091, %v3123
        %v3132 = vsub.f32 %v3092, %v3124
        %v3133 = vsub.f32 %v3093, %v3125
        %v3134 = vsub.f32 %v3094, %v3126
        %v3135 = vsub.f32 %v3095, %v3127
        %v3136 = vsub.f32 %v3096, %v3128
        %v3137 = vsub.f32 %v3097, %v3129
        %v3138 = vmul.f32 %v3130, %v3130
        %v3139 = vmul.f32 %v3131, %v3131
        %v3140 = vmul.f32 %v3132, %v3132
        %v3141 = vmul.f32 %v3133, %v3133
        %v3142 = vmul.f32 %v3134, %v3134
        %v3143 = vmul.f32 %v3135, %v3135
        %v3144 = vmul.f32 %v3136, %v3136
        %v3145 = vmul.f32 %v3137, %v3137
        %v3146 = vsel %vm586, %v3138, 0.0
        %3147 = vadd.xlane.f32.xlu0 %v3146
        %v3148 = vpop.xlane.xlu0 %3147
        %v3149 = vsel %vm586, %v3139, 0.0
        %3150 = vadd.xlane.f32.xlu0 %v3149
        %v3151 = vpop.xlane.xlu0 %3150
        %v3152 = vsel %vm586, %v3140, 0.0
        %3153 = vadd.xlane.f32.xlu0 %v3152
        %v3154 = vpop.xlane.xlu0 %3153
        %v3155 = vsel %vm586, %v3141, 0.0
        %3156 = vadd.xlane.f32.xlu0 %v3155
        %v3157 = vpop.xlane.xlu0 %3156
        %v3158 = vsel %vm586, %v3142, 0.0
        %3159 = vadd.xlane.f32.xlu0 %v3158
        %v3160 = vpop.xlane.xlu0 %3159
        %v3161 = vsel %vm586, %v3143, 0.0
        %3162 = vadd.xlane.f32.xlu0 %v3161
        %v3163 = vpop.xlane.xlu0 %3162
        %v3164 = vsel %vm586, %v3144, 0.0
        %3165 = vadd.xlane.f32.xlu0 %v3164
        %v3166 = vpop.xlane.xlu0 %3165
        %v3167 = vsel %vm586, %v3145, 0.0
        %3168 = vadd.xlane.f32.xlu0 %v3167
        %v3169 = vpop.xlane.xlu0 %3168
        %v3170 = vmul.f32 %v3148, %v611
        %v3171 = vmul.f32 %v3151, %v611
        %v3172 = vmul.f32 %v3154, %v611
        %v3173 = vmul.f32 %v3157, %v611
        %v3174 = vmul.f32 %v3160, %v611
        %v3175 = vmul.f32 %v3163, %v611
        %v3176 = vmul.f32 %v3166, %v611
        %v3177 = vmul.f32 %v3169, %v611
        %v3178 = vadd.f32 %v3170, 1e-05
        %v3179 = vadd.f32 %v3171, 1e-05
        %v3180 = vadd.f32 %v3172, 1e-05
        %v3181 = vadd.f32 %v3173, 1e-05
        %v3182 = vadd.f32 %v3174, 1e-05
        %v3183 = vadd.f32 %v3175, 1e-05
        %v3184 = vadd.f32 %v3176, 1e-05
        %v3185 = vadd.f32 %v3177, 1e-05
        %v3186 = vrsqrt.pop %v3178
        %v3187 = vrsqrt.pop %v3179
        %v3188 = vrsqrt.pop %v3180
        %v3189 = vrsqrt.pop %v3181
        %v3190 = vrsqrt.pop %v3182
        %v3191 = vrsqrt.pop %v3183
        %v3192 = vrsqrt.pop %v3184
        %v3193 = vrsqrt.pop %v3185
        %v3194 = vmul.f32 %v3130, %v3186
        %v3195 = vmul.f32 %v3131, %v3187
        %v3196 = vmul.f32 %v3132, %v3188
        %v3197 = vmul.f32 %v3133, %v3189
        %v3198 = vmul.f32 %v3134, %v3190
        %v3199 = vmul.f32 %v3135, %v3191
        %v3200 = vmul.f32 %v3136, %v3192
        %v3201 = vmul.f32 %v3137, %v3193
        %v3202 = vlaneseq
        %v3203 = vshrl.u32 %v3202, 7
        %v3204 = vsub.s32 0, %v3203
        %v3205 = vrot.slane %v2113, %v3204
        %v3206 = vmul.f32 %v3194, %v3205
        %v3207 = vmul.f32 %v3195, %v3205
        %v3208 = vmul.f32 %v3196, %v3205
        %v3209 = vmul.f32 %v3197, %v3205
        %v3210 = vmul.f32 %v3198, %v3205
        %v3211 = vmul.f32 %v3199, %v3205
        %v3212 = vmul.f32 %v3200, %v3205
        %v3213 = vmul.f32 %v3201, %v3205
        %v3214 = vlaneseq
        %v3215 = vshrl.u32 %v3214, 7
        %v3216 = vsub.s32 0, %v3215
        %v3217 = vrot.slane %v2114, %v3216
        %v3218 = vadd.f32 %v3206, %v3217
        %v3219 = vadd.f32 %v3207, %v3217
        %v3220 = vadd.f32 %v3208, %v3217
        %v3221 = vadd.f32 %v3209, %v3217
        %v3222 = vadd.f32 %v3210, %v3217
        %v3223 = vadd.f32 %v3211, %v3217
        %v3224 = vadd.f32 %v3212, %v3217
        %v3225 = vadd.f32 %v3213, %v3217
        %v3226 = vpack.c.bf16 %v3219, %v3218
        %v3227 = vpack.c.bf16 %v3221, %v3220
        %v3228 = vpack.c.bf16 %v3223, %v3222
        %v3229 = vpack.c.bf16 %v3225, %v3224
        %v3230 = vlaneseq
        %v3231 = vshrl.u32 %v3230, 7
        %v3232 = vsub.s32 0, %v3231
        %v3233 = vrot.slane %v2115, %v3232
        %3234 = vrot.lane.b32.xlu0 %v2269, 64
        %v3235 = vpop.permute.xlu0 %3234
        %v3238 = vsel %vm586, %v3226, 0
        %v3241 = vsel %vm586, %v3227, 0
        %v3244 = vsel %vm586, %v3228, 0
        %v3247 = vsel %vm586, %v3229, 0
        %3249 = vmatprep.subr.bf16.mxu0 0
        %3250 = vmatpush1.bf16.msra.mxu0 %v3235
        %3251 = vmatprep.subr.bf16.mxu0 0
        %3252 = vmatpush1.bf16.msra.mxu0 0
        %3253 = vmatprep.subr.bf16.mxu0 0
        %3254 = vmatpush1.bf16.msra.mxu0 0
        %3255 = vmatprep.subr.bf16.mxu0 0
        %3256 = vmatpush1.bf16.msra.mxu0 0
        %3257 = vmatprep.subr.bf16.mxu0 0
        %3258 = vmatpush1.bf16.msra.mxu0 0
        %3259 = vmatprep.subr.bf16.mxu0 0
        %3260 = vmatpush1.bf16.msra.mxu0 0
        %3261 = vmatprep.subr.bf16.mxu0 0
        %3262 = vmatpush1.bf16.msra.mxu0 0
        %3263 = vmatprep.subr.bf16.mxu0 0
        %3264 = vmatpush1.bf16.msra.mxu0 0
        %3265 = vmatprep.subr.bf16.mxu0 0
        %3266 = vmatpush1.bf16.msra.mxu0 0
        %3267 = vmatprep.subr.bf16.mxu0 0
        %3268 = vmatpush1.bf16.msra.mxu0 0
        %3269 = vmatprep.subr.bf16.mxu0 0
        %3270 = vmatpush1.bf16.msra.mxu0 0
        %3271 = vmatprep.subr.bf16.mxu0 0
        %3272 = vmatpush1.bf16.msra.mxu0 0
        %3273 = vmatprep.subr.bf16.mxu0 0
        %3274 = vmatpush1.bf16.msra.mxu0 0
        %3275 = vmatprep.subr.bf16.mxu0 0
        %3276 = vmatpush1.bf16.msra.mxu0 0
        %3277 = vmatprep.subr.bf16.mxu0 0
        %3278 = vmatpush1.bf16.msra.mxu0 0
        %3279 = vmatprep.subr.bf16.mxu0 0
        %3280 = vmatpush1.bf16.msra.mxu0 0
        %3281 = vmatprep.mubr.bf16.mxu0 0
        %3282 = vmatmul.mubr.bf16.gmra.mrb[0].mxu0 %v3238
        %v3283 = vpop.f32.mrb[0].mxu0
        %v3284 = vadd.f32 %v3233, %v3283
        %v3285 = vpop.f32.mrb[0].mxu0
        %v3286 = vpop.f32.mrb[0].mxu0
        %v3287 = vadd.f32 %v3233, %v3286
        %v3288 = vpop.f32.mrb[0].mxu0
        %3289 = vmatprep.mubr.bf16.mxu0 0
        %3290 = vmatmul.mubr.bf16.gmra.mrb[0].mxu0 %v3241
        %v3291 = vpop.f32.mrb[0].mxu0
        %v3292 = vadd.f32 %v3233, %v3291
        %v3293 = vpop.f32.mrb[0].mxu0
        %v3294 = vpop.f32.mrb[0].mxu0
        %v3295 = vadd.f32 %v3233, %v3294
        %v3296 = vpop.f32.mrb[0].mxu0
        %3297 = vmatprep.mubr.bf16.mxu0 0
        %3298 = vmatmul.mubr.bf16.gmra.mrb[0].mxu0 %v3244
        %v3299 = vpop.f32.mrb[0].mxu0
        %v3300 = vadd.f32 %v3233, %v3299
        %v3301 = vpop.f32.mrb[0].mxu0
        %v3302 = vpop.f32.mrb[0].mxu0
        %v3303 = vadd.f32 %v3233, %v3302
        %v3304 = vpop.f32.mrb[0].mxu0
        %3305 = vmatprep.mubr.bf16.mxu0 0
        %3306 = vmatmul.mubr.bf16.gmra.mrb[0].mxu0 %v3247
        %v3307 = vpop.f32.mrb[0].mxu0
        %v3308 = vadd.f32 %v3233, %v3307
        %v3309 = vpop.f32.mrb[0].mxu0
        %v3310 = vpop.f32.mrb[0].mxu0
        %v3311 = vadd.f32 %v3233, %v3310
        %v3312 = vpop.f32.mrb[0].mxu0
        %3313 = vdwg.mxu0
        %v3314 = vmul.f32 %v3284, 0.5
        %v3315 = vmul.f32 %v3287, 0.5
        %v3316 = vmul.f32 %v3292, 0.5
        %v3317 = vmul.f32 %v3295, 0.5
        %v3318 = vmul.f32 %v3300, 0.5
        %v3319 = vmul.f32 %v3303, 0.5
        %v3320 = vmul.f32 %v3308, 0.5
        %v3321 = vmul.f32 %v3311, 0.5
        %v3322 = vmul.f32 %v3284, 0.044715
        %v3323 = vmul.f32 %v3287, 0.044715
        %v3324 = vmul.f32 %v3292, 0.044715
        %v3325 = vmul.f32 %v3295, 0.044715
        %v3326 = vmul.f32 %v3300, 0.044715
        %v3327 = vmul.f32 %v3303, 0.044715
        %v3328 = vmul.f32 %v3308, 0.044715
        %v3329 = vmul.f32 %v3311, 0.044715
        %v3330 = vmul.f32 %v3322, %v3284
        %v3331 = vmul.f32 %v3323, %v3287
        %v3332 = vmul.f32 %v3324, %v3292
        %v3333 = vmul.f32 %v3325, %v3295
        %v3334 = vmul.f32 %v3326, %v3300
        %v3335 = vmul.f32 %v3327, %v3303
        %v3336 = vmul.f32 %v3328, %v3308
        %v3337 = vmul.f32 %v3329, %v3311
        %v3338 = vmul.f32 %v3330, %v3284
        %v3339 = vmul.f32 %v3331, %v3287
        %v3340 = vmul.f32 %v3332, %v3292
        %v3341 = vmul.f32 %v3333, %v3295
        %v3342 = vmul.f32 %v3334, %v3300
        %v3343 = vmul.f32 %v3335, %v3303
        %v3344 = vmul.f32 %v3336, %v3308
        %v3345 = vmul.f32 %v3337, %v3311
        %v3346 = vadd.f32 %v3284, %v3338
        %v3347 = vadd.f32 %v3287, %v3339
        %v3348 = vadd.f32 %v3292, %v3340
        %v3349 = vadd.f32 %v3295, %v3341
        %v3350 = vadd.f32 %v3300, %v3342
        %v3351 = vadd.f32 %v3303, %v3343
        %v3352 = vadd.f32 %v3308, %v3344
        %v3353 = vadd.f32 %v3311, %v3345
        %v3354 = vmul.f32 %v3346, 0.7978846
        %v3355 = vmul.f32 %v3347, 0.7978846
        %v3356 = vmul.f32 %v3348, 0.7978846
        %v3357 = vmul.f32 %v3349, 0.7978846
        %v3358 = vmul.f32 %v3350, 0.7978846
        %v3359 = vmul.f32 %v3351, 0.7978846
        %v3360 = vmul.f32 %v3352, 0.7978846
        %v3361 = vmul.f32 %v3353, 0.7978846
        %v3362 = vtanh.pop %v3354
        %v3363 = vtanh.pop %v3355
        %v3364 = vtanh.pop %v3356
        %v3365 = vtanh.pop %v3357
        %v3366 = vtanh.pop %v3358
        %v3367 = vtanh.pop %v3359
        %v3368 = vtanh.pop %v3360
        %v3369 = vtanh.pop %v3361
        %v3370 = vadd.f32 %v3362, 1.0
        %v3371 = vadd.f32 %v3363, 1.0
        %v3372 = vadd.f32 %v3364, 1.0
        %v3373 = vadd.f32 %v3365, 1.0
        %v3374 = vadd.f32 %v3366, 1.0
        %v3375 = vadd.f32 %v3367, 1.0
        %v3376 = vadd.f32 %v3368, 1.0
        %v3377 = vadd.f32 %v3369, 1.0
        %v3378 = vmul.f32 %v3314, %v3370
        %v3379 = vmul.f32 %v3315, %v3371
        %v3380 = vmul.f32 %v3316, %v3372
        %v3381 = vmul.f32 %v3317, %v3373
        %v3382 = vmul.f32 %v3318, %v3374
        %v3383 = vmul.f32 %v3319, %v3375
        %v3384 = vmul.f32 %v3320, %v3376
        %v3385 = vmul.f32 %v3321, %v3377
        %v3386 = vpack.c.bf16 %v3379, %v3378
        %v3387 = vpack.c.bf16 %v3381, %v3380
        %v3388 = vpack.c.bf16 %v3383, %v3382
        %v3389 = vpack.c.bf16 %v3385, %v3384
        %v3390 = vlaneseq
        %v3391 = vshrl.u32 %v3390, 7
        %v3392 = vsub.s32 0, %v3391
        %v3393 = vrot.slane %v2116, %v3392
        %v3402 = vunpack.c.l.b16 %v2121
        %v3403 = vunpack.c.l.b16 %v2122
        %v3404 = vunpack.c.l.b16 %v2123
        %v3405 = vunpack.c.l.b16 %v2124
        %v3406 = vunpack.c.l.b16 %v2125
        %v3407 = vunpack.c.l.b16 %v2126
        %v3408 = vunpack.c.l.b16 %v2127
        %v3409 = vunpack.c.l.b16 %v2128
        %v3410 = vpack.c.b16 %v3403, %v3402
        %v3411 = vpack.c.b16 %v3405, %v3404
        %v3412 = vpack.c.b16 %v3407, %v3406
        %v3413 = vpack.c.b16 %v3409, %v3408
        %v3419 = vsel %vm1079, %v3386, 0
        %v3422 = vsel %vm1079, %v3387, 0
        %v3425 = vsel %vm1079, %v3388, 0
        %v3428 = vsel %vm1079, %v3389, 0
        %3430 = vmatprep.subr.bf16.mxu0 0
        %3431 = vmatpush1.bf16.msra.mxu0 %v3410
        %3432 = vmatprep.subr.bf16.mxu0 0
        %3433 = vmatpush1.bf16.msra.mxu0 %v3411
        %3434 = vmatprep.subr.bf16.mxu0 0
        %3435 = vmatpush1.bf16.msra.mxu0 %v3412
        %3436 = vmatprep.subr.bf16.mxu0 0
        %3437 = vmatpush1.bf16.msra.mxu0 %v3413
        %3438 = vmatprep.subr.bf16.mxu0 0
        %3439 = vmatpush1.bf16.msra.mxu0 0
        %3440 = vmatprep.subr.bf16.mxu0 0
        %3441 = vmatpush1.bf16.msra.mxu0 0
        %3442 = vmatprep.subr.bf16.mxu0 0
        %3443 = vmatpush1.bf16.msra.mxu0 0
        %3444 = vmatprep.subr.bf16.mxu0 0
        %3445 = vmatpush1.bf16.msra.mxu0 0
        %3446 = vmatprep.subr.bf16.mxu0 0
        %3447 = vmatpush1.bf16.msra.mxu0 0
        %3448 = vmatprep.subr.bf16.mxu0 0
        %3449 = vmatpush1.bf16.msra.mxu0 0
        %3450 = vmatprep.subr.bf16.mxu0 0
        %3451 = vmatpush1.bf16.msra.mxu0 0
        %3452 = vmatprep.subr.bf16.mxu0 0
        %3453 = vmatpush1.bf16.msra.mxu0 0
        %3454 = vmatprep.subr.bf16.mxu0 0
        %3455 = vmatpush1.bf16.msra.mxu0 0
        %3456 = vmatprep.subr.bf16.mxu0 0
        %3457 = vmatpush1.bf16.msra.mxu0 0
        %3458 = vmatprep.subr.bf16.mxu0 0
        %3459 = vmatpush1.bf16.msra.mxu0 0
        %3460 = vmatprep.subr.bf16.mxu0 0
        %3461 = vmatpush1.bf16.msra.mxu0 0
        %3462 = vmatprep.mubr.bf16.mxu0 0
        %3463 = vmatmul.mubr.bf16.gmra.mrb[0].mxu0 %v3419
        %v3464 = vpop.f32.mrb[0].mxu0
        %v3465 = vadd.f32 %v3393, %v3464
        %v3466 = vpop.f32.mrb[0].mxu0
        %v3467 = vpop.f32.mrb[0].mxu0
        %v3468 = vadd.f32 %v3393, %v3467
        %v3469 = vpop.f32.mrb[0].mxu0
        %3470 = vmatprep.mubr.bf16.mxu0 0
        %3471 = vmatmul.mubr.bf16.gmra.mrb[0].mxu0 %v3422
        %v3472 = vpop.f32.mrb[0].mxu0
        %v3473 = vadd.f32 %v3393, %v3472
        %v3474 = vpop.f32.mrb[0].mxu0
        %v3475 = vpop.f32.mrb[0].mxu0
        %v3476 = vadd.f32 %v3393, %v3475
        %v3477 = vpop.f32.mrb[0].mxu0
        %3478 = vmatprep.mubr.bf16.mxu0 0
        %3479 = vmatmul.mubr.bf16.gmra.mrb[0].mxu0 %v3425
        %v3480 = vpop.f32.mrb[0].mxu0
        %v3481 = vadd.f32 %v3393, %v3480
        %v3482 = vpop.f32.mrb[0].mxu0
        %v3483 = vpop.f32.mrb[0].mxu0
        %v3484 = vadd.f32 %v3393, %v3483
        %v3485 = vpop.f32.mrb[0].mxu0
        %3486 = vmatprep.mubr.bf16.mxu0 0
        %3487 = vmatmul.mubr.bf16.gmra.mrb[0].mxu0 %v3428
        %v3488 = vpop.f32.mrb[0].mxu0
        %v3489 = vadd.f32 %v3393, %v3488
        %v3490 = vpop.f32.mrb[0].mxu0
        %v3491 = vpop.f32.mrb[0].mxu0
        %v3492 = vadd.f32 %v3393, %v3491
        %v3493 = vpop.f32.mrb[0].mxu0
        %3494 = vdwg.mxu0
        %v3495 = vadd.f32 %v3090, %v3465
        %v3496 = vadd.f32 %v3091, %v3468
        %v3497 = vadd.f32 %v3092, %v3473
        %v3498 = vadd.f32 %v3093, %v3476
        %v3499 = vadd.f32 %v3094, %v3481
        %v3500 = vadd.f32 %v3095, %v3484
        %v3501 = vadd.f32 %v3096, %v3489
        %v3502 = vadd.f32 %v3097, %v3492
        %v3503 = vpack.c.bf16 %v3496, %v3495
        %v3504 = vpack.c.bf16 %v3498, %v3497
        %v3505 = vpack.c.bf16 %v3500, %v3499
        %v3506 = vpack.c.bf16 %v3502, %v3501
        %v3507 = vld [vmem:[%s6] sm:$0xf]
        %v3508 = vld [vmem:[%s6 + $0x4] sm:$0xf]
        %v3511 = vunpack.c.l.b16 %v3507
        %v3512 = vunpack.c.l.b16 %v3508
        %v3513 = vpack.c.b16 %v3512, %v3511
        %v3515 = vsel %vm1079, %v3513, 0
        %3517 = vmatprep.subr.bf16.mxu0 0
        %3518 = vmatpush1.bf16.msra.mxu0 %v3503
        %3519 = vmatprep.subr.bf16.mxu0 0
        %3520 = vmatpush1.bf16.msra.mxu0 %v3504
        %3521 = vmatprep.subr.bf16.mxu0 0
        %3522 = vmatpush1.bf16.msra.mxu0 %v3505
        %3523 = vmatprep.subr.bf16.mxu0 0
        %3524 = vmatpush1.bf16.msra.mxu0 %v3506
        %3525 = vmatprep.subr.bf16.mxu0 0
        %3526 = vmatpush1.bf16.msra.mxu0 0
        %3527 = vmatprep.subr.bf16.mxu0 0
        %3528 = vmatpush1.bf16.msra.mxu0 0
        %3529 = vmatprep.subr.bf16.mxu0 0
        %3530 = vmatpush1.bf16.msra.mxu0 0
        %3531 = vmatprep.subr.bf16.mxu0 0
        %3532 = vmatpush1.bf16.msra.mxu0 0
        %3533 = vmatprep.subr.bf16.mxu0 0
        %3534 = vmatpush1.bf16.msra.mxu0 0
        %3535 = vmatprep.subr.bf16.mxu0 0
        %3536 = vmatpush1.bf16.msra.mxu0 0
        %3537 = vmatprep.subr.bf16.mxu0 0
        %3538 = vmatpush1.bf16.msra.mxu0 0
        %3539 = vmatprep.subr.bf16.mxu0 0
        %3540 = vmatpush1.bf16.msra.mxu0 0
        %3541 = vmatprep.subr.bf16.mxu0 0
        %3542 = vmatpush1.bf16.msra.mxu0 0
        %3543 = vmatprep.subr.bf16.mxu0 0
        %3544 = vmatpush1.bf16.msra.mxu0 0
        %3545 = vmatprep.subr.bf16.mxu0 0
        %3546 = vmatpush1.bf16.msra.mxu0 0
        %3547 = vmatprep.subr.bf16.mxu0 0
        %3548 = vmatpush1.bf16.msra.mxu0 0
        %3549 = vmatprep.mubr.bf16.mxu0 0
        %3550 = vmatmul.mubr.bf16.gmra.mrb[0].mxu0 %v3515
        %v3551 = vpop.f32.mrb[0].mxu0
        %v3552 = vadd.f32 0.0, %v3551
        %v3553 = vpop.f32.mrb[0].mxu0
        %v3554 = vpop.f32.mrb[0].mxu0
        %v3555 = vadd.f32 0.0, %v3554
        %v3556 = vpop.f32.mrb[0].mxu0
        %3557 = vdwg.mxu0
        %s3558 = scalar_lea.vmem %s6, 8
        %v3559 = vld [vmem:[%s3558] sm:$0xf]
        %v3560 = vld [vmem:[%s3558 + $0x4] sm:$0xf]
        %v3563 = vunpack.c.l.b16 %v3559
        %v3564 = vunpack.c.l.b16 %v3560
        %v3565 = vpack.c.b16 %v3564, %v3563
        %v3567 = vsel %vm1079, %v3565, 0
        %3569 = vmatprep.subr.bf16.mxu0 0
        %3570 = vmatpush1.bf16.msra.mxu0 %v3503
        %3571 = vmatprep.subr.bf16.mxu0 0
        %3572 = vmatpush1.bf16.msra.mxu0 %v3504
        %3573 = vmatprep.subr.bf16.mxu0 0
        %3574 = vmatpush1.bf16.msra.mxu0 %v3505
        %3575 = vmatprep.subr.bf16.mxu0 0
        %3576 = vmatpush1.bf16.msra.mxu0 %v3506
        %3577 = vmatprep.subr.bf16.mxu0 0
        %3578 = vmatpush1.bf16.msra.mxu0 0
        %3579 = vmatprep.subr.bf16.mxu0 0
        %3580 = vmatpush1.bf16.msra.mxu0 0
        %3581 = vmatprep.subr.bf16.mxu0 0
        %3582 = vmatpush1.bf16.msra.mxu0 0
        %3583 = vmatprep.subr.bf16.mxu0 0
        %3584 = vmatpush1.bf16.msra.mxu0 0
        %3585 = vmatprep.subr.bf16.mxu0 0
        %3586 = vmatpush1.bf16.msra.mxu0 0
        %3587 = vmatprep.subr.bf16.mxu0 0
        %3588 = vmatpush1.bf16.msra.mxu0 0
        %3589 = vmatprep.subr.bf16.mxu0 0
        %3590 = vmatpush1.bf16.msra.mxu0 0
        %3591 = vmatprep.subr.bf16.mxu0 0
        %3592 = vmatpush1.bf16.msra.mxu0 0
        %3593 = vmatprep.subr.bf16.mxu0 0
        %3594 = vmatpush1.bf16.msra.mxu0 0
        %3595 = vmatprep.subr.bf16.mxu0 0
        %3596 = vmatpush1.bf16.msra.mxu0 0
        %3597 = vmatprep.subr.bf16.mxu0 0
        %3598 = vmatpush1.bf16.msra.mxu0 0
        %3599 = vmatprep.subr.bf16.mxu0 0
        %3600 = vmatpush1.bf16.msra.mxu0 0
        %3601 = vmatprep.mubr.bf16.mxu0 0
        %3602 = vmatmul.mubr.bf16.gmra.mrb[0].mxu0 %v3567
        %v3603 = vpop.f32.mrb[0].mxu0
        %v3604 = vadd.f32 0.0, %v3603
        %v3605 = vpop.f32.mrb[0].mxu0
        %v3606 = vpop.f32.mrb[0].mxu0
        %v3607 = vadd.f32 0.0, %v3606
        %v3608 = vpop.f32.mrb[0].mxu0
        %3609 = vdwg.mxu0
        %s3610 = scalar_lea.vmem %s6, 16
        %v3611 = vld [vmem:[%s3610] sm:$0xf]
        %v3612 = vld [vmem:[%s3610 + $0x4] sm:$0xf]
        %v3615 = vunpack.c.l.b16 %v3611
        %v3616 = vunpack.c.l.b16 %v3612
        %v3617 = vpack.c.b16 %v3616, %v3615
        %v3619 = vsel %vm1079, %v3617, 0
        %3621 = vmatprep.subr.bf16.mxu0 0
        %3622 = vmatpush1.bf16.msra.mxu0 %v3503
        %3623 = vmatprep.subr.bf16.mxu0 0
        %3624 = vmatpush1.bf16.msra.mxu0 %v3504
        %3625 = vmatprep.subr.bf16.mxu0 0
        %3626 = vmatpush1.bf16.msra.mxu0 %v3505
        %3627 = vmatprep.subr.bf16.mxu0 0
        %3628 = vmatpush1.bf16.msra.mxu0 %v3506
        %3629 = vmatprep.subr.bf16.mxu0 0
        %3630 = vmatpush1.bf16.msra.mxu0 0
        %3631 = vmatprep.subr.bf16.mxu0 0
        %3632 = vmatpush1.bf16.msra.mxu0 0
        %3633 = vmatprep.subr.bf16.mxu0 0
        %3634 = vmatpush1.bf16.msra.mxu0 0
        %3635 = vmatprep.subr.bf16.mxu0 0
        %3636 = vmatpush1.bf16.msra.mxu0 0
        %3637 = vmatprep.subr.bf16.mxu0 0
        %3638 = vmatpush1.bf16.msra.mxu0 0
        %3639 = vmatprep.subr.bf16.mxu0 0
        %3640 = vmatpush1.bf16.msra.mxu0 0
        %3641 = vmatprep.subr.bf16.mxu0 0
        %3642 = vmatpush1.bf16.msra.mxu0 0
        %3643 = vmatprep.subr.bf16.mxu0 0
        %3644 = vmatpush1.bf16.msra.mxu0 0
        %3645 = vmatprep.subr.bf16.mxu0 0
        %3646 = vmatpush1.bf16.msra.mxu0 0
        %3647 = vmatprep.subr.bf16.mxu0 0
        %3648 = vmatpush1.bf16.msra.mxu0 0
        %3649 = vmatprep.subr.bf16.mxu0 0
        %3650 = vmatpush1.bf16.msra.mxu0 0
        %3651 = vmatprep.subr.bf16.mxu0 0
        %3652 = vmatpush1.bf16.msra.mxu0 0
        %3653 = vmatprep.mubr.bf16.mxu0 0
        %3654 = vmatmul.mubr.bf16.gmra.mrb[0].mxu0 %v3619
        %v3655 = vpop.f32.mrb[0].mxu0
        %v3656 = vadd.f32 0.0, %v3655
        %v3657 = vpop.f32.mrb[0].mxu0
        %v3658 = vpop.f32.mrb[0].mxu0
        %v3659 = vadd.f32 0.0, %v3658
        %v3660 = vpop.f32.mrb[0].mxu0
        %3661 = vdwg.mxu0
        %s3662 = scalar_lea.vmem %s6, 24
        %v3663 = vld [vmem:[%s3662] sm:$0xf]
        %v3664 = vld [vmem:[%s3662 + $0x4] sm:$0xf]
        %v3667 = vunpack.c.l.b16 %v3663
        %v3668 = vunpack.c.l.b16 %v3664
        %v3669 = vpack.c.b16 %v3668, %v3667
        %v3671 = vsel %vm1079, %v3669, 0
        %3673 = vmatprep.subr.bf16.mxu0 0
        %3674 = vmatpush1.bf16.msra.mxu0 %v3503
        %3675 = vmatprep.subr.bf16.mxu0 0
        %3676 = vmatpush1.bf16.msra.mxu0 %v3504
        %3677 = vmatprep.subr.bf16.mxu0 0
        %3678 = vmatpush1.bf16.msra.mxu0 %v3505
        %3679 = vmatprep.subr.bf16.mxu0 0
        %3680 = vmatpush1.bf16.msra.mxu0 %v3506
        %3681 = vmatprep.subr.bf16.mxu0 0
        %3682 = vmatpush1.bf16.msra.mxu0 0
        %3683 = vmatprep.subr.bf16.mxu0 0
        %3684 = vmatpush1.bf16.msra.mxu0 0
        %3685 = vmatprep.subr.bf16.mxu0 0
        %3686 = vmatpush1.bf16.msra.mxu0 0
        %3687 = vmatprep.subr.bf16.mxu0 0
        %3688 = vmatpush1.bf16.msra.mxu0 0
        %3689 = vmatprep.subr.bf16.mxu0 0
        %3690 = vmatpush1.bf16.msra.mxu0 0
        %3691 = vmatprep.subr.bf16.mxu0 0
        %3692 = vmatpush1.bf16.msra.mxu0 0
        %3693 = vmatprep.subr.bf16.mxu0 0
        %3694 = vmatpush1.bf16.msra.mxu0 0
        %3695 = vmatprep.subr.bf16.mxu0 0
        %3696 = vmatpush1.bf16.msra.mxu0 0
        %3697 = vmatprep.subr.bf16.mxu0 0
        %3698 = vmatpush1.bf16.msra.mxu0 0
        %3699 = vmatprep.subr.bf16.mxu0 0
        %3700 = vmatpush1.bf16.msra.mxu0 0
        %3701 = vmatprep.subr.bf16.mxu0 0
        %3702 = vmatpush1.bf16.msra.mxu0 0
        %3703 = vmatprep.subr.bf16.mxu0 0
        %3704 = vmatpush1.bf16.msra.mxu0 0
        %3705 = vmatprep.mubr.bf16.mxu0 0
        %3706 = vmatmul.mubr.bf16.gmra.mrb[0].mxu0 %v3671
        %v3707 = vpop.f32.mrb[0].mxu0
        %v3708 = vadd.f32 0.0, %v3707
        %v3709 = vpop.f32.mrb[0].mxu0
        %v3710 = vpop.f32.mrb[0].mxu0
        %v3711 = vadd.f32 0.0, %v3710
        %v3712 = vpop.f32.mrb[0].mxu0
        %3713 = vdwg.mxu0
        %3716 = vrot.lane.b32.xlu0 %v3604, 16
        %v3717 = vpop.permute.xlu0 %3716
        %3718 = vrot.lane.b32.xlu0 %v3607, 16
        %v3719 = vpop.permute.xlu0 %3718
        %3724 = vrot.lane.b32.xlu0 %v3656, 32
        %v3725 = vpop.permute.xlu0 %3724
        %3726 = vrot.lane.b32.xlu0 %v3659, 32
        %v3727 = vpop.permute.xlu0 %3726
        %3732 = vrot.lane.b32.xlu0 %v3708, 48
        %v3733 = vpop.permute.xlu0 %3732
        %3734 = vrot.lane.b32.xlu0 %v3711, 48
        %v3735 = vpop.permute.xlu0 %3734
        %v3738 = vsel %vm586, %v3552, %v3717
        %v3739 = vsel %vm586, %v3555, %v3719
        %vm3740 = vcmask 261120
        %v3741 = vsel %vm3740, %v3738, %v3725
        %v3742 = vsel %vm3740, %v3739, %v3727
        %v3743 = vsel %vm506, %v3741, %v3733
        %v3744 = vsel %vm506, %v3742, %v3735
        %v3745 = vld [vmem:[%s1 + $0x13] sm:$0x1]
        %v3746 = vld [vmem:[%s1 + $0x14] sm:$0x1]
        %v3747 = vsel %vm1079, %v3743, 0.0
        %3748 = vadd.xlane.f32.xlu0 %v3747
        %v3749 = vpop.xlane.xlu0 %3748
        %v3750 = vsel %vm1079, %v3744, 0.0
        %3751 = vadd.xlane.f32.xlu0 %v3750
        %v3752 = vpop.xlane.xlu0 %3751
        %v3753 = vrcp.pop 64.0
        %v3754 = vmul.f32 %v3749, %v3753
        %v3755 = vmul.f32 %v3752, %v3753
        %v3756 = vsub.f32 %v3743, %v3754
        %v3757 = vsub.f32 %v3744, %v3755
        %v3758 = vmul.f32 %v3756, %v3756
        %v3759 = vmul.f32 %v3757, %v3757
        %v3760 = vsel %vm1079, %v3758, 0.0
        %3761 = vadd.xlane.f32.xlu0 %v3760
        %v3762 = vpop.xlane.xlu0 %3761
        %v3763 = vsel %vm1079, %v3759, 0.0
        %3764 = vadd.xlane.f32.xlu0 %v3763
        %v3765 = vpop.xlane.xlu0 %3764
        %v3766 = vmul.f32 %v3762, %v3753
        %v3767 = vmul.f32 %v3765, %v3753
        %v3768 = vadd.f32 %v3766, 1e-05
        %v3769 = vadd.f32 %v3767, 1e-05
        %v3770 = vrsqrt.pop %v3768
        %v3771 = vrsqrt.pop %v3769
        %v3772 = vmul.f32 %v3756, %v3770
        %v3773 = vmul.f32 %v3757, %v3771
        %v3774 = vlaneseq
        %v3775 = vshrl.u32 %v3774, 7
        %v3776 = vsub.s32 0, %v3775
        %v3777 = vrot.slane %v3745, %v3776
        %v3778 = vmul.f32 %v3772, %v3777
        %v3779 = vmul.f32 %v3773, %v3777
        %v3780 = vlaneseq
        %v3781 = vshrl.u32 %v3780, 7
        %v3782 = vsub.s32 0, %v3781
        %v3783 = vrot.slane %v3746, %v3782
        %v3784 = vadd.f32 %v3778, %v3783
        %v3785 = vadd.f32 %v3779, %v3783
        %v3786 = vpack.c.bf16 %v3785, %v3784
        %v3787 = vld [vmem:[%s7] sm:$0xf]
        %v3788 = vld [vmem:[%s7 + $0x4] sm:$0xf]
        %v3789 = vld [vmem:[%s7 + $0x8] sm:$0xf]
        %v3790 = vld [vmem:[%s7 + $0xc] sm:$0xf]
        %v3791 = vld [vmem:[%s7 + $0x10] sm:$0xf]
        %v3792 = vld [vmem:[%s7 + $0x14] sm:$0xf]
        %v3793 = vld [vmem:[%s7 + $0x18] sm:$0xf]
        %v3794 = vld [vmem:[%s7 + $0x1c] sm:$0xf]
        %v3803 = vunpack.c.l.b16 %v3787
        %v3804 = vunpack.c.l.b16 %v3788
        %v3805 = vunpack.c.l.b16 %v3789
        %v3806 = vunpack.c.l.b16 %v3790
        %v3807 = vunpack.c.l.b16 %v3791
        %v3808 = vunpack.c.l.b16 %v3792
        %v3809 = vunpack.c.l.b16 %v3793
        %v3810 = vunpack.c.l.b16 %v3794
        %v3811 = vpack.c.b16 %v3804, %v3803
        %v3812 = vpack.c.b16 %v3806, %v3805
        %v3813 = vpack.c.b16 %v3808, %v3807
        %v3814 = vpack.c.b16 %v3810, %v3809
        %v3820 = vsel %vm1079, %v3786, 0
        %3822 = vmatprep.subr.bf16.mxu0 0
        %3823 = vmatpush1.bf16.msra.mxu0 %v3811
        %3824 = vmatprep.subr.bf16.mxu0 0
        %3825 = vmatpush1.bf16.msra.mxu0 %v3812
        %3826 = vmatprep.subr.bf16.mxu0 0
        %3827 = vmatpush1.bf16.msra.mxu0 %v3813
        %3828 = vmatprep.subr.bf16.mxu0 0
        %3829 = vmatpush1.bf16.msra.mxu0 %v3814
        %3830 = vmatprep.subr.bf16.mxu0 0
        %3831 = vmatpush1.bf16.msra.mxu0 0
        %3832 = vmatprep.subr.bf16.mxu0 0
        %3833 = vmatpush1.bf16.msra.mxu0 0
        %3834 = vmatprep.subr.bf16.mxu0 0
        %3835 = vmatpush1.bf16.msra.mxu0 0
        %3836 = vmatprep.subr.bf16.mxu0 0
        %3837 = vmatpush1.bf16.msra.mxu0 0
        %3838 = vmatprep.subr.bf16.mxu0 0
        %3839 = vmatpush1.bf16.msra.mxu0 0
        %3840 = vmatprep.subr.bf16.mxu0 0
        %3841 = vmatpush1.bf16.msra.mxu0 0
        %3842 = vmatprep.subr.bf16.mxu0 0
        %3843 = vmatpush1.bf16.msra.mxu0 0
        %3844 = vmatprep.subr.bf16.mxu0 0
        %3845 = vmatpush1.bf16.msra.mxu0 0
        %3846 = vmatprep.subr.bf16.mxu0 0
        %3847 = vmatpush1.bf16.msra.mxu0 0
        %3848 = vmatprep.subr.bf16.mxu0 0
        %3849 = vmatpush1.bf16.msra.mxu0 0
        %3850 = vmatprep.subr.bf16.mxu0 0
        %3851 = vmatpush1.bf16.msra.mxu0 0
        %3852 = vmatprep.subr.bf16.mxu0 0
        %3853 = vmatpush1.bf16.msra.mxu0 0
        %3854 = vmatprep.mubr.bf16.mxu0 0
        %3855 = vmatmul.mubr.bf16.gmra.mrb[0].mxu0 %v3820
        %v3856 = vpop.f32.mrb[0].mxu0
        %v3857 = vadd.f32 0.0, %v3856
        %v3858 = vpop.f32.mrb[0].mxu0
        %v3859 = vpop.f32.mrb[0].mxu0
        %v3860 = vadd.f32 0.0, %v3859
        %v3861 = vpop.f32.mrb[0].mxu0
        %3862 = vdwg.mxu0
        %v3863 = vld [vmem:[%s1 + $0x15] sm:$0x1]
        %v3864 = vld [vmem:[%s1 + $0x16] sm:$0x1]
        %v3865 = vld [vmem:[%s1 + $0x17] sm:$0x1]
        %v3866 = vld [vmem:[%s1 + $0x18] sm:$0x1]
        %v3867 = vld [vmem:[%s1 + $0x19] sm:$0x1]
        %v3868 = vld [vmem:[%s1 + $0x1a] sm:$0x1]
        %v3869 = vld [vmem:[%s1 + $0x1b] sm:$0x1]
        %v3870 = vld [vmem:[%s1 + $0x1c] sm:$0x1]
        %v3871 = vld [vmem:[%s8] sm:$0xff]
        %v3872 = vld [vmem:[%s8 + $0x8] sm:$0xff]
        %v3873 = vld [vmem:[%s8 + $0x10] sm:$0xff]
        %v3874 = vld [vmem:[%s8 + $0x18] sm:$0xff]
        %v3875 = vld [vmem:[%s9] sm:$0xf]
        %v3876 = vld [vmem:[%s9 + $0x4] sm:$0xf]
        %v3877 = vld [vmem:[%s9 + $0x8] sm:$0xf]
        %v3878 = vld [vmem:[%s9 + $0xc] sm:$0xf]
        %v3879 = vld [vmem:[%s9 + $0x10] sm:$0xf]
        %v3880 = vld [vmem:[%s9 + $0x14] sm:$0xf]
        %v3881 = vld [vmem:[%s9 + $0x18] sm:$0xf]
        %v3882 = vld [vmem:[%s9 + $0x1c] sm:$0xf]
        %v3883 = vld [vmem:[%s9 + $0x20] sm:$0xf]
        %v3884 = vld [vmem:[%s9 + $0x24] sm:$0xf]
        %v3885 = vld [vmem:[%s9 + $0x28] sm:$0xf]
        %v3886 = vld [vmem:[%s9 + $0x2c] sm:$0xf]
        %v3887 = vld [vmem:[%s9 + $0x30] sm:$0xf]
        %v3888 = vld [vmem:[%s9 + $0x34] sm:$0xf]
        %v3889 = vld [vmem:[%s9 + $0x38] sm:$0xf]
        %v3890 = vld [vmem:[%s9 + $0x3c] sm:$0xf]
        %v3891 = vsel %vm3740, %v3857, 0.0
        %3892 = vadd.xlane.f32.xlu0 %v3891
        %v3893 = vpop.xlane.xlu0 %3892
        %v3894 = vsel %vm3740, %v3860, 0.0
        %3895 = vadd.xlane.f32.xlu0 %v3894
        %v3896 = vpop.xlane.xlu0 %3895
        %v3897 = vrcp.pop 32.0
        %v3898 = vmul.f32 %v3893, %v3897
        %v3899 = vmul.f32 %v3896, %v3897
        %v3900 = vsub.f32 %v3857, %v3898
        %v3901 = vsub.f32 %v3860, %v3899
        %v3902 = vmul.f32 %v3900, %v3900
        %v3903 = vmul.f32 %v3901, %v3901
        %v3904 = vsel %vm3740, %v3902, 0.0
        %3905 = vadd.xlane.f32.xlu0 %v3904
        %v3906 = vpop.xlane.xlu0 %3905
        %v3907 = vsel %vm3740, %v3903, 0.0
        %3908 = vadd.xlane.f32.xlu0 %v3907
        %v3909 = vpop.xlane.xlu0 %3908
        %v3910 = vmul.f32 %v3906, %v3897
        %v3911 = vmul.f32 %v3909, %v3897
        %v3912 = vadd.f32 %v3910, 1e-05
        %v3913 = vadd.f32 %v3911, 1e-05
        %v3914 = vrsqrt.pop %v3912
        %v3915 = vrsqrt.pop %v3913
        %v3916 = vmul.f32 %v3900, %v3914
        %v3917 = vmul.f32 %v3901, %v3915
        %v3918 = vlaneseq
        %v3919 = vshrl.u32 %v3918, 7
        %v3920 = vsub.s32 0, %v3919
        %v3921 = vrot.slane %v3863, %v3920
        %v3922 = vmul.f32 %v3916, %v3921
        %v3923 = vmul.f32 %v3917, %v3921
        %v3924 = vlaneseq
        %v3925 = vshrl.u32 %v3924, 7
        %v3926 = vsub.s32 0, %v3925
        %v3927 = vrot.slane %v3864, %v3926
        %v3928 = vadd.f32 %v3922, %v3927
        %v3929 = vadd.f32 %v3923, %v3927
        %v3930 = vpack.c.bf16 %v3929, %v3928
        %v3931 = vlaneseq
        %v3932 = vshrl.u32 %v3931, 7
        %v3933 = vsub.s32 0, %v3932
        %v3934 = vrot.slane %v3865, %v3933
        %v3939 = vunpack.c.l.b16 %v3871
        %v3940 = vunpack.c.l.b16 %v3872
        %v3941 = vunpack.c.l.b16 %v3873
        %v3942 = vunpack.c.l.b16 %v3874
        %v3943 = vpack.c.b16 %v3940, %v3939
        %v3944 = vpack.c.b16 %v3942, %v3941
        %v3948 = vsel %vm3740, %v3930, 0
        %3950 = vmatprep.subr.bf16.mxu0 0
        %3951 = vmatpush1.bf16.msra.mxu0 %v3943
        %3952 = vmatprep.subr.bf16.mxu0 0
        %3953 = vmatpush1.bf16.msra.mxu0 %v3944
        %3954 = vmatprep.subr.bf16.mxu0 0
        %3955 = vmatpush1.bf16.msra.mxu0 0
        %3956 = vmatprep.subr.bf16.mxu0 0
        %3957 = vmatpush1.bf16.msra.mxu0 0
        %3958 = vmatprep.subr.bf16.mxu0 0
        %3959 = vmatpush1.bf16.msra.mxu0 0
        %3960 = vmatprep.subr.bf16.mxu0 0
        %3961 = vmatpush1.bf16.msra.mxu0 0
        %3962 = vmatprep.subr.bf16.mxu0 0
        %3963 = vmatpush1.bf16.msra.mxu0 0
        %3964 = vmatprep.subr.bf16.mxu0 0
        %3965 = vmatpush1.bf16.msra.mxu0 0
        %3966 = vmatprep.subr.bf16.mxu0 0
        %3967 = vmatpush1.bf16.msra.mxu0 0
        %3968 = vmatprep.subr.bf16.mxu0 0
        %3969 = vmatpush1.bf16.msra.mxu0 0
        %3970 = vmatprep.subr.bf16.mxu0 0
        %3971 = vmatpush1.bf16.msra.mxu0 0
        %3972 = vmatprep.subr.bf16.mxu0 0
        %3973 = vmatpush1.bf16.msra.mxu0 0
        %3974 = vmatprep.subr.bf16.mxu0 0
        %3975 = vmatpush1.bf16.msra.mxu0 0
        %3976 = vmatprep.subr.bf16.mxu0 0
        %3977 = vmatpush1.bf16.msra.mxu0 0
        %3978 = vmatprep.subr.bf16.mxu0 0
        %3979 = vmatpush1.bf16.msra.mxu0 0
        %3980 = vmatprep.subr.bf16.mxu0 0
        %3981 = vmatpush1.bf16.msra.mxu0 0
        %3982 = vmatprep.mubr.bf16.mxu0 0
        %3983 = vmatmul.mubr.bf16.gmra.mrb[0].mxu0 %v3948
        %v3984 = vpop.f32.mrb[0].mxu0
        %v3985 = vadd.f32 %v3934, %v3984
        %v3986 = vpop.f32.mrb[0].mxu0
        %v3987 = vpop.f32.mrb[0].mxu0
        %v3988 = vadd.f32 %v3934, %v3987
        %v3989 = vpop.f32.mrb[0].mxu0
        %3990 = vdwg.mxu0
        %v3991 = vmul.f32 %v3985, 0.35355338
        %v3992 = vmul.f32 %v3988, 0.35355338
        %v3993 = vpack.c.bf16 %v3992, %v3991
        %v3994 = vpack.c.bf16 %v3988, %v3985
        %v3995 = vld [vmem:[%s10] sm:$0xff]
        %v3996 = vld [vmem:[%s10 + $0x8] sm:$0xff]
        %3998 = vrot.lane.b32.xlu0 %v3994, 96
        %v3999 = vpop.permute.xlu0 %3998
        %v4001 = vsel %vm989, %v3993, 0
        %v4004 = vsel %vm989, %v3999, 0
        %4006 = vmatprep.subr.bf16.mxu0 0
        %4007 = vmatpush1.bf16.xpose.msra.mxu0 %v4004
        %4008 = vmatprep.subr.bf16.mxu0 0
        %4009 = vmatpush1.bf16.xpose.msra.mxu0 0
        %4010 = vmatprep.subr.bf16.mxu0 0
        %4011 = vmatpush1.bf16.xpose.msra.mxu0 0
        %4012 = vmatprep.subr.bf16.mxu0 0
        %4013 = vmatpush1.bf16.xpose.msra.mxu0 0
        %4014 = vmatprep.subr.bf16.mxu0 0
        %4015 = vmatpush1.bf16.xpose.msra.mxu0 0
        %4016 = vmatprep.subr.bf16.mxu0 0
        %4017 = vmatpush1.bf16.xpose.msra.mxu0 0
        %4018 = vmatprep.subr.bf16.mxu0 0
        %4019 = vmatpush1.bf16.xpose.msra.mxu0 0
        %4020 = vmatprep.subr.bf16.mxu0 0
        %4021 = vmatpush1.bf16.xpose.msra.mxu0 0
        %4022 = vmatprep.subr.bf16.mxu0 0
        %4023 = vmatpush1.bf16.xpose.msra.mxu0 0
        %4024 = vmatprep.subr.bf16.mxu0 0
        %4025 = vmatpush1.bf16.xpose.msra.mxu0 0
        %4026 = vmatprep.subr.bf16.mxu0 0
        %4027 = vmatpush1.bf16.xpose.msra.mxu0 0
        %4028 = vmatprep.subr.bf16.mxu0 0
        %4029 = vmatpush1.bf16.xpose.msra.mxu0 0
        %4030 = vmatprep.subr.bf16.mxu0 0
        %4031 = vmatpush1.bf16.xpose.msra.mxu0 0
        %4032 = vmatprep.subr.bf16.mxu0 0
        %4033 = vmatpush1.bf16.xpose.msra.mxu0 0
        %4034 = vmatprep.subr.bf16.mxu0 0
        %4035 = vmatpush1.bf16.xpose.msra.mxu0 0
        %4036 = vmatprep.subr.bf16.mxu0 0
        %4037 = vmatpush1.bf16.xpose.msra.mxu0 0
        %4038 = vmatprep.mubr.bf16.mxu0 0
        %4039 = vmatmul.mubr.bf16.gmra.mrb[0].mxu0 %v4001
        %v4040 = vpop.f32.mrb[0].mxu0
        %v4041 = vadd.f32 %v3995, %v4040
        %v4042 = vpop.f32.mrb[0].mxu0
        %v4043 = vpop.f32.mrb[0].mxu0
        %v4044 = vadd.f32 %v3996, %v4043
        %v4045 = vpop.f32.mrb[0].mxu0
        %4046 = vdwg.mxu0
        %v4047 = vsel %vm586, %v4041, -inf
        %4048 = vmax.xlane.f32.xlu0 %v4047
        %v4049 = vpop.xlane.xlu0 %4048
        %v4050 = vsel %vm586, %v4044, -inf
        %4051 = vmax.xlane.f32.xlu0 %v4050
        %v4052 = vpop.xlane.xlu0 %4051
        %v4053 = vsub.f32 %v4041, %v4049
        %v4054 = vsub.f32 %v4044, %v4052
        %v4055 = vmul.f32 %v4053, 1.442695
        %v4056 = vpow.pop %v4055
        %v4057 = vmul.f32 %v4054, 1.442695
        %v4058 = vpow.pop %v4057
        %v4059 = vsel %vm586, %v4056, 0.0
        %4060 = vadd.xlane.f32.xlu0 %v4059
        %v4061 = vpop.xlane.xlu0 %4060
        %v4062 = vsel %vm586, %v4058, 0.0
        %4063 = vadd.xlane.f32.xlu0 %v4062
        %v4064 = vpop.xlane.xlu0 %4063
        %v4065 = vrcp.pop %v4061
        %v4066 = vrcp.pop %v4064
        %v4067 = vmul.f32 %v4056, %v4065
        %v4068 = vmul.f32 %v4058, %v4066
        %v4069 = vpack.c.bf16 %v4068, %v4067
        %4070 = vrot.lane.b32.xlu0 %v3994, 64
        %v4071 = vpop.permute.xlu0 %4070
        %v4074 = vsel %vm586, %v4069, 0
        %4076 = vmatprep.subr.bf16.mxu0 0
        %4077 = vmatpush1.bf16.msra.mxu0 %v4071
        %4078 = vmatprep.subr.bf16.mxu0 0
        %4079 = vmatpush1.bf16.msra.mxu0 0
        %4080 = vmatprep.subr.bf16.mxu0 0
        %4081 = vmatpush1.bf16.msra.mxu0 0
        %4082 = vmatprep.subr.bf16.mxu0 0
        %4083 = vmatpush1.bf16.msra.mxu0 0
        %4084 = vmatprep.subr.bf16.mxu0 0
        %4085 = vmatpush1.bf16.msra.mxu0 0
        %4086 = vmatprep.subr.bf16.mxu0 0
        %4087 = vmatpush1.bf16.msra.mxu0 0
        %4088 = vmatprep.subr.bf16.mxu0 0
        %4089 = vmatpush1.bf16.msra.mxu0 0
        %4090 = vmatprep.subr.bf16.mxu0 0
        %4091 = vmatpush1.bf16.msra.mxu0 0
        %4092 = vmatprep.subr.bf16.mxu0 0
        %4093 = vmatpush1.bf16.msra.mxu0 0
        %4094 = vmatprep.subr.bf16.mxu0 0
        %4095 = vmatpush1.bf16.msra.mxu0 0
        %4096 = vmatprep.subr.bf16.mxu0 0
        %4097 = vmatpush1.bf16.msra.mxu0 0
        %4098 = vmatprep.subr.bf16.mxu0 0
        %4099 = vmatpush1.bf16.msra.mxu0 0
        %4100 = vmatprep.subr.bf16.mxu0 0
        %4101 = vmatpush1.bf16.msra.mxu0 0
        %4102 = vmatprep.subr.bf16.mxu0 0
        %4103 = vmatpush1.bf16.msra.mxu0 0
        %4104 = vmatprep.subr.bf16.mxu0 0
        %4105 = vmatpush1.bf16.msra.mxu0 0
        %4106 = vmatprep.subr.bf16.mxu0 0
        %4107 = vmatpush1.bf16.msra.mxu0 0
        %4108 = vmatprep.mubr.bf16.mxu0 0
        %4109 = vmatmul.mubr.bf16.gmra.mrb[0].mxu0 %v4074
        %v4110 = vpop.f32.mrb[0].mxu0
        %v4111 = vadd.f32 0.0, %v4110
        %v4112 = vpop.f32.mrb[0].mxu0
        %v4113 = vpop.f32.mrb[0].mxu0
        %v4114 = vadd.f32 0.0, %v4113
        %v4115 = vpop.f32.mrb[0].mxu0
        %4116 = vdwg.mxu0
        %s4117 = scalar_lea.vmem %s10, 16
        %v4118 = vld [vmem:[%s4117] sm:$0xff]
        %v4119 = vld [vmem:[%s4117 + $0x8] sm:$0xff]
        %4121 = vrot.lane.b32.xlu0 %v3993, 120
        %v4122 = vpop.permute.xlu0 %4121
        %4123 = vrot.lane.b32.xlu0 %v3994, 88
        %v4124 = vpop.permute.xlu0 %4123
        %v4126 = vsel %vm989, %v4122, 0
        %v4129 = vsel %vm989, %v4124, 0
        %4131 = vmatprep.subr.bf16.mxu0 0
        %4132 = vmatpush1.bf16.xpose.msra.mxu0 %v4129
        %4133 = vmatprep.subr.bf16.mxu0 0
        %4134 = vmatpush1.bf16.xpose.msra.mxu0 0
        %4135 = vmatprep.subr.bf16.mxu0 0
        %4136 = vmatpush1.bf16.xpose.msra.mxu0 0
        %4137 = vmatprep.subr.bf16.mxu0 0
        %4138 = vmatpush1.bf16.xpose.msra.mxu0 0
        %4139 = vmatprep.subr.bf16.mxu0 0
        %4140 = vmatpush1.bf16.xpose.msra.mxu0 0
        %4141 = vmatprep.subr.bf16.mxu0 0
        %4142 = vmatpush1.bf16.xpose.msra.mxu0 0
        %4143 = vmatprep.subr.bf16.mxu0 0
        %4144 = vmatpush1.bf16.xpose.msra.mxu0 0
        %4145 = vmatprep.subr.bf16.mxu0 0
        %4146 = vmatpush1.bf16.xpose.msra.mxu0 0
        %4147 = vmatprep.subr.bf16.mxu0 0
        %4148 = vmatpush1.bf16.xpose.msra.mxu0 0
        %4149 = vmatprep.subr.bf16.mxu0 0
        %4150 = vmatpush1.bf16.xpose.msra.mxu0 0
        %4151 = vmatprep.subr.bf16.mxu0 0
        %4152 = vmatpush1.bf16.xpose.msra.mxu0 0
        %4153 = vmatprep.subr.bf16.mxu0 0
        %4154 = vmatpush1.bf16.xpose.msra.mxu0 0
        %4155 = vmatprep.subr.bf16.mxu0 0
        %4156 = vmatpush1.bf16.xpose.msra.mxu0 0
        %4157 = vmatprep.subr.bf16.mxu0 0
        %4158 = vmatpush1.bf16.xpose.msra.mxu0 0
        %4159 = vmatprep.subr.bf16.mxu0 0
        %4160 = vmatpush1.bf16.xpose.msra.mxu0 0
        %4161 = vmatprep.subr.bf16.mxu0 0
        %4162 = vmatpush1.bf16.xpose.msra.mxu0 0
        %4163 = vmatprep.mubr.bf16.mxu0 0
        %4164 = vmatmul.mubr.bf16.gmra.mrb[0].mxu0 %v4126
        %v4165 = vpop.f32.mrb[0].mxu0
        %v4166 = vadd.f32 %v4118, %v4165
        %v4167 = vpop.f32.mrb[0].mxu0
        %v4168 = vpop.f32.mrb[0].mxu0
        %v4169 = vadd.f32 %v4119, %v4168
        %v4170 = vpop.f32.mrb[0].mxu0
        %4171 = vdwg.mxu0
        %v4172 = vsel %vm586, %v4166, -inf
        %4173 = vmax.xlane.f32.xlu0 %v4172
        %v4174 = vpop.xlane.xlu0 %4173
        %v4175 = vsel %vm586, %v4169, -inf
        %4176 = vmax.xlane.f32.xlu0 %v4175
        %v4177 = vpop.xlane.xlu0 %4176
        %v4178 = vsub.f32 %v4166, %v4174
        %v4179 = vsub.f32 %v4169, %v4177
        %v4180 = vmul.f32 %v4178, 1.442695
        %v4181 = vpow.pop %v4180
        %v4182 = vmul.f32 %v4179, 1.442695
        %v4183 = vpow.pop %v4182
        %v4184 = vsel %vm586, %v4181, 0.0
        %4185 = vadd.xlane.f32.xlu0 %v4184
        %v4186 = vpop.xlane.xlu0 %4185
        %v4187 = vsel %vm586, %v4183, 0.0
        %4188 = vadd.xlane.f32.xlu0 %v4187
        %v4189 = vpop.xlane.xlu0 %4188
        %v4190 = vrcp.pop %v4186
        %v4191 = vrcp.pop %v4189
        %v4192 = vmul.f32 %v4181, %v4190
        %v4193 = vmul.f32 %v4183, %v4191
        %v4194 = vpack.c.bf16 %v4193, %v4192
        %4195 = vrot.lane.b32.xlu0 %v3994, 56
        %v4196 = vpop.permute.xlu0 %4195
        %v4199 = vsel %vm586, %v4194, 0
        %4201 = vmatprep.subr.bf16.mxu0 0
        %4202 = vmatpush1.bf16.msra.mxu0 %v4196
        %4203 = vmatprep.subr.bf16.mxu0 0
        %4204 = vmatpush1.bf16.msra.mxu0 0
        %4205 = vmatprep.subr.bf16.mxu0 0
        %4206 = vmatpush1.bf16.msra.mxu0 0
        %4207 = vmatprep.subr.bf16.mxu0 0
        %4208 = vmatpush1.bf16.msra.mxu0 0
        %4209 = vmatprep.subr.bf16.mxu0 0
        %4210 = vmatpush1.bf16.msra.mxu0 0
        %4211 = vmatprep.subr.bf16.mxu0 0
        %4212 = vmatpush1.bf16.msra.mxu0 0
        %4213 = vmatprep.subr.bf16.mxu0 0
        %4214 = vmatpush1.bf16.msra.mxu0 0
        %4215 = vmatprep.subr.bf16.mxu0 0
        %4216 = vmatpush1.bf16.msra.mxu0 0
        %4217 = vmatprep.subr.bf16.mxu0 0
        %4218 = vmatpush1.bf16.msra.mxu0 0
        %4219 = vmatprep.subr.bf16.mxu0 0
        %4220 = vmatpush1.bf16.msra.mxu0 0
        %4221 = vmatprep.subr.bf16.mxu0 0
        %4222 = vmatpush1.bf16.msra.mxu0 0
        %4223 = vmatprep.subr.bf16.mxu0 0
        %4224 = vmatpush1.bf16.msra.mxu0 0
        %4225 = vmatprep.subr.bf16.mxu0 0
        %4226 = vmatpush1.bf16.msra.mxu0 0
        %4227 = vmatprep.subr.bf16.mxu0 0
        %4228 = vmatpush1.bf16.msra.mxu0 0
        %4229 = vmatprep.subr.bf16.mxu0 0
        %4230 = vmatpush1.bf16.msra.mxu0 0
        %4231 = vmatprep.subr.bf16.mxu0 0
        %4232 = vmatpush1.bf16.msra.mxu0 0
        %4233 = vmatprep.mubr.bf16.mxu0 0
        %4234 = vmatmul.mubr.bf16.gmra.mrb[0].mxu0 %v4199
        %v4235 = vpop.f32.mrb[0].mxu0
        %v4236 = vadd.f32 0.0, %v4235
        %v4237 = vpop.f32.mrb[0].mxu0
        %v4238 = vpop.f32.mrb[0].mxu0
        %v4239 = vadd.f32 0.0, %v4238
        %v4240 = vpop.f32.mrb[0].mxu0
        %4241 = vdwg.mxu0
        %s4242 = scalar_lea.vmem %s10, 32
        %v4243 = vld [vmem:[%s4242] sm:$0xff]
        %v4244 = vld [vmem:[%s4242 + $0x8] sm:$0xff]
        %4245 = vrot.lane.b32.xlu0 %v3993, 112
        %v4246 = vpop.permute.xlu0 %4245
        %4247 = vrot.lane.b32.xlu0 %v3994, 80
        %v4248 = vpop.permute.xlu0 %4247
        %v4250 = vsel %vm989, %v4246, 0
        %v4253 = vsel %vm989, %v4248, 0
        %4255 = vmatprep.subr.bf16.mxu0 0
        %4256 = vmatpush1.bf16.xpose.msra.mxu0 %v4253
        %4257 = vmatprep.subr.bf16.mxu0 0
        %4258 = vmatpush1.bf16.xpose.msra.mxu0 0
        %4259 = vmatprep.subr.bf16.mxu0 0
        %4260 = vmatpush1.bf16.xpose.msra.mxu0 0
        %4261 = vmatprep.subr.bf16.mxu0 0
        %4262 = vmatpush1.bf16.xpose.msra.mxu0 0
        %4263 = vmatprep.subr.bf16.mxu0 0
        %4264 = vmatpush1.bf16.xpose.msra.mxu0 0
        %4265 = vmatprep.subr.bf16.mxu0 0
        %4266 = vmatpush1.bf16.xpose.msra.mxu0 0
        %4267 = vmatprep.subr.bf16.mxu0 0
        %4268 = vmatpush1.bf16.xpose.msra.mxu0 0
        %4269 = vmatprep.subr.bf16.mxu0 0
        %4270 = vmatpush1.bf16.xpose.msra.mxu0 0
        %4271 = vmatprep.subr.bf16.mxu0 0
        %4272 = vmatpush1.bf16.xpose.msra.mxu0 0
        %4273 = vmatprep.subr.bf16.mxu0 0
        %4274 = vmatpush1.bf16.xpose.msra.mxu0 0
        %4275 = vmatprep.subr.bf16.mxu0 0
        %4276 = vmatpush1.bf16.xpose.msra.mxu0 0
        %4277 = vmatprep.subr.bf16.mxu0 0
        %4278 = vmatpush1.bf16.xpose.msra.mxu0 0
        %4279 = vmatprep.subr.bf16.mxu0 0
        %4280 = vmatpush1.bf16.xpose.msra.mxu0 0
        %4281 = vmatprep.subr.bf16.mxu0 0
        %4282 = vmatpush1.bf16.xpose.msra.mxu0 0
        %4283 = vmatprep.subr.bf16.mxu0 0
        %4284 = vmatpush1.bf16.xpose.msra.mxu0 0
        %4285 = vmatprep.subr.bf16.mxu0 0
        %4286 = vmatpush1.bf16.xpose.msra.mxu0 0
        %4287 = vmatprep.mubr.bf16.mxu0 0
        %4288 = vmatmul.mubr.bf16.gmra.mrb[0].mxu0 %v4250
        %v4289 = vpop.f32.mrb[0].mxu0
        %v4290 = vadd.f32 %v4243, %v4289
        %v4291 = vpop.f32.mrb[0].mxu0
        %v4292 = vpop.f32.mrb[0].mxu0
        %v4293 = vadd.f32 %v4244, %v4292
        %v4294 = vpop.f32.mrb[0].mxu0
        %4295 = vdwg.mxu0
        %v4296 = vsel %vm586, %v4290, -inf
        %4297 = vmax.xlane.f32.xlu0 %v4296
        %v4298 = vpop.xlane.xlu0 %4297
        %v4299 = vsel %vm586, %v4293, -inf
        %4300 = vmax.xlane.f32.xlu0 %v4299
        %v4301 = vpop.xlane.xlu0 %4300
        %v4302 = vsub.f32 %v4290, %v4298
        %v4303 = vsub.f32 %v4293, %v4301
        %v4304 = vmul.f32 %v4302, 1.442695
        %v4305 = vpow.pop %v4304
        %v4306 = vmul.f32 %v4303, 1.442695
        %v4307 = vpow.pop %v4306
        %v4308 = vsel %vm586, %v4305, 0.0
        %4309 = vadd.xlane.f32.xlu0 %v4308
        %v4310 = vpop.xlane.xlu0 %4309
        %v4311 = vsel %vm586, %v4307, 0.0
        %4312 = vadd.xlane.f32.xlu0 %v4311
        %v4313 = vpop.xlane.xlu0 %4312
        %v4314 = vrcp.pop %v4310
        %v4315 = vrcp.pop %v4313
        %v4316 = vmul.f32 %v4305, %v4314
        %v4317 = vmul.f32 %v4307, %v4315
        %v4318 = vpack.c.bf16 %v4317, %v4316
        %4319 = vrot.lane.b32.xlu0 %v3994, 48
        %v4320 = vpop.permute.xlu0 %4319
        %v4323 = vsel %vm586, %v4318, 0
        %4325 = vmatprep.subr.bf16.mxu0 0
        %4326 = vmatpush1.bf16.msra.mxu0 %v4320
        %4327 = vmatprep.subr.bf16.mxu0 0
        %4328 = vmatpush1.bf16.msra.mxu0 0
        %4329 = vmatprep.subr.bf16.mxu0 0
        %4330 = vmatpush1.bf16.msra.mxu0 0
        %4331 = vmatprep.subr.bf16.mxu0 0
        %4332 = vmatpush1.bf16.msra.mxu0 0
        %4333 = vmatprep.subr.bf16.mxu0 0
        %4334 = vmatpush1.bf16.msra.mxu0 0
        %4335 = vmatprep.subr.bf16.mxu0 0
        %4336 = vmatpush1.bf16.msra.mxu0 0
        %4337 = vmatprep.subr.bf16.mxu0 0
        %4338 = vmatpush1.bf16.msra.mxu0 0
        %4339 = vmatprep.subr.bf16.mxu0 0
        %4340 = vmatpush1.bf16.msra.mxu0 0
        %4341 = vmatprep.subr.bf16.mxu0 0
        %4342 = vmatpush1.bf16.msra.mxu0 0
        %4343 = vmatprep.subr.bf16.mxu0 0
        %4344 = vmatpush1.bf16.msra.mxu0 0
        %4345 = vmatprep.subr.bf16.mxu0 0
        %4346 = vmatpush1.bf16.msra.mxu0 0
        %4347 = vmatprep.subr.bf16.mxu0 0
        %4348 = vmatpush1.bf16.msra.mxu0 0
        %4349 = vmatprep.subr.bf16.mxu0 0
        %4350 = vmatpush1.bf16.msra.mxu0 0
        %4351 = vmatprep.subr.bf16.mxu0 0
        %4352 = vmatpush1.bf16.msra.mxu0 0
        %4353 = vmatprep.subr.bf16.mxu0 0
        %4354 = vmatpush1.bf16.msra.mxu0 0
        %4355 = vmatprep.subr.bf16.mxu0 0
        %4356 = vmatpush1.bf16.msra.mxu0 0
        %4357 = vmatprep.mubr.bf16.mxu0 0
        %4358 = vmatmul.mubr.bf16.gmra.mrb[0].mxu0 %v4323
        %v4359 = vpop.f32.mrb[0].mxu0
        %v4360 = vadd.f32 0.0, %v4359
        %v4361 = vpop.f32.mrb[0].mxu0
        %v4362 = vpop.f32.mrb[0].mxu0
        %v4363 = vadd.f32 0.0, %v4362
        %v4364 = vpop.f32.mrb[0].mxu0
        %4365 = vdwg.mxu0
        %s4366 = scalar_lea.vmem %s10, 48
        %v4367 = vld [vmem:[%s4366] sm:$0xff]
        %v4368 = vld [vmem:[%s4366 + $0x8] sm:$0xff]
        %4369 = vrot.lane.b32.xlu0 %v3993, 104
        %v4370 = vpop.permute.xlu0 %4369
        %4371 = vrot.lane.b32.xlu0 %v3994, 72
        %v4372 = vpop.permute.xlu0 %4371
        %v4374 = vsel %vm989, %v4370, 0
        %v4377 = vsel %vm989, %v4372, 0
        %4379 = vmatprep.subr.bf16.mxu0 0
        %4380 = vmatpush1.bf16.xpose.msra.mxu0 %v4377
        %4381 = vmatprep.subr.bf16.mxu0 0
        %4382 = vmatpush1.bf16.xpose.msra.mxu0 0
        %4383 = vmatprep.subr.bf16.mxu0 0
        %4384 = vmatpush1.bf16.xpose.msra.mxu0 0
        %4385 = vmatprep.subr.bf16.mxu0 0
        %4386 = vmatpush1.bf16.xpose.msra.mxu0 0
        %4387 = vmatprep.subr.bf16.mxu0 0
        %4388 = vmatpush1.bf16.xpose.msra.mxu0 0
        %4389 = vmatprep.subr.bf16.mxu0 0
        %4390 = vmatpush1.bf16.xpose.msra.mxu0 0
        %4391 = vmatprep.subr.bf16.mxu0 0
        %4392 = vmatpush1.bf16.xpose.msra.mxu0 0
        %4393 = vmatprep.subr.bf16.mxu0 0
        %4394 = vmatpush1.bf16.xpose.msra.mxu0 0
        %4395 = vmatprep.subr.bf16.mxu0 0
        %4396 = vmatpush1.bf16.xpose.msra.mxu0 0
        %4397 = vmatprep.subr.bf16.mxu0 0
        %4398 = vmatpush1.bf16.xpose.msra.mxu0 0
        %4399 = vmatprep.subr.bf16.mxu0 0
        %4400 = vmatpush1.bf16.xpose.msra.mxu0 0
        %4401 = vmatprep.subr.bf16.mxu0 0
        %4402 = vmatpush1.bf16.xpose.msra.mxu0 0
        %4403 = vmatprep.subr.bf16.mxu0 0
        %4404 = vmatpush1.bf16.xpose.msra.mxu0 0
        %4405 = vmatprep.subr.bf16.mxu0 0
        %4406 = vmatpush1.bf16.xpose.msra.mxu0 0
        %4407 = vmatprep.subr.bf16.mxu0 0
        %4408 = vmatpush1.bf16.xpose.msra.mxu0 0
        %4409 = vmatprep.subr.bf16.mxu0 0
        %4410 = vmatpush1.bf16.xpose.msra.mxu0 0
        %4411 = vmatprep.mubr.bf16.mxu0 0
        %4412 = vmatmul.mubr.bf16.gmra.mrb[0].mxu0 %v4374
        %v4413 = vpop.f32.mrb[0].mxu0
        %v4414 = vadd.f32 %v4367, %v4413
        %v4415 = vpop.f32.mrb[0].mxu0
        %v4416 = vpop.f32.mrb[0].mxu0
        %v4417 = vadd.f32 %v4368, %v4416
        %v4418 = vpop.f32.mrb[0].mxu0
        %4419 = vdwg.mxu0
        %v4420 = vsel %vm586, %v4414, -inf
        %4421 = vmax.xlane.f32.xlu0 %v4420
        %v4422 = vpop.xlane.xlu0 %4421
        %v4423 = vsel %vm586, %v4417, -inf
        %4424 = vmax.xlane.f32.xlu0 %v4423
        %v4425 = vpop.xlane.xlu0 %4424
        %v4426 = vsub.f32 %v4414, %v4422
        %v4427 = vsub.f32 %v4417, %v4425
        %v4428 = vmul.f32 %v4426, 1.442695
        %v4429 = vpow.pop %v4428
        %v4430 = vmul.f32 %v4427, 1.442695
        %v4431 = vpow.pop %v4430
        %v4432 = vsel %vm586, %v4429, 0.0
        %4433 = vadd.xlane.f32.xlu0 %v4432
        %v4434 = vpop.xlane.xlu0 %4433
        %v4435 = vsel %vm586, %v4431, 0.0
        %4436 = vadd.xlane.f32.xlu0 %v4435
        %v4437 = vpop.xlane.xlu0 %4436
        %v4438 = vrcp.pop %v4434
        %v4439 = vrcp.pop %v4437
        %v4440 = vmul.f32 %v4429, %v4438
        %v4441 = vmul.f32 %v4431, %v4439
        %v4442 = vpack.c.bf16 %v4441, %v4440
        %4443 = vrot.lane.b32.xlu0 %v3994, 40
        %v4444 = vpop.permute.xlu0 %4443
        %v4447 = vsel %vm586, %v4442, 0
        %4449 = vmatprep.subr.bf16.mxu0 0
        %4450 = vmatpush1.bf16.msra.mxu0 %v4444
        %4451 = vmatprep.subr.bf16.mxu0 0
        %4452 = vmatpush1.bf16.msra.mxu0 0
        %4453 = vmatprep.subr.bf16.mxu0 0
        %4454 = vmatpush1.bf16.msra.mxu0 0
        %4455 = vmatprep.subr.bf16.mxu0 0
        %4456 = vmatpush1.bf16.msra.mxu0 0
        %4457 = vmatprep.subr.bf16.mxu0 0
        %4458 = vmatpush1.bf16.msra.mxu0 0
        %4459 = vmatprep.subr.bf16.mxu0 0
        %4460 = vmatpush1.bf16.msra.mxu0 0
        %4461 = vmatprep.subr.bf16.mxu0 0
        %4462 = vmatpush1.bf16.msra.mxu0 0
        %4463 = vmatprep.subr.bf16.mxu0 0
        %4464 = vmatpush1.bf16.msra.mxu0 0
        %4465 = vmatprep.subr.bf16.mxu0 0
        %4466 = vmatpush1.bf16.msra.mxu0 0
        %4467 = vmatprep.subr.bf16.mxu0 0
        %4468 = vmatpush1.bf16.msra.mxu0 0
        %4469 = vmatprep.subr.bf16.mxu0 0
        %4470 = vmatpush1.bf16.msra.mxu0 0
        %4471 = vmatprep.subr.bf16.mxu0 0
        %4472 = vmatpush1.bf16.msra.mxu0 0
        %4473 = vmatprep.subr.bf16.mxu0 0
        %4474 = vmatpush1.bf16.msra.mxu0 0
        %4475 = vmatprep.subr.bf16.mxu0 0
        %4476 = vmatpush1.bf16.msra.mxu0 0
        %4477 = vmatprep.subr.bf16.mxu0 0
        %4478 = vmatpush1.bf16.msra.mxu0 0
        %4479 = vmatprep.subr.bf16.mxu0 0
        %4480 = vmatpush1.bf16.msra.mxu0 0
        %4481 = vmatprep.mubr.bf16.mxu0 0
        %4482 = vmatmul.mubr.bf16.gmra.mrb[0].mxu0 %v4447
        %v4483 = vpop.f32.mrb[0].mxu0
        %v4484 = vadd.f32 0.0, %v4483
        %v4485 = vpop.f32.mrb[0].mxu0
        %v4486 = vpop.f32.mrb[0].mxu0
        %v4487 = vadd.f32 0.0, %v4486
        %v4488 = vpop.f32.mrb[0].mxu0
        %4489 = vdwg.mxu0
        %4492 = vrot.lane.b32.xlu0 %v4236, 8
        %v4493 = vpop.permute.xlu0 %4492
        %4494 = vrot.lane.b32.xlu0 %v4239, 8
        %v4495 = vpop.permute.xlu0 %4494
        %4500 = vrot.lane.b32.xlu0 %v4360, 16
        %v4501 = vpop.permute.xlu0 %4500
        %4502 = vrot.lane.b32.xlu0 %v4363, 16
        %v4503 = vpop.permute.xlu0 %4502
        %4508 = vrot.lane.b32.xlu0 %v4484, 24
        %v4509 = vpop.permute.xlu0 %4508
        %4510 = vrot.lane.b32.xlu0 %v4487, 24
        %v4511 = vpop.permute.xlu0 %4510
        %v4514 = vsel %vm989, %v4111, %v4493
        %v4515 = vsel %vm989, %v4114, %v4495
        %v4516 = vsel %vm586, %v4514, %v4501
        %v4517 = vsel %vm586, %v4515, %v4503
        %vm4518 = vcmask 195584
        %v4519 = vsel %vm4518, %v4516, %v4509
        %v4520 = vsel %vm4518, %v4517, %v4511
        %v4521 = vpack.c.bf16 %v4520, %v4519
        %4522 = vrot.lane.b32.xlu0 %v3943, 32
        %v4523 = vpop.permute.xlu0 %4522
        %4524 = vrot.lane.b32.xlu0 %v3944, 32
        %v4525 = vpop.permute.xlu0 %4524
        %v4529 = vsel %vm3740, %v4521, 0
        %4531 = vmatprep.subr.bf16.mxu0 0
        %4532 = vmatpush1.bf16.msra.mxu0 %v4523
        %4533 = vmatprep.subr.bf16.mxu0 0
        %4534 = vmatpush1.bf16.msra.mxu0 %v4525
        %4535 = vmatprep.subr.bf16.mxu0 0
        %4536 = vmatpush1.bf16.msra.mxu0 0
        %4537 = vmatprep.subr.bf16.mxu0 0
        %4538 = vmatpush1.bf16.msra.mxu0 0
        %4539 = vmatprep.subr.bf16.mxu0 0
        %4540 = vmatpush1.bf16.msra.mxu0 0
        %4541 = vmatprep.subr.bf16.mxu0 0
        %4542 = vmatpush1.bf16.msra.mxu0 0
        %4543 = vmatprep.subr.bf16.mxu0 0
        %4544 = vmatpush1.bf16.msra.mxu0 0
        %4545 = vmatprep.subr.bf16.mxu0 0
        %4546 = vmatpush1.bf16.msra.mxu0 0
        %4547 = vmatprep.subr.bf16.mxu0 0
        %4548 = vmatpush1.bf16.msra.mxu0 0
        %4549 = vmatprep.subr.bf16.mxu0 0
        %4550 = vmatpush1.bf16.msra.mxu0 0
        %4551 = vmatprep.subr.bf16.mxu0 0
        %4552 = vmatpush1.bf16.msra.mxu0 0
        %4553 = vmatprep.subr.bf16.mxu0 0
        %4554 = vmatpush1.bf16.msra.mxu0 0
        %4555 = vmatprep.subr.bf16.mxu0 0
        %4556 = vmatpush1.bf16.msra.mxu0 0
        %4557 = vmatprep.subr.bf16.mxu0 0
        %4558 = vmatpush1.bf16.msra.mxu0 0
        %4559 = vmatprep.subr.bf16.mxu0 0
        %4560 = vmatpush1.bf16.msra.mxu0 0
        %4561 = vmatprep.subr.bf16.mxu0 0
        %4562 = vmatpush1.bf16.msra.mxu0 0
        %4563 = vmatprep.mubr.bf16.mxu0 0
        %4564 = vmatmul.mubr.bf16.gmra.mrb[0].mxu0 %v4529
        %v4565 = vpop.f32.mrb[0].mxu0
        %v4566 = vadd.f32 0.0, %v4565
        %v4567 = vpop.f32.mrb[0].mxu0
        %v4568 = vpop.f32.mrb[0].mxu0
        %v4569 = vadd.f32 0.0, %v4568
        %v4570 = vpop.f32.mrb[0].mxu0
        %4571 = vdwg.mxu0
        %v4572 = vadd.f32 %v3857, %v4566
        %v4573 = vadd.f32 %v3860, %v4569
        %v4574 = vlaneseq
        %v4575 = vshrl.u32 %v4574, 7
        %v4576 = vsub.s32 0, %v4575
        %v4577 = vrot.slane %v3866, %v4576
        %v4578 = vadd.f32 %v4572, %v4577
        %v4579 = vadd.f32 %v4573, %v4577
        %v4580 = vsel %vm3740, %v4578, 0.0
        %4581 = vadd.xlane.f32.xlu0 %v4580
        %v4582 = vpop.xlane.xlu0 %4581
        %v4583 = vsel %vm3740, %v4579, 0.0
        %4584 = vadd.xlane.f32.xlu0 %v4583
        %v4585 = vpop.xlane.xlu0 %4584
        %v4586 = vmul.f32 %v4582, %v3897
        %v4587 = vmul.f32 %v4585, %v3897
        %v4588 = vsub.f32 %v4578, %v4586
        %v4589 = vsub.f32 %v4579, %v4587
        %v4590 = vmul.f32 %v4588, %v4588
        %v4591 = vmul.f32 %v4589, %v4589
        %v4592 = vsel %vm3740, %v4590, 0.0
        %4593 = vadd.xlane.f32.xlu0 %v4592
        %v4594 = vpop.xlane.xlu0 %4593
        %v4595 = vsel %vm3740, %v4591, 0.0
        %4596 = vadd.xlane.f32.xlu0 %v4595
        %v4597 = vpop.xlane.xlu0 %4596
        %v4598 = vmul.f32 %v4594, %v3897
        %v4599 = vmul.f32 %v4597, %v3897
        %v4600 = vadd.f32 %v4598, 1e-05
        %v4601 = vadd.f32 %v4599, 1e-05
        %v4602 = vrsqrt.pop %v4600
        %v4603 = vrsqrt.pop %v4601
        %v4604 = vmul.f32 %v4588, %v4602
        %v4605 = vmul.f32 %v4589, %v4603
        %v4606 = vlaneseq
        %v4607 = vshrl.u32 %v4606, 7
        %v4608 = vsub.s32 0, %v4607
        %v4609 = vrot.slane %v3867, %v4608
        %v4610 = vmul.f32 %v4604, %v4609
        %v4611 = vmul.f32 %v4605, %v4609
        %v4612 = vlaneseq
        %v4613 = vshrl.u32 %v4612, 7
        %v4614 = vsub.s32 0, %v4613
        %v4615 = vrot.slane %v3868, %v4614
        %v4616 = vadd.f32 %v4610, %v4615
        %v4617 = vadd.f32 %v4611, %v4615
        %v4618 = vpack.c.bf16 %v4617, %v4616
        %v4619 = vlaneseq
        %v4620 = vshrl.u32 %v4619, 7
        %v4621 = vsub.s32 0, %v4620
        %v4622 = vrot.slane %v3869, %v4621
        %v4623 = vunpack.c.h.b16 %v3871
        %v4624 = vunpack.c.h.b16 %v3872
        %v4625 = vunpack.c.h.b16 %v3873
        %v4626 = vunpack.c.h.b16 %v3874
        %v4627 = vpack.c.b16 %v4624, %v4623
        %v4628 = vpack.c.b16 %v4626, %v4625
        %v4632 = vsel %vm3740, %v4618, 0
        %4634 = vmatprep.subr.bf16.mxu0 0
        %4635 = vmatpush1.bf16.msra.mxu0 %v4627
        %4636 = vmatprep.subr.bf16.mxu0 0
        %4637 = vmatpush1.bf16.msra.mxu0 %v4628
        %4638 = vmatprep.subr.bf16.mxu0 0
        %4639 = vmatpush1.bf16.msra.mxu0 0
        %4640 = vmatprep.subr.bf16.mxu0 0
        %4641 = vmatpush1.bf16.msra.mxu0 0
        %4642 = vmatprep.subr.bf16.mxu0 0
        %4643 = vmatpush1.bf16.msra.mxu0 0
        %4644 = vmatprep.subr.bf16.mxu0 0
        %4645 = vmatpush1.bf16.msra.mxu0 0
        %4646 = vmatprep.subr.bf16.mxu0 0
        %4647 = vmatpush1.bf16.msra.mxu0 0
        %4648 = vmatprep.subr.bf16.mxu0 0
        %4649 = vmatpush1.bf16.msra.mxu0 0
        %4650 = vmatprep.subr.bf16.mxu0 0
        %4651 = vmatpush1.bf16.msra.mxu0 0
        %4652 = vmatprep.subr.bf16.mxu0 0
        %4653 = vmatpush1.bf16.msra.mxu0 0
        %4654 = vmatprep.subr.bf16.mxu0 0
        %4655 = vmatpush1.bf16.msra.mxu0 0
        %4656 = vmatprep.subr.bf16.mxu0 0
        %4657 = vmatpush1.bf16.msra.mxu0 0
        %4658 = vmatprep.subr.bf16.mxu0 0
        %4659 = vmatpush1.bf16.msra.mxu0 0
        %4660 = vmatprep.subr.bf16.mxu0 0
        %4661 = vmatpush1.bf16.msra.mxu0 0
        %4662 = vmatprep.subr.bf16.mxu0 0
        %4663 = vmatpush1.bf16.msra.mxu0 0
        %4664 = vmatprep.subr.bf16.mxu0 0
        %4665 = vmatpush1.bf16.msra.mxu0 0
        %4666 = vmatprep.mubr.bf16.mxu0 0
        %4667 = vmatmul.mubr.bf16.gmra.mrb[0].mxu0 %v4632
        %v4668 = vpop.f32.mrb[0].mxu0
        %v4669 = vadd.f32 %v4622, %v4668
        %v4670 = vpop.f32.mrb[0].mxu0
        %v4671 = vpop.f32.mrb[0].mxu0
        %v4672 = vadd.f32 %v4622, %v4671
        %v4673 = vpop.f32.mrb[0].mxu0
        %4674 = vdwg.mxu0
        %v4675 = vmul.f32 %v4669, 0.5
        %v4676 = vmul.f32 %v4672, 0.5
        %v4677 = vmul.f32 %v4669, 0.044715
        %v4678 = vmul.f32 %v4672, 0.044715
        %v4679 = vmul.f32 %v4677, %v4669
        %v4680 = vmul.f32 %v4678, %v4672
        %v4681 = vmul.f32 %v4679, %v4669
        %v4682 = vmul.f32 %v4680, %v4672
        %v4683 = vadd.f32 %v4669, %v4681
        %v4684 = vadd.f32 %v4672, %v4682
        %v4685 = vmul.f32 %v4683, 0.7978846
        %v4686 = vmul.f32 %v4684, 0.7978846
        %v4687 = vtanh.pop %v4685
        %v4688 = vtanh.pop %v4686
        %v4689 = vadd.f32 %v4687, 1.0
        %v4690 = vadd.f32 %v4688, 1.0
        %v4691 = vmul.f32 %v4675, %v4689
        %v4692 = vmul.f32 %v4676, %v4690
        %v4693 = vpack.c.bf16 %v4692, %v4691
        %v4694 = vlaneseq
        %v4695 = vshrl.u32 %v4694, 7
        %v4696 = vsub.s32 0, %v4695
        %v4697 = vrot.slane %v3870, %v4696
        %v4714 = vunpack.c.l.b16 %v3875
        %v4715 = vunpack.c.l.b16 %v3876
        %v4716 = vunpack.c.l.b16 %v3877
        %v4717 = vunpack.c.l.b16 %v3878
        %v4718 = vunpack.c.l.b16 %v3879
        %v4719 = vunpack.c.l.b16 %v3880
        %v4720 = vunpack.c.l.b16 %v3881
        %v4721 = vunpack.c.l.b16 %v3882
        %v4722 = vunpack.c.l.b16 %v3883
        %v4723 = vunpack.c.l.b16 %v3884
        %v4724 = vunpack.c.l.b16 %v3885
        %v4725 = vunpack.c.l.b16 %v3886
        %v4726 = vunpack.c.l.b16 %v3887
        %v4727 = vunpack.c.l.b16 %v3888
        %v4728 = vunpack.c.l.b16 %v3889
        %v4729 = vunpack.c.l.b16 %v3890
        %v4730 = vpack.c.b16 %v4715, %v4714
        %v4731 = vpack.c.b16 %v4717, %v4716
        %v4732 = vpack.c.b16 %v4719, %v4718
        %v4733 = vpack.c.b16 %v4721, %v4720
        %v4734 = vpack.c.b16 %v4723, %v4722
        %v4735 = vpack.c.b16 %v4725, %v4724
        %v4736 = vpack.c.b16 %v4727, %v4726
        %v4737 = vpack.c.b16 %v4729, %v4728
        %4746 = vmatprep.subr.bf16.mxu0 0
        %4747 = vmatpush1.bf16.msra.mxu0 %v4730
        %4748 = vmatprep.subr.bf16.mxu0 0
        %4749 = vmatpush1.bf16.msra.mxu0 %v4731
        %4750 = vmatprep.subr.bf16.mxu0 0
        %4751 = vmatpush1.bf16.msra.mxu0 %v4732
        %4752 = vmatprep.subr.bf16.mxu0 0
        %4753 = vmatpush1.bf16.msra.mxu0 %v4733
        %4754 = vmatprep.subr.bf16.mxu0 0
        %4755 = vmatpush1.bf16.msra.mxu0 %v4734
        %4756 = vmatprep.subr.bf16.mxu0 0
        %4757 = vmatpush1.bf16.msra.mxu0 %v4735
        %4758 = vmatprep.subr.bf16.mxu0 0
        %4759 = vmatpush1.bf16.msra.mxu0 %v4736
        %4760 = vmatprep.subr.bf16.mxu0 0
        %4761 = vmatpush1.bf16.msra.mxu0 %v4737
        %4762 = vmatprep.subr.bf16.mxu0 0
        %4763 = vmatpush1.bf16.msra.mxu0 0
        %4764 = vmatprep.subr.bf16.mxu0 0
        %4765 = vmatpush1.bf16.msra.mxu0 0
        %4766 = vmatprep.subr.bf16.mxu0 0
        %4767 = vmatpush1.bf16.msra.mxu0 0
        %4768 = vmatprep.subr.bf16.mxu0 0
        %4769 = vmatpush1.bf16.msra.mxu0 0
        %4770 = vmatprep.subr.bf16.mxu0 0
        %4771 = vmatpush1.bf16.msra.mxu0 0
        %4772 = vmatprep.subr.bf16.mxu0 0
        %4773 = vmatpush1.bf16.msra.mxu0 0
        %4774 = vmatprep.subr.bf16.mxu0 0
        %4775 = vmatpush1.bf16.msra.mxu0 0
        %4776 = vmatprep.subr.bf16.mxu0 0
        %4777 = vmatpush1.bf16.msra.mxu0 0
        %4778 = vmatprep.mubr.bf16.mxu0 0
        %4779 = vmatmul.mubr.bf16.gmra.mrb[0].mxu0 %v4693
        %v4780 = vpop.f32.mrb[0].mxu0
        %v4781 = vadd.f32 %v4697, %v4780
        %v4782 = vpop.f32.mrb[0].mxu0
        %v4783 = vpop.f32.mrb[0].mxu0
        %v4784 = vadd.f32 %v4697, %v4783
        %v4785 = vpop.f32.mrb[0].mxu0
        %4786 = vdwg.mxu0
        %v4787 = vadd.f32 %v4578, %v4781
        %v4788 = vadd.f32 %v4579, %v4784
        %v4789 = vld [vmem:[%s1 + $0x1d] sm:$0x1]
        %v4790 = vld [vmem:[%s1 + $0x1e] sm:$0x1]
        %v4791 = vld [vmem:[%s1 + $0x1f] sm:$0x1]
        %v4792 = vld [vmem:[%s1 + $0x20] sm:$0x1]
        %v4793 = vld [vmem:[%s1 + $0x21] sm:$0x1]
        %v4794 = vld [vmem:[%s1 + $0x22] sm:$0x1]
        %v4795 = vld [vmem:[%s1 + $0x23] sm:$0x1]
        %v4796 = vld [vmem:[%s1 + $0x24] sm:$0x1]
        %s4797 = scalar_lea.vmem %s8, 32
        %v4798 = vld [vmem:[%s4797] sm:$0xff]
        %v4799 = vld [vmem:[%s4797 + $0x8] sm:$0xff]
        %v4800 = vld [vmem:[%s4797 + $0x10] sm:$0xff]
        %v4801 = vld [vmem:[%s4797 + $0x18] sm:$0xff]
        %s4802 = scalar_lea.vmem %s9, 64
        %v4803 = vld [vmem:[%s4802] sm:$0xf]
        %v4804 = vld [vmem:[%s4802 + $0x4] sm:$0xf]
        %v4805 = vld [vmem:[%s4802 + $0x8] sm:$0xf]
        %v4806 = vld [vmem:[%s4802 + $0xc] sm:$0xf]
        %v4807 = vld [vmem:[%s4802 + $0x10] sm:$0xf]
        %v4808 = vld [vmem:[%s4802 + $0x14] sm:$0xf]
        %v4809 = vld [vmem:[%s4802 + $0x18] sm:$0xf]
        %v4810 = vld [vmem:[%s4802 + $0x1c] sm:$0xf]
        %v4811 = vld [vmem:[%s4802 + $0x20] sm:$0xf]
        %v4812 = vld [vmem:[%s4802 + $0x24] sm:$0xf]
        %v4813 = vld [vmem:[%s4802 + $0x28] sm:$0xf]
        %v4814 = vld [vmem:[%s4802 + $0x2c] sm:$0xf]
        %v4815 = vld [vmem:[%s4802 + $0x30] sm:$0xf]
        %v4816 = vld [vmem:[%s4802 + $0x34] sm:$0xf]
        %v4817 = vld [vmem:[%s4802 + $0x38] sm:$0xf]
        %v4818 = vld [vmem:[%s4802 + $0x3c] sm:$0xf]
        %v4819 = vsel %vm3740, %v4787, 0.0
        %4820 = vadd.xlane.f32.xlu0 %v4819
        %v4821 = vpop.xlane.xlu0 %4820
        %v4822 = vsel %vm3740, %v4788, 0.0
        %4823 = vadd.xlane.f32.xlu0 %v4822
        %v4824 = vpop.xlane.xlu0 %4823
        %v4825 = vmul.f32 %v4821, %v3897
        %v4826 = vmul.f32 %v4824, %v3897
        %v4827 = vsub.f32 %v4787, %v4825
        %v4828 = vsub.f32 %v4788, %v4826
        %v4829 = vmul.f32 %v4827, %v4827
        %v4830 = vmul.f32 %v4828, %v4828
        %v4831 = vsel %vm3740, %v4829, 0.0
        %4832 = vadd.xlane.f32.xlu0 %v4831
        %v4833 = vpop.xlane.xlu0 %4832
        %v4834 = vsel %vm3740, %v4830, 0.0
        %4835 = vadd.xlane.f32.xlu0 %v4834
        %v4836 = vpop.xlane.xlu0 %4835
        %v4837 = vmul.f32 %v4833, %v3897
        %v4838 = vmul.f32 %v4836, %v3897
        %v4839 = vadd.f32 %v4837, 1e-05
        %v4840 = vadd.f32 %v4838, 1e-05
        %v4841 = vrsqrt.pop %v4839
        %v4842 = vrsqrt.pop %v4840
        %v4843 = vmul.f32 %v4827, %v4841
        %v4844 = vmul.f32 %v4828, %v4842
        %v4845 = vlaneseq
        %v4846 = vshrl.u32 %v4845, 7
        %v4847 = vsub.s32 0, %v4846
        %v4848 = vrot.slane %v4789, %v4847
        %v4849 = vmul.f32 %v4843, %v4848
        %v4850 = vmul.f32 %v4844, %v4848
        %v4851 = vlaneseq
        %v4852 = vshrl.u32 %v4851, 7
        %v4853 = vsub.s32 0, %v4852
        %v4854 = vrot.slane %v4790, %v4853
        %v4855 = vadd.f32 %v4849, %v4854
        %v4856 = vadd.f32 %v4850, %v4854
        %v4857 = vpack.c.bf16 %v4856, %v4855
        %v4858 = vlaneseq
        %v4859 = vshrl.u32 %v4858, 7
        %v4860 = vsub.s32 0, %v4859
        %v4861 = vrot.slane %v4791, %v4860
        %v4866 = vunpack.c.l.b16 %v4798
        %v4867 = vunpack.c.l.b16 %v4799
        %v4868 = vunpack.c.l.b16 %v4800
        %v4869 = vunpack.c.l.b16 %v4801
        %v4870 = vpack.c.b16 %v4867, %v4866
        %v4871 = vpack.c.b16 %v4869, %v4868
        %v4875 = vsel %vm3740, %v4857, 0
        %4877 = vmatprep.subr.bf16.mxu0 0
        %4878 = vmatpush1.bf16.msra.mxu0 %v4870
        %4879 = vmatprep.subr.bf16.mxu0 0
        %4880 = vmatpush1.bf16.msra.mxu0 %v4871
        %4881 = vmatprep.subr.bf16.mxu0 0
        %4882 = vmatpush1.bf16.msra.mxu0 0
        %4883 = vmatprep.subr.bf16.mxu0 0
        %4884 = vmatpush1.bf16.msra.mxu0 0
        %4885 = vmatprep.subr.bf16.mxu0 0
        %4886 = vmatpush1.bf16.msra.mxu0 0
        %4887 = vmatprep.subr.bf16.mxu0 0
        %4888 = vmatpush1.bf16.msra.mxu0 0
        %4889 = vmatprep.subr.bf16.mxu0 0
        %4890 = vmatpush1.bf16.msra.mxu0 0
        %4891 = vmatprep.subr.bf16.mxu0 0
        %4892 = vmatpush1.bf16.msra.mxu0 0
        %4893 = vmatprep.subr.bf16.mxu0 0
        %4894 = vmatpush1.bf16.msra.mxu0 0
        %4895 = vmatprep.subr.bf16.mxu0 0
        %4896 = vmatpush1.bf16.msra.mxu0 0
        %4897 = vmatprep.subr.bf16.mxu0 0
        %4898 = vmatpush1.bf16.msra.mxu0 0
        %4899 = vmatprep.subr.bf16.mxu0 0
        %4900 = vmatpush1.bf16.msra.mxu0 0
        %4901 = vmatprep.subr.bf16.mxu0 0
        %4902 = vmatpush1.bf16.msra.mxu0 0
        %4903 = vmatprep.subr.bf16.mxu0 0
        %4904 = vmatpush1.bf16.msra.mxu0 0
        %4905 = vmatprep.subr.bf16.mxu0 0
        %4906 = vmatpush1.bf16.msra.mxu0 0
        %4907 = vmatprep.subr.bf16.mxu0 0
        %4908 = vmatpush1.bf16.msra.mxu0 0
        %4909 = vmatprep.mubr.bf16.mxu0 0
        %4910 = vmatmul.mubr.bf16.gmra.mrb[0].mxu0 %v4875
        %v4911 = vpop.f32.mrb[0].mxu0
        %v4912 = vadd.f32 %v4861, %v4911
        %v4913 = vpop.f32.mrb[0].mxu0
        %v4914 = vpop.f32.mrb[0].mxu0
        %v4915 = vadd.f32 %v4861, %v4914
        %v4916 = vpop.f32.mrb[0].mxu0
        %4917 = vdwg.mxu0
        %v4918 = vmul.f32 %v4912, 0.35355338
        %v4919 = vmul.f32 %v4915, 0.35355338
        %v4920 = vpack.c.bf16 %v4919, %v4918
        %v4921 = vpack.c.bf16 %v4915, %v4912
        %s4922 = scalar_lea.vmem %s10, 64
        %v4923 = vld [vmem:[%s4922] sm:$0xff]
        %v4924 = vld [vmem:[%s4922 + $0x8] sm:$0xff]
        %4926 = vrot.lane.b32.xlu0 %v4921, 96
        %v4927 = vpop.permute.xlu0 %4926
        %v4929 = vsel %vm989, %v4920, 0
        %v4932 = vsel %vm989, %v4927, 0
        %4934 = vmatprep.subr.bf16.mxu0 0
        %4935 = vmatpush1.bf16.xpose.msra.mxu0 %v4932
        %4936 = vmatprep.subr.bf16.mxu0 0
        %4937 = vmatpush1.bf16.xpose.msra.mxu0 0
        %4938 = vmatprep.subr.bf16.mxu0 0
        %4939 = vmatpush1.bf16.xpose.msra.mxu0 0
        %4940 = vmatprep.subr.bf16.mxu0 0
        %4941 = vmatpush1.bf16.xpose.msra.mxu0 0
        %4942 = vmatprep.subr.bf16.mxu0 0
        %4943 = vmatpush1.bf16.xpose.msra.mxu0 0
        %4944 = vmatprep.subr.bf16.mxu0 0
        %4945 = vmatpush1.bf16.xpose.msra.mxu0 0
        %4946 = vmatprep.subr.bf16.mxu0 0
        %4947 = vmatpush1.bf16.xpose.msra.mxu0 0
        %4948 = vmatprep.subr.bf16.mxu0 0
        %4949 = vmatpush1.bf16.xpose.msra.mxu0 0
        %4950 = vmatprep.subr.bf16.mxu0 0
        %4951 = vmatpush1.bf16.xpose.msra.mxu0 0
        %4952 = vmatprep.subr.bf16.mxu0 0
        %4953 = vmatpush1.bf16.xpose.msra.mxu0 0
        %4954 = vmatprep.subr.bf16.mxu0 0
        %4955 = vmatpush1.bf16.xpose.msra.mxu0 0
        %4956 = vmatprep.subr.bf16.mxu0 0
        %4957 = vmatpush1.bf16.xpose.msra.mxu0 0
        %4958 = vmatprep.subr.bf16.mxu0 0
        %4959 = vmatpush1.bf16.xpose.msra.mxu0 0
        %4960 = vmatprep.subr.bf16.mxu0 0
        %4961 = vmatpush1.bf16.xpose.msra.mxu0 0
        %4962 = vmatprep.subr.bf16.mxu0 0
        %4963 = vmatpush1.bf16.xpose.msra.mxu0 0
        %4964 = vmatprep.subr.bf16.mxu0 0
        %4965 = vmatpush1.bf16.xpose.msra.mxu0 0
        %4966 = vmatprep.mubr.bf16.mxu0 0
        %4967 = vmatmul.mubr.bf16.gmra.mrb[0].mxu0 %v4929
        %v4968 = vpop.f32.mrb[0].mxu0
        %v4969 = vadd.f32 %v4923, %v4968
        %v4970 = vpop.f32.mrb[0].mxu0
        %v4971 = vpop.f32.mrb[0].mxu0
        %v4972 = vadd.f32 %v4924, %v4971
        %v4973 = vpop.f32.mrb[0].mxu0
        %4974 = vdwg.mxu0
        %v4975 = vsel %vm586, %v4969, -inf
        %4976 = vmax.xlane.f32.xlu0 %v4975
        %v4977 = vpop.xlane.xlu0 %4976
        %v4978 = vsel %vm586, %v4972, -inf
        %4979 = vmax.xlane.f32.xlu0 %v4978
        %v4980 = vpop.xlane.xlu0 %4979
        %v4981 = vsub.f32 %v4969, %v4977
        %v4982 = vsub.f32 %v4972, %v4980
        %v4983 = vmul.f32 %v4981, 1.442695
        %v4984 = vpow.pop %v4983
        %v4985 = vmul.f32 %v4982, 1.442695
        %v4986 = vpow.pop %v4985
        %v4987 = vsel %vm586, %v4984, 0.0
        %4988 = vadd.xlane.f32.xlu0 %v4987
        %v4989 = vpop.xlane.xlu0 %4988
        %v4990 = vsel %vm586, %v4986, 0.0
        %4991 = vadd.xlane.f32.xlu0 %v4990
        %v4992 = vpop.xlane.xlu0 %4991
        %v4993 = vrcp.pop %v4989
        %v4994 = vrcp.pop %v4992
        %v4995 = vmul.f32 %v4984, %v4993
        %v4996 = vmul.f32 %v4986, %v4994
        %v4997 = vpack.c.bf16 %v4996, %v4995
        %4998 = vrot.lane.b32.xlu0 %v4921, 64
        %v4999 = vpop.permute.xlu0 %4998
        %v5002 = vsel %vm586, %v4997, 0
        %5004 = vmatprep.subr.bf16.mxu0 0
        %5005 = vmatpush1.bf16.msra.mxu0 %v4999
        %5006 = vmatprep.subr.bf16.mxu0 0
        %5007 = vmatpush1.bf16.msra.mxu0 0
        %5008 = vmatprep.subr.bf16.mxu0 0
        %5009 = vmatpush1.bf16.msra.mxu0 0
        %5010 = vmatprep.subr.bf16.mxu0 0
        %5011 = vmatpush1.bf16.msra.mxu0 0
        %5012 = vmatprep.subr.bf16.mxu0 0
        %5013 = vmatpush1.bf16.msra.mxu0 0
        %5014 = vmatprep.subr.bf16.mxu0 0
        %5015 = vmatpush1.bf16.msra.mxu0 0
        %5016 = vmatprep.subr.bf16.mxu0 0
        %5017 = vmatpush1.bf16.msra.mxu0 0
        %5018 = vmatprep.subr.bf16.mxu0 0
        %5019 = vmatpush1.bf16.msra.mxu0 0
        %5020 = vmatprep.subr.bf16.mxu0 0
        %5021 = vmatpush1.bf16.msra.mxu0 0
        %5022 = vmatprep.subr.bf16.mxu0 0
        %5023 = vmatpush1.bf16.msra.mxu0 0
        %5024 = vmatprep.subr.bf16.mxu0 0
        %5025 = vmatpush1.bf16.msra.mxu0 0
        %5026 = vmatprep.subr.bf16.mxu0 0
        %5027 = vmatpush1.bf16.msra.mxu0 0
        %5028 = vmatprep.subr.bf16.mxu0 0
        %5029 = vmatpush1.bf16.msra.mxu0 0
        %5030 = vmatprep.subr.bf16.mxu0 0
        %5031 = vmatpush1.bf16.msra.mxu0 0
        %5032 = vmatprep.subr.bf16.mxu0 0
        %5033 = vmatpush1.bf16.msra.mxu0 0
        %5034 = vmatprep.subr.bf16.mxu0 0
        %5035 = vmatpush1.bf16.msra.mxu0 0
        %5036 = vmatprep.mubr.bf16.mxu0 0
        %5037 = vmatmul.mubr.bf16.gmra.mrb[0].mxu0 %v5002
        %v5038 = vpop.f32.mrb[0].mxu0
        %v5039 = vadd.f32 0.0, %v5038
        %v5040 = vpop.f32.mrb[0].mxu0
        %v5041 = vpop.f32.mrb[0].mxu0
        %v5042 = vadd.f32 0.0, %v5041
        %v5043 = vpop.f32.mrb[0].mxu0
        %5044 = vdwg.mxu0
        %s5045 = scalar_lea.vmem %s10, 80
        %v5046 = vld [vmem:[%s5045] sm:$0xff]
        %v5047 = vld [vmem:[%s5045 + $0x8] sm:$0xff]
        %5049 = vrot.lane.b32.xlu0 %v4920, 120
        %v5050 = vpop.permute.xlu0 %5049
        %5051 = vrot.lane.b32.xlu0 %v4921, 88
        %v5052 = vpop.permute.xlu0 %5051
        %v5054 = vsel %vm989, %v5050, 0
        %v5057 = vsel %vm989, %v5052, 0
        %5059 = vmatprep.subr.bf16.mxu0 0
        %5060 = vmatpush1.bf16.xpose.msra.mxu0 %v5057
        %5061 = vmatprep.subr.bf16.mxu0 0
        %5062 = vmatpush1.bf16.xpose.msra.mxu0 0
        %5063 = vmatprep.subr.bf16.mxu0 0
        %5064 = vmatpush1.bf16.xpose.msra.mxu0 0
        %5065 = vmatprep.subr.bf16.mxu0 0
        %5066 = vmatpush1.bf16.xpose.msra.mxu0 0
        %5067 = vmatprep.subr.bf16.mxu0 0
        %5068 = vmatpush1.bf16.xpose.msra.mxu0 0
        %5069 = vmatprep.subr.bf16.mxu0 0
        %5070 = vmatpush1.bf16.xpose.msra.mxu0 0
        %5071 = vmatprep.subr.bf16.mxu0 0
        %5072 = vmatpush1.bf16.xpose.msra.mxu0 0
        %5073 = vmatprep.subr.bf16.mxu0 0
        %5074 = vmatpush1.bf16.xpose.msra.mxu0 0
        %5075 = vmatprep.subr.bf16.mxu0 0
        %5076 = vmatpush1.bf16.xpose.msra.mxu0 0
        %5077 = vmatprep.subr.bf16.mxu0 0
        %5078 = vmatpush1.bf16.xpose.msra.mxu0 0
        %5079 = vmatprep.subr.bf16.mxu0 0
        %5080 = vmatpush1.bf16.xpose.msra.mxu0 0
        %5081 = vmatprep.subr.bf16.mxu0 0
        %5082 = vmatpush1.bf16.xpose.msra.mxu0 0
        %5083 = vmatprep.subr.bf16.mxu0 0
        %5084 = vmatpush1.bf16.xpose.msra.mxu0 0
        %5085 = vmatprep.subr.bf16.mxu0 0
        %5086 = vmatpush1.bf16.xpose.msra.mxu0 0
        %5087 = vmatprep.subr.bf16.mxu0 0
        %5088 = vmatpush1.bf16.xpose.msra.mxu0 0
        %5089 = vmatprep.subr.bf16.mxu0 0
        %5090 = vmatpush1.bf16.xpose.msra.mxu0 0
        %5091 = vmatprep.mubr.bf16.mxu0 0
        %5092 = vmatmul.mubr.bf16.gmra.mrb[0].mxu0 %v5054
        %v5093 = vpop.f32.mrb[0].mxu0
        %v5094 = vadd.f32 %v5046, %v5093
        %v5095 = vpop.f32.mrb[0].mxu0
        %v5096 = vpop.f32.mrb[0].mxu0
        %v5097 = vadd.f32 %v5047, %v5096
        %v5098 = vpop.f32.mrb[0].mxu0
        %5099 = vdwg.mxu0
        %v5100 = vsel %vm586, %v5094, -inf
        %5101 = vmax.xlane.f32.xlu0 %v5100
        %v5102 = vpop.xlane.xlu0 %5101
        %v5103 = vsel %vm586, %v5097, -inf
        %5104 = vmax.xlane.f32.xlu0 %v5103
        %v5105 = vpop.xlane.xlu0 %5104
        %v5106 = vsub.f32 %v5094, %v5102
        %v5107 = vsub.f32 %v5097, %v5105
        %v5108 = vmul.f32 %v5106, 1.442695
        %v5109 = vpow.pop %v5108
        %v5110 = vmul.f32 %v5107, 1.442695
        %v5111 = vpow.pop %v5110
        %v5112 = vsel %vm586, %v5109, 0.0
        %5113 = vadd.xlane.f32.xlu0 %v5112
        %v5114 = vpop.xlane.xlu0 %5113
        %v5115 = vsel %vm586, %v5111, 0.0
        %5116 = vadd.xlane.f32.xlu0 %v5115
        %v5117 = vpop.xlane.xlu0 %5116
        %v5118 = vrcp.pop %v5114
        %v5119 = vrcp.pop %v5117
        %v5120 = vmul.f32 %v5109, %v5118
        %v5121 = vmul.f32 %v5111, %v5119
        %v5122 = vpack.c.bf16 %v5121, %v5120
        %5123 = vrot.lane.b32.xlu0 %v4921, 56
        %v5124 = vpop.permute.xlu0 %5123
        %v5127 = vsel %vm586, %v5122, 0
        %5129 = vmatprep.subr.bf16.mxu0 0
        %5130 = vmatpush1.bf16.msra.mxu0 %v5124
        %5131 = vmatprep.subr.bf16.mxu0 0
        %5132 = vmatpush1.bf16.msra.mxu0 0
        %5133 = vmatprep.subr.bf16.mxu0 0
        %5134 = vmatpush1.bf16.msra.mxu0 0
        %5135 = vmatprep.subr.bf16.mxu0 0
        %5136 = vmatpush1.bf16.msra.mxu0 0
        %5137 = vmatprep.subr.bf16.mxu0 0
        %5138 = vmatpush1.bf16.msra.mxu0 0
        %5139 = vmatprep.subr.bf16.mxu0 0
        %5140 = vmatpush1.bf16.msra.mxu0 0
        %5141 = vmatprep.subr.bf16.mxu0 0
        %5142 = vmatpush1.bf16.msra.mxu0 0
        %5143 = vmatprep.subr.bf16.mxu0 0
        %5144 = vmatpush1.bf16.msra.mxu0 0
        %5145 = vmatprep.subr.bf16.mxu0 0
        %5146 = vmatpush1.bf16.msra.mxu0 0
        %5147 = vmatprep.subr.bf16.mxu0 0
        %5148 = vmatpush1.bf16.msra.mxu0 0
        %5149 = vmatprep.subr.bf16.mxu0 0
        %5150 = vmatpush1.bf16.msra.mxu0 0
        %5151 = vmatprep.subr.bf16.mxu0 0
        %5152 = vmatpush1.bf16.msra.mxu0 0
        %5153 = vmatprep.subr.bf16.mxu0 0
        %5154 = vmatpush1.bf16.msra.mxu0 0
        %5155 = vmatprep.subr.bf16.mxu0 0
        %5156 = vmatpush1.bf16.msra.mxu0 0
        %5157 = vmatprep.subr.bf16.mxu0 0
        %5158 = vmatpush1.bf16.msra.mxu0 0
        %5159 = vmatprep.subr.bf16.mxu0 0
        %5160 = vmatpush1.bf16.msra.mxu0 0
        %5161 = vmatprep.mubr.bf16.mxu0 0
        %5162 = vmatmul.mubr.bf16.gmra.mrb[0].mxu0 %v5127
        %v5163 = vpop.f32.mrb[0].mxu0
        %v5164 = vadd.f32 0.0, %v5163
        %v5165 = vpop.f32.mrb[0].mxu0
        %v5166 = vpop.f32.mrb[0].mxu0
        %v5167 = vadd.f32 0.0, %v5166
        %v5168 = vpop.f32.mrb[0].mxu0
        %5169 = vdwg.mxu0
        %s5170 = scalar_lea.vmem %s10, 96
        %v5171 = vld [vmem:[%s5170] sm:$0xff]
        %v5172 = vld [vmem:[%s5170 + $0x8] sm:$0xff]
        %5173 = vrot.lane.b32.xlu0 %v4920, 112
        %v5174 = vpop.permute.xlu0 %5173
        %5175 = vrot.lane.b32.xlu0 %v4921, 80
        %v5176 = vpop.permute.xlu0 %5175
        %v5178 = vsel %vm989, %v5174, 0
        %v5181 = vsel %vm989, %v5176, 0
        %5183 = vmatprep.subr.bf16.mxu0 0
        %5184 = vmatpush1.bf16.xpose.msra.mxu0 %v5181
        %5185 = vmatprep.subr.bf16.mxu0 0
        %5186 = vmatpush1.bf16.xpose.msra.mxu0 0
        %5187 = vmatprep.subr.bf16.mxu0 0
        %5188 = vmatpush1.bf16.xpose.msra.mxu0 0
        %5189 = vmatprep.subr.bf16.mxu0 0
        %5190 = vmatpush1.bf16.xpose.msra.mxu0 0
        %5191 = vmatprep.subr.bf16.mxu0 0
        %5192 = vmatpush1.bf16.xpose.msra.mxu0 0
        %5193 = vmatprep.subr.bf16.mxu0 0
        %5194 = vmatpush1.bf16.xpose.msra.mxu0 0
        %5195 = vmatprep.subr.bf16.mxu0 0
        %5196 = vmatpush1.bf16.xpose.msra.mxu0 0
        %5197 = vmatprep.subr.bf16.mxu0 0
        %5198 = vmatpush1.bf16.xpose.msra.mxu0 0
        %5199 = vmatprep.subr.bf16.mxu0 0
        %5200 = vmatpush1.bf16.xpose.msra.mxu0 0
        %5201 = vmatprep.subr.bf16.mxu0 0
        %5202 = vmatpush1.bf16.xpose.msra.mxu0 0
        %5203 = vmatprep.subr.bf16.mxu0 0
        %5204 = vmatpush1.bf16.xpose.msra.mxu0 0
        %5205 = vmatprep.subr.bf16.mxu0 0
        %5206 = vmatpush1.bf16.xpose.msra.mxu0 0
        %5207 = vmatprep.subr.bf16.mxu0 0
        %5208 = vmatpush1.bf16.xpose.msra.mxu0 0
        %5209 = vmatprep.subr.bf16.mxu0 0
        %5210 = vmatpush1.bf16.xpose.msra.mxu0 0
        %5211 = vmatprep.subr.bf16.mxu0 0
        %5212 = vmatpush1.bf16.xpose.msra.mxu0 0
        %5213 = vmatprep.subr.bf16.mxu0 0
        %5214 = vmatpush1.bf16.xpose.msra.mxu0 0
        %5215 = vmatprep.mubr.bf16.mxu0 0
        %5216 = vmatmul.mubr.bf16.gmra.mrb[0].mxu0 %v5178
        %v5217 = vpop.f32.mrb[0].mxu0
        %v5218 = vadd.f32 %v5171, %v5217
        %v5219 = vpop.f32.mrb[0].mxu0
        %v5220 = vpop.f32.mrb[0].mxu0
        %v5221 = vadd.f32 %v5172, %v5220
        %v5222 = vpop.f32.mrb[0].mxu0
        %5223 = vdwg.mxu0
        %v5224 = vsel %vm586, %v5218, -inf
        %5225 = vmax.xlane.f32.xlu0 %v5224
        %v5226 = vpop.xlane.xlu0 %5225
        %v5227 = vsel %vm586, %v5221, -inf
        %5228 = vmax.xlane.f32.xlu0 %v5227
        %v5229 = vpop.xlane.xlu0 %5228
        %v5230 = vsub.f32 %v5218, %v5226
        %v5231 = vsub.f32 %v5221, %v5229
        %v5232 = vmul.f32 %v5230, 1.442695
        %v5233 = vpow.pop %v5232
        %v5234 = vmul.f32 %v5231, 1.442695
        %v5235 = vpow.pop %v5234
        %v5236 = vsel %vm586, %v5233, 0.0
        %5237 = vadd.xlane.f32.xlu0 %v5236
        %v5238 = vpop.xlane.xlu0 %5237
        %v5239 = vsel %vm586, %v5235, 0.0
        %5240 = vadd.xlane.f32.xlu0 %v5239
        %v5241 = vpop.xlane.xlu0 %5240
        %v5242 = vrcp.pop %v5238
        %v5243 = vrcp.pop %v5241
        %v5244 = vmul.f32 %v5233, %v5242
        %v5245 = vmul.f32 %v5235, %v5243
        %v5246 = vpack.c.bf16 %v5245, %v5244
        %5247 = vrot.lane.b32.xlu0 %v4921, 48
        %v5248 = vpop.permute.xlu0 %5247
        %v5251 = vsel %vm586, %v5246, 0
        %5253 = vmatprep.subr.bf16.mxu0 0
        %5254 = vmatpush1.bf16.msra.mxu0 %v5248
        %5255 = vmatprep.subr.bf16.mxu0 0
        %5256 = vmatpush1.bf16.msra.mxu0 0
        %5257 = vmatprep.subr.bf16.mxu0 0
        %5258 = vmatpush1.bf16.msra.mxu0 0
        %5259 = vmatprep.subr.bf16.mxu0 0
        %5260 = vmatpush1.bf16.msra.mxu0 0
        %5261 = vmatprep.subr.bf16.mxu0 0
        %5262 = vmatpush1.bf16.msra.mxu0 0
        %5263 = vmatprep.subr.bf16.mxu0 0
        %5264 = vmatpush1.bf16.msra.mxu0 0
        %5265 = vmatprep.subr.bf16.mxu0 0
        %5266 = vmatpush1.bf16.msra.mxu0 0
        %5267 = vmatprep.subr.bf16.mxu0 0
        %5268 = vmatpush1.bf16.msra.mxu0 0
        %5269 = vmatprep.subr.bf16.mxu0 0
        %5270 = vmatpush1.bf16.msra.mxu0 0
        %5271 = vmatprep.subr.bf16.mxu0 0
        %5272 = vmatpush1.bf16.msra.mxu0 0
        %5273 = vmatprep.subr.bf16.mxu0 0
        %5274 = vmatpush1.bf16.msra.mxu0 0
        %5275 = vmatprep.subr.bf16.mxu0 0
        %5276 = vmatpush1.bf16.msra.mxu0 0
        %5277 = vmatprep.subr.bf16.mxu0 0
        %5278 = vmatpush1.bf16.msra.mxu0 0
        %5279 = vmatprep.subr.bf16.mxu0 0
        %5280 = vmatpush1.bf16.msra.mxu0 0
        %5281 = vmatprep.subr.bf16.mxu0 0
        %5282 = vmatpush1.bf16.msra.mxu0 0
        %5283 = vmatprep.subr.bf16.mxu0 0
        %5284 = vmatpush1.bf16.msra.mxu0 0
        %5285 = vmatprep.mubr.bf16.mxu0 0
        %5286 = vmatmul.mubr.bf16.gmra.mrb[0].mxu0 %v5251
        %v5287 = vpop.f32.mrb[0].mxu0
        %v5288 = vadd.f32 0.0, %v5287
        %v5289 = vpop.f32.mrb[0].mxu0
        %v5290 = vpop.f32.mrb[0].mxu0
        %v5291 = vadd.f32 0.0, %v5290
        %v5292 = vpop.f32.mrb[0].mxu0
        %5293 = vdwg.mxu0
        %s5294 = scalar_lea.vmem %s10, 112
        %v5295 = vld [vmem:[%s5294] sm:$0xff]
        %v5296 = vld [vmem:[%s5294 + $0x8] sm:$0xff]
        %5297 = vrot.lane.b32.xlu0 %v4920, 104
        %v5298 = vpop.permute.xlu0 %5297
        %5299 = vrot.lane.b32.xlu0 %v4921, 72
        %v5300 = vpop.permute.xlu0 %5299
        %v5302 = vsel %vm989, %v5298, 0
        %v5305 = vsel %vm989, %v5300, 0
        %5307 = vmatprep.subr.bf16.mxu0 0
        %5308 = vmatpush1.bf16.xpose.msra.mxu0 %v5305
        %5309 = vmatprep.subr.bf16.mxu0 0
        %5310 = vmatpush1.bf16.xpose.msra.mxu0 0
        %5311 = vmatprep.subr.bf16.mxu0 0
        %5312 = vmatpush1.bf16.xpose.msra.mxu0 0
        %5313 = vmatprep.subr.bf16.mxu0 0
        %5314 = vmatpush1.bf16.xpose.msra.mxu0 0
        %5315 = vmatprep.subr.bf16.mxu0 0
        %5316 = vmatpush1.bf16.xpose.msra.mxu0 0
        %5317 = vmatprep.subr.bf16.mxu0 0
        %5318 = vmatpush1.bf16.xpose.msra.mxu0 0
        %5319 = vmatprep.subr.bf16.mxu0 0
        %5320 = vmatpush1.bf16.xpose.msra.mxu0 0
        %5321 = vmatprep.subr.bf16.mxu0 0
        %5322 = vmatpush1.bf16.xpose.msra.mxu0 0
        %5323 = vmatprep.subr.bf16.mxu0 0
        %5324 = vmatpush1.bf16.xpose.msra.mxu0 0
        %5325 = vmatprep.subr.bf16.mxu0 0
        %5326 = vmatpush1.bf16.xpose.msra.mxu0 0
        %5327 = vmatprep.subr.bf16.mxu0 0
        %5328 = vmatpush1.bf16.xpose.msra.mxu0 0
        %5329 = vmatprep.subr.bf16.mxu0 0
        %5330 = vmatpush1.bf16.xpose.msra.mxu0 0
        %5331 = vmatprep.subr.bf16.mxu0 0
        %5332 = vmatpush1.bf16.xpose.msra.mxu0 0
        %5333 = vmatprep.subr.bf16.mxu0 0
        %5334 = vmatpush1.bf16.xpose.msra.mxu0 0
        %5335 = vmatprep.subr.bf16.mxu0 0
        %5336 = vmatpush1.bf16.xpose.msra.mxu0 0
        %5337 = vmatprep.subr.bf16.mxu0 0
        %5338 = vmatpush1.bf16.xpose.msra.mxu0 0
        %5339 = vmatprep.mubr.bf16.mxu0 0
        %5340 = vmatmul.mubr.bf16.gmra.mrb[0].mxu0 %v5302
        %v5341 = vpop.f32.mrb[0].mxu0
        %v5342 = vadd.f32 %v5295, %v5341
        %v5343 = vpop.f32.mrb[0].mxu0
        %v5344 = vpop.f32.mrb[0].mxu0
        %v5345 = vadd.f32 %v5296, %v5344
        %v5346 = vpop.f32.mrb[0].mxu0
        %5347 = vdwg.mxu0
        %v5348 = vsel %vm586, %v5342, -inf
        %5349 = vmax.xlane.f32.xlu0 %v5348
        %v5350 = vpop.xlane.xlu0 %5349
        %v5351 = vsel %vm586, %v5345, -inf
        %5352 = vmax.xlane.f32.xlu0 %v5351
        %v5353 = vpop.xlane.xlu0 %5352
        %v5354 = vsub.f32 %v5342, %v5350
        %v5355 = vsub.f32 %v5345, %v5353
        %v5356 = vmul.f32 %v5354, 1.442695
        %v5357 = vpow.pop %v5356
        %v5358 = vmul.f32 %v5355, 1.442695
        %v5359 = vpow.pop %v5358
        %v5360 = vsel %vm586, %v5357, 0.0
        %5361 = vadd.xlane.f32.xlu0 %v5360
        %v5362 = vpop.xlane.xlu0 %5361
        %v5363 = vsel %vm586, %v5359, 0.0
        %5364 = vadd.xlane.f32.xlu0 %v5363
        %v5365 = vpop.xlane.xlu0 %5364
        %v5366 = vrcp.pop %v5362
        %v5367 = vrcp.pop %v5365
        %v5368 = vmul.f32 %v5357, %v5366
        %v5369 = vmul.f32 %v5359, %v5367
        %v5370 = vpack.c.bf16 %v5369, %v5368
        %5371 = vrot.lane.b32.xlu0 %v4921, 40
        %v5372 = vpop.permute.xlu0 %5371
        %v5375 = vsel %vm586, %v5370, 0
        %5377 = vmatprep.subr.bf16.mxu0 0
        %5378 = vmatpush1.bf16.msra.mxu0 %v5372
        %5379 = vmatprep.subr.bf16.mxu0 0
        %5380 = vmatpush1.bf16.msra.mxu0 0
        %5381 = vmatprep.subr.bf16.mxu0 0
        %5382 = vmatpush1.bf16.msra.mxu0 0
        %5383 = vmatprep.subr.bf16.mxu0 0
        %5384 = vmatpush1.bf16.msra.mxu0 0
        %5385 = vmatprep.subr.bf16.mxu0 0
        %5386 = vmatpush1.bf16.msra.mxu0 0
        %5387 = vmatprep.subr.bf16.mxu0 0
        %5388 = vmatpush1.bf16.msra.mxu0 0
        %5389 = vmatprep.subr.bf16.mxu0 0
        %5390 = vmatpush1.bf16.msra.mxu0 0
        %5391 = vmatprep.subr.bf16.mxu0 0
        %5392 = vmatpush1.bf16.msra.mxu0 0
        %5393 = vmatprep.subr.bf16.mxu0 0
        %5394 = vmatpush1.bf16.msra.mxu0 0
        %5395 = vmatprep.subr.bf16.mxu0 0
        %5396 = vmatpush1.bf16.msra.mxu0 0
        %5397 = vmatprep.subr.bf16.mxu0 0
        %5398 = vmatpush1.bf16.msra.mxu0 0
        %5399 = vmatprep.subr.bf16.mxu0 0
        %5400 = vmatpush1.bf16.msra.mxu0 0
        %5401 = vmatprep.subr.bf16.mxu0 0
        %5402 = vmatpush1.bf16.msra.mxu0 0
        %5403 = vmatprep.subr.bf16.mxu0 0
        %5404 = vmatpush1.bf16.msra.mxu0 0
        %5405 = vmatprep.subr.bf16.mxu0 0
        %5406 = vmatpush1.bf16.msra.mxu0 0
        %5407 = vmatprep.subr.bf16.mxu0 0
        %5408 = vmatpush1.bf16.msra.mxu0 0
        %5409 = vmatprep.mubr.bf16.mxu0 0
        %5410 = vmatmul.mubr.bf16.gmra.mrb[0].mxu0 %v5375
        %v5411 = vpop.f32.mrb[0].mxu0
        %v5412 = vadd.f32 0.0, %v5411
        %v5413 = vpop.f32.mrb[0].mxu0
        %v5414 = vpop.f32.mrb[0].mxu0
        %v5415 = vadd.f32 0.0, %v5414
        %v5416 = vpop.f32.mrb[0].mxu0
        %5417 = vdwg.mxu0
        %5420 = vrot.lane.b32.xlu0 %v5164, 8
        %v5421 = vpop.permute.xlu0 %5420
        %5422 = vrot.lane.b32.xlu0 %v5167, 8
        %v5423 = vpop.permute.xlu0 %5422
        %5428 = vrot.lane.b32.xlu0 %v5288, 16
        %v5429 = vpop.permute.xlu0 %5428
        %5430 = vrot.lane.b32.xlu0 %v5291, 16
        %v5431 = vpop.permute.xlu0 %5430
        %5436 = vrot.lane.b32.xlu0 %v5412, 24
        %v5437 = vpop.permute.xlu0 %5436
        %5438 = vrot.lane.b32.xlu0 %v5415, 24
        %v5439 = vpop.permute.xlu0 %5438
        %v5442 = vsel %vm989, %v5039, %v5421
        %v5443 = vsel %vm989, %v5042, %v5423
        %v5444 = vsel %vm586, %v5442, %v5429
        %v5445 = vsel %vm586, %v5443, %v5431
        %v5446 = vsel %vm4518, %v5444, %v5437
        %v5447 = vsel %vm4518, %v5445, %v5439
        %v5448 = vpack.c.bf16 %v5447, %v5446
        %5449 = vrot.lane.b32.xlu0 %v4870, 32
        %v5450 = vpop.permute.xlu0 %5449
        %5451 = vrot.lane.b32.xlu0 %v4871, 32
        %v5452 = vpop.permute.xlu0 %5451
        %v5456 = vsel %vm3740, %v5448, 0
        %5458 = vmatprep.subr.bf16.mxu0 0
        %5459 = vmatpush1.bf16.msra.mxu0 %v5450
        %5460 = vmatprep.subr.bf16.mxu0 0
        %5461 = vmatpush1.bf16.msra.mxu0 %v5452
        %5462 = vmatprep.subr.bf16.mxu0 0
        %5463 = vmatpush1.bf16.msra.mxu0 0
        %5464 = vmatprep.subr.bf16.mxu0 0
        %5465 = vmatpush1.bf16.msra.mxu0 0
        %5466 = vmatprep.subr.bf16.mxu0 0
        %5467 = vmatpush1.bf16.msra.mxu0 0
        %5468 = vmatprep.subr.bf16.mxu0 0
        %5469 = vmatpush1.bf16.msra.mxu0 0
        %5470 = vmatprep.subr.bf16.mxu0 0
        %5471 = vmatpush1.bf16.msra.mxu0 0
        %5472 = vmatprep.subr.bf16.mxu0 0
        %5473 = vmatpush1.bf16.msra.mxu0 0
        %5474 = vmatprep.subr.bf16.mxu0 0
        %5475 = vmatpush1.bf16.msra.mxu0 0
        %5476 = vmatprep.subr.bf16.mxu0 0
        %5477 = vmatpush1.bf16.msra.mxu0 0
        %5478 = vmatprep.subr.bf16.mxu0 0
        %5479 = vmatpush1.bf16.msra.mxu0 0
        %5480 = vmatprep.subr.bf16.mxu0 0
        %5481 = vmatpush1.bf16.msra.mxu0 0
        %5482 = vmatprep.subr.bf16.mxu0 0
        %5483 = vmatpush1.bf16.msra.mxu0 0
        %5484 = vmatprep.subr.bf16.mxu0 0
        %5485 = vmatpush1.bf16.msra.mxu0 0
        %5486 = vmatprep.subr.bf16.mxu0 0
        %5487 = vmatpush1.bf16.msra.mxu0 0
        %5488 = vmatprep.subr.bf16.mxu0 0
        %5489 = vmatpush1.bf16.msra.mxu0 0
        %5490 = vmatprep.mubr.bf16.mxu0 0
        %5491 = vmatmul.mubr.bf16.gmra.mrb[0].mxu0 %v5456
        %v5492 = vpop.f32.mrb[0].mxu0
        %v5493 = vadd.f32 0.0, %v5492
        %v5494 = vpop.f32.mrb[0].mxu0
        %v5495 = vpop.f32.mrb[0].mxu0
        %v5496 = vadd.f32 0.0, %v5495
        %v5497 = vpop.f32.mrb[0].mxu0
        %5498 = vdwg.mxu0
        %v5499 = vadd.f32 %v4787, %v5493
        %v5500 = vadd.f32 %v4788, %v5496
        %v5501 = vlaneseq
        %v5502 = vshrl.u32 %v5501, 7
        %v5503 = vsub.s32 0, %v5502
        %v5504 = vrot.slane %v4792, %v5503
        %v5505 = vadd.f32 %v5499, %v5504
        %v5506 = vadd.f32 %v5500, %v5504
        %v5507 = vsel %vm3740, %v5505, 0.0
        %5508 = vadd.xlane.f32.xlu0 %v5507
        %v5509 = vpop.xlane.xlu0 %5508
        %v5510 = vsel %vm3740, %v5506, 0.0
        %5511 = vadd.xlane.f32.xlu0 %v5510
        %v5512 = vpop.xlane.xlu0 %5511
        %v5513 = vmul.f32 %v5509, %v3897
        %v5514 = vmul.f32 %v5512, %v3897
        %v5515 = vsub.f32 %v5505, %v5513
        %v5516 = vsub.f32 %v5506, %v5514
        %v5517 = vmul.f32 %v5515, %v5515
        %v5518 = vmul.f32 %v5516, %v5516
        %v5519 = vsel %vm3740, %v5517, 0.0
        %5520 = vadd.xlane.f32.xlu0 %v5519
        %v5521 = vpop.xlane.xlu0 %5520
        %v5522 = vsel %vm3740, %v5518, 0.0
        %5523 = vadd.xlane.f32.xlu0 %v5522
        %v5524 = vpop.xlane.xlu0 %5523
        %v5525 = vmul.f32 %v5521, %v3897
        %v5526 = vmul.f32 %v5524, %v3897
        %v5527 = vadd.f32 %v5525, 1e-05
        %v5528 = vadd.f32 %v5526, 1e-05
        %v5529 = vrsqrt.pop %v5527
        %v5530 = vrsqrt.pop %v5528
        %v5531 = vmul.f32 %v5515, %v5529
        %v5532 = vmul.f32 %v5516, %v5530
        %v5533 = vlaneseq
        %v5534 = vshrl.u32 %v5533, 7
        %v5535 = vsub.s32 0, %v5534
        %v5536 = vrot.slane %v4793, %v5535
        %v5537 = vmul.f32 %v5531, %v5536
        %v5538 = vmul.f32 %v5532, %v5536
        %v5539 = vlaneseq
        %v5540 = vshrl.u32 %v5539, 7
        %v5541 = vsub.s32 0, %v5540
        %v5542 = vrot.slane %v4794, %v5541
        %v5543 = vadd.f32 %v5537, %v5542
        %v5544 = vadd.f32 %v5538, %v5542
        %v5545 = vpack.c.bf16 %v5544, %v5543
        %v5546 = vlaneseq
        %v5547 = vshrl.u32 %v5546, 7
        %v5548 = vsub.s32 0, %v5547
        %v5549 = vrot.slane %v4795, %v5548
        %v5550 = vunpack.c.h.b16 %v4798
        %v5551 = vunpack.c.h.b16 %v4799
        %v5552 = vunpack.c.h.b16 %v4800
        %v5553 = vunpack.c.h.b16 %v4801
        %v5554 = vpack.c.b16 %v5551, %v5550
        %v5555 = vpack.c.b16 %v5553, %v5552
        %v5559 = vsel %vm3740, %v5545, 0
        %5561 = vmatprep.subr.bf16.mxu0 0
        %5562 = vmatpush1.bf16.msra.mxu0 %v5554
        %5563 = vmatprep.subr.bf16.mxu0 0
        %5564 = vmatpush1.bf16.msra.mxu0 %v5555
        %5565 = vmatprep.subr.bf16.mxu0 0
        %5566 = vmatpush1.bf16.msra.mxu0 0
        %5567 = vmatprep.subr.bf16.mxu0 0
        %5568 = vmatpush1.bf16.msra.mxu0 0
        %5569 = vmatprep.subr.bf16.mxu0 0
        %5570 = vmatpush1.bf16.msra.mxu0 0
        %5571 = vmatprep.subr.bf16.mxu0 0
        %5572 = vmatpush1.bf16.msra.mxu0 0
        %5573 = vmatprep.subr.bf16.mxu0 0
        %5574 = vmatpush1.bf16.msra.mxu0 0
        %5575 = vmatprep.subr.bf16.mxu0 0
        %5576 = vmatpush1.bf16.msra.mxu0 0
        %5577 = vmatprep.subr.bf16.mxu0 0
        %5578 = vmatpush1.bf16.msra.mxu0 0
        %5579 = vmatprep.subr.bf16.mxu0 0
        %5580 = vmatpush1.bf16.msra.mxu0 0
        %5581 = vmatprep.subr.bf16.mxu0 0
        %5582 = vmatpush1.bf16.msra.mxu0 0
        %5583 = vmatprep.subr.bf16.mxu0 0
        %5584 = vmatpush1.bf16.msra.mxu0 0
        %5585 = vmatprep.subr.bf16.mxu0 0
        %5586 = vmatpush1.bf16.msra.mxu0 0
        %5587 = vmatprep.subr.bf16.mxu0 0
        %5588 = vmatpush1.bf16.msra.mxu0 0
        %5589 = vmatprep.subr.bf16.mxu0 0
        %5590 = vmatpush1.bf16.msra.mxu0 0
        %5591 = vmatprep.subr.bf16.mxu0 0
        %5592 = vmatpush1.bf16.msra.mxu0 0
        %5593 = vmatprep.mubr.bf16.mxu0 0
        %5594 = vmatmul.mubr.bf16.gmra.mrb[0].mxu0 %v5559
        %v5595 = vpop.f32.mrb[0].mxu0
        %v5596 = vadd.f32 %v5549, %v5595
        %v5597 = vpop.f32.mrb[0].mxu0
        %v5598 = vpop.f32.mrb[0].mxu0
        %v5599 = vadd.f32 %v5549, %v5598
        %v5600 = vpop.f32.mrb[0].mxu0
        %5601 = vdwg.mxu0
        %v5602 = vmul.f32 %v5596, 0.5
        %v5603 = vmul.f32 %v5599, 0.5
        %v5604 = vmul.f32 %v5596, 0.044715
        %v5605 = vmul.f32 %v5599, 0.044715
        %v5606 = vmul.f32 %v5604, %v5596
        %v5607 = vmul.f32 %v5605, %v5599
        %v5608 = vmul.f32 %v5606, %v5596
        %v5609 = vmul.f32 %v5607, %v5599
        %v5610 = vadd.f32 %v5596, %v5608
        %v5611 = vadd.f32 %v5599, %v5609
        %v5612 = vmul.f32 %v5610, 0.7978846
        %v5613 = vmul.f32 %v5611, 0.7978846
        %v5614 = vtanh.pop %v5612
        %v5615 = vtanh.pop %v5613
        %v5616 = vadd.f32 %v5614, 1.0
        %v5617 = vadd.f32 %v5615, 1.0
        %v5618 = vmul.f32 %v5602, %v5616
        %v5619 = vmul.f32 %v5603, %v5617
        %v5620 = vpack.c.bf16 %v5619, %v5618
        %v5621 = vlaneseq
        %v5622 = vshrl.u32 %v5621, 7
        %v5623 = vsub.s32 0, %v5622
        %v5624 = vrot.slane %v4796, %v5623
        %v5641 = vunpack.c.l.b16 %v4803
        %v5642 = vunpack.c.l.b16 %v4804
        %v5643 = vunpack.c.l.b16 %v4805
        %v5644 = vunpack.c.l.b16 %v4806
        %v5645 = vunpack.c.l.b16 %v4807
        %v5646 = vunpack.c.l.b16 %v4808
        %v5647 = vunpack.c.l.b16 %v4809
        %v5648 = vunpack.c.l.b16 %v4810
        %v5649 = vunpack.c.l.b16 %v4811
        %v5650 = vunpack.c.l.b16 %v4812
        %v5651 = vunpack.c.l.b16 %v4813
        %v5652 = vunpack.c.l.b16 %v4814
        %v5653 = vunpack.c.l.b16 %v4815
        %v5654 = vunpack.c.l.b16 %v4816
        %v5655 = vunpack.c.l.b16 %v4817
        %v5656 = vunpack.c.l.b16 %v4818
        %v5657 = vpack.c.b16 %v5642, %v5641
        %v5658 = vpack.c.b16 %v5644, %v5643
        %v5659 = vpack.c.b16 %v5646, %v5645
        %v5660 = vpack.c.b16 %v5648, %v5647
        %v5661 = vpack.c.b16 %v5650, %v5649
        %v5662 = vpack.c.b16 %v5652, %v5651
        %v5663 = vpack.c.b16 %v5654, %v5653
        %v5664 = vpack.c.b16 %v5656, %v5655
        %5673 = vmatprep.subr.bf16.mxu0 0
        %5674 = vmatpush1.bf16.msra.mxu0 %v5657
        %5675 = vmatprep.subr.bf16.mxu0 0
        %5676 = vmatpush1.bf16.msra.mxu0 %v5658
        %5677 = vmatprep.subr.bf16.mxu0 0
        %5678 = vmatpush1.bf16.msra.mxu0 %v5659
        %5679 = vmatprep.subr.bf16.mxu0 0
        %5680 = vmatpush1.bf16.msra.mxu0 %v5660
        %5681 = vmatprep.subr.bf16.mxu0 0
        %5682 = vmatpush1.bf16.msra.mxu0 %v5661
        %5683 = vmatprep.subr.bf16.mxu0 0
        %5684 = vmatpush1.bf16.msra.mxu0 %v5662
        %5685 = vmatprep.subr.bf16.mxu0 0
        %5686 = vmatpush1.bf16.msra.mxu0 %v5663
        %5687 = vmatprep.subr.bf16.mxu0 0
        %5688 = vmatpush1.bf16.msra.mxu0 %v5664
        %5689 = vmatprep.subr.bf16.mxu0 0
        %5690 = vmatpush1.bf16.msra.mxu0 0
        %5691 = vmatprep.subr.bf16.mxu0 0
        %5692 = vmatpush1.bf16.msra.mxu0 0
        %5693 = vmatprep.subr.bf16.mxu0 0
        %5694 = vmatpush1.bf16.msra.mxu0 0
        %5695 = vmatprep.subr.bf16.mxu0 0
        %5696 = vmatpush1.bf16.msra.mxu0 0
        %5697 = vmatprep.subr.bf16.mxu0 0
        %5698 = vmatpush1.bf16.msra.mxu0 0
        %5699 = vmatprep.subr.bf16.mxu0 0
        %5700 = vmatpush1.bf16.msra.mxu0 0
        %5701 = vmatprep.subr.bf16.mxu0 0
        %5702 = vmatpush1.bf16.msra.mxu0 0
        %5703 = vmatprep.subr.bf16.mxu0 0
        %5704 = vmatpush1.bf16.msra.mxu0 0
        %5705 = vmatprep.mubr.bf16.mxu0 0
        %5706 = vmatmul.mubr.bf16.gmra.mrb[0].mxu0 %v5620
        %v5707 = vpop.f32.mrb[0].mxu0
        %v5708 = vadd.f32 %v5624, %v5707
        %v5709 = vpop.f32.mrb[0].mxu0
        %v5710 = vpop.f32.mrb[0].mxu0
        %v5711 = vadd.f32 %v5624, %v5710
        %v5712 = vpop.f32.mrb[0].mxu0
        %5713 = vdwg.mxu0
        %v5714 = vadd.f32 %v5505, %v5708
        %v5715 = vadd.f32 %v5506, %v5711
        %v5716 = vld [vmem:[%s1 + $0x25] sm:$0x1]
        %v5717 = vld [vmem:[%s1 + $0x26] sm:$0x1]
        %v5718 = vsel %vm3740, %v5714, 0.0
        %5719 = vadd.xlane.f32.xlu0 %v5718
        %v5720 = vpop.xlane.xlu0 %5719
        %v5721 = vsel %vm3740, %v5715, 0.0
        %5722 = vadd.xlane.f32.xlu0 %v5721
        %v5723 = vpop.xlane.xlu0 %5722
        %v5724 = vmul.f32 %v5720, %v3897
        %v5725 = vmul.f32 %v5723, %v3897
        %v5726 = vsub.f32 %v5714, %v5724
        %v5727 = vsub.f32 %v5715, %v5725
        %v5728 = vmul.f32 %v5726, %v5726
        %v5729 = vmul.f32 %v5727, %v5727
        %v5730 = vsel %vm3740, %v5728, 0.0
        %5731 = vadd.xlane.f32.xlu0 %v5730
        %v5732 = vpop.xlane.xlu0 %5731
        %v5733 = vsel %vm3740, %v5729, 0.0
        %5734 = vadd.xlane.f32.xlu0 %v5733
        %v5735 = vpop.xlane.xlu0 %5734
        %v5736 = vmul.f32 %v5732, %v3897
        %v5737 = vmul.f32 %v5735, %v3897
        %v5738 = vadd.f32 %v5736, 1e-05
        %v5739 = vadd.f32 %v5737, 1e-05
        %v5740 = vrsqrt.pop %v5738
        %v5741 = vrsqrt.pop %v5739
        %v5742 = vmul.f32 %v5726, %v5740
        %v5743 = vmul.f32 %v5727, %v5741
        %v5744 = vlaneseq
        %v5745 = vshrl.u32 %v5744, 7
        %v5746 = vsub.s32 0, %v5745
        %v5747 = vrot.slane %v5716, %v5746
        %v5748 = vmul.f32 %v5742, %v5747
        %v5749 = vmul.f32 %v5743, %v5747
        %v5750 = vlaneseq
        %v5751 = vshrl.u32 %v5750, 7
        %v5752 = vsub.s32 0, %v5751
        %v5753 = vrot.slane %v5717, %v5752
        %v5754 = vadd.f32 %v5748, %v5753
        %v5755 = vadd.f32 %v5749, %v5753
        %v5756 = vsel %vm3740, %v5754, 0.0
        %v5757 = vsel %vm3740, %v5755, 0.0
        %v5758 = vadd.f32 %v5756, %v5757
        %v5759 = vrot.slane %v5758, 4
        %v5760 = vadd.f32 %v5758, %v5759
        %v5761 = vrot.slane %v5760, 2
        %v5762 = vadd.f32 %v5760, %v5761
        %v5763 = vrot.slane %v5762, 1
        %v5764 = vadd.f32 %v5762, %v5763
        %v5765 = vmul.f32 %v5764, %v611
        %v5766 = vld [vmem:[%s11] sm:$0xff]
        %v5767 = vld [vmem:[%s11 + $0x8] sm:$0xff]
        %v5768 = vld [vmem:[%s11 + $0x10] sm:$0xff]
        %v5769 = vld [vmem:[%s11 + $0x18] sm:$0xff]
        %v5770 = vld [vmem:[%s1 + $0x27] sm:$0x1]
        %v5772 = vsel %vm3740, %v5765, 0
        %5774 = vmatprep.subr.mxu0 0.0
        %5775 = vmatpush1.msra.mxu0 %v5766
        %5776 = vmatprep.subr.mxu0 0.0
        %5777 = vmatpush1.msra.mxu0 %v5767
        %5778 = vmatprep.subr.mxu0 0.0
        %5779 = vmatpush1.msra.mxu0 %v5768
        %5780 = vmatprep.subr.mxu0 0.0
        %5781 = vmatpush1.msra.mxu0 %v5769
        %5782 = vmatprep.subr.mxu0 0.0
        %5783 = vmatpush1.msra.mxu0 0.0
        %5784 = vmatprep.subr.mxu0 0.0
        %5785 = vmatpush1.msra.mxu0 0.0
        %5786 = vmatprep.subr.mxu0 0.0
        %5787 = vmatpush1.msra.mxu0 0.0
        %5788 = vmatprep.subr.mxu0 0.0
        %5789 = vmatpush1.msra.mxu0 0.0
        %5790 = vmatprep.subr.mxu0 0.0
        %5791 = vmatpush1.msra.mxu0 0.0
        %5792 = vmatprep.subr.mxu0 0.0
        %5793 = vmatpush1.msra.mxu0 0.0
        %5794 = vmatprep.subr.mxu0 0.0
        %5795 = vmatpush1.msra.mxu0 0.0
        %5796 = vmatprep.subr.mxu0 0.0
        %5797 = vmatpush1.msra.mxu0 0.0
        %5798 = vmatprep.subr.mxu0 0.0
        %5799 = vmatpush1.msra.mxu0 0.0
        %5800 = vmatprep.subr.mxu0 0.0
        %5801 = vmatpush1.msra.mxu0 0.0
        %5802 = vmatprep.subr.mxu0 0.0
        %5803 = vmatpush1.msra.mxu0 0.0
        %5804 = vmatprep.subr.mxu0 0.0
        %5805 = vmatpush1.msra.mxu0 0.0
        %5806 = vmatprep.subr.mxu0 0.0
        %5807 = vmatpush1.msra.mxu0 0.0
        %5808 = vmatprep.subr.mxu0 0.0
        %5809 = vmatpush1.msra.mxu0 0.0
        %5810 = vmatprep.subr.mxu0 0.0
        %5811 = vmatpush1.msra.mxu0 0.0
        %5812 = vmatprep.subr.mxu0 0.0
        %5813 = vmatpush1.msra.mxu0 0.0
        %5814 = vmatprep.subr.mxu0 0.0
        %5815 = vmatpush1.msra.mxu0 0.0
        %5816 = vmatprep.subr.mxu0 0.0
        %5817 = vmatpush1.msra.mxu0 0.0
        %5818 = vmatprep.subr.mxu0 0.0
        %5819 = vmatpush1.msra.mxu0 0.0
        %5820 = vmatprep.subr.mxu0 0.0
        %5821 = vmatpush1.msra.mxu0 0.0
        %5822 = vmatprep.subr.mxu0 0.0
        %5823 = vmatpush1.msra.mxu0 0.0
        %5824 = vmatprep.subr.mxu0 0.0
        %5825 = vmatpush1.msra.mxu0 0.0
        %5826 = vmatprep.subr.mxu0 0.0
        %5827 = vmatpush1.msra.mxu0 0.0
        %5828 = vmatprep.subr.mxu0 0.0
        %5829 = vmatpush1.msra.mxu0 0.0
        %5830 = vmatprep.subr.mxu0 0.0
        %5831 = vmatpush1.msra.mxu0 0.0
        %5832 = vmatprep.subr.mxu0 0.0
        %5833 = vmatpush1.msra.mxu0 0.0
        %5834 = vmatprep.subr.mxu0 0.0
        %5835 = vmatpush1.msra.mxu0 0.0
        %5836 = vmatprep.subr.mxu0 0.0
        %5837 = vmatpush1.msra.mxu0 0.0
        %5838 = vmatprep.mubr.f32.mxu0 0.0
        %5839 = vmatmul.mubr.f32.gmra.mrb[0].mxu0 %v5772
        %v5840 = vpop.f32.mrb[0].mxu0
        %v5841 = vadd.f32 %v5770, %v5840
        %v5842 = vpop.f32.mrb[0].mxu0
        %5843 = vdwg.mxu0
        %vm5844 = vcmask 8192
        %5845 = vst.msk [vmem:[%s436] sm:$0x1] %vm5844, %v5841
        %vm5846 = vcmask 253952
        %5847 = vst.msk [vmem:[%s442] sm:$0x1] %vm5846, %v5765
        %s5848 = sand.u32 %s296, 1
        %s5849 = scalar_lea.sflag [#allocation3], %s5848
        %s5850 = sand.u32 %s296, 1
        %s5851 = scalar_lea.vmem [#allocation2], %s5850
        %s5852 = sand.u32 %s322, 1
        %s5853 = scalar_lea.sflag [#allocation5], %s5852
        %s5854 = sand.u32 %s322, 1
        %s5855 = scalar_lea.vmem [#allocation4], %s5854
        // Predicated region
        $region69: #{swin_forward.1} parent=67 // pred_check
          %p5856 = pneg %p306
        $region70: #{swin_forward.1} parent=67 // pred_check_branch
          %5858 = sbr.rel (%p5856) target = $region72
        $region71: #{swin_forward.1} parent=67 // pred_region
          %s5860 = ssub.s32 16, 16
          %5861 = vsyncadd %s5849, %s5860
          %s5862 = smul.addr %s31, 16
          %s5863 = scalar_lea.hbm %s12, %s5862
          %s5865 = sshll.u32 %s5851, 4
          %s5866 = int_to_ptr.vmem [resolvable:$true] %s5865
          %5868 = dma.vmem_to_hbm [thread:$0]  %s5866, 16, %s5863, %s5849
        $region72: #{swin_forward.1} parent=67 // pred_fallthru
          _
        // Predicated region
        $region73: #{swin_forward.1} parent=67 // pred_check
          %p5869 = pneg %p332
        $region74: #{swin_forward.1} parent=67 // pred_check_branch
          %5871 = sbr.rel (%p5869) target = $region76
        $region75: #{swin_forward.1} parent=67 // pred_region
          %s5873 = ssub.s32 16, 16
          %5874 = vsyncadd %s5853, %s5873
          %s5875 = smul.addr %s31, 16
          %s5876 = scalar_lea.hbm %s13, %s5875
          %s5878 = sshll.u32 %s5855, 4
          %s5879 = int_to_ptr.vmem [resolvable:$true] %s5878
          %5881 = dma.vmem_to_hbm [thread:$0]  %s5879, 16, %s5876, %s5853
        $region76: #{swin_forward.1} parent=67 // pred_fallthru
          _
      $region68: #{swin_forward.1} parent=5 // pred_fallthru
        _
      %p5882 = scmp.le.s32.totalorder 2, %s26
      // Predicated region
      $region77: #{swin_forward.1} parent=5 // pred_check
        %p5883 = pneg %p5882
      $region78: #{swin_forward.1} parent=5 // pred_check_branch
        %5885 = sbr.rel (%p5883) target = $region80
      $region79: #{swin_forward.1} parent=5 // pred_region
        %s5886 = ssub.s32 %s26, 2
        // Predicated region
        $region81: #{swin_forward.1} parent=79 // pred_check
          %p5887 = pneg %p312
        $region82: #{swin_forward.1} parent=79 // pred_check_branch
          %5889 = sbr.rel (%p5887) target = $region84
        $region83: #{swin_forward.1} parent=79 // pred_region
          %s5890 = sand.u32 %s297, 1
          %s5891 = scalar_lea.sflag [#allocation3], %s5890
          %s5892 = sand.u32 %s297, 1
          %s5893 = scalar_lea.vmem [#allocation2], %s5892
          %5894 = dma.done %s5891, 16
        $region84: #{swin_forward.1} parent=79 // pred_fallthru
          _
        // Predicated region
        $region85: #{swin_forward.1} parent=79 // pred_check
          %p5895 = pneg %p338
        $region86: #{swin_forward.1} parent=79 // pred_check_branch
          %5897 = sbr.rel (%p5895) target = $region88
        $region87: #{swin_forward.1} parent=79 // pred_region
          %s5898 = sand.u32 %s323, 1
          %s5899 = scalar_lea.sflag [#allocation5], %s5898
          %s5900 = sand.u32 %s323, 1
          %s5901 = scalar_lea.vmem [#allocation4], %s5900
          %5902 = dma.done %s5899, 16
        $region88: #{swin_forward.1} parent=79 // pred_fallthru
          _
      $region80: #{swin_forward.1} parent=5 // pred_fallthru
        _
    $region6: #{swin_forward.1} parent=1 // loop_footer
      %s30 = sadd.s32 1, %s26
    $region7: #{swin_forward.1} parent=1 // loop_footer_branch
      %25 = sbr.rel target = $region3
    $region8: #{swin_forward.1} parent=1 // loop_exit
      _
    %5903 = vsyncpa [#allocation3], 1
    %s5904 = scalar_lea.sflag [#allocation3], 1
    %5905 = vsyncpa %s5904, 1
    %5906 = vsyncpa [#allocation5], 1
    %s5907 = scalar_lea.sflag [#allocation5], 1
    %5908 = vsyncpa %s5907, 1

</llo_original>
